<compile_context>
chip_gen: v7x
topology: tpu7x:2x2x1
jax: 0.10.0
libtpu: 0.0.40
codegen_flags: <defaults>
</compile_context>

<pallas_src>
import numpy as np

import jax
import jax.numpy as jnp
from jax.experimental import pallas as pl
from jax.experimental.pallas import tpu as pltpu

_F32 = jnp.float32
_BF16 = jnp.bfloat16


# ----------------------- shared per-layer building blocks ----------------------- #
# Activations are 2-D (H*TB, W*C): row index = h*TB + image, columns = w*C + c.
# The same functions run inside the Pallas kernel (on values read from VMEM refs)
# and in the plain-XLA emulation used for validation.

def _conv_fused(a, w, b, tb, cin, k, oh, ow):
    """VALID conv (stride 1) + bias + ReLU as ONE bf16 matmul.

    a: (H*tb, W*cin) f32;  w: (k*k*ow*cin, ow*cout) bf16 stacked block-diagonal
    taps;  b: (1, ow*cout) f32.  Returns (oh*tb, ow*cout) f32.
    """
    ab = a.astype(_BF16)                                 # cast once, slice 16x
    taps = [ab[dh * tb:(dh + oh) * tb, dw * cin:(dw + ow) * cin]
            for dh in range(k) for dw in range(k)]
    cat = jnp.concatenate(taps, axis=-1)                 # (oh*tb, k*k*ow*cin)
    y = jnp.dot(cat, w, preferred_element_type=_F32)     # one MXU matmul
    return jnp.maximum(y + b, 0.0)


def _pool_fused(a, pw, tb, oh):
    """Floor-mode AvgPool2d(2,2).  Row pairs: f32 VPU add via a layout-preserving
    reshape (tb % 8 == 0).  Column pairs + the 0.25 scale: one small bf16 matmul."""
    ho, c = oh // 2, a.shape[-1]
    t = a[:2 * ho * tb].reshape(ho, 2 * tb, c)
    rows = (t[:, :tb, :] + t[:, tb:, :]).reshape(ho * tb, c)
    return jnp.dot(rows.astype(_BF16), pw, preferred_element_type=_F32)


def _head_fused(p2, w3, b3, wl1, bl1, wl2, bl2, tb):
    """conv3 (1x1 output == dense 256->144) + linear1 + linear2."""
    flat = jnp.concatenate([p2[dh * tb:(dh + 1) * tb, :] for dh in range(4)],
                           axis=-1)                                    # (tb, 256)
    a3 = jnp.maximum(jnp.dot(flat.astype(_BF16), w3,
                             preferred_element_type=_F32) + b3, 0.0)   # (tb, 144)
    h = jnp.maximum(jnp.dot(a3.astype(_BF16), wl1,
                            preferred_element_type=_F32) + bl1, 0.0)   # (tb, 84)
    return jnp.dot(h.astype(_BF16), wl2,
                   preferred_element_type=_F32) + bl2                  # (tb, 10)


def _lenet_body(x2d, w, tb):
    a1 = _conv_fused(x2d, w["w1"], w["b1"], tb, 1, 4, 25, 25)   # (25*tb, 150)
    p1 = _pool_fused(a1, w["pw1"], tb, 25)                      # (12*tb, 72)
    a2 = _conv_fused(p1, w["w2"], w["b2"], tb, 6, 4, 9, 9)      # (9*tb, 144)
    p2 = _pool_fused(a2, w["pw2"], tb, 9)                       # (4*tb, 64)
    return _head_fused(p2, w["w3"], w["b3"], w["wl1"], w["bl1"],
                       w["wl2"], w["bl2"], tb)                  # (tb, 10)


# ------------------------------- Pallas kernel ------------------------------- #

_PACK_KEYS = ("w1", "b1", "pw1", "w2", "b2", "pw2",
              "w3", "b3", "wl1", "bl1", "wl2", "bl2")


def _lenet_kernel(x_ref, *refs):
    *w_refs, o_ref = refs
    tb = o_ref.shape[0]
    w = {k: r[...] for k, r in zip(_PACK_KEYS, w_refs)}
    # (28, TB, 28) -> (28*TB, 28): layout-preserving merge (TB % 8 == 0, f32).
    x2d = x_ref[...].reshape(28 * tb, 28)
    o_ref[...] = _lenet_body(x2d, w, tb).astype(o_ref.dtype)


# ------------------------- one-time weight packing -------------------------- #

def _conv_tap_stack(w, ow):
    """(OC, IC, KH, KW) torch conv weight -> (KH*KW*OW*IC, OW*OC) bf16 stacked
    block-diagonal weight for the fused shifted-window matmul."""
    w = np.asarray(w, np.float32)
    oc, ic, kh, kw = w.shape
    eye = np.eye(ow, dtype=np.float32)
    blocks = [np.kron(eye, w[:, :, dh, dw].T)          # (OW*IC, OW*OC) per tap
              for dh in range(kh) for dw in range(kw)]
    return jnp.asarray(np.concatenate(blocks, axis=0), jnp.bfloat16)


def _pool_col_mat(w, c):
    """(W*C, (W//2)*C) bf16 matrix: adjacent-column pair sum * 0.25 (the full
    2x2 average-pool scale; row pairs are summed un-scaled on the VPU)."""
    wo = w // 2
    q = np.zeros((w, wo), np.float32)
    r = np.arange(wo)
    q[2 * r, r] = 0.25
    q[2 * r + 1, r] = 0.25
    return jnp.asarray(np.kron(q, np.eye(c, dtype=np.float32)), jnp.bfloat16)


def _bias_row(b, reps):
    return jnp.asarray(np.tile(np.asarray(b, np.float32), reps)[None, :])


def pack_params(params):
    """Repack PyTorch-layout params ONCE into matmul-ready kernel layouts."""
    p = {k: np.asarray(v, np.float32) for k, v in params.items()}
    return {
        "w1": _conv_tap_stack(p["conv1_w"], 25), "b1": _bias_row(p["conv1_b"], 25),
        "pw1": _pool_col_mat(25, 6),
        "w2": _conv_tap_stack(p["conv2_w"], 9), "b2": _bias_row(p["conv2_b"], 9),
        "pw2": _pool_col_mat(9, 16),
        "w3": _conv_tap_stack(p["conv3_w"], 1), "b3": _bias_row(p["conv3_b"], 1),
        "wl1": jnp.asarray(p["lin1_w"].T, jnp.bfloat16),
        "bl1": jnp.asarray(p["lin1_b"][None, :]),
        "wl2": jnp.asarray(p["lin2_w"].T, jnp.bfloat16),
        "bl2": jnp.asarray(p["lin2_b"][None, :]),
    }


# --------------------------------- forward ---------------------------------- #

def lenet_forward(packed, x):
    """x: (N, 1, 28, 28) f32 NCHW -> logits (N, 10) f32; one fused Pallas call."""
    n = x.shape[0]
    assert x.shape[1:] == (1, 28, 28), "LeNet head pins the input to 1x28x28"
    tb = min(32, ((n + 7) // 8) * 8)              # images per grid step; % 8 == 0
    n_pad = pl.cdiv(n, tb) * tb
    xs = x.reshape(n, 28, 28)                     # C_in == 1: pure reshape
    if n_pad != n:
        xs = jnp.pad(xs, ((0, n_pad - n), (0, 0), (0, 0)))
    # Layout plumbing only: (H, N, W) so one batch tile is a contiguous block and
    # the in-kernel 2-D activation has row index h*TB + image.
    xt = jnp.transpose(xs, (1, 0, 2))             # (28, n_pad, 28)

    weights = tuple(packed[k] for k in _PACK_KEYS)

    def const_spec(a):
        zeros = (0,) * a.ndim
        return pl.BlockSpec(a.shape, lambda i: zeros)

    # True network FLOPs (not the inflated block-diagonal count).
    flops = 2 * n_pad * (6 * 25 * 25 * 16 + 16 * 9 * 9 * 96 + 144 * 256
                         + 144 * 84 + 84 * 10)
    bytes_accessed = (xt.size * xt.dtype.itemsize + n_pad * 10 * 4
                      + sum(int(np.prod(a.shape)) * a.dtype.itemsize
                            for a in weights))

    out = pl.pallas_call(
        _lenet_kernel,
        out_shape=jax.ShapeDtypeStruct((n_pad, 10), jnp.float32),
        grid=(n_pad // tb,),
        in_specs=[pl.BlockSpec((28, tb, 28), lambda i: (0, i, 0))]
                 + [const_spec(a) for a in weights],
        out_specs=pl.BlockSpec((tb, 10), lambda i: (i, 0)),
        compiler_params=pltpu.CompilerParams(
            dimension_semantics=("parallel",)),
        cost_estimate=pl.CostEstimate(flops=int(flops), transcendentals=0,
                                      bytes_accessed=int(bytes_accessed)),
    )(xt, *weights)
    return out[:n]


# ------------------------------ init & references --------------------------- #

def init_params(key):
    """Deterministic PyTorch-style (uniform +/- 1/sqrt(fan_in)) init."""
    def uniform(k, shape, fan_in):
        bound = 1.0 / float(fan_in) ** 0.5
        return jax.random.uniform(k, shape, jnp.float32, -bound, bound)

    ks = jax.random.split(key, 10)
    return {
        "conv1_w": uniform(ks[0], (6, 1, 4, 4), 1 * 4 * 4),
        "conv1_b": uniform(ks[1], (6,), 1 * 4 * 4),
        "conv2_w": uniform(ks[2], (16, 6, 4, 4), 6 * 4 * 4),
        "conv2_b": uniform(ks[3], (16,), 6 * 4 * 4),
        "conv3_w": uniform(ks[4], (144, 16, 4, 4), 16 * 4 * 4),
        "conv3_b": uniform(ks[5], (144,), 16 * 4 * 4),
        "lin1_w": uniform(ks[6], (84, 144), 144),   # PyTorch Linear: (out, in)
        "lin1_b": uniform(ks[7], (84,), 144),
        "lin2_w": uniform(ks[8], (10, 84), 84),
        "lin2_b": uniform(ks[9], (10,), 84),
    }


def lenet_emulate(packed, x):
    """The exact same bf16 math as the kernel, run as plain XLA (validation)."""
    n = x.shape[0]
    x2d = jnp.transpose(x.reshape(n, 28, 28), (1, 0, 2)).reshape(28 * n, 28)
    return _lenet_body(x2d, packed, n)


def lenet_reference(params, x):
    """Pure f32 XLA reference of the PyTorch module (validation only)."""
    hi = jax.lax.Precision.HIGHEST

    def conv(x, w, b):
        y = jax.lax.conv_general_dilated(
            x, w, (1, 1), "VALID",
            dimension_numbers=("NCHW", "OIHW", "NCHW"), precision=hi)
        return jax.nn.relu(y + b[None, :, None, None])

    def pool(x):
        h2, w2 = x.shape[2] // 2, x.shape[3] // 2
        xc = x[:, :, :2 * h2, :2 * w2]
        return 0.25 * (xc[:, :, 0::2, 0::2] + xc[:, :, 0::2, 1::2]
                       + xc[:, :, 1::2, 0::2] + xc[:, :, 1::2, 1::2])

    x = pool(conv(x, params["conv1_w"], params["conv1_b"]))
    x = pool(conv(x, params["conv2_w"], params["conv2_b"]))
    x = conv(x, params["conv3_w"], params["conv3_b"])
    x = x.reshape(x.shape[0], -1)
    x = jax.nn.relu(jnp.dot(x, params["lin1_w"].T, precision=hi) + params["lin1_b"])
    return jnp.dot(x, params["lin2_w"].T, precision=hi) + params["lin2_b"]


if __name__ == "__main__":
    key = jax.random.PRNGKey(0)
    kx, kp = jax.random.split(key)
    # 1x28x28 input is pinned by the Flatten->Linear(144) head (MNIST).  Batch 70
    # is deliberately NOT a multiple of TB=32: it exercises the wrapper padding
    # path and a 3-step "parallel" grid (both v7x TensorCores get work).
    n = 70
    x = jax.random.normal(kx, (n, 1, 28, 28), jnp.float32)
    params = init_params(kp)
    packed = pack_params(params)          # one-time, matmul-ready layouts

    out = jax.jit(lenet_forward)(packed, x)
    jax.block_until_ready(out)
    assert out.shape == (n, 10) and out.dtype == jnp.float32

    # Tight gate: identical bf16 math run as plain XLA -> catches packing /
    # BlockSpec / layout bugs without being masked by bf16-vs-f32 drift.
    emu = lenet_emulate(packed, x)
    err_emu = float(jnp.max(jnp.abs(out - emu)))
    assert err_emu <= 5e-3 * (1.0 + float(jnp.max(jnp.abs(emu)))), \
        f"kernel/emulation mismatch: {err_emu}"

    # Loose gate vs the f32 PyTorch-semantics reference (kernel uses bf16 MXU ops).
    ref = lenet_reference(params, x)
    err = float(jnp.max(jnp.abs(out - ref)))
    tol = 0.1 * (1.0 + float(jnp.max(jnp.abs(ref))))
    assert err <= tol, f"kernel/reference mismatch: {err} > {tol}"
    print("KERNEL_OK")
</pallas_src>

<mosaic_0001>
module attributes {stable_mosaic.version = 11 : i64} {
  func.func @_lenet_kernel(%arg0: i32, %arg1: memref<28x32x28xf32, #tpu.memory_space<vmem>>, %arg2: memref<400x150xbf16, #tpu.memory_space<vmem>>, %arg3: memref<1x150xf32, #tpu.memory_space<vmem>>, %arg4: memref<150x72xbf16, #tpu.memory_space<vmem>>, %arg5: memref<864x144xbf16, #tpu.memory_space<vmem>>, %arg6: memref<1x144xf32, #tpu.memory_space<vmem>>, %arg7: memref<144x64xbf16, #tpu.memory_space<vmem>>, %arg8: memref<256x144xbf16, #tpu.memory_space<vmem>>, %arg9: memref<1x144xf32, #tpu.memory_space<vmem>>, %arg10: memref<144x84xbf16, #tpu.memory_space<vmem>>, %arg11: memref<1x84xf32, #tpu.memory_space<vmem>>, %arg12: memref<84x10xbf16, #tpu.memory_space<vmem>>, %arg13: memref<1x10xf32, #tpu.memory_space<vmem>>, %arg14: memref<32x10xf32, #tpu.memory_space<vmem>>) attributes {dimension_semantics = [#tpu.dimension_semantics<parallel>], iteration_bounds = array<i64: 3>, scalar_prefetch = 0 : i64, scratch_operands = 0 : i64, tpu.core_type = #tpu.core_type<tc>, window_params = [{transform_indices = @transform_0, window_bounds = array<i64: 28, 32, 28>}, {pipeline_mode = #tpu.pipeline_mode<synchronous>, transform_indices = @transform_1, window_bounds = array<i64: 400, 150>}, {pipeline_mode = #tpu.pipeline_mode<synchronous>, transform_indices = @transform_2, window_bounds = array<i64: 1, 150>}, {pipeline_mode = #tpu.pipeline_mode<synchronous>, transform_indices = @transform_3, window_bounds = array<i64: 150, 72>}, {pipeline_mode = #tpu.pipeline_mode<synchronous>, transform_indices = @transform_4, window_bounds = array<i64: 864, 144>}, {pipeline_mode = #tpu.pipeline_mode<synchronous>, transform_indices = @transform_5, window_bounds = array<i64: 1, 144>}, {pipeline_mode = #tpu.pipeline_mode<synchronous>, transform_indices = @transform_6, window_bounds = array<i64: 144, 64>}, {pipeline_mode = #tpu.pipeline_mode<synchronous>, transform_indices = @transform_7, window_bounds = array<i64: 256, 144>}, {pipeline_mode = #tpu.pipeline_mode<synchronous>, transform_indices = @transform_8, window_bounds = array<i64: 1, 144>}, {pipeline_mode = #tpu.pipeline_mode<synchronous>, transform_indices = @transform_9, window_bounds = array<i64: 144, 84>}, {pipeline_mode = #tpu.pipeline_mode<synchronous>, transform_indices = @transform_10, window_bounds = array<i64: 1, 84>}, {pipeline_mode = #tpu.pipeline_mode<synchronous>, transform_indices = @transform_11, window_bounds = array<i64: 84, 10>}, {pipeline_mode = #tpu.pipeline_mode<synchronous>, transform_indices = @transform_12, window_bounds = array<i64: 1, 10>}, {transform_indices = @transform_13, window_bounds = array<i64: 32, 10>}]} {
    %c0 = arith.constant 0 : index
    %c0_0 = arith.constant 0 : index
    %0 = vector.load %arg2[%c0, %c0_0] : memref<400x150xbf16, #tpu.memory_space<vmem>>, vector<400x150xbf16>
    %c0_1 = arith.constant 0 : index
    %c0_2 = arith.constant 0 : index
    %1 = vector.load %arg3[%c0_1, %c0_2] : memref<1x150xf32, #tpu.memory_space<vmem>>, vector<1x150xf32>
    %c0_3 = arith.constant 0 : index
    %c0_4 = arith.constant 0 : index
    %2 = vector.load %arg4[%c0_3, %c0_4] : memref<150x72xbf16, #tpu.memory_space<vmem>>, vector<150x72xbf16>
    %c0_5 = arith.constant 0 : index
    %c0_6 = arith.constant 0 : index
    %3 = vector.load %arg5[%c0_5, %c0_6] : memref<864x144xbf16, #tpu.memory_space<vmem>>, vector<864x144xbf16>
    %c0_7 = arith.constant 0 : index
    %c0_8 = arith.constant 0 : index
    %4 = vector.load %arg6[%c0_7, %c0_8] : memref<1x144xf32, #tpu.memory_space<vmem>>, vector<1x144xf32>
    %c0_9 = arith.constant 0 : index
    %c0_10 = arith.constant 0 : index
    %5 = vector.load %arg7[%c0_9, %c0_10] : memref<144x64xbf16, #tpu.memory_space<vmem>>, vector<144x64xbf16>
    %c0_11 = arith.constant 0 : index
    %c0_12 = arith.constant 0 : index
    %6 = vector.load %arg8[%c0_11, %c0_12] : memref<256x144xbf16, #tpu.memory_space<vmem>>, vector<256x144xbf16>
    %c0_13 = arith.constant 0 : index
    %c0_14 = arith.constant 0 : index
    %7 = vector.load %arg9[%c0_13, %c0_14] : memref<1x144xf32, #tpu.memory_space<vmem>>, vector<1x144xf32>
    %c0_15 = arith.constant 0 : index
    %c0_16 = arith.constant 0 : index
    %8 = vector.load %arg10[%c0_15, %c0_16] : memref<144x84xbf16, #tpu.memory_space<vmem>>, vector<144x84xbf16>
    %c0_17 = arith.constant 0 : index
    %c0_18 = arith.constant 0 : index
    %9 = vector.load %arg11[%c0_17, %c0_18] : memref<1x84xf32, #tpu.memory_space<vmem>>, vector<1x84xf32>
    %c0_19 = arith.constant 0 : index
    %c0_20 = arith.constant 0 : index
    %10 = vector.load %arg12[%c0_19, %c0_20] : memref<84x10xbf16, #tpu.memory_space<vmem>>, vector<84x10xbf16>
    %c0_21 = arith.constant 0 : index
    %c0_22 = arith.constant 0 : index
    %11 = vector.load %arg13[%c0_21, %c0_22] : memref<1x10xf32, #tpu.memory_space<vmem>>, vector<1x10xf32>
    %c0_23 = arith.constant 0 : index
    %c0_24 = arith.constant 0 : index
    %c0_25 = arith.constant 0 : index
    %12 = vector.load %arg1[%c0_23, %c0_24, %c0_25] : memref<28x32x28xf32, #tpu.memory_space<vmem>>, vector<28x32x28xf32>
    %13 = vector.shape_cast %12 : vector<28x32x28xf32> to vector<896x28xf32>
    %14 = arith.truncf %13 : vector<896x28xf32> to vector<896x28xbf16>
    %15 = vector.extract_strided_slice %14 {offsets = [0, 0], sizes = [800, 25], strides = [1, 1]} : vector<896x28xbf16> to vector<800x25xbf16>
    %16 = vector.extract_strided_slice %14 {offsets = [0, 1], sizes = [800, 25], strides = [1, 1]} : vector<896x28xbf16> to vector<800x25xbf16>
    %17 = vector.extract_strided_slice %14 {offsets = [0, 2], sizes = [800, 25], strides = [1, 1]} : vector<896x28xbf16> to vector<800x25xbf16>
    %18 = vector.extract_strided_slice %14 {offsets = [0, 3], sizes = [800, 25], strides = [1, 1]} : vector<896x28xbf16> to vector<800x25xbf16>
    %19 = vector.extract_strided_slice %14 {offsets = [32, 0], sizes = [800, 25], strides = [1, 1]} : vector<896x28xbf16> to vector<800x25xbf16>
    %20 = vector.extract_strided_slice %14 {offsets = [32, 1], sizes = [800, 25], strides = [1, 1]} : vector<896x28xbf16> to vector<800x25xbf16>
    %21 = vector.extract_strided_slice %14 {offsets = [32, 2], sizes = [800, 25], strides = [1, 1]} : vector<896x28xbf16> to vector<800x25xbf16>
    %22 = vector.extract_strided_slice %14 {offsets = [32, 3], sizes = [800, 25], strides = [1, 1]} : vector<896x28xbf16> to vector<800x25xbf16>
    %23 = vector.extract_strided_slice %14 {offsets = [64, 0], sizes = [800, 25], strides = [1, 1]} : vector<896x28xbf16> to vector<800x25xbf16>
    %24 = vector.extract_strided_slice %14 {offsets = [64, 1], sizes = [800, 25], strides = [1, 1]} : vector<896x28xbf16> to vector<800x25xbf16>
    %25 = vector.extract_strided_slice %14 {offsets = [64, 2], sizes = [800, 25], strides = [1, 1]} : vector<896x28xbf16> to vector<800x25xbf16>
    %26 = vector.extract_strided_slice %14 {offsets = [64, 3], sizes = [800, 25], strides = [1, 1]} : vector<896x28xbf16> to vector<800x25xbf16>
    %27 = vector.extract_strided_slice %14 {offsets = [96, 0], sizes = [800, 25], strides = [1, 1]} : vector<896x28xbf16> to vector<800x25xbf16>
    %28 = vector.extract_strided_slice %14 {offsets = [96, 1], sizes = [800, 25], strides = [1, 1]} : vector<896x28xbf16> to vector<800x25xbf16>
    %29 = vector.extract_strided_slice %14 {offsets = [96, 2], sizes = [800, 25], strides = [1, 1]} : vector<896x28xbf16> to vector<800x25xbf16>
    %30 = vector.extract_strided_slice %14 {offsets = [96, 3], sizes = [800, 25], strides = [1, 1]} : vector<896x28xbf16> to vector<800x25xbf16>
    %31 = tpu.concatenate %15, %16, %17, %18, %19, %20, %21, %22, %23, %24, %25, %26, %27, %28, %29, %30 in 1 : vector<800x25xbf16>, vector<800x25xbf16>, vector<800x25xbf16>, vector<800x25xbf16>, vector<800x25xbf16>, vector<800x25xbf16>, vector<800x25xbf16>, vector<800x25xbf16>, vector<800x25xbf16>, vector<800x25xbf16>, vector<800x25xbf16>, vector<800x25xbf16>, vector<800x25xbf16>, vector<800x25xbf16>, vector<800x25xbf16>, vector<800x25xbf16> -> vector<800x400xbf16>
    %cst = arith.constant dense<0.000000e+00> : vector<800x150xf32>
    %32 = tpu.matmul %31, %0, %cst {dimension_numbers = #tpu.dot_dimension_numbers<[1], [0], [0], [1], [0, 0, 1, 1], [], []>} : vector<800x400xbf16>, vector<400x150xbf16>, vector<800x150xf32> -> vector<800x150xf32>
    %33 = vector.broadcast %1 : vector<1x150xf32> to vector<800x150xf32>
    %34 = arith.addf %32, %33 : vector<800x150xf32>
    %cst_26 = arith.constant 0.000000e+00 : f32
    %35 = vector.broadcast %cst_26 : f32 to vector<800x150xf32>
    %36 = arith.maximumf %34, %35 : vector<800x150xf32>
    %37 = vector.extract_strided_slice %36 {offsets = [0, 0], sizes = [768, 150], strides = [1, 1]} : vector<800x150xf32> to vector<768x150xf32>
    %38 = vector.shape_cast %37 : vector<768x150xf32> to vector<12x64x150xf32>
    %39 = vector.extract_strided_slice %38 {offsets = [0, 0, 0], sizes = [12, 32, 150], strides = [1, 1, 1]} : vector<12x64x150xf32> to vector<12x32x150xf32>
    %40 = vector.extract_strided_slice %38 {offsets = [0, 32, 0], sizes = [12, 32, 150], strides = [1, 1, 1]} : vector<12x64x150xf32> to vector<12x32x150xf32>
    %41 = arith.addf %39, %40 : vector<12x32x150xf32>
    %42 = vector.shape_cast %41 : vector<12x32x150xf32> to vector<384x150xf32>
    %43 = arith.truncf %42 : vector<384x150xf32> to vector<384x150xbf16>
    %cst_27 = arith.constant dense<0.000000e+00> : vector<384x72xf32>
    %44 = tpu.matmul %43, %2, %cst_27 {dimension_numbers = #tpu.dot_dimension_numbers<[1], [0], [0], [1], [0, 0, 1, 1], [], []>} : vector<384x150xbf16>, vector<150x72xbf16>, vector<384x72xf32> -> vector<384x72xf32>
    %45 = arith.truncf %44 : vector<384x72xf32> to vector<384x72xbf16>
    %46 = vector.extract_strided_slice %45 {offsets = [0, 0], sizes = [288, 54], strides = [1, 1]} : vector<384x72xbf16> to vector<288x54xbf16>
    %47 = vector.extract_strided_slice %45 {offsets = [0, 6], sizes = [288, 54], strides = [1, 1]} : vector<384x72xbf16> to vector<288x54xbf16>
    %48 = vector.extract_strided_slice %45 {offsets = [0, 12], sizes = [288, 54], strides = [1, 1]} : vector<384x72xbf16> to vector<288x54xbf16>
    %49 = vector.extract_strided_slice %45 {offsets = [0, 18], sizes = [288, 54], strides = [1, 1]} : vector<384x72xbf16> to vector<288x54xbf16>
    %50 = vector.extract_strided_slice %45 {offsets = [32, 0], sizes = [288, 54], strides = [1, 1]} : vector<384x72xbf16> to vector<288x54xbf16>
    %51 = vector.extract_strided_slice %45 {offsets = [32, 6], sizes = [288, 54], strides = [1, 1]} : vector<384x72xbf16> to vector<288x54xbf16>
    %52 = vector.extract_strided_slice %45 {offsets = [32, 12], sizes = [288, 54], strides = [1, 1]} : vector<384x72xbf16> to vector<288x54xbf16>
    %53 = vector.extract_strided_slice %45 {offsets = [32, 18], sizes = [288, 54], strides = [1, 1]} : vector<384x72xbf16> to vector<288x54xbf16>
    %54 = vector.extract_strided_slice %45 {offsets = [64, 0], sizes = [288, 54], strides = [1, 1]} : vector<384x72xbf16> to vector<288x54xbf16>
    %55 = vector.extract_strided_slice %45 {offsets = [64, 6], sizes = [288, 54], strides = [1, 1]} : vector<384x72xbf16> to vector<288x54xbf16>
    %56 = vector.extract_strided_slice %45 {offsets = [64, 12], sizes = [288, 54], strides = [1, 1]} : vector<384x72xbf16> to vector<288x54xbf16>
    %57 = vector.extract_strided_slice %45 {offsets = [64, 18], sizes = [288, 54], strides = [1, 1]} : vector<384x72xbf16> to vector<288x54xbf16>
    %58 = vector.extract_strided_slice %45 {offsets = [96, 0], sizes = [288, 54], strides = [1, 1]} : vector<384x72xbf16> to vector<288x54xbf16>
    %59 = vector.extract_strided_slice %45 {offsets = [96, 6], sizes = [288, 54], strides = [1, 1]} : vector<384x72xbf16> to vector<288x54xbf16>
    %60 = vector.extract_strided_slice %45 {offsets = [96, 12], sizes = [288, 54], strides = [1, 1]} : vector<384x72xbf16> to vector<288x54xbf16>
    %61 = vector.extract_strided_slice %45 {offsets = [96, 18], sizes = [288, 54], strides = [1, 1]} : vector<384x72xbf16> to vector<288x54xbf16>
    %62 = tpu.concatenate %46, %47, %48, %49, %50, %51, %52, %53, %54, %55, %56, %57, %58, %59, %60, %61 in 1 : vector<288x54xbf16>, vector<288x54xbf16>, vector<288x54xbf16>, vector<288x54xbf16>, vector<288x54xbf16>, vector<288x54xbf16>, vector<288x54xbf16>, vector<288x54xbf16>, vector<288x54xbf16>, vector<288x54xbf16>, vector<288x54xbf16>, vector<288x54xbf16>, vector<288x54xbf16>, vector<288x54xbf16>, vector<288x54xbf16>, vector<288x54xbf16> -> vector<288x864xbf16>
    %cst_28 = arith.constant dense<0.000000e+00> : vector<288x144xf32>
    %63 = tpu.matmul %62, %3, %cst_28 {dimension_numbers = #tpu.dot_dimension_numbers<[1], [0], [0], [1], [0, 0, 1, 1], [], []>} : vector<288x864xbf16>, vector<864x144xbf16>, vector<288x144xf32> -> vector<288x144xf32>
    %64 = vector.broadcast %4 : vector<1x144xf32> to vector<288x144xf32>
    %65 = arith.addf %63, %64 : vector<288x144xf32>
    %cst_29 = arith.constant 0.000000e+00 : f32
    %66 = vector.broadcast %cst_29 : f32 to vector<288x144xf32>
    %67 = arith.maximumf %65, %66 : vector<288x144xf32>
    %68 = vector.extract_strided_slice %67 {offsets = [0, 0], sizes = [256, 144], strides = [1, 1]} : vector<288x144xf32> to vector<256x144xf32>
    %69 = vector.shape_cast %68 : vector<256x144xf32> to vector<4x64x144xf32>
    %70 = vector.extract_strided_slice %69 {offsets = [0, 0, 0], sizes = [4, 32, 144], strides = [1, 1, 1]} : vector<4x64x144xf32> to vector<4x32x144xf32>
    %71 = vector.extract_strided_slice %69 {offsets = [0, 32, 0], sizes = [4, 32, 144], strides = [1, 1, 1]} : vector<4x64x144xf32> to vector<4x32x144xf32>
    %72 = arith.addf %70, %71 : vector<4x32x144xf32>
    %73 = vector.shape_cast %72 : vector<4x32x144xf32> to vector<128x144xf32>
    %74 = arith.truncf %73 : vector<128x144xf32> to vector<128x144xbf16>
    %cst_30 = arith.constant dense<0.000000e+00> : vector<128x64xf32>
    %75 = tpu.matmul %74, %5, %cst_30 {dimension_numbers = #tpu.dot_dimension_numbers<[1], [0], [0], [1], [0, 0, 1, 1], [], []>} : vector<128x144xbf16>, vector<144x64xbf16>, vector<128x64xf32> -> vector<128x64xf32>
    %76 = vector.extract_strided_slice %75 {offsets = [0, 0], sizes = [32, 64], strides = [1, 1]} : vector<128x64xf32> to vector<32x64xf32>
    %77 = vector.extract_strided_slice %75 {offsets = [32, 0], sizes = [32, 64], strides = [1, 1]} : vector<128x64xf32> to vector<32x64xf32>
    %78 = vector.extract_strided_slice %75 {offsets = [64, 0], sizes = [32, 64], strides = [1, 1]} : vector<128x64xf32> to vector<32x64xf32>
    %79 = vector.extract_strided_slice %75 {offsets = [96, 0], sizes = [32, 64], strides = [1, 1]} : vector<128x64xf32> to vector<32x64xf32>
    %80 = tpu.concatenate %76, %77, %78, %79 in 1 : vector<32x64xf32>, vector<32x64xf32>, vector<32x64xf32>, vector<32x64xf32> -> vector<32x256xf32>
    %81 = arith.truncf %80 : vector<32x256xf32> to vector<32x256xbf16>
    %cst_31 = arith.constant dense<0.000000e+00> : vector<32x144xf32>
    %82 = tpu.matmul %81, %6, %cst_31 {dimension_numbers = #tpu.dot_dimension_numbers<[1], [0], [0], [1], [0, 0, 1, 1], [], []>} : vector<32x256xbf16>, vector<256x144xbf16>, vector<32x144xf32> -> vector<32x144xf32>
    %83 = vector.broadcast %7 : vector<1x144xf32> to vector<32x144xf32>
    %84 = arith.addf %82, %83 : vector<32x144xf32>
    %cst_32 = arith.constant 0.000000e+00 : f32
    %85 = vector.broadcast %cst_32 : f32 to vector<32x144xf32>
    %86 = arith.maximumf %84, %85 : vector<32x144xf32>
    %87 = arith.truncf %86 : vector<32x144xf32> to vector<32x144xbf16>
    %cst_33 = arith.constant dense<0.000000e+00> : vector<32x84xf32>
    %88 = tpu.matmul %87, %8, %cst_33 {dimension_numbers = #tpu.dot_dimension_numbers<[1], [0], [0], [1], [0, 0, 1, 1], [], []>} : vector<32x144xbf16>, vector<144x84xbf16>, vector<32x84xf32> -> vector<32x84xf32>
    %89 = vector.broadcast %9 : vector<1x84xf32> to vector<32x84xf32>
    %90 = arith.addf %88, %89 : vector<32x84xf32>
    %cst_34 = arith.constant 0.000000e+00 : f32
    %91 = vector.broadcast %cst_34 : f32 to vector<32x84xf32>
    %92 = arith.maximumf %90, %91 : vector<32x84xf32>
    %93 = arith.truncf %92 : vector<32x84xf32> to vector<32x84xbf16>
    %cst_35 = arith.constant dense<0.000000e+00> : vector<32x10xf32>
    %94 = tpu.matmul %93, %10, %cst_35 {dimension_numbers = #tpu.dot_dimension_numbers<[1], [0], [0], [1], [0, 0, 1, 1], [], []>} : vector<32x84xbf16>, vector<84x10xbf16>, vector<32x10xf32> -> vector<32x10xf32>
    %95 = vector.broadcast %11 : vector<1x10xf32> to vector<32x10xf32>
    %96 = arith.addf %94, %95 : vector<32x10xf32>
    %c0_36 = arith.constant 0 : index
    %c0_37 = arith.constant 0 : index
    %97 = vector.load %arg14[%c0_36, %c0_37] : memref<32x10xf32, #tpu.memory_space<vmem>>, vector<32x10xf32>
    tpu.vector_store %arg14[%c0_36, %c0_37], %96 {strides = array<i32>} : memref<32x10xf32, #tpu.memory_space<vmem>>, vector<32x10xf32>,
    return
  }
  func.func @transform_0(%arg0: i32) -> (i32, i32, i32) {
    %c0_i32 = arith.constant 0 : i32
    %c0_i32_0 = arith.constant 0 : i32
    %c0_i32_1 = arith.constant 0 : i32
    return %c0_i32, %arg0, %c0_i32_0 : i32, i32, i32
  }
  func.func @transform_1(%arg0: i32) -> (i32, i32) {
    %c0_i32 = arith.constant 0 : i32
    %c0_i32_0 = arith.constant 0 : i32
    %c0_i32_1 = arith.constant 0 : i32
    return %c0_i32, %c0_i32_0 : i32, i32
  }
  func.func @transform_2(%arg0: i32) -> (i32, i32) {
    %c0_i32 = arith.constant 0 : i32
    %c0_i32_0 = arith.constant 0 : i32
    %c0_i32_1 = arith.constant 0 : i32
    return %c0_i32, %c0_i32_0 : i32, i32
  }
  func.func @transform_3(%arg0: i32) -> (i32, i32) {
    %c0_i32 = arith.constant 0 : i32
    %c0_i32_0 = arith.constant 0 : i32
    %c0_i32_1 = arith.constant 0 : i32
    return %c0_i32, %c0_i32_0 : i32, i32
  }
  func.func @transform_4(%arg0: i32) -> (i32, i32) {
    %c0_i32 = arith.constant 0 : i32
    %c0_i32_0 = arith.constant 0 : i32
    %c0_i32_1 = arith.constant 0 : i32
    return %c0_i32, %c0_i32_0 : i32, i32
  }
  func.func @transform_5(%arg0: i32) -> (i32, i32) {
    %c0_i32 = arith.constant 0 : i32
    %c0_i32_0 = arith.constant 0 : i32
    %c0_i32_1 = arith.constant 0 : i32
    return %c0_i32, %c0_i32_0 : i32, i32
  }
  func.func @transform_6(%arg0: i32) -> (i32, i32) {
    %c0_i32 = arith.constant 0 : i32
    %c0_i32_0 = arith.constant 0 : i32
    %c0_i32_1 = arith.constant 0 : i32
    return %c0_i32, %c0_i32_0 : i32, i32
  }
  func.func @transform_7(%arg0: i32) -> (i32, i32) {
    %c0_i32 = arith.constant 0 : i32
    %c0_i32_0 = arith.constant 0 : i32
    %c0_i32_1 = arith.constant 0 : i32
    return %c0_i32, %c0_i32_0 : i32, i32
  }
  func.func @transform_8(%arg0: i32) -> (i32, i32) {
    %c0_i32 = arith.constant 0 : i32
    %c0_i32_0 = arith.constant 0 : i32
    %c0_i32_1 = arith.constant 0 : i32
    return %c0_i32, %c0_i32_0 : i32, i32
  }
  func.func @transform_9(%arg0: i32) -> (i32, i32) {
    %c0_i32 = arith.constant 0 : i32
    %c0_i32_0 = arith.constant 0 : i32
    %c0_i32_1 = arith.constant 0 : i32
    return %c0_i32, %c0_i32_0 : i32, i32
  }
  func.func @transform_10(%arg0: i32) -> (i32, i32) {
    %c0_i32 = arith.constant 0 : i32
    %c0_i32_0 = arith.constant 0 : i32
    %c0_i32_1 = arith.constant 0 : i32
    return %c0_i32, %c0_i32_0 : i32, i32
  }
  func.func @transform_11(%arg0: i32) -> (i32, i32) {
    %c0_i32 = arith.constant 0 : i32
    %c0_i32_0 = arith.constant 0 : i32
    %c0_i32_1 = arith.constant 0 : i32
    return %c0_i32, %c0_i32_0 : i32, i32
  }
  func.func @transform_12(%arg0: i32) -> (i32, i32) {
    %c0_i32 = arith.constant 0 : i32
    %c0_i32_0 = arith.constant 0 : i32
    %c0_i32_1 = arith.constant 0 : i32
    return %c0_i32, %c0_i32_0 : i32, i32
  }
  func.func @transform_13(%arg0: i32) -> (i32, i32) {
    %c0_i32 = arith.constant 0 : i32
    %c0_i32_0 = arith.constant 0 : i32
    return %arg0, %c0_i32 : i32, i32
  }
}

</mosaic_0001>

<llo_original>
// kernel: lenet_forward.1
$region0: #{lenet_forward.1}
  #allocation0 [shape = 'u32[]', space=smem, size = 0x4, offset = 0x4, fixed_abs, tag = 'smem constant byte address 0x4 - core index']
  #allocation1 [shape = 'u32[144,128]{1,0:T(1,128)}', space=vmem, size = 0x12000, scoped, tag = 'internal scratch']
  %s0 = inlined_call_operand.vmem [shape: f32[28,96,28], index: 0, kind: input, shape index: {}]
  %s1 = inlined_call_operand.vmem [shape: bf16[400,150], index: 1, kind: input, shape index: {}]
  %s2 = inlined_call_operand.vmem [shape: f32[1,150], index: 2, kind: input, shape index: {}]
  %s3 = inlined_call_operand.vmem [shape: bf16[150,72], index: 3, kind: input, shape index: {}]
  %s4 = inlined_call_operand.vmem [shape: bf16[864,144], index: 4, kind: input, shape index: {}]
  %s5 = inlined_call_operand.vmem [shape: f32[1,144], index: 5, kind: input, shape index: {}]
  %s6 = inlined_call_operand.vmem [shape: bf16[144,64], index: 6, kind: input, shape index: {}]
  %s7 = inlined_call_operand.vmem [shape: bf16[256,144], index: 7, kind: input, shape index: {}]
  %s8 = inlined_call_operand.vmem [shape: f32[1,144], index: 8, kind: input, shape index: {}]
  %s9 = inlined_call_operand.vmem [shape: bf16[144,84], index: 9, kind: input, shape index: {}]
  %s10 = inlined_call_operand.vmem [shape: f32[1,84], index: 10, kind: input, shape index: {}]
  %s11 = inlined_call_operand.vmem [shape: bf16[84,10], index: 11, kind: input, shape index: {}]
  %s12 = inlined_call_operand.vmem [shape: f32[1,10], index: 12, kind: input, shape index: {}]
  %s13 = inlined_call_operand.vmem [shape: f32[96,10], index: 13, kind: output, shape index: {}]
  %s14 = sld [smem:[#allocation0]]
  $region123: #{lenet_forward.1} parent=0
    _
  %s16 = ssub.s32 1, %s14
  %s17 = scalar_select 0, %s16, %s14
  $region1: #{lenet_forward.1} parent=0
    #allocation2 [shape = 'u8[917504]{0}', space=vmem, size = 0xe0000, scoped, tag = 'input window, operand 0']
    loop: start=0, step=1, limit=5
    $region2: #{lenet_forward.1} parent=1 // loop_pre_header
      _
    $region3: #{lenet_forward.1} parent=1 // loop_header
      %s19 = sphi 0, %s23
      %p20 = scmp.ge.s32.totalorder %s19, 5
      %s29 = sphi 0, %s31
      %s32 = sphi 0, %s29
      %s33 = sphi 0, %s32
      %s49 = sphi 0, %s33
      %s53 = sphi 0, %s53
      %s55 = sphi 0, %s53
      %s56 = sphi 0, %s55
      %s70 = sphi 0, %s56
      %s74 = sphi 0, %s74
      %s76 = sphi 0, %s74
      %s77 = sphi 0, %s76
      %s91 = sphi 0, %s77
      %s95 = sphi 0, %s95
      %s97 = sphi 0, %s95
      %s98 = sphi 0, %s97
      %s112 = sphi 0, %s98
      %s116 = sphi 0, %s116
      %s118 = sphi 0, %s116
      %s119 = sphi 0, %s118
      %s133 = sphi 0, %s119
      %s137 = sphi 0, %s137
      %s139 = sphi 0, %s137
      %s140 = sphi 0, %s139
      %s154 = sphi 0, %s140
      %s158 = sphi 0, %s158
      %s160 = sphi 0, %s158
      %s161 = sphi 0, %s160
      %s175 = sphi 0, %s161
      %s179 = sphi 0, %s179
      %s181 = sphi 0, %s179
      %s182 = sphi 0, %s181
      %s196 = sphi 0, %s182
      %s200 = sphi 0, %s200
      %s202 = sphi 0, %s200
      %s203 = sphi 0, %s202
      %s217 = sphi 0, %s203
      %s221 = sphi 0, %s221
      %s223 = sphi 0, %s221
      %s224 = sphi 0, %s223
      %s238 = sphi 0, %s224
      %s242 = sphi 0, %s242
      %s244 = sphi 0, %s242
      %s245 = sphi 0, %s244
      %s259 = sphi 0, %s245
      %s263 = sphi 0, %s263
      %s265 = sphi 0, %s263
      %s266 = sphi 0, %s265
      %s280 = sphi 0, %s266
      %s284 = sphi 0, %s284
      %s286 = sphi 0, %s284
      %s287 = sphi 0, %s286
      %s301 = sphi 0, %s287
      %s307 = sphi 0, %s309
      %s310 = sphi 0, %s307
      %s311 = sphi 0, %s310
      %s327 = sphi 0, %s311
    $region4: #{lenet_forward.1} parent=1 // loop_header_branch
      %22 = sbr.rel (%p20) target = $region8
    $region5: #{lenet_forward.1} parent=1 // loop_body
      %s24 = ssub.s32 %s19, 1
      %s25 = ssub.s32 %s19, 2
      %s26 = sadd.s32 %s19, 1
      %s27 = ssub.s32 %s19, %s26
      %p28 = scmp.eq.s32.totalorder %s27, 0
      %s30 = sadd.s32 %s29, 1
      %s31 = scalar_select %p28, %s29, %s30
      %p34 = pneg %p28
      %p35 = scmp.eq.s32.totalorder %s19, 2
      %p36 = por %p34, %p35
      %p37 = scmp.ne.s32.totalorder %s29, %s32
      %p38 = scmp.eq.s32.totalorder %s19, 0
      %p39 = por %p37, %p38
      %p40 = scmp.ne.s32.totalorder %s29, %s32
      %p41 = scmp.eq.s32.totalorder %s24, 2
      %p42 = por %p40, %p41
      %p43 = scmp.ne.s32.totalorder %s32, %s33
      %p44 = scmp.eq.s32.totalorder %s24, 0
      %p45 = por %p43, %p44
      %p46 = scmp.ne.s32.totalorder %s32, %s33
      %p47 = scmp.eq.s32.totalorder %s25, 2
      %p48 = por %p46, %p47
      %p50 = scmp.ne.s32.totalorder %s33, %s49
      %p51 = scmp.eq.s32.totalorder %s25, 0
      %p52 = por %p50, %p51
      %s54 = sadd.s32 %s53, 1
      %p57 = scmp.eq.s32.totalorder %s19, 2
      %p58 = scmp.ne.s32.totalorder %s53, %s55
      %p59 = scmp.eq.s32.totalorder %s19, 0
      %p60 = por %p58, %p59
      %p61 = scmp.ne.s32.totalorder %s53, %s55
      %p62 = scmp.eq.s32.totalorder %s24, 2
      %p63 = por %p61, %p62
      %p64 = scmp.ne.s32.totalorder %s55, %s56
      %p65 = scmp.eq.s32.totalorder %s24, 0
      %p66 = por %p64, %p65
      %p67 = scmp.ne.s32.totalorder %s55, %s56
      %p68 = scmp.eq.s32.totalorder %s25, 2
      %p69 = por %p67, %p68
      %p71 = scmp.ne.s32.totalorder %s56, %s70
      %p72 = scmp.eq.s32.totalorder %s25, 0
      %p73 = por %p71, %p72
      %s75 = sadd.s32 %s74, 1
      %p78 = scmp.eq.s32.totalorder %s19, 2
      %p79 = scmp.ne.s32.totalorder %s74, %s76
      %p80 = scmp.eq.s32.totalorder %s19, 0
      %p81 = por %p79, %p80
      %p82 = scmp.ne.s32.totalorder %s74, %s76
      %p83 = scmp.eq.s32.totalorder %s24, 2
      %p84 = por %p82, %p83
      %p85 = scmp.ne.s32.totalorder %s76, %s77
      %p86 = scmp.eq.s32.totalorder %s24, 0
      %p87 = por %p85, %p86
      %p88 = scmp.ne.s32.totalorder %s76, %s77
      %p89 = scmp.eq.s32.totalorder %s25, 2
      %p90 = por %p88, %p89
      %p92 = scmp.ne.s32.totalorder %s77, %s91
      %p93 = scmp.eq.s32.totalorder %s25, 0
      %p94 = por %p92, %p93
      %s96 = sadd.s32 %s95, 1
      %p99 = scmp.eq.s32.totalorder %s19, 2
      %p100 = scmp.ne.s32.totalorder %s95, %s97
      %p101 = scmp.eq.s32.totalorder %s19, 0
      %p102 = por %p100, %p101
      %p103 = scmp.ne.s32.totalorder %s95, %s97
      %p104 = scmp.eq.s32.totalorder %s24, 2
      %p105 = por %p103, %p104
      %p106 = scmp.ne.s32.totalorder %s97, %s98
      %p107 = scmp.eq.s32.totalorder %s24, 0
      %p108 = por %p106, %p107
      %p109 = scmp.ne.s32.totalorder %s97, %s98
      %p110 = scmp.eq.s32.totalorder %s25, 2
      %p111 = por %p109, %p110
      %p113 = scmp.ne.s32.totalorder %s98, %s112
      %p114 = scmp.eq.s32.totalorder %s25, 0
      %p115 = por %p113, %p114
      %s117 = sadd.s32 %s116, 1
      %p120 = scmp.eq.s32.totalorder %s19, 2
      %p121 = scmp.ne.s32.totalorder %s116, %s118
      %p122 = scmp.eq.s32.totalorder %s19, 0
      %p123 = por %p121, %p122
      %p124 = scmp.ne.s32.totalorder %s116, %s118
      %p125 = scmp.eq.s32.totalorder %s24, 2
      %p126 = por %p124, %p125
      %p127 = scmp.ne.s32.totalorder %s118, %s119
      %p128 = scmp.eq.s32.totalorder %s24, 0
      %p129 = por %p127, %p128
      %p130 = scmp.ne.s32.totalorder %s118, %s119
      %p131 = scmp.eq.s32.totalorder %s25, 2
      %p132 = por %p130, %p131
      %p134 = scmp.ne.s32.totalorder %s119, %s133
      %p135 = scmp.eq.s32.totalorder %s25, 0
      %p136 = por %p134, %p135
      %s138 = sadd.s32 %s137, 1
      %p141 = scmp.eq.s32.totalorder %s19, 2
      %p142 = scmp.ne.s32.totalorder %s137, %s139
      %p143 = scmp.eq.s32.totalorder %s19, 0
      %p144 = por %p142, %p143
      %p145 = scmp.ne.s32.totalorder %s137, %s139
      %p146 = scmp.eq.s32.totalorder %s24, 2
      %p147 = por %p145, %p146
      %p148 = scmp.ne.s32.totalorder %s139, %s140
      %p149 = scmp.eq.s32.totalorder %s24, 0
      %p150 = por %p148, %p149
      %p151 = scmp.ne.s32.totalorder %s139, %s140
      %p152 = scmp.eq.s32.totalorder %s25, 2
      %p153 = por %p151, %p152
      %p155 = scmp.ne.s32.totalorder %s140, %s154
      %p156 = scmp.eq.s32.totalorder %s25, 0
      %p157 = por %p155, %p156
      %s159 = sadd.s32 %s158, 1
      %p162 = scmp.eq.s32.totalorder %s19, 2
      %p163 = scmp.ne.s32.totalorder %s158, %s160
      %p164 = scmp.eq.s32.totalorder %s19, 0
      %p165 = por %p163, %p164
      %p166 = scmp.ne.s32.totalorder %s158, %s160
      %p167 = scmp.eq.s32.totalorder %s24, 2
      %p168 = por %p166, %p167
      %p169 = scmp.ne.s32.totalorder %s160, %s161
      %p170 = scmp.eq.s32.totalorder %s24, 0
      %p171 = por %p169, %p170
      %p172 = scmp.ne.s32.totalorder %s160, %s161
      %p173 = scmp.eq.s32.totalorder %s25, 2
      %p174 = por %p172, %p173
      %p176 = scmp.ne.s32.totalorder %s161, %s175
      %p177 = scmp.eq.s32.totalorder %s25, 0
      %p178 = por %p176, %p177
      %s180 = sadd.s32 %s179, 1
      %p183 = scmp.eq.s32.totalorder %s19, 2
      %p184 = scmp.ne.s32.totalorder %s179, %s181
      %p185 = scmp.eq.s32.totalorder %s19, 0
      %p186 = por %p184, %p185
      %p187 = scmp.ne.s32.totalorder %s179, %s181
      %p188 = scmp.eq.s32.totalorder %s24, 2
      %p189 = por %p187, %p188
      %p190 = scmp.ne.s32.totalorder %s181, %s182
      %p191 = scmp.eq.s32.totalorder %s24, 0
      %p192 = por %p190, %p191
      %p193 = scmp.ne.s32.totalorder %s181, %s182
      %p194 = scmp.eq.s32.totalorder %s25, 2
      %p195 = por %p193, %p194
      %p197 = scmp.ne.s32.totalorder %s182, %s196
      %p198 = scmp.eq.s32.totalorder %s25, 0
      %p199 = por %p197, %p198
      %s201 = sadd.s32 %s200, 1
      %p204 = scmp.eq.s32.totalorder %s19, 2
      %p205 = scmp.ne.s32.totalorder %s200, %s202
      %p206 = scmp.eq.s32.totalorder %s19, 0
      %p207 = por %p205, %p206
      %p208 = scmp.ne.s32.totalorder %s200, %s202
      %p209 = scmp.eq.s32.totalorder %s24, 2
      %p210 = por %p208, %p209
      %p211 = scmp.ne.s32.totalorder %s202, %s203
      %p212 = scmp.eq.s32.totalorder %s24, 0
      %p213 = por %p211, %p212
      %p214 = scmp.ne.s32.totalorder %s202, %s203
      %p215 = scmp.eq.s32.totalorder %s25, 2
      %p216 = por %p214, %p215
      %p218 = scmp.ne.s32.totalorder %s203, %s217
      %p219 = scmp.eq.s32.totalorder %s25, 0
      %p220 = por %p218, %p219
      %s222 = sadd.s32 %s221, 1
      %p225 = scmp.eq.s32.totalorder %s19, 2
      %p226 = scmp.ne.s32.totalorder %s221, %s223
      %p227 = scmp.eq.s32.totalorder %s19, 0
      %p228 = por %p226, %p227
      %p229 = scmp.ne.s32.totalorder %s221, %s223
      %p230 = scmp.eq.s32.totalorder %s24, 2
      %p231 = por %p229, %p230
      %p232 = scmp.ne.s32.totalorder %s223, %s224
      %p233 = scmp.eq.s32.totalorder %s24, 0
      %p234 = por %p232, %p233
      %p235 = scmp.ne.s32.totalorder %s223, %s224
      %p236 = scmp.eq.s32.totalorder %s25, 2
      %p237 = por %p235, %p236
      %p239 = scmp.ne.s32.totalorder %s224, %s238
      %p240 = scmp.eq.s32.totalorder %s25, 0
      %p241 = por %p239, %p240
      %s243 = sadd.s32 %s242, 1
      %p246 = scmp.eq.s32.totalorder %s19, 2
      %p247 = scmp.ne.s32.totalorder %s242, %s244
      %p248 = scmp.eq.s32.totalorder %s19, 0
      %p249 = por %p247, %p248
      %p250 = scmp.ne.s32.totalorder %s242, %s244
      %p251 = scmp.eq.s32.totalorder %s24, 2
      %p252 = por %p250, %p251
      %p253 = scmp.ne.s32.totalorder %s244, %s245
      %p254 = scmp.eq.s32.totalorder %s24, 0
      %p255 = por %p253, %p254
      %p256 = scmp.ne.s32.totalorder %s244, %s245
      %p257 = scmp.eq.s32.totalorder %s25, 2
      %p258 = por %p256, %p257
      %p260 = scmp.ne.s32.totalorder %s245, %s259
      %p261 = scmp.eq.s32.totalorder %s25, 0
      %p262 = por %p260, %p261
      %s264 = sadd.s32 %s263, 1
      %p267 = scmp.eq.s32.totalorder %s19, 2
      %p268 = scmp.ne.s32.totalorder %s263, %s265
      %p269 = scmp.eq.s32.totalorder %s19, 0
      %p270 = por %p268, %p269
      %p271 = scmp.ne.s32.totalorder %s263, %s265
      %p272 = scmp.eq.s32.totalorder %s24, 2
      %p273 = por %p271, %p272
      %p274 = scmp.ne.s32.totalorder %s265, %s266
      %p275 = scmp.eq.s32.totalorder %s24, 0
      %p276 = por %p274, %p275
      %p277 = scmp.ne.s32.totalorder %s265, %s266
      %p278 = scmp.eq.s32.totalorder %s25, 2
      %p279 = por %p277, %p278
      %p281 = scmp.ne.s32.totalorder %s266, %s280
      %p282 = scmp.eq.s32.totalorder %s25, 0
      %p283 = por %p281, %p282
      %s285 = sadd.s32 %s284, 1
      %p288 = scmp.eq.s32.totalorder %s19, 2
      %p289 = scmp.ne.s32.totalorder %s284, %s286
      %p290 = scmp.eq.s32.totalorder %s19, 0
      %p291 = por %p289, %p290
      %p292 = scmp.ne.s32.totalorder %s284, %s286
      %p293 = scmp.eq.s32.totalorder %s24, 2
      %p294 = por %p292, %p293
      %p295 = scmp.ne.s32.totalorder %s286, %s287
      %p296 = scmp.eq.s32.totalorder %s24, 0
      %p297 = por %p295, %p296
      %p298 = scmp.ne.s32.totalorder %s286, %s287
      %p299 = scmp.eq.s32.totalorder %s25, 2
      %p300 = por %p298, %p299
      %p302 = scmp.ne.s32.totalorder %s287, %s301
      %p303 = scmp.eq.s32.totalorder %s25, 0
      %p304 = por %p302, %p303
      %s305 = ssub.s32 %s19, %s26
      %p306 = scmp.eq.s32.totalorder %s305, 0
      %s308 = sadd.s32 %s307, 1
      %s309 = scalar_select %p306, %s307, %s308
      %p312 = pneg %p306
      %p313 = scmp.eq.s32.totalorder %s19, 2
      %p314 = por %p312, %p313
      %p315 = scmp.ne.s32.totalorder %s307, %s310
      %p316 = scmp.eq.s32.totalorder %s19, 0
      %p317 = por %p315, %p316
      %p318 = scmp.ne.s32.totalorder %s307, %s310
      %p319 = scmp.eq.s32.totalorder %s24, 2
      %p320 = por %p318, %p319
      %p321 = scmp.ne.s32.totalorder %s310, %s311
      %p322 = scmp.eq.s32.totalorder %s24, 0
      %p323 = por %p321, %p322
      %p324 = scmp.ne.s32.totalorder %s310, %s311
      %p325 = scmp.eq.s32.totalorder %s25, 2
      %p326 = por %p324, %p325
      %p328 = scmp.ne.s32.totalorder %s311, %s327
      %p329 = scmp.eq.s32.totalorder %s25, 0
      %p330 = por %p328, %p329
      %p331 = scmp.le.s32.totalorder 1, %s19
      %p332 = scmp.lt.s32.totalorder %s19, 4
      %p333 = pnand %p331, %p332
      %p334 = pneg %p333
      // Predicated region
      $region9: #{lenet_forward.1} parent=5 // pred_check
        _
      $region10: #{lenet_forward.1} parent=5 // pred_check_branch
        %336 = sbr.rel (%p333) target = $region12
      $region11: #{lenet_forward.1} parent=5 // pred_region
        %s337 = ssub.s32 %s19, 1
        // Predicated region
        $region13: #{lenet_forward.1} parent=11 // pred_check
          %p338 = pneg %p66
        $region14: #{lenet_forward.1} parent=11 // pred_check_branch
          %340 = sbr.rel (%p338) target = $region16
        $region15: #{lenet_forward.1} parent=11 // pred_region
          _
        $region16: #{lenet_forward.1} parent=11 // pred_fallthru
          _
        // Predicated region
        $region17: #{lenet_forward.1} parent=11 // pred_check
          %p341 = pneg %p87
        $region18: #{lenet_forward.1} parent=11 // pred_check_branch
          %343 = sbr.rel (%p341) target = $region20
        $region19: #{lenet_forward.1} parent=11 // pred_region
          _
        $region20: #{lenet_forward.1} parent=11 // pred_fallthru
          _
        // Predicated region
        $region21: #{lenet_forward.1} parent=11 // pred_check
          %p344 = pneg %p108
        $region22: #{lenet_forward.1} parent=11 // pred_check_branch
          %346 = sbr.rel (%p344) target = $region24
        $region23: #{lenet_forward.1} parent=11 // pred_region
          _
        $region24: #{lenet_forward.1} parent=11 // pred_fallthru
          _
        // Predicated region
        $region25: #{lenet_forward.1} parent=11 // pred_check
          %p347 = pneg %p129
        $region26: #{lenet_forward.1} parent=11 // pred_check_branch
          %349 = sbr.rel (%p347) target = $region28
        $region27: #{lenet_forward.1} parent=11 // pred_region
          _
        $region28: #{lenet_forward.1} parent=11 // pred_fallthru
          _
        // Predicated region
        $region29: #{lenet_forward.1} parent=11 // pred_check
          %p350 = pneg %p150
        $region30: #{lenet_forward.1} parent=11 // pred_check_branch
          %352 = sbr.rel (%p350) target = $region32
        $region31: #{lenet_forward.1} parent=11 // pred_region
          _
        $region32: #{lenet_forward.1} parent=11 // pred_fallthru
          _
        // Predicated region
        $region33: #{lenet_forward.1} parent=11 // pred_check
          %p353 = pneg %p171
        $region34: #{lenet_forward.1} parent=11 // pred_check_branch
          %355 = sbr.rel (%p353) target = $region36
        $region35: #{lenet_forward.1} parent=11 // pred_region
          _
        $region36: #{lenet_forward.1} parent=11 // pred_fallthru
          _
        // Predicated region
        $region37: #{lenet_forward.1} parent=11 // pred_check
          %p356 = pneg %p192
        $region38: #{lenet_forward.1} parent=11 // pred_check_branch
          %358 = sbr.rel (%p356) target = $region40
        $region39: #{lenet_forward.1} parent=11 // pred_region
          _
        $region40: #{lenet_forward.1} parent=11 // pred_fallthru
          _
        // Predicated region
        $region41: #{lenet_forward.1} parent=11 // pred_check
          %p359 = pneg %p213
        $region42: #{lenet_forward.1} parent=11 // pred_check_branch
          %361 = sbr.rel (%p359) target = $region44
        $region43: #{lenet_forward.1} parent=11 // pred_region
          _
        $region44: #{lenet_forward.1} parent=11 // pred_fallthru
          _
        // Predicated region
        $region45: #{lenet_forward.1} parent=11 // pred_check
          %p362 = pneg %p234
        $region46: #{lenet_forward.1} parent=11 // pred_check_branch
          %364 = sbr.rel (%p362) target = $region48
        $region47: #{lenet_forward.1} parent=11 // pred_region
          _
        $region48: #{lenet_forward.1} parent=11 // pred_fallthru
          _
        // Predicated region
        $region49: #{lenet_forward.1} parent=11 // pred_check
          %p365 = pneg %p255
        $region50: #{lenet_forward.1} parent=11 // pred_check_branch
          %367 = sbr.rel (%p365) target = $region52
        $region51: #{lenet_forward.1} parent=11 // pred_region
          _
        $region52: #{lenet_forward.1} parent=11 // pred_fallthru
          _
        // Predicated region
        $region53: #{lenet_forward.1} parent=11 // pred_check
          %p368 = pneg %p276
        $region54: #{lenet_forward.1} parent=11 // pred_check_branch
          %370 = sbr.rel (%p368) target = $region56
        $region55: #{lenet_forward.1} parent=11 // pred_region
          _
        $region56: #{lenet_forward.1} parent=11 // pred_fallthru
          _
        // Predicated region
        $region57: #{lenet_forward.1} parent=11 // pred_check
          %p371 = pneg %p297
        $region58: #{lenet_forward.1} parent=11 // pred_check_branch
          %373 = sbr.rel (%p371) target = $region60
        $region59: #{lenet_forward.1} parent=11 // pred_region
          _
        $region60: #{lenet_forward.1} parent=11 // pred_fallthru
          _
      $region12: #{lenet_forward.1} parent=5 // pred_fallthru
        _
      %p374 = scmp.lt.s32.totalorder %s19, 3
      // Predicated region
      $region61: #{lenet_forward.1} parent=5 // pred_check
        %p375 = pneg %p374
      $region62: #{lenet_forward.1} parent=5 // pred_check_branch
        %377 = sbr.rel (%p375) target = $region64
      $region63: #{lenet_forward.1} parent=5 // pred_region
        // Predicated region
        $region65: #{lenet_forward.1} parent=63 // pred_check
          %p378 = pneg %p39
        $region66: #{lenet_forward.1} parent=63 // pred_check_branch
          %380 = sbr.rel (%p378) target = $region68
        $region67: #{lenet_forward.1} parent=63 // pred_region
          %s381 = sand.u32 %s29, 1
          %s382 = sand.u32 %s29, 1
          %s383 = smul.addr %s382, 896
          %s384 = scalar_lea.vmem [#allocation2], %s383
          %s385 = smul.u32 4, %s19
          %s386 = smul.addr %s385, 8
          %s387 = scalar_lea.vmem %s0, %s386
          // Predicated region
          $region69: #{lenet_forward.1} parent=67 // pred_check
            _
          $region70: #{lenet_forward.1} parent=67 // pred_check_branch
            %389 = sbr.rel (0) target = $region72
          $region71: #{lenet_forward.1} parent=67 // pred_region
            // Predicated region
            $region73: #{lenet_forward.1} parent=71 // pred_check
              _
            $region74: #{lenet_forward.1} parent=71 // pred_check_branch
              %391 = sbr.rel (0) target = $region76
            $region75: #{lenet_forward.1} parent=71 // pred_region
              // Predicated region
              $region88: #{lenet_forward.1} parent=75 // pred_check
                _
              $region89: #{lenet_forward.1} parent=75 // pred_check_branch
                %628 = sbr.rel (0) target = $region91
              $region90: #{lenet_forward.1} parent=75 // pred_region
                loop: start=0, step=1, limit=1
                $region92: #{lenet_forward.1} parent=90 // loop_pre_header
                  _
                $region93: #{lenet_forward.1} parent=90 // loop_header
                  %s630 = sphi 0, %s634
                  %p631 = scmp.ge.s32.totalorder %s630, 1
                  %s635 = sphi %s387, %s387
                  %s636 = sphi %s384, %s384
                $region94: #{lenet_forward.1} parent=90 // loop_header_branch
                  %633 = sbr.rel (%p631) target = $region98
                $region95: #{lenet_forward.1} parent=90 // loop_body
                  %v637 = vld [vmem:[%s635] sm:$0xff]
                  %638 = vst [vmem:[%s636] sm:$0xff] %v637
                  %v639 = vld [vmem:[%s635 + $0x8] sm:$0xff]
                  %640 = vst [vmem:[%s636 + $0x8] sm:$0xff] %v639
                  %v641 = vld [vmem:[%s635 + $0x10] sm:$0xff]
                  %642 = vst [vmem:[%s636 + $0x10] sm:$0xff] %v641
                  %v643 = vld [vmem:[%s635 + $0x18] sm:$0xff]
                  %644 = vst [vmem:[%s636 + $0x18] sm:$0xff] %v643
                  %v645 = vld [vmem:[%s635 + $0x60] sm:$0xff]
                  %646 = vst [vmem:[%s636 + $0x20] sm:$0xff] %v645
                  %v647 = vld [vmem:[%s635 + $0x68] sm:$0xff]
                  %648 = vst [vmem:[%s636 + $0x28] sm:$0xff] %v647
                  %v649 = vld [vmem:[%s635 + $0x70] sm:$0xff]
                  %650 = vst [vmem:[%s636 + $0x30] sm:$0xff] %v649
                  %v651 = vld [vmem:[%s635 + $0x78] sm:$0xff]
                  %652 = vst [vmem:[%s636 + $0x38] sm:$0xff] %v651
                  %v653 = vld [vmem:[%s635 + $0xc0] sm:$0xff]
                  %654 = vst [vmem:[%s636 + $0x40] sm:$0xff] %v653
                  %v655 = vld [vmem:[%s635 + $0xc8] sm:$0xff]
                  %656 = vst [vmem:[%s636 + $0x48] sm:$0xff] %v655
                  %v657 = vld [vmem:[%s635 + $0xd0] sm:$0xff]
                  %658 = vst [vmem:[%s636 + $0x50] sm:$0xff] %v657
                  %v659 = vld [vmem:[%s635 + $0xd8] sm:$0xff]
                  %660 = vst [vmem:[%s636 + $0x58] sm:$0xff] %v659
                  %v661 = vld [vmem:[%s635 + $0x120] sm:$0xff]
                  %662 = vst [vmem:[%s636 + $0x60] sm:$0xff] %v661
                  %v663 = vld [vmem:[%s635 + $0x128] sm:$0xff]
                  %664 = vst [vmem:[%s636 + $0x68] sm:$0xff] %v663
                  %v665 = vld [vmem:[%s635 + $0x130] sm:$0xff]
                  %666 = vst [vmem:[%s636 + $0x70] sm:$0xff] %v665
                  %v667 = vld [vmem:[%s635 + $0x138] sm:$0xff]
                  %668 = vst [vmem:[%s636 + $0x78] sm:$0xff] %v667
                  %v669 = vld [vmem:[%s635 + $0x180] sm:$0xff]
                  %670 = vst [vmem:[%s636 + $0x80] sm:$0xff] %v669
                  %v671 = vld [vmem:[%s635 + $0x188] sm:$0xff]
                  %672 = vst [vmem:[%s636 + $0x88] sm:$0xff] %v671
                  %v673 = vld [vmem:[%s635 + $0x190] sm:$0xff]
                  %674 = vst [vmem:[%s636 + $0x90] sm:$0xff] %v673
                  %v675 = vld [vmem:[%s635 + $0x198] sm:$0xff]
                  %676 = vst [vmem:[%s636 + $0x98] sm:$0xff] %v675
                  %v677 = vld [vmem:[%s635 + $0x1e0] sm:$0xff]
                  %678 = vst [vmem:[%s636 + $0xa0] sm:$0xff] %v677
                  %v679 = vld [vmem:[%s635 + $0x1e8] sm:$0xff]
                  %680 = vst [vmem:[%s636 + $0xa8] sm:$0xff] %v679
                  %v681 = vld [vmem:[%s635 + $0x1f0] sm:$0xff]
                  %682 = vst [vmem:[%s636 + $0xb0] sm:$0xff] %v681
                  %v683 = vld [vmem:[%s635 + $0x1f8] sm:$0xff]
                  %684 = vst [vmem:[%s636 + $0xb8] sm:$0xff] %v683
                  %v685 = vld [vmem:[%s635 + $0x240] sm:$0xff]
                  %686 = vst [vmem:[%s636 + $0xc0] sm:$0xff] %v685
                  %v687 = vld [vmem:[%s635 + $0x248] sm:$0xff]
                  %688 = vst [vmem:[%s636 + $0xc8] sm:$0xff] %v687
                  %v689 = vld [vmem:[%s635 + $0x250] sm:$0xff]
                  %690 = vst [vmem:[%s636 + $0xd0] sm:$0xff] %v689
                  %v691 = vld [vmem:[%s635 + $0x258] sm:$0xff]
                  %692 = vst [vmem:[%s636 + $0xd8] sm:$0xff] %v691
                  %v693 = vld [vmem:[%s635 + $0x2a0] sm:$0xff]
                  %694 = vst [vmem:[%s636 + $0xe0] sm:$0xff] %v693
                  %v695 = vld [vmem:[%s635 + $0x2a8] sm:$0xff]
                  %696 = vst [vmem:[%s636 + $0xe8] sm:$0xff] %v695
                  %v697 = vld [vmem:[%s635 + $0x2b0] sm:$0xff]
                  %698 = vst [vmem:[%s636 + $0xf0] sm:$0xff] %v697
                  %v699 = vld [vmem:[%s635 + $0x2b8] sm:$0xff]
                  %700 = vst [vmem:[%s636 + $0xf8] sm:$0xff] %v699
                  %v701 = vld [vmem:[%s635 + $0x300] sm:$0xff]
                  %702 = vst [vmem:[%s636 + $0x100] sm:$0xff] %v701
                  %v703 = vld [vmem:[%s635 + $0x308] sm:$0xff]
                  %704 = vst [vmem:[%s636 + $0x108] sm:$0xff] %v703
                  %v705 = vld [vmem:[%s635 + $0x310] sm:$0xff]
                  %706 = vst [vmem:[%s636 + $0x110] sm:$0xff] %v705
                  %v707 = vld [vmem:[%s635 + $0x318] sm:$0xff]
                  %708 = vst [vmem:[%s636 + $0x118] sm:$0xff] %v707
                  %v709 = vld [vmem:[%s635 + $0x360] sm:$0xff]
                  %710 = vst [vmem:[%s636 + $0x120] sm:$0xff] %v709
                  %v711 = vld [vmem:[%s635 + $0x368] sm:$0xff]
                  %712 = vst [vmem:[%s636 + $0x128] sm:$0xff] %v711
                  %v713 = vld [vmem:[%s635 + $0x370] sm:$0xff]
                  %714 = vst [vmem:[%s636 + $0x130] sm:$0xff] %v713
                  %v715 = vld [vmem:[%s635 + $0x378] sm:$0xff]
                  %716 = vst [vmem:[%s636 + $0x138] sm:$0xff] %v715
                  %v717 = vld [vmem:[%s635 + $0x3c0] sm:$0xff]
                  %718 = vst [vmem:[%s636 + $0x140] sm:$0xff] %v717
                  %v719 = vld [vmem:[%s635 + $0x3c8] sm:$0xff]
                  %720 = vst [vmem:[%s636 + $0x148] sm:$0xff] %v719
                  %v721 = vld [vmem:[%s635 + $0x3d0] sm:$0xff]
                  %722 = vst [vmem:[%s636 + $0x150] sm:$0xff] %v721
                  %v723 = vld [vmem:[%s635 + $0x3d8] sm:$0xff]
                  %724 = vst [vmem:[%s636 + $0x158] sm:$0xff] %v723
                  %v725 = vld [vmem:[%s635 + $0x420] sm:$0xff]
                  %726 = vst [vmem:[%s636 + $0x160] sm:$0xff] %v725
                  %v727 = vld [vmem:[%s635 + $0x428] sm:$0xff]
                  %728 = vst [vmem:[%s636 + $0x168] sm:$0xff] %v727
                  %v729 = vld [vmem:[%s635 + $0x430] sm:$0xff]
                  %730 = vst [vmem:[%s636 + $0x170] sm:$0xff] %v729
                  %v731 = vld [vmem:[%s635 + $0x438] sm:$0xff]
                  %732 = vst [vmem:[%s636 + $0x178] sm:$0xff] %v731
                  %v733 = vld [vmem:[%s635 + $0x480] sm:$0xff]
                  %734 = vst [vmem:[%s636 + $0x180] sm:$0xff] %v733
                  %v735 = vld [vmem:[%s635 + $0x488] sm:$0xff]
                  %736 = vst [vmem:[%s636 + $0x188] sm:$0xff] %v735
                  %v737 = vld [vmem:[%s635 + $0x490] sm:$0xff]
                  %738 = vst [vmem:[%s636 + $0x190] sm:$0xff] %v737
                  %v739 = vld [vmem:[%s635 + $0x498] sm:$0xff]
                  %740 = vst [vmem:[%s636 + $0x198] sm:$0xff] %v739
                  %v741 = vld [vmem:[%s635 + $0x4e0] sm:$0xff]
                  %742 = vst [vmem:[%s636 + $0x1a0] sm:$0xff] %v741
                  %v743 = vld [vmem:[%s635 + $0x4e8] sm:$0xff]
                  %744 = vst [vmem:[%s636 + $0x1a8] sm:$0xff] %v743
                  %v745 = vld [vmem:[%s635 + $0x4f0] sm:$0xff]
                  %746 = vst [vmem:[%s636 + $0x1b0] sm:$0xff] %v745
                  %v747 = vld [vmem:[%s635 + $0x4f8] sm:$0xff]
                  %748 = vst [vmem:[%s636 + $0x1b8] sm:$0xff] %v747
                  %v749 = vld [vmem:[%s635 + $0x540] sm:$0xff]
                  %750 = vst [vmem:[%s636 + $0x1c0] sm:$0xff] %v749
                  %v751 = vld [vmem:[%s635 + $0x548] sm:$0xff]
                  %752 = vst [vmem:[%s636 + $0x1c8] sm:$0xff] %v751
                  %v753 = vld [vmem:[%s635 + $0x550] sm:$0xff]
                  %754 = vst [vmem:[%s636 + $0x1d0] sm:$0xff] %v753
                  %v755 = vld [vmem:[%s635 + $0x558] sm:$0xff]
                  %756 = vst [vmem:[%s636 + $0x1d8] sm:$0xff] %v755
                  %v757 = vld [vmem:[%s635 + $0x5a0] sm:$0xff]
                  %758 = vst [vmem:[%s636 + $0x1e0] sm:$0xff] %v757
                  %v759 = vld [vmem:[%s635 + $0x5a8] sm:$0xff]
                  %760 = vst [vmem:[%s636 + $0x1e8] sm:$0xff] %v759
                  %v761 = vld [vmem:[%s635 + $0x5b0] sm:$0xff]
                  %762 = vst [vmem:[%s636 + $0x1f0] sm:$0xff] %v761
                  %v763 = vld [vmem:[%s635 + $0x5b8] sm:$0xff]
                  %764 = vst [vmem:[%s636 + $0x1f8] sm:$0xff] %v763
                  %v765 = vld [vmem:[%s635 + $0x600] sm:$0xff]
                  %766 = vst [vmem:[%s636 + $0x200] sm:$0xff] %v765
                  %v767 = vld [vmem:[%s635 + $0x608] sm:$0xff]
                  %768 = vst [vmem:[%s636 + $0x208] sm:$0xff] %v767
                  %v769 = vld [vmem:[%s635 + $0x610] sm:$0xff]
                  %770 = vst [vmem:[%s636 + $0x210] sm:$0xff] %v769
                  %v771 = vld [vmem:[%s635 + $0x618] sm:$0xff]
                  %772 = vst [vmem:[%s636 + $0x218] sm:$0xff] %v771
                  %v773 = vld [vmem:[%s635 + $0x660] sm:$0xff]
                  %774 = vst [vmem:[%s636 + $0x220] sm:$0xff] %v773
                  %v775 = vld [vmem:[%s635 + $0x668] sm:$0xff]
                  %776 = vst [vmem:[%s636 + $0x228] sm:$0xff] %v775
                  %v777 = vld [vmem:[%s635 + $0x670] sm:$0xff]
                  %778 = vst [vmem:[%s636 + $0x230] sm:$0xff] %v777
                  %v779 = vld [vmem:[%s635 + $0x678] sm:$0xff]
                  %780 = vst [vmem:[%s636 + $0x238] sm:$0xff] %v779
                  %v781 = vld [vmem:[%s635 + $0x6c0] sm:$0xff]
                  %782 = vst [vmem:[%s636 + $0x240] sm:$0xff] %v781
                  %v783 = vld [vmem:[%s635 + $0x6c8] sm:$0xff]
                  %784 = vst [vmem:[%s636 + $0x248] sm:$0xff] %v783
                  %v785 = vld [vmem:[%s635 + $0x6d0] sm:$0xff]
                  %786 = vst [vmem:[%s636 + $0x250] sm:$0xff] %v785
                  %v787 = vld [vmem:[%s635 + $0x6d8] sm:$0xff]
                  %788 = vst [vmem:[%s636 + $0x258] sm:$0xff] %v787
                  %v789 = vld [vmem:[%s635 + $0x720] sm:$0xff]
                  %790 = vst [vmem:[%s636 + $0x260] sm:$0xff] %v789
                  %v791 = vld [vmem:[%s635 + $0x728] sm:$0xff]
                  %792 = vst [vmem:[%s636 + $0x268] sm:$0xff] %v791
                  %v793 = vld [vmem:[%s635 + $0x730] sm:$0xff]
                  %794 = vst [vmem:[%s636 + $0x270] sm:$0xff] %v793
                  %v795 = vld [vmem:[%s635 + $0x738] sm:$0xff]
                  %796 = vst [vmem:[%s636 + $0x278] sm:$0xff] %v795
                  %v797 = vld [vmem:[%s635 + $0x780] sm:$0xff]
                  %798 = vst [vmem:[%s636 + $0x280] sm:$0xff] %v797
                  %v799 = vld [vmem:[%s635 + $0x788] sm:$0xff]
                  %800 = vst [vmem:[%s636 + $0x288] sm:$0xff] %v799
                  %v801 = vld [vmem:[%s635 + $0x790] sm:$0xff]
                  %802 = vst [vmem:[%s636 + $0x290] sm:$0xff] %v801
                  %v803 = vld [vmem:[%s635 + $0x798] sm:$0xff]
                  %804 = vst [vmem:[%s636 + $0x298] sm:$0xff] %v803
                  %v805 = vld [vmem:[%s635 + $0x7e0] sm:$0xff]
                  %806 = vst [vmem:[%s636 + $0x2a0] sm:$0xff] %v805
                  %v807 = vld [vmem:[%s635 + $0x7e8] sm:$0xff]
                  %808 = vst [vmem:[%s636 + $0x2a8] sm:$0xff] %v807
                  %v809 = vld [vmem:[%s635 + $0x7f0] sm:$0xff]
                  %810 = vst [vmem:[%s636 + $0x2b0] sm:$0xff] %v809
                  %v811 = vld [vmem:[%s635 + $0x7f8] sm:$0xff]
                  %812 = vst [vmem:[%s636 + $0x2b8] sm:$0xff] %v811
                  %v813 = vld [vmem:[%s635 + $0x840] sm:$0xff]
                  %814 = vst [vmem:[%s636 + $0x2c0] sm:$0xff] %v813
                  %v815 = vld [vmem:[%s635 + $0x848] sm:$0xff]
                  %816 = vst [vmem:[%s636 + $0x2c8] sm:$0xff] %v815
                  %v817 = vld [vmem:[%s635 + $0x850] sm:$0xff]
                  %818 = vst [vmem:[%s636 + $0x2d0] sm:$0xff] %v817
                  %v819 = vld [vmem:[%s635 + $0x858] sm:$0xff]
                  %820 = vst [vmem:[%s636 + $0x2d8] sm:$0xff] %v819
                  %v821 = vld [vmem:[%s635 + $0x8a0] sm:$0xff]
                  %822 = vst [vmem:[%s636 + $0x2e0] sm:$0xff] %v821
                  %v823 = vld [vmem:[%s635 + $0x8a8] sm:$0xff]
                  %824 = vst [vmem:[%s636 + $0x2e8] sm:$0xff] %v823
                  %v825 = vld [vmem:[%s635 + $0x8b0] sm:$0xff]
                  %826 = vst [vmem:[%s636 + $0x2f0] sm:$0xff] %v825
                  %v827 = vld [vmem:[%s635 + $0x8b8] sm:$0xff]
                  %828 = vst [vmem:[%s636 + $0x2f8] sm:$0xff] %v827
                  %v829 = vld [vmem:[%s635 + $0x900] sm:$0xff]
                  %830 = vst [vmem:[%s636 + $0x300] sm:$0xff] %v829
                  %v831 = vld [vmem:[%s635 + $0x908] sm:$0xff]
                  %832 = vst [vmem:[%s636 + $0x308] sm:$0xff] %v831
                  %v833 = vld [vmem:[%s635 + $0x910] sm:$0xff]
                  %834 = vst [vmem:[%s636 + $0x310] sm:$0xff] %v833
                  %v835 = vld [vmem:[%s635 + $0x918] sm:$0xff]
                  %836 = vst [vmem:[%s636 + $0x318] sm:$0xff] %v835
                  %v837 = vld [vmem:[%s635 + $0x960] sm:$0xff]
                  %838 = vst [vmem:[%s636 + $0x320] sm:$0xff] %v837
                  %v839 = vld [vmem:[%s635 + $0x968] sm:$0xff]
                  %840 = vst [vmem:[%s636 + $0x328] sm:$0xff] %v839
                  %v841 = vld [vmem:[%s635 + $0x970] sm:$0xff]
                  %842 = vst [vmem:[%s636 + $0x330] sm:$0xff] %v841
                  %v843 = vld [vmem:[%s635 + $0x978] sm:$0xff]
                  %844 = vst [vmem:[%s636 + $0x338] sm:$0xff] %v843
                  %v845 = vld [vmem:[%s635 + $0x9c0] sm:$0xff]
                  %846 = vst [vmem:[%s636 + $0x340] sm:$0xff] %v845
                  %v847 = vld [vmem:[%s635 + $0x9c8] sm:$0xff]
                  %848 = vst [vmem:[%s636 + $0x348] sm:$0xff] %v847
                  %v849 = vld [vmem:[%s635 + $0x9d0] sm:$0xff]
                  %850 = vst [vmem:[%s636 + $0x350] sm:$0xff] %v849
                  %v851 = vld [vmem:[%s635 + $0x9d8] sm:$0xff]
                  %852 = vst [vmem:[%s636 + $0x358] sm:$0xff] %v851
                  %v853 = vld [vmem:[%s635 + $0xa20] sm:$0xff]
                  %854 = vst [vmem:[%s636 + $0x360] sm:$0xff] %v853
                  %v855 = vld [vmem:[%s635 + $0xa28] sm:$0xff]
                  %856 = vst [vmem:[%s636 + $0x368] sm:$0xff] %v855
                  %v857 = vld [vmem:[%s635 + $0xa30] sm:$0xff]
                  %858 = vst [vmem:[%s636 + $0x370] sm:$0xff] %v857
                  %v859 = vld [vmem:[%s635 + $0xa38] sm:$0xff]
                  %860 = vst [vmem:[%s636 + $0x378] sm:$0xff] %v859
                $region96: #{lenet_forward.1} parent=90 // loop_footer
                  %s634 = sadd.s32 1, %s630
                $region97: #{lenet_forward.1} parent=90 // loop_footer_branch
                  %629 = sbr.rel target = $region93
                $region98: #{lenet_forward.1} parent=90 // loop_exit
                  _
              $region91: #{lenet_forward.1} parent=75 // pred_fallthru
                _
              // Predicated region
              $region99: #{lenet_forward.1} parent=75 // pred_check
                _
              $region100: #{lenet_forward.1} parent=75 // pred_check_branch
                %862 = sbr.rel target = $region102
              $region101: #{lenet_forward.1} parent=75 // pred_region
                _
              $region102: #{lenet_forward.1} parent=75 // pred_fallthru
                _
            $region76: #{lenet_forward.1} parent=71 // pred_fallthru
              _
            // Predicated region
            $region77: #{lenet_forward.1} parent=71 // pred_check
              _
            $region78: #{lenet_forward.1} parent=71 // pred_check_branch
              %393 = sbr.rel target = $region80
            $region79: #{lenet_forward.1} parent=71 // pred_region
              loop: start=0, step=1, limit=1
              $region81: #{lenet_forward.1} parent=79 // loop_pre_header
                _
              $region82: #{lenet_forward.1} parent=79 // loop_header
                %s396 = sphi 0, %s400
                %p397 = scmp.ge.s32.totalorder %s396, 1
                %s401 = sphi %s387, %s387
                %s402 = sphi %s384, %s384
              $region83: #{lenet_forward.1} parent=79 // loop_header_branch
                %399 = sbr.rel (%p397) target = $region87
              $region84: #{lenet_forward.1} parent=79 // loop_body
                %v403 = vld [vmem:[%s401] sm:$0xff]
                %404 = vst [vmem:[%s402] sm:$0xff] %v403
                %v405 = vld [vmem:[%s401 + $0x8] sm:$0xff]
                %406 = vst [vmem:[%s402 + $0x8] sm:$0xff] %v405
                %v407 = vld [vmem:[%s401 + $0x10] sm:$0xff]
                %408 = vst [vmem:[%s402 + $0x10] sm:$0xff] %v407
                %v409 = vld [vmem:[%s401 + $0x18] sm:$0xff]
                %410 = vst [vmem:[%s402 + $0x18] sm:$0xff] %v409
                %v411 = vld [vmem:[%s401 + $0x60] sm:$0xff]
                %412 = vst [vmem:[%s402 + $0x20] sm:$0xff] %v411
                %v413 = vld [vmem:[%s401 + $0x68] sm:$0xff]
                %414 = vst [vmem:[%s402 + $0x28] sm:$0xff] %v413
                %v415 = vld [vmem:[%s401 + $0x70] sm:$0xff]
                %416 = vst [vmem:[%s402 + $0x30] sm:$0xff] %v415
                %v417 = vld [vmem:[%s401 + $0x78] sm:$0xff]
                %418 = vst [vmem:[%s402 + $0x38] sm:$0xff] %v417
                %v419 = vld [vmem:[%s401 + $0xc0] sm:$0xff]
                %420 = vst [vmem:[%s402 + $0x40] sm:$0xff] %v419
                %v421 = vld [vmem:[%s401 + $0xc8] sm:$0xff]
                %422 = vst [vmem:[%s402 + $0x48] sm:$0xff] %v421
                %v423 = vld [vmem:[%s401 + $0xd0] sm:$0xff]
                %424 = vst [vmem:[%s402 + $0x50] sm:$0xff] %v423
                %v425 = vld [vmem:[%s401 + $0xd8] sm:$0xff]
                %426 = vst [vmem:[%s402 + $0x58] sm:$0xff] %v425
                %v427 = vld [vmem:[%s401 + $0x120] sm:$0xff]
                %428 = vst [vmem:[%s402 + $0x60] sm:$0xff] %v427
                %v429 = vld [vmem:[%s401 + $0x128] sm:$0xff]
                %430 = vst [vmem:[%s402 + $0x68] sm:$0xff] %v429
                %v431 = vld [vmem:[%s401 + $0x130] sm:$0xff]
                %432 = vst [vmem:[%s402 + $0x70] sm:$0xff] %v431
                %v433 = vld [vmem:[%s401 + $0x138] sm:$0xff]
                %434 = vst [vmem:[%s402 + $0x78] sm:$0xff] %v433
                %v435 = vld [vmem:[%s401 + $0x180] sm:$0xff]
                %436 = vst [vmem:[%s402 + $0x80] sm:$0xff] %v435
                %v437 = vld [vmem:[%s401 + $0x188] sm:$0xff]
                %438 = vst [vmem:[%s402 + $0x88] sm:$0xff] %v437
                %v439 = vld [vmem:[%s401 + $0x190] sm:$0xff]
                %440 = vst [vmem:[%s402 + $0x90] sm:$0xff] %v439
                %v441 = vld [vmem:[%s401 + $0x198] sm:$0xff]
                %442 = vst [vmem:[%s402 + $0x98] sm:$0xff] %v441
                %v443 = vld [vmem:[%s401 + $0x1e0] sm:$0xff]
                %444 = vst [vmem:[%s402 + $0xa0] sm:$0xff] %v443
                %v445 = vld [vmem:[%s401 + $0x1e8] sm:$0xff]
                %446 = vst [vmem:[%s402 + $0xa8] sm:$0xff] %v445
                %v447 = vld [vmem:[%s401 + $0x1f0] sm:$0xff]
                %448 = vst [vmem:[%s402 + $0xb0] sm:$0xff] %v447
                %v449 = vld [vmem:[%s401 + $0x1f8] sm:$0xff]
                %450 = vst [vmem:[%s402 + $0xb8] sm:$0xff] %v449
                %v451 = vld [vmem:[%s401 + $0x240] sm:$0xff]
                %452 = vst [vmem:[%s402 + $0xc0] sm:$0xff] %v451
                %v453 = vld [vmem:[%s401 + $0x248] sm:$0xff]
                %454 = vst [vmem:[%s402 + $0xc8] sm:$0xff] %v453
                %v455 = vld [vmem:[%s401 + $0x250] sm:$0xff]
                %456 = vst [vmem:[%s402 + $0xd0] sm:$0xff] %v455
                %v457 = vld [vmem:[%s401 + $0x258] sm:$0xff]
                %458 = vst [vmem:[%s402 + $0xd8] sm:$0xff] %v457
                %v459 = vld [vmem:[%s401 + $0x2a0] sm:$0xff]
                %460 = vst [vmem:[%s402 + $0xe0] sm:$0xff] %v459
                %v461 = vld [vmem:[%s401 + $0x2a8] sm:$0xff]
                %462 = vst [vmem:[%s402 + $0xe8] sm:$0xff] %v461
                %v463 = vld [vmem:[%s401 + $0x2b0] sm:$0xff]
                %464 = vst [vmem:[%s402 + $0xf0] sm:$0xff] %v463
                %v465 = vld [vmem:[%s401 + $0x2b8] sm:$0xff]
                %466 = vst [vmem:[%s402 + $0xf8] sm:$0xff] %v465
                %v467 = vld [vmem:[%s401 + $0x300] sm:$0xff]
                %468 = vst [vmem:[%s402 + $0x100] sm:$0xff] %v467
                %v469 = vld [vmem:[%s401 + $0x308] sm:$0xff]
                %470 = vst [vmem:[%s402 + $0x108] sm:$0xff] %v469
                %v471 = vld [vmem:[%s401 + $0x310] sm:$0xff]
                %472 = vst [vmem:[%s402 + $0x110] sm:$0xff] %v471
                %v473 = vld [vmem:[%s401 + $0x318] sm:$0xff]
                %474 = vst [vmem:[%s402 + $0x118] sm:$0xff] %v473
                %v475 = vld [vmem:[%s401 + $0x360] sm:$0xff]
                %476 = vst [vmem:[%s402 + $0x120] sm:$0xff] %v475
                %v477 = vld [vmem:[%s401 + $0x368] sm:$0xff]
                %478 = vst [vmem:[%s402 + $0x128] sm:$0xff] %v477
                %v479 = vld [vmem:[%s401 + $0x370] sm:$0xff]
                %480 = vst [vmem:[%s402 + $0x130] sm:$0xff] %v479
                %v481 = vld [vmem:[%s401 + $0x378] sm:$0xff]
                %482 = vst [vmem:[%s402 + $0x138] sm:$0xff] %v481
                %v483 = vld [vmem:[%s401 + $0x3c0] sm:$0xff]
                %484 = vst [vmem:[%s402 + $0x140] sm:$0xff] %v483
                %v485 = vld [vmem:[%s401 + $0x3c8] sm:$0xff]
                %486 = vst [vmem:[%s402 + $0x148] sm:$0xff] %v485
                %v487 = vld [vmem:[%s401 + $0x3d0] sm:$0xff]
                %488 = vst [vmem:[%s402 + $0x150] sm:$0xff] %v487
                %v489 = vld [vmem:[%s401 + $0x3d8] sm:$0xff]
                %490 = vst [vmem:[%s402 + $0x158] sm:$0xff] %v489
                %v491 = vld [vmem:[%s401 + $0x420] sm:$0xff]
                %492 = vst [vmem:[%s402 + $0x160] sm:$0xff] %v491
                %v493 = vld [vmem:[%s401 + $0x428] sm:$0xff]
                %494 = vst [vmem:[%s402 + $0x168] sm:$0xff] %v493
                %v495 = vld [vmem:[%s401 + $0x430] sm:$0xff]
                %496 = vst [vmem:[%s402 + $0x170] sm:$0xff] %v495
                %v497 = vld [vmem:[%s401 + $0x438] sm:$0xff]
                %498 = vst [vmem:[%s402 + $0x178] sm:$0xff] %v497
                %v499 = vld [vmem:[%s401 + $0x480] sm:$0xff]
                %500 = vst [vmem:[%s402 + $0x180] sm:$0xff] %v499
                %v501 = vld [vmem:[%s401 + $0x488] sm:$0xff]
                %502 = vst [vmem:[%s402 + $0x188] sm:$0xff] %v501
                %v503 = vld [vmem:[%s401 + $0x490] sm:$0xff]
                %504 = vst [vmem:[%s402 + $0x190] sm:$0xff] %v503
                %v505 = vld [vmem:[%s401 + $0x498] sm:$0xff]
                %506 = vst [vmem:[%s402 + $0x198] sm:$0xff] %v505
                %v507 = vld [vmem:[%s401 + $0x4e0] sm:$0xff]
                %508 = vst [vmem:[%s402 + $0x1a0] sm:$0xff] %v507
                %v509 = vld [vmem:[%s401 + $0x4e8] sm:$0xff]
                %510 = vst [vmem:[%s402 + $0x1a8] sm:$0xff] %v509
                %v511 = vld [vmem:[%s401 + $0x4f0] sm:$0xff]
                %512 = vst [vmem:[%s402 + $0x1b0] sm:$0xff] %v511
                %v513 = vld [vmem:[%s401 + $0x4f8] sm:$0xff]
                %514 = vst [vmem:[%s402 + $0x1b8] sm:$0xff] %v513
                %v515 = vld [vmem:[%s401 + $0x540] sm:$0xff]
                %516 = vst [vmem:[%s402 + $0x1c0] sm:$0xff] %v515
                %v517 = vld [vmem:[%s401 + $0x548] sm:$0xff]
                %518 = vst [vmem:[%s402 + $0x1c8] sm:$0xff] %v517
                %v519 = vld [vmem:[%s401 + $0x550] sm:$0xff]
                %520 = vst [vmem:[%s402 + $0x1d0] sm:$0xff] %v519
                %v521 = vld [vmem:[%s401 + $0x558] sm:$0xff]
                %522 = vst [vmem:[%s402 + $0x1d8] sm:$0xff] %v521
                %v523 = vld [vmem:[%s401 + $0x5a0] sm:$0xff]
                %524 = vst [vmem:[%s402 + $0x1e0] sm:$0xff] %v523
                %v525 = vld [vmem:[%s401 + $0x5a8] sm:$0xff]
                %526 = vst [vmem:[%s402 + $0x1e8] sm:$0xff] %v525
                %v527 = vld [vmem:[%s401 + $0x5b0] sm:$0xff]
                %528 = vst [vmem:[%s402 + $0x1f0] sm:$0xff] %v527
                %v529 = vld [vmem:[%s401 + $0x5b8] sm:$0xff]
                %530 = vst [vmem:[%s402 + $0x1f8] sm:$0xff] %v529
                %v531 = vld [vmem:[%s401 + $0x600] sm:$0xff]
                %532 = vst [vmem:[%s402 + $0x200] sm:$0xff] %v531
                %v533 = vld [vmem:[%s401 + $0x608] sm:$0xff]
                %534 = vst [vmem:[%s402 + $0x208] sm:$0xff] %v533
                %v535 = vld [vmem:[%s401 + $0x610] sm:$0xff]
                %536 = vst [vmem:[%s402 + $0x210] sm:$0xff] %v535
                %v537 = vld [vmem:[%s401 + $0x618] sm:$0xff]
                %538 = vst [vmem:[%s402 + $0x218] sm:$0xff] %v537
                %v539 = vld [vmem:[%s401 + $0x660] sm:$0xff]
                %540 = vst [vmem:[%s402 + $0x220] sm:$0xff] %v539
                %v541 = vld [vmem:[%s401 + $0x668] sm:$0xff]
                %542 = vst [vmem:[%s402 + $0x228] sm:$0xff] %v541
                %v543 = vld [vmem:[%s401 + $0x670] sm:$0xff]
                %544 = vst [vmem:[%s402 + $0x230] sm:$0xff] %v543
                %v545 = vld [vmem:[%s401 + $0x678] sm:$0xff]
                %546 = vst [vmem:[%s402 + $0x238] sm:$0xff] %v545
                %v547 = vld [vmem:[%s401 + $0x6c0] sm:$0xff]
                %548 = vst [vmem:[%s402 + $0x240] sm:$0xff] %v547
                %v549 = vld [vmem:[%s401 + $0x6c8] sm:$0xff]
                %550 = vst [vmem:[%s402 + $0x248] sm:$0xff] %v549
                %v551 = vld [vmem:[%s401 + $0x6d0] sm:$0xff]
                %552 = vst [vmem:[%s402 + $0x250] sm:$0xff] %v551
                %v553 = vld [vmem:[%s401 + $0x6d8] sm:$0xff]
                %554 = vst [vmem:[%s402 + $0x258] sm:$0xff] %v553
                %v555 = vld [vmem:[%s401 + $0x720] sm:$0xff]
                %556 = vst [vmem:[%s402 + $0x260] sm:$0xff] %v555
                %v557 = vld [vmem:[%s401 + $0x728] sm:$0xff]
                %558 = vst [vmem:[%s402 + $0x268] sm:$0xff] %v557
                %v559 = vld [vmem:[%s401 + $0x730] sm:$0xff]
                %560 = vst [vmem:[%s402 + $0x270] sm:$0xff] %v559
                %v561 = vld [vmem:[%s401 + $0x738] sm:$0xff]
                %562 = vst [vmem:[%s402 + $0x278] sm:$0xff] %v561
                %v563 = vld [vmem:[%s401 + $0x780] sm:$0xff]
                %564 = vst [vmem:[%s402 + $0x280] sm:$0xff] %v563
                %v565 = vld [vmem:[%s401 + $0x788] sm:$0xff]
                %566 = vst [vmem:[%s402 + $0x288] sm:$0xff] %v565
                %v567 = vld [vmem:[%s401 + $0x790] sm:$0xff]
                %568 = vst [vmem:[%s402 + $0x290] sm:$0xff] %v567
                %v569 = vld [vmem:[%s401 + $0x798] sm:$0xff]
                %570 = vst [vmem:[%s402 + $0x298] sm:$0xff] %v569
                %v571 = vld [vmem:[%s401 + $0x7e0] sm:$0xff]
                %572 = vst [vmem:[%s402 + $0x2a0] sm:$0xff] %v571
                %v573 = vld [vmem:[%s401 + $0x7e8] sm:$0xff]
                %574 = vst [vmem:[%s402 + $0x2a8] sm:$0xff] %v573
                %v575 = vld [vmem:[%s401 + $0x7f0] sm:$0xff]
                %576 = vst [vmem:[%s402 + $0x2b0] sm:$0xff] %v575
                %v577 = vld [vmem:[%s401 + $0x7f8] sm:$0xff]
                %578 = vst [vmem:[%s402 + $0x2b8] sm:$0xff] %v577
                %v579 = vld [vmem:[%s401 + $0x840] sm:$0xff]
                %580 = vst [vmem:[%s402 + $0x2c0] sm:$0xff] %v579
                %v581 = vld [vmem:[%s401 + $0x848] sm:$0xff]
                %582 = vst [vmem:[%s402 + $0x2c8] sm:$0xff] %v581
                %v583 = vld [vmem:[%s401 + $0x850] sm:$0xff]
                %584 = vst [vmem:[%s402 + $0x2d0] sm:$0xff] %v583
                %v585 = vld [vmem:[%s401 + $0x858] sm:$0xff]
                %586 = vst [vmem:[%s402 + $0x2d8] sm:$0xff] %v585
                %v587 = vld [vmem:[%s401 + $0x8a0] sm:$0xff]
                %588 = vst [vmem:[%s402 + $0x2e0] sm:$0xff] %v587
                %v589 = vld [vmem:[%s401 + $0x8a8] sm:$0xff]
                %590 = vst [vmem:[%s402 + $0x2e8] sm:$0xff] %v589
                %v591 = vld [vmem:[%s401 + $0x8b0] sm:$0xff]
                %592 = vst [vmem:[%s402 + $0x2f0] sm:$0xff] %v591
                %v593 = vld [vmem:[%s401 + $0x8b8] sm:$0xff]
                %594 = vst [vmem:[%s402 + $0x2f8] sm:$0xff] %v593
                %v595 = vld [vmem:[%s401 + $0x900] sm:$0xff]
                %596 = vst [vmem:[%s402 + $0x300] sm:$0xff] %v595
                %v597 = vld [vmem:[%s401 + $0x908] sm:$0xff]
                %598 = vst [vmem:[%s402 + $0x308] sm:$0xff] %v597
                %v599 = vld [vmem:[%s401 + $0x910] sm:$0xff]
                %600 = vst [vmem:[%s402 + $0x310] sm:$0xff] %v599
                %v601 = vld [vmem:[%s401 + $0x918] sm:$0xff]
                %602 = vst [vmem:[%s402 + $0x318] sm:$0xff] %v601
                %v603 = vld [vmem:[%s401 + $0x960] sm:$0xff]
                %604 = vst [vmem:[%s402 + $0x320] sm:$0xff] %v603
                %v605 = vld [vmem:[%s401 + $0x968] sm:$0xff]
                %606 = vst [vmem:[%s402 + $0x328] sm:$0xff] %v605
                %v607 = vld [vmem:[%s401 + $0x970] sm:$0xff]
                %608 = vst [vmem:[%s402 + $0x330] sm:$0xff] %v607
                %v609 = vld [vmem:[%s401 + $0x978] sm:$0xff]
                %610 = vst [vmem:[%s402 + $0x338] sm:$0xff] %v609
                %v611 = vld [vmem:[%s401 + $0x9c0] sm:$0xff]
                %612 = vst [vmem:[%s402 + $0x340] sm:$0xff] %v611
                %v613 = vld [vmem:[%s401 + $0x9c8] sm:$0xff]
                %614 = vst [vmem:[%s402 + $0x348] sm:$0xff] %v613
                %v615 = vld [vmem:[%s401 + $0x9d0] sm:$0xff]
                %616 = vst [vmem:[%s402 + $0x350] sm:$0xff] %v615
                %v617 = vld [vmem:[%s401 + $0x9d8] sm:$0xff]
                %618 = vst [vmem:[%s402 + $0x358] sm:$0xff] %v617
                %v619 = vld [vmem:[%s401 + $0xa20] sm:$0xff]
                %620 = vst [vmem:[%s402 + $0x360] sm:$0xff] %v619
                %v621 = vld [vmem:[%s401 + $0xa28] sm:$0xff]
                %622 = vst [vmem:[%s402 + $0x368] sm:$0xff] %v621
                %v623 = vld [vmem:[%s401 + $0xa30] sm:$0xff]
                %624 = vst [vmem:[%s402 + $0x370] sm:$0xff] %v623
                %v625 = vld [vmem:[%s401 + $0xa38] sm:$0xff]
                %626 = vst [vmem:[%s402 + $0x378] sm:$0xff] %v625
              $region85: #{lenet_forward.1} parent=79 // loop_footer
                %s400 = sadd.s32 1, %s396
              $region86: #{lenet_forward.1} parent=79 // loop_footer_branch
                %395 = sbr.rel target = $region82
              $region87: #{lenet_forward.1} parent=79 // loop_exit
                _
            $region80: #{lenet_forward.1} parent=71 // pred_fallthru
              _
          $region72: #{lenet_forward.1} parent=67 // pred_fallthru
            _
          %863 = vnop
        $region68: #{lenet_forward.1} parent=63 // pred_fallthru
          _
      $region64: #{lenet_forward.1} parent=5 // pred_fallthru
        _
      %p864 = scmp.le.s32.totalorder 1, %s19
      %p865 = scmp.lt.s32.totalorder %s19, 4
      %p866 = pnand %p864, %p865
      %p867 = pneg %p866
      // Predicated region
      $region103: #{lenet_forward.1} parent=5 // pred_check
        _
      $region104: #{lenet_forward.1} parent=5 // pred_check_branch
        %869 = sbr.rel (%p866) target = $region106
      $region105: #{lenet_forward.1} parent=5 // pred_region
        %s870 = ssub.s32 %s19, 1
        %s871 = sand.u32 %s32, 1
        %s872 = sand.u32 %s32, 1
        %s873 = smul.addr %s872, 896
        %s874 = scalar_lea.vmem [#allocation2], %s873
        // Predicated region
        $region107: #{lenet_forward.1} parent=105 // pred_check
          %p875 = pneg %p45
        $region108: #{lenet_forward.1} parent=105 // pred_check_branch
          %877 = sbr.rel (%p875) target = $region110
        $region109: #{lenet_forward.1} parent=105 // pred_region
          _
        $region110: #{lenet_forward.1} parent=105 // pred_fallthru
          _
        %s878 = sand.u32 %s32, 1
        %s879 = sand.u32 %s32, 1
        %s880 = smul.addr %s879, 896
        %s881 = scalar_lea.vmem [#allocation2], %s880
        %p882 = pneg %p45
        %p883 = pneg %p42
        %p884 = pneg %p66
        %p885 = pneg %p63
        %p886 = pneg %p87
        %p887 = pneg %p84
        %p888 = pneg %p108
        %p889 = pneg %p105
        %p890 = pneg %p129
        %p891 = pneg %p126
        %p892 = pneg %p150
        %p893 = pneg %p147
        %p894 = pneg %p171
        %p895 = pneg %p168
        %p896 = pneg %p192
        %p897 = pneg %p189
        %p898 = pneg %p213
        %p899 = pneg %p210
        %p900 = pneg %p234
        %p901 = pneg %p231
        %p902 = pneg %p255
        %p903 = pneg %p252
        %p904 = pneg %p276
        %p905 = pneg %p273
        %p906 = pneg %p297
        %p907 = pneg %p294
        %p908 = pneg %p323
        %p909 = pneg %p320
        %s910 = smul.u32 4, %s24
        %p911 = scmp.lt.s32.totalorder %s910, 11
        %s912 = scalar_select %p911, %s910, 11
        %s913 = smul.addr %s912, 8
        %s914 = scalar_lea.vmem %s13, %s913
        %s915 = smul.u32 4, %s24
        %s916 = smul.u32 4, %s24
        %p917 = scmp.lt.s32.totalorder %s916, 11
        %s918 = scalar_select %p917, %s916, 11
        %s919 = smul.addr %s918, 8
        %s920 = scalar_lea.vmem %s13, %s919
        %s921 = smul.u32 4, %s24
        %v923 = vld [vmem:[%s1] sm:$0xff]
        %v924 = vld [vmem:[%s1 + $0x8] sm:$0xff]
        %v925 = vld [vmem:[%s1 + $0x10] sm:$0xff]
        %v926 = vld [vmem:[%s1 + $0x18] sm:$0xff]
        %v927 = vld [vmem:[%s1 + $0x20] sm:$0xff]
        %v928 = vld [vmem:[%s1 + $0x28] sm:$0xff]
        %v929 = vld [vmem:[%s1 + $0x30] sm:$0xff]
        %v930 = vld [vmem:[%s1 + $0x38] sm:$0xff]
        %v931 = vld [vmem:[%s1 + $0x40] sm:$0xff]
        %v932 = vld [vmem:[%s1 + $0x48] sm:$0xff]
        %v933 = vld [vmem:[%s1 + $0x50] sm:$0xff]
        %v934 = vld [vmem:[%s1 + $0x58] sm:$0xff]
        %v935 = vld [vmem:[%s1 + $0x60] sm:$0xff]
        %v936 = vld [vmem:[%s1 + $0x68] sm:$0xff]
        %v937 = vld [vmem:[%s1 + $0x70] sm:$0xff]
        %v938 = vld [vmem:[%s1 + $0x78] sm:$0xff]
        %v939 = vld [vmem:[%s1 + $0x80] sm:$0xff]
        %v940 = vld [vmem:[%s1 + $0x88] sm:$0xff]
        %v941 = vld [vmem:[%s1 + $0x90] sm:$0xff]
        %v942 = vld [vmem:[%s1 + $0x98] sm:$0xff]
        %v943 = vld [vmem:[%s1 + $0xa0] sm:$0xff]
        %v944 = vld [vmem:[%s1 + $0xa8] sm:$0xff]
        %v945 = vld [vmem:[%s1 + $0xb0] sm:$0xff]
        %v946 = vld [vmem:[%s1 + $0xb8] sm:$0xff]
        %v947 = vld [vmem:[%s1 + $0xc0] sm:$0xff]
        %v948 = vld [vmem:[%s1 + $0xc8] sm:$0xff]
        %v949 = vld [vmem:[%s1 + $0xd0] sm:$0xff]
        %v950 = vld [vmem:[%s1 + $0xd8] sm:$0xff]
        %v951 = vld [vmem:[%s1 + $0xe0] sm:$0xff]
        %v952 = vld [vmem:[%s1 + $0xe8] sm:$0xff]
        %v953 = vld [vmem:[%s1 + $0xf0] sm:$0xff]
        %v954 = vld [vmem:[%s1 + $0xf8] sm:$0xff]
        %v955 = vld [vmem:[%s1 + $0x100] sm:$0xff]
        %v956 = vld [vmem:[%s1 + $0x108] sm:$0xff]
        %v957 = vld [vmem:[%s1 + $0x110] sm:$0xff]
        %v958 = vld [vmem:[%s1 + $0x118] sm:$0xff]
        %v959 = vld [vmem:[%s1 + $0x120] sm:$0xff]
        %v960 = vld [vmem:[%s1 + $0x128] sm:$0xff]
        %v961 = vld [vmem:[%s1 + $0x130] sm:$0xff]
        %v962 = vld [vmem:[%s1 + $0x138] sm:$0xff]
        %v963 = vld [vmem:[%s1 + $0x140] sm:$0xff]
        %v964 = vld [vmem:[%s1 + $0x148] sm:$0xff]
        %v965 = vld [vmem:[%s1 + $0x150] sm:$0xff]
        %v966 = vld [vmem:[%s1 + $0x158] sm:$0xff]
        %v967 = vld [vmem:[%s1 + $0x160] sm:$0xff]
        %v968 = vld [vmem:[%s1 + $0x168] sm:$0xff]
        %v969 = vld [vmem:[%s1 + $0x170] sm:$0xff]
        %v970 = vld [vmem:[%s1 + $0x178] sm:$0xff]
        %v971 = vld [vmem:[%s1 + $0x180] sm:$0xff]
        %v972 = vld [vmem:[%s1 + $0x188] sm:$0xff]
        %v973 = vld [vmem:[%s2] sm:$0x3]
        %v974 = vld [vmem:[%s3] sm:$0xf]
        %v975 = vld [vmem:[%s3 + $0x4] sm:$0xf]
        %v976 = vld [vmem:[%s3 + $0x8] sm:$0xf]
        %v977 = vld [vmem:[%s3 + $0xc] sm:$0xf]
        %v978 = vld [vmem:[%s3 + $0x10] sm:$0xf]
        %v979 = vld [vmem:[%s3 + $0x14] sm:$0xf]
        %v980 = vld [vmem:[%s3 + $0x18] sm:$0xf]
        %v981 = vld [vmem:[%s3 + $0x1c] sm:$0xf]
        %v982 = vld [vmem:[%s3 + $0x20] sm:$0xf]
        %v983 = vld [vmem:[%s3 + $0x24] sm:$0xf]
        %v984 = vld [vmem:[%s3 + $0x28] sm:$0xf]
        %v985 = vld [vmem:[%s3 + $0x2c] sm:$0xf]
        %v986 = vld [vmem:[%s3 + $0x30] sm:$0xf]
        %v987 = vld [vmem:[%s3 + $0x34] sm:$0xf]
        %v988 = vld [vmem:[%s3 + $0x38] sm:$0xf]
        %v989 = vld [vmem:[%s3 + $0x3c] sm:$0xf]
        %v990 = vld [vmem:[%s3 + $0x40] sm:$0xf]
        %v991 = vld [vmem:[%s3 + $0x44] sm:$0xf]
        %v992 = vld [vmem:[%s3 + $0x48] sm:$0x7]
        %v993 = vld [vmem:[%s4] sm:$0xff]
        %v994 = vld [vmem:[%s4 + $0x8] sm:$0xff]
        %v995 = vld [vmem:[%s4 + $0x10] sm:$0xff]
        %v996 = vld [vmem:[%s4 + $0x18] sm:$0xff]
        %v997 = vld [vmem:[%s4 + $0x20] sm:$0xff]
        %v998 = vld [vmem:[%s4 + $0x28] sm:$0xff]
        %v999 = vld [vmem:[%s4 + $0x30] sm:$0xff]
        %v1000 = vld [vmem:[%s4 + $0x38] sm:$0xff]
        %v1001 = vld [vmem:[%s4 + $0x40] sm:$0xff]
        %v1002 = vld [vmem:[%s4 + $0x48] sm:$0xff]
        %v1003 = vld [vmem:[%s4 + $0x50] sm:$0xff]
        %v1004 = vld [vmem:[%s4 + $0x58] sm:$0xff]
        %v1005 = vld [vmem:[%s4 + $0x60] sm:$0xff]
        %v1006 = vld [vmem:[%s4 + $0x68] sm:$0xff]
        %v1007 = vld [vmem:[%s4 + $0x70] sm:$0xff]
        %v1008 = vld [vmem:[%s4 + $0x78] sm:$0xff]
        %v1009 = vld [vmem:[%s4 + $0x80] sm:$0xff]
        %v1010 = vld [vmem:[%s4 + $0x88] sm:$0xff]
        %v1011 = vld [vmem:[%s4 + $0x90] sm:$0xff]
        %v1012 = vld [vmem:[%s4 + $0x98] sm:$0xff]
        %v1013 = vld [vmem:[%s4 + $0xa0] sm:$0xff]
        %v1014 = vld [vmem:[%s4 + $0xa8] sm:$0xff]
        %v1015 = vld [vmem:[%s4 + $0xb0] sm:$0xff]
        %v1016 = vld [vmem:[%s4 + $0xb8] sm:$0xff]
        %v1017 = vld [vmem:[%s4 + $0xc0] sm:$0xff]
        %v1018 = vld [vmem:[%s4 + $0xc8] sm:$0xff]
        %v1019 = vld [vmem:[%s4 + $0xd0] sm:$0xff]
        %v1020 = vld [vmem:[%s4 + $0xd8] sm:$0xff]
        %v1021 = vld [vmem:[%s4 + $0xe0] sm:$0xff]
        %v1022 = vld [vmem:[%s4 + $0xe8] sm:$0xff]
        %v1023 = vld [vmem:[%s4 + $0xf0] sm:$0xff]
        %v1024 = vld [vmem:[%s4 + $0xf8] sm:$0xff]
        %v1025 = vld [vmem:[%s4 + $0x100] sm:$0xff]
        %v1026 = vld [vmem:[%s4 + $0x108] sm:$0xff]
        %v1027 = vld [vmem:[%s4 + $0x110] sm:$0xff]
        %v1028 = vld [vmem:[%s4 + $0x118] sm:$0xff]
        %v1029 = vld [vmem:[%s4 + $0x120] sm:$0xff]
        %v1030 = vld [vmem:[%s4 + $0x128] sm:$0xff]
        %v1031 = vld [vmem:[%s4 + $0x130] sm:$0xff]
        %v1032 = vld [vmem:[%s4 + $0x138] sm:$0xff]
        %v1033 = vld [vmem:[%s4 + $0x140] sm:$0xff]
        %v1034 = vld [vmem:[%s4 + $0x148] sm:$0xff]
        %v1035 = vld [vmem:[%s4 + $0x150] sm:$0xff]
        %v1036 = vld [vmem:[%s4 + $0x158] sm:$0xff]
        %v1037 = vld [vmem:[%s4 + $0x160] sm:$0xff]
        %v1038 = vld [vmem:[%s4 + $0x168] sm:$0xff]
        %v1039 = vld [vmem:[%s4 + $0x170] sm:$0xff]
        %v1040 = vld [vmem:[%s4 + $0x178] sm:$0xff]
        %v1041 = vld [vmem:[%s4 + $0x180] sm:$0xff]
        %v1042 = vld [vmem:[%s4 + $0x188] sm:$0xff]
        %v1043 = vld [vmem:[%s4 + $0x190] sm:$0xff]
        %v1044 = vld [vmem:[%s4 + $0x198] sm:$0xff]
        %v1045 = vld [vmem:[%s4 + $0x1a0] sm:$0xff]
        %v1046 = vld [vmem:[%s4 + $0x1a8] sm:$0xff]
        %v1047 = vld [vmem:[%s4 + $0x1b0] sm:$0xff]
        %v1048 = vld [vmem:[%s4 + $0x1b8] sm:$0xff]
        %v1049 = vld [vmem:[%s4 + $0x1c0] sm:$0xff]
        %v1050 = vld [vmem:[%s4 + $0x1c8] sm:$0xff]
        %v1051 = vld [vmem:[%s4 + $0x1d0] sm:$0xff]
        %v1052 = vld [vmem:[%s4 + $0x1d8] sm:$0xff]
        %v1053 = vld [vmem:[%s4 + $0x1e0] sm:$0xff]
        %v1054 = vld [vmem:[%s4 + $0x1e8] sm:$0xff]
        %v1055 = vld [vmem:[%s4 + $0x1f0] sm:$0xff]
        %v1056 = vld [vmem:[%s4 + $0x1f8] sm:$0xff]
        %v1057 = vld [vmem:[%s4 + $0x200] sm:$0xff]
        %v1058 = vld [vmem:[%s4 + $0x208] sm:$0xff]
        %v1059 = vld [vmem:[%s4 + $0x210] sm:$0xff]
        %v1060 = vld [vmem:[%s4 + $0x218] sm:$0xff]
        %v1061 = vld [vmem:[%s4 + $0x220] sm:$0xff]
        %v1062 = vld [vmem:[%s4 + $0x228] sm:$0xff]
        %v1063 = vld [vmem:[%s4 + $0x230] sm:$0xff]
        %v1064 = vld [vmem:[%s4 + $0x238] sm:$0xff]
        %v1065 = vld [vmem:[%s4 + $0x240] sm:$0xff]
        %v1066 = vld [vmem:[%s4 + $0x248] sm:$0xff]
        %v1067 = vld [vmem:[%s4 + $0x250] sm:$0xff]
        %v1068 = vld [vmem:[%s4 + $0x258] sm:$0xff]
        %v1069 = vld [vmem:[%s4 + $0x260] sm:$0xff]
        %v1070 = vld [vmem:[%s4 + $0x268] sm:$0xff]
        %v1071 = vld [vmem:[%s4 + $0x270] sm:$0xff]
        %v1072 = vld [vmem:[%s4 + $0x278] sm:$0xff]
        %v1073 = vld [vmem:[%s4 + $0x280] sm:$0xff]
        %v1074 = vld [vmem:[%s4 + $0x288] sm:$0xff]
        %v1075 = vld [vmem:[%s4 + $0x290] sm:$0xff]
        %v1076 = vld [vmem:[%s4 + $0x298] sm:$0xff]
        %v1077 = vld [vmem:[%s4 + $0x2a0] sm:$0xff]
        %v1078 = vld [vmem:[%s4 + $0x2a8] sm:$0xff]
        %v1079 = vld [vmem:[%s4 + $0x2b0] sm:$0xff]
        %v1080 = vld [vmem:[%s4 + $0x2b8] sm:$0xff]
        %v1081 = vld [vmem:[%s4 + $0x2c0] sm:$0xff]
        %v1082 = vld [vmem:[%s4 + $0x2c8] sm:$0xff]
        %v1083 = vld [vmem:[%s4 + $0x2d0] sm:$0xff]
        %v1084 = vld [vmem:[%s4 + $0x2d8] sm:$0xff]
        %v1085 = vld [vmem:[%s4 + $0x2e0] sm:$0xff]
        %v1086 = vld [vmem:[%s4 + $0x2e8] sm:$0xff]
        %v1087 = vld [vmem:[%s4 + $0x2f0] sm:$0xff]
        %v1088 = vld [vmem:[%s4 + $0x2f8] sm:$0xff]
        %v1089 = vld [vmem:[%s4 + $0x300] sm:$0xff]
        %v1090 = vld [vmem:[%s4 + $0x308] sm:$0xff]
        %v1091 = vld [vmem:[%s4 + $0x310] sm:$0xff]
        %v1092 = vld [vmem:[%s4 + $0x318] sm:$0xff]
        %v1093 = vld [vmem:[%s4 + $0x320] sm:$0xff]
        %v1094 = vld [vmem:[%s4 + $0x328] sm:$0xff]
        %v1095 = vld [vmem:[%s4 + $0x330] sm:$0xff]
        %v1096 = vld [vmem:[%s4 + $0x338] sm:$0xff]
        %v1097 = vld [vmem:[%s4 + $0x340] sm:$0xff]
        %v1098 = vld [vmem:[%s4 + $0x348] sm:$0xff]
        %v1099 = vld [vmem:[%s4 + $0x350] sm:$0xff]
        %v1100 = vld [vmem:[%s4 + $0x358] sm:$0xff]
        %v1101 = vld [vmem:[%s5] sm:$0x3]
        %v1102 = vld [vmem:[%s6] sm:$0xf]
        %v1103 = vld [vmem:[%s6 + $0x4] sm:$0xf]
        %v1104 = vld [vmem:[%s6 + $0x8] sm:$0xf]
        %v1105 = vld [vmem:[%s6 + $0xc] sm:$0xf]
        %v1106 = vld [vmem:[%s6 + $0x10] sm:$0xf]
        %v1107 = vld [vmem:[%s6 + $0x14] sm:$0xf]
        %v1108 = vld [vmem:[%s6 + $0x18] sm:$0xf]
        %v1109 = vld [vmem:[%s6 + $0x1c] sm:$0xf]
        %v1110 = vld [vmem:[%s6 + $0x20] sm:$0xf]
        %v1111 = vld [vmem:[%s6 + $0x24] sm:$0xf]
        %v1112 = vld [vmem:[%s6 + $0x28] sm:$0xf]
        %v1113 = vld [vmem:[%s6 + $0x2c] sm:$0xf]
        %v1114 = vld [vmem:[%s6 + $0x30] sm:$0xf]
        %v1115 = vld [vmem:[%s6 + $0x34] sm:$0xf]
        %v1116 = vld [vmem:[%s6 + $0x38] sm:$0xf]
        %v1117 = vld [vmem:[%s6 + $0x3c] sm:$0xf]
        %v1118 = vld [vmem:[%s6 + $0x40] sm:$0xf]
        %v1119 = vld [vmem:[%s6 + $0x44] sm:$0xf]
        %v1120 = vld [vmem:[%s7] sm:$0xff]
        %v1121 = vld [vmem:[%s7 + $0x8] sm:$0xff]
        %v1122 = vld [vmem:[%s7 + $0x10] sm:$0xff]
        %v1123 = vld [vmem:[%s7 + $0x18] sm:$0xff]
        %v1124 = vld [vmem:[%s7 + $0x20] sm:$0xff]
        %v1125 = vld [vmem:[%s7 + $0x28] sm:$0xff]
        %v1126 = vld [vmem:[%s7 + $0x30] sm:$0xff]
        %v1127 = vld [vmem:[%s7 + $0x38] sm:$0xff]
        %v1128 = vld [vmem:[%s7 + $0x40] sm:$0xff]
        %v1129 = vld [vmem:[%s7 + $0x48] sm:$0xff]
        %v1130 = vld [vmem:[%s7 + $0x50] sm:$0xff]
        %v1131 = vld [vmem:[%s7 + $0x58] sm:$0xff]
        %v1132 = vld [vmem:[%s7 + $0x60] sm:$0xff]
        %v1133 = vld [vmem:[%s7 + $0x68] sm:$0xff]
        %v1134 = vld [vmem:[%s7 + $0x70] sm:$0xff]
        %v1135 = vld [vmem:[%s7 + $0x78] sm:$0xff]
        %v1136 = vld [vmem:[%s7 + $0x80] sm:$0xff]
        %v1137 = vld [vmem:[%s7 + $0x88] sm:$0xff]
        %v1138 = vld [vmem:[%s7 + $0x90] sm:$0xff]
        %v1139 = vld [vmem:[%s7 + $0x98] sm:$0xff]
        %v1140 = vld [vmem:[%s7 + $0xa0] sm:$0xff]
        %v1141 = vld [vmem:[%s7 + $0xa8] sm:$0xff]
        %v1142 = vld [vmem:[%s7 + $0xb0] sm:$0xff]
        %v1143 = vld [vmem:[%s7 + $0xb8] sm:$0xff]
        %v1144 = vld [vmem:[%s7 + $0xc0] sm:$0xff]
        %v1145 = vld [vmem:[%s7 + $0xc8] sm:$0xff]
        %v1146 = vld [vmem:[%s7 + $0xd0] sm:$0xff]
        %v1147 = vld [vmem:[%s7 + $0xd8] sm:$0xff]
        %v1148 = vld [vmem:[%s7 + $0xe0] sm:$0xff]
        %v1149 = vld [vmem:[%s7 + $0xe8] sm:$0xff]
        %v1150 = vld [vmem:[%s7 + $0xf0] sm:$0xff]
        %v1151 = vld [vmem:[%s7 + $0xf8] sm:$0xff]
        %v1152 = vld [vmem:[%s8] sm:$0x3]
        %v1153 = vld [vmem:[%s9] sm:$0xf]
        %v1154 = vld [vmem:[%s9 + $0x4] sm:$0xf]
        %v1155 = vld [vmem:[%s9 + $0x8] sm:$0xf]
        %v1156 = vld [vmem:[%s9 + $0xc] sm:$0xf]
        %v1157 = vld [vmem:[%s9 + $0x10] sm:$0xf]
        %v1158 = vld [vmem:[%s9 + $0x14] sm:$0xf]
        %v1159 = vld [vmem:[%s9 + $0x18] sm:$0xf]
        %v1160 = vld [vmem:[%s9 + $0x1c] sm:$0xf]
        %v1161 = vld [vmem:[%s9 + $0x20] sm:$0xf]
        %v1162 = vld [vmem:[%s9 + $0x24] sm:$0xf]
        %v1163 = vld [vmem:[%s9 + $0x28] sm:$0xf]
        %v1164 = vld [vmem:[%s9 + $0x2c] sm:$0xf]
        %v1165 = vld [vmem:[%s9 + $0x30] sm:$0xf]
        %v1166 = vld [vmem:[%s9 + $0x34] sm:$0xf]
        %v1167 = vld [vmem:[%s9 + $0x38] sm:$0xf]
        %v1168 = vld [vmem:[%s9 + $0x3c] sm:$0xf]
        %v1169 = vld [vmem:[%s9 + $0x40] sm:$0xf]
        %v1170 = vld [vmem:[%s9 + $0x44] sm:$0xf]
        %v1171 = vld [vmem:[%s10] sm:$0x1]
        %v1172 = vld [vmem:[%s11] sm:$0xf]
        %v1173 = vld [vmem:[%s11 + $0x4] sm:$0xf]
        %v1174 = vld [vmem:[%s11 + $0x8] sm:$0xf]
        %v1175 = vld [vmem:[%s11 + $0xc] sm:$0xf]
        %v1176 = vld [vmem:[%s11 + $0x10] sm:$0xf]
        %v1177 = vld [vmem:[%s11 + $0x14] sm:$0xf]
        %v1178 = vld [vmem:[%s11 + $0x18] sm:$0xf]
        %v1179 = vld [vmem:[%s11 + $0x1c] sm:$0xf]
        %v1180 = vld [vmem:[%s11 + $0x20] sm:$0xf]
        %v1181 = vld [vmem:[%s11 + $0x24] sm:$0xf]
        %v1182 = vld [vmem:[%s11 + $0x28] sm:$0x3]
        %v1183 = vld [vmem:[%s12] sm:$0x1]
        %v1184 = vld [vmem:[%s874] sm:$0xff]
        %v1185 = vld [vmem:[%s874 + $0x8] sm:$0xff]
        %v1186 = vld [vmem:[%s874 + $0x10] sm:$0xff]
        %v1187 = vld [vmem:[%s874 + $0x18] sm:$0xff]
        %v1188 = vld [vmem:[%s874 + $0x20] sm:$0xff]
        %v1189 = vld [vmem:[%s874 + $0x28] sm:$0xff]
        %v1190 = vld [vmem:[%s874 + $0x30] sm:$0xff]
        %v1191 = vld [vmem:[%s874 + $0x38] sm:$0xff]
        %v1192 = vld [vmem:[%s874 + $0x40] sm:$0xff]
        %v1193 = vld [vmem:[%s874 + $0x48] sm:$0xff]
        %v1194 = vld [vmem:[%s874 + $0x50] sm:$0xff]
        %v1195 = vld [vmem:[%s874 + $0x58] sm:$0xff]
        %v1196 = vld [vmem:[%s874 + $0x60] sm:$0xff]
        %v1197 = vld [vmem:[%s874 + $0x68] sm:$0xff]
        %v1198 = vld [vmem:[%s874 + $0x70] sm:$0xff]
        %v1199 = vld [vmem:[%s874 + $0x78] sm:$0xff]
        %v1200 = vld [vmem:[%s874 + $0x80] sm:$0xff]
        %v1201 = vld [vmem:[%s874 + $0x88] sm:$0xff]
        %v1202 = vld [vmem:[%s874 + $0x90] sm:$0xff]
        %v1203 = vld [vmem:[%s874 + $0x98] sm:$0xff]
        %v1204 = vld [vmem:[%s874 + $0xa0] sm:$0xff]
        %v1205 = vld [vmem:[%s874 + $0xa8] sm:$0xff]
        %v1206 = vld [vmem:[%s874 + $0xb0] sm:$0xff]
        %v1207 = vld [vmem:[%s874 + $0xb8] sm:$0xff]
        %v1208 = vld [vmem:[%s874 + $0xc0] sm:$0xff]
        %v1209 = vld [vmem:[%s874 + $0xc8] sm:$0xff]
        %v1210 = vld [vmem:[%s874 + $0xd0] sm:$0xff]
        %v1211 = vld [vmem:[%s874 + $0xd8] sm:$0xff]
        %v1212 = vld [vmem:[%s874 + $0xe0] sm:$0xff]
        %v1213 = vld [vmem:[%s874 + $0xe8] sm:$0xff]
        %v1214 = vld [vmem:[%s874 + $0xf0] sm:$0xff]
        %v1215 = vld [vmem:[%s874 + $0xf8] sm:$0xff]
        %v1216 = vld [vmem:[%s874 + $0x100] sm:$0xff]
        %v1217 = vld [vmem:[%s874 + $0x108] sm:$0xff]
        %v1218 = vld [vmem:[%s874 + $0x110] sm:$0xff]
        %v1219 = vld [vmem:[%s874 + $0x118] sm:$0xff]
        %v1220 = vld [vmem:[%s874 + $0x120] sm:$0xff]
        %v1221 = vld [vmem:[%s874 + $0x128] sm:$0xff]
        %v1222 = vld [vmem:[%s874 + $0x130] sm:$0xff]
        %v1223 = vld [vmem:[%s874 + $0x138] sm:$0xff]
        %v1224 = vld [vmem:[%s874 + $0x140] sm:$0xff]
        %v1225 = vld [vmem:[%s874 + $0x148] sm:$0xff]
        %v1226 = vld [vmem:[%s874 + $0x150] sm:$0xff]
        %v1227 = vld [vmem:[%s874 + $0x158] sm:$0xff]
        %v1228 = vld [vmem:[%s874 + $0x160] sm:$0xff]
        %v1229 = vld [vmem:[%s874 + $0x168] sm:$0xff]
        %v1230 = vld [vmem:[%s874 + $0x170] sm:$0xff]
        %v1231 = vld [vmem:[%s874 + $0x178] sm:$0xff]
        %v1232 = vld [vmem:[%s874 + $0x180] sm:$0xff]
        %v1233 = vld [vmem:[%s874 + $0x188] sm:$0xff]
        %v1234 = vld [vmem:[%s874 + $0x190] sm:$0xff]
        %v1235 = vld [vmem:[%s874 + $0x198] sm:$0xff]
        %v1236 = vld [vmem:[%s874 + $0x1a0] sm:$0xff]
        %v1237 = vld [vmem:[%s874 + $0x1a8] sm:$0xff]
        %v1238 = vld [vmem:[%s874 + $0x1b0] sm:$0xff]
        %v1239 = vld [vmem:[%s874 + $0x1b8] sm:$0xff]
        %v1240 = vld [vmem:[%s874 + $0x1c0] sm:$0xff]
        %v1241 = vld [vmem:[%s874 + $0x1c8] sm:$0xff]
        %v1242 = vld [vmem:[%s874 + $0x1d0] sm:$0xff]
        %v1243 = vld [vmem:[%s874 + $0x1d8] sm:$0xff]
        %v1244 = vld [vmem:[%s874 + $0x1e0] sm:$0xff]
        %v1245 = vld [vmem:[%s874 + $0x1e8] sm:$0xff]
        %v1246 = vld [vmem:[%s874 + $0x1f0] sm:$0xff]
        %v1247 = vld [vmem:[%s874 + $0x1f8] sm:$0xff]
        %v1248 = vld [vmem:[%s874 + $0x200] sm:$0xff]
        %v1249 = vld [vmem:[%s874 + $0x208] sm:$0xff]
        %v1250 = vld [vmem:[%s874 + $0x210] sm:$0xff]
        %v1251 = vld [vmem:[%s874 + $0x218] sm:$0xff]
        %v1252 = vld [vmem:[%s874 + $0x220] sm:$0xff]
        %v1253 = vld [vmem:[%s874 + $0x228] sm:$0xff]
        %v1254 = vld [vmem:[%s874 + $0x230] sm:$0xff]
        %v1255 = vld [vmem:[%s874 + $0x238] sm:$0xff]
        %v1256 = vld [vmem:[%s874 + $0x240] sm:$0xff]
        %v1257 = vld [vmem:[%s874 + $0x248] sm:$0xff]
        %v1258 = vld [vmem:[%s874 + $0x250] sm:$0xff]
        %v1259 = vld [vmem:[%s874 + $0x258] sm:$0xff]
        %v1260 = vld [vmem:[%s874 + $0x260] sm:$0xff]
        %v1261 = vld [vmem:[%s874 + $0x268] sm:$0xff]
        %v1262 = vld [vmem:[%s874 + $0x270] sm:$0xff]
        %v1263 = vld [vmem:[%s874 + $0x278] sm:$0xff]
        %v1264 = vld [vmem:[%s874 + $0x280] sm:$0xff]
        %v1265 = vld [vmem:[%s874 + $0x288] sm:$0xff]
        %v1266 = vld [vmem:[%s874 + $0x290] sm:$0xff]
        %v1267 = vld [vmem:[%s874 + $0x298] sm:$0xff]
        %v1268 = vld [vmem:[%s874 + $0x2a0] sm:$0xff]
        %v1269 = vld [vmem:[%s874 + $0x2a8] sm:$0xff]
        %v1270 = vld [vmem:[%s874 + $0x2b0] sm:$0xff]
        %v1271 = vld [vmem:[%s874 + $0x2b8] sm:$0xff]
        %v1272 = vld [vmem:[%s874 + $0x2c0] sm:$0xff]
        %v1273 = vld [vmem:[%s874 + $0x2c8] sm:$0xff]
        %v1274 = vld [vmem:[%s874 + $0x2d0] sm:$0xff]
        %v1275 = vld [vmem:[%s874 + $0x2d8] sm:$0xff]
        %v1276 = vld [vmem:[%s874 + $0x2e0] sm:$0xff]
        %v1277 = vld [vmem:[%s874 + $0x2e8] sm:$0xff]
        %v1278 = vld [vmem:[%s874 + $0x2f0] sm:$0xff]
        %v1279 = vld [vmem:[%s874 + $0x2f8] sm:$0xff]
        %v1280 = vld [vmem:[%s874 + $0x300] sm:$0xff]
        %v1281 = vld [vmem:[%s874 + $0x308] sm:$0xff]
        %v1282 = vld [vmem:[%s874 + $0x310] sm:$0xff]
        %v1283 = vld [vmem:[%s874 + $0x318] sm:$0xff]
        %v1284 = vld [vmem:[%s874 + $0x320] sm:$0xff]
        %v1285 = vld [vmem:[%s874 + $0x328] sm:$0xff]
        %v1286 = vld [vmem:[%s874 + $0x330] sm:$0xff]
        %v1287 = vld [vmem:[%s874 + $0x338] sm:$0xff]
        %v1288 = vld [vmem:[%s874 + $0x340] sm:$0xff]
        %v1289 = vld [vmem:[%s874 + $0x348] sm:$0xff]
        %v1290 = vld [vmem:[%s874 + $0x350] sm:$0xff]
        %v1291 = vld [vmem:[%s874 + $0x358] sm:$0xff]
        %v1292 = vld [vmem:[%s874 + $0x360] sm:$0xff]
        %v1293 = vld [vmem:[%s874 + $0x368] sm:$0xff]
        %v1294 = vld [vmem:[%s874 + $0x370] sm:$0xff]
        %v1295 = vld [vmem:[%s874 + $0x378] sm:$0xff]
        %v1296 = vpack.c.bf16 %v1185, %v1184
        %v1297 = vpack.c.bf16 %v1187, %v1186
        %v1298 = vpack.c.bf16 %v1189, %v1188
        %v1299 = vpack.c.bf16 %v1191, %v1190
        %v1300 = vpack.c.bf16 %v1193, %v1192
        %v1301 = vpack.c.bf16 %v1195, %v1194
        %v1302 = vpack.c.bf16 %v1197, %v1196
        %v1303 = vpack.c.bf16 %v1199, %v1198
        %v1304 = vpack.c.bf16 %v1201, %v1200
        %v1305 = vpack.c.bf16 %v1203, %v1202
        %v1306 = vpack.c.bf16 %v1205, %v1204
        %v1307 = vpack.c.bf16 %v1207, %v1206
        %v1308 = vpack.c.bf16 %v1209, %v1208
        %v1309 = vpack.c.bf16 %v1211, %v1210
        %v1310 = vpack.c.bf16 %v1213, %v1212
        %v1311 = vpack.c.bf16 %v1215, %v1214
        %v1312 = vpack.c.bf16 %v1217, %v1216
        %v1313 = vpack.c.bf16 %v1219, %v1218
        %v1314 = vpack.c.bf16 %v1221, %v1220
        %v1315 = vpack.c.bf16 %v1223, %v1222
        %v1316 = vpack.c.bf16 %v1225, %v1224
        %v1317 = vpack.c.bf16 %v1227, %v1226
        %v1318 = vpack.c.bf16 %v1229, %v1228
        %v1319 = vpack.c.bf16 %v1231, %v1230
        %v1320 = vpack.c.bf16 %v1233, %v1232
        %v1321 = vpack.c.bf16 %v1235, %v1234
        %v1322 = vpack.c.bf16 %v1237, %v1236
        %v1323 = vpack.c.bf16 %v1239, %v1238
        %v1324 = vpack.c.bf16 %v1241, %v1240
        %v1325 = vpack.c.bf16 %v1243, %v1242
        %v1326 = vpack.c.bf16 %v1245, %v1244
        %v1327 = vpack.c.bf16 %v1247, %v1246
        %v1328 = vpack.c.bf16 %v1249, %v1248
        %v1329 = vpack.c.bf16 %v1251, %v1250
        %v1330 = vpack.c.bf16 %v1253, %v1252
        %v1331 = vpack.c.bf16 %v1255, %v1254
        %v1332 = vpack.c.bf16 %v1257, %v1256
        %v1333 = vpack.c.bf16 %v1259, %v1258
        %v1334 = vpack.c.bf16 %v1261, %v1260
        %v1335 = vpack.c.bf16 %v1263, %v1262
        %v1336 = vpack.c.bf16 %v1265, %v1264
        %v1337 = vpack.c.bf16 %v1267, %v1266
        %v1338 = vpack.c.bf16 %v1269, %v1268
        %v1339 = vpack.c.bf16 %v1271, %v1270
        %v1340 = vpack.c.bf16 %v1273, %v1272
        %v1341 = vpack.c.bf16 %v1275, %v1274
        %v1342 = vpack.c.bf16 %v1277, %v1276
        %v1343 = vpack.c.bf16 %v1279, %v1278
        %v1344 = vpack.c.bf16 %v1281, %v1280
        %v1345 = vpack.c.bf16 %v1283, %v1282
        %v1346 = vpack.c.bf16 %v1285, %v1284
        %v1347 = vpack.c.bf16 %v1287, %v1286
        %v1348 = vpack.c.bf16 %v1289, %v1288
        %v1349 = vpack.c.bf16 %v1291, %v1290
        %v1350 = vpack.c.bf16 %v1293, %v1292
        %v1351 = vpack.c.bf16 %v1295, %v1294
        %1402 = vrot.lane.b32.xlu0 %v1296, 24
        %v1403 = vpop.permute.xlu0 %1402
        %1404 = vrot.lane.b32.xlu0 %v1297, 24
        %v1405 = vpop.permute.xlu0 %1404
        %1406 = vrot.lane.b32.xlu0 %v1298, 24
        %v1407 = vpop.permute.xlu0 %1406
        %1408 = vrot.lane.b32.xlu0 %v1299, 24
        %v1409 = vpop.permute.xlu0 %1408
        %1410 = vrot.lane.b32.xlu0 %v1300, 24
        %v1411 = vpop.permute.xlu0 %1410
        %1412 = vrot.lane.b32.xlu0 %v1301, 24
        %v1413 = vpop.permute.xlu0 %1412
        %1414 = vrot.lane.b32.xlu0 %v1302, 24
        %v1415 = vpop.permute.xlu0 %1414
        %1416 = vrot.lane.b32.xlu0 %v1303, 24
        %v1417 = vpop.permute.xlu0 %1416
        %1418 = vrot.lane.b32.xlu0 %v1304, 24
        %v1419 = vpop.permute.xlu0 %1418
        %1420 = vrot.lane.b32.xlu0 %v1305, 24
        %v1421 = vpop.permute.xlu0 %1420
        %1422 = vrot.lane.b32.xlu0 %v1306, 24
        %v1423 = vpop.permute.xlu0 %1422
        %1424 = vrot.lane.b32.xlu0 %v1307, 24
        %v1425 = vpop.permute.xlu0 %1424
        %1426 = vrot.lane.b32.xlu0 %v1308, 24
        %v1427 = vpop.permute.xlu0 %1426
        %1428 = vrot.lane.b32.xlu0 %v1309, 24
        %v1429 = vpop.permute.xlu0 %1428
        %1430 = vrot.lane.b32.xlu0 %v1310, 24
        %v1431 = vpop.permute.xlu0 %1430
        %1432 = vrot.lane.b32.xlu0 %v1311, 24
        %v1433 = vpop.permute.xlu0 %1432
        %1434 = vrot.lane.b32.xlu0 %v1312, 24
        %v1435 = vpop.permute.xlu0 %1434
        %1436 = vrot.lane.b32.xlu0 %v1313, 24
        %v1437 = vpop.permute.xlu0 %1436
        %1438 = vrot.lane.b32.xlu0 %v1314, 24
        %v1439 = vpop.permute.xlu0 %1438
        %1440 = vrot.lane.b32.xlu0 %v1315, 24
        %v1441 = vpop.permute.xlu0 %1440
        %1442 = vrot.lane.b32.xlu0 %v1316, 24
        %v1443 = vpop.permute.xlu0 %1442
        %1444 = vrot.lane.b32.xlu0 %v1317, 24
        %v1445 = vpop.permute.xlu0 %1444
        %1446 = vrot.lane.b32.xlu0 %v1318, 24
        %v1447 = vpop.permute.xlu0 %1446
        %1448 = vrot.lane.b32.xlu0 %v1319, 24
        %v1449 = vpop.permute.xlu0 %1448
        %1450 = vrot.lane.b32.xlu0 %v1320, 24
        %v1451 = vpop.permute.xlu0 %1450
        %1452 = vrot.lane.b32.xlu0 %v1321, 24
        %v1453 = vpop.permute.xlu0 %1452
        %1454 = vrot.lane.b32.xlu0 %v1322, 24
        %v1455 = vpop.permute.xlu0 %1454
        %1456 = vrot.lane.b32.xlu0 %v1323, 24
        %v1457 = vpop.permute.xlu0 %1456
        %1458 = vrot.lane.b32.xlu0 %v1324, 24
        %v1459 = vpop.permute.xlu0 %1458
        %1460 = vrot.lane.b32.xlu0 %v1325, 24
        %v1461 = vpop.permute.xlu0 %1460
        %1462 = vrot.lane.b32.xlu0 %v1326, 24
        %v1463 = vpop.permute.xlu0 %1462
        %1464 = vrot.lane.b32.xlu0 %v1327, 24
        %v1465 = vpop.permute.xlu0 %1464
        %1466 = vrot.lane.b32.xlu0 %v1328, 24
        %v1467 = vpop.permute.xlu0 %1466
        %1468 = vrot.lane.b32.xlu0 %v1329, 24
        %v1469 = vpop.permute.xlu0 %1468
        %1470 = vrot.lane.b32.xlu0 %v1330, 24
        %v1471 = vpop.permute.xlu0 %1470
        %1472 = vrot.lane.b32.xlu0 %v1331, 24
        %v1473 = vpop.permute.xlu0 %1472
        %1474 = vrot.lane.b32.xlu0 %v1332, 24
        %v1475 = vpop.permute.xlu0 %1474
        %1476 = vrot.lane.b32.xlu0 %v1333, 24
        %v1477 = vpop.permute.xlu0 %1476
        %1478 = vrot.lane.b32.xlu0 %v1334, 24
        %v1479 = vpop.permute.xlu0 %1478
        %1480 = vrot.lane.b32.xlu0 %v1335, 24
        %v1481 = vpop.permute.xlu0 %1480
        %1482 = vrot.lane.b32.xlu0 %v1336, 24
        %v1483 = vpop.permute.xlu0 %1482
        %1484 = vrot.lane.b32.xlu0 %v1337, 24
        %v1485 = vpop.permute.xlu0 %1484
        %1486 = vrot.lane.b32.xlu0 %v1338, 24
        %v1487 = vpop.permute.xlu0 %1486
        %1488 = vrot.lane.b32.xlu0 %v1339, 24
        %v1489 = vpop.permute.xlu0 %1488
        %1490 = vrot.lane.b32.xlu0 %v1340, 24
        %v1491 = vpop.permute.xlu0 %1490
        %1492 = vrot.lane.b32.xlu0 %v1341, 24
        %v1493 = vpop.permute.xlu0 %1492
        %1494 = vrot.lane.b32.xlu0 %v1342, 24
        %v1495 = vpop.permute.xlu0 %1494
        %1496 = vrot.lane.b32.xlu0 %v1343, 24
        %v1497 = vpop.permute.xlu0 %1496
        %1498 = vrot.lane.b32.xlu0 %v1344, 24
        %v1499 = vpop.permute.xlu0 %1498
        %1500 = vrot.lane.b32.xlu0 %v1345, 24
        %v1501 = vpop.permute.xlu0 %1500
        %1502 = vrot.lane.b32.xlu0 %v1296, 48
        %v1503 = vpop.permute.xlu0 %1502
        %1504 = vrot.lane.b32.xlu0 %v1297, 48
        %v1505 = vpop.permute.xlu0 %1504
        %1506 = vrot.lane.b32.xlu0 %v1298, 48
        %v1507 = vpop.permute.xlu0 %1506
        %1508 = vrot.lane.b32.xlu0 %v1299, 48
        %v1509 = vpop.permute.xlu0 %1508
        %1510 = vrot.lane.b32.xlu0 %v1300, 48
        %v1511 = vpop.permute.xlu0 %1510
        %1512 = vrot.lane.b32.xlu0 %v1301, 48
        %v1513 = vpop.permute.xlu0 %1512
        %1514 = vrot.lane.b32.xlu0 %v1302, 48
        %v1515 = vpop.permute.xlu0 %1514
        %1516 = vrot.lane.b32.xlu0 %v1303, 48
        %v1517 = vpop.permute.xlu0 %1516
        %1518 = vrot.lane.b32.xlu0 %v1304, 48
        %v1519 = vpop.permute.xlu0 %1518
        %1520 = vrot.lane.b32.xlu0 %v1305, 48
        %v1521 = vpop.permute.xlu0 %1520
        %1522 = vrot.lane.b32.xlu0 %v1306, 48
        %v1523 = vpop.permute.xlu0 %1522
        %1524 = vrot.lane.b32.xlu0 %v1307, 48
        %v1525 = vpop.permute.xlu0 %1524
        %1526 = vrot.lane.b32.xlu0 %v1308, 48
        %v1527 = vpop.permute.xlu0 %1526
        %1528 = vrot.lane.b32.xlu0 %v1309, 48
        %v1529 = vpop.permute.xlu0 %1528
        %1530 = vrot.lane.b32.xlu0 %v1310, 48
        %v1531 = vpop.permute.xlu0 %1530
        %1532 = vrot.lane.b32.xlu0 %v1311, 48
        %v1533 = vpop.permute.xlu0 %1532
        %1534 = vrot.lane.b32.xlu0 %v1312, 48
        %v1535 = vpop.permute.xlu0 %1534
        %1536 = vrot.lane.b32.xlu0 %v1313, 48
        %v1537 = vpop.permute.xlu0 %1536
        %1538 = vrot.lane.b32.xlu0 %v1314, 48
        %v1539 = vpop.permute.xlu0 %1538
        %1540 = vrot.lane.b32.xlu0 %v1315, 48
        %v1541 = vpop.permute.xlu0 %1540
        %1542 = vrot.lane.b32.xlu0 %v1316, 48
        %v1543 = vpop.permute.xlu0 %1542
        %1544 = vrot.lane.b32.xlu0 %v1317, 48
        %v1545 = vpop.permute.xlu0 %1544
        %1546 = vrot.lane.b32.xlu0 %v1318, 48
        %v1547 = vpop.permute.xlu0 %1546
        %1548 = vrot.lane.b32.xlu0 %v1319, 48
        %v1549 = vpop.permute.xlu0 %1548
        %1550 = vrot.lane.b32.xlu0 %v1320, 48
        %v1551 = vpop.permute.xlu0 %1550
        %1552 = vrot.lane.b32.xlu0 %v1321, 48
        %v1553 = vpop.permute.xlu0 %1552
        %1554 = vrot.lane.b32.xlu0 %v1322, 48
        %v1555 = vpop.permute.xlu0 %1554
        %1556 = vrot.lane.b32.xlu0 %v1323, 48
        %v1557 = vpop.permute.xlu0 %1556
        %1558 = vrot.lane.b32.xlu0 %v1324, 48
        %v1559 = vpop.permute.xlu0 %1558
        %1560 = vrot.lane.b32.xlu0 %v1325, 48
        %v1561 = vpop.permute.xlu0 %1560
        %1562 = vrot.lane.b32.xlu0 %v1326, 48
        %v1563 = vpop.permute.xlu0 %1562
        %1564 = vrot.lane.b32.xlu0 %v1327, 48
        %v1565 = vpop.permute.xlu0 %1564
        %1566 = vrot.lane.b32.xlu0 %v1328, 48
        %v1567 = vpop.permute.xlu0 %1566
        %1568 = vrot.lane.b32.xlu0 %v1329, 48
        %v1569 = vpop.permute.xlu0 %1568
        %1570 = vrot.lane.b32.xlu0 %v1330, 48
        %v1571 = vpop.permute.xlu0 %1570
        %1572 = vrot.lane.b32.xlu0 %v1331, 48
        %v1573 = vpop.permute.xlu0 %1572
        %1574 = vrot.lane.b32.xlu0 %v1332, 48
        %v1575 = vpop.permute.xlu0 %1574
        %1576 = vrot.lane.b32.xlu0 %v1333, 48
        %v1577 = vpop.permute.xlu0 %1576
        %1578 = vrot.lane.b32.xlu0 %v1334, 48
        %v1579 = vpop.permute.xlu0 %1578
        %1580 = vrot.lane.b32.xlu0 %v1335, 48
        %v1581 = vpop.permute.xlu0 %1580
        %1582 = vrot.lane.b32.xlu0 %v1336, 48
        %v1583 = vpop.permute.xlu0 %1582
        %1584 = vrot.lane.b32.xlu0 %v1337, 48
        %v1585 = vpop.permute.xlu0 %1584
        %1586 = vrot.lane.b32.xlu0 %v1338, 48
        %v1587 = vpop.permute.xlu0 %1586
        %1588 = vrot.lane.b32.xlu0 %v1339, 48
        %v1589 = vpop.permute.xlu0 %1588
        %1590 = vrot.lane.b32.xlu0 %v1340, 48
        %v1591 = vpop.permute.xlu0 %1590
        %1592 = vrot.lane.b32.xlu0 %v1341, 48
        %v1593 = vpop.permute.xlu0 %1592
        %1594 = vrot.lane.b32.xlu0 %v1342, 48
        %v1595 = vpop.permute.xlu0 %1594
        %1596 = vrot.lane.b32.xlu0 %v1343, 48
        %v1597 = vpop.permute.xlu0 %1596
        %1598 = vrot.lane.b32.xlu0 %v1344, 48
        %v1599 = vpop.permute.xlu0 %1598
        %1600 = vrot.lane.b32.xlu0 %v1345, 48
        %v1601 = vpop.permute.xlu0 %1600
        %1602 = vrot.lane.b32.xlu0 %v1296, 72
        %v1603 = vpop.permute.xlu0 %1602
        %1604 = vrot.lane.b32.xlu0 %v1297, 72
        %v1605 = vpop.permute.xlu0 %1604
        %1606 = vrot.lane.b32.xlu0 %v1298, 72
        %v1607 = vpop.permute.xlu0 %1606
        %1608 = vrot.lane.b32.xlu0 %v1299, 72
        %v1609 = vpop.permute.xlu0 %1608
        %1610 = vrot.lane.b32.xlu0 %v1300, 72
        %v1611 = vpop.permute.xlu0 %1610
        %1612 = vrot.lane.b32.xlu0 %v1301, 72
        %v1613 = vpop.permute.xlu0 %1612
        %1614 = vrot.lane.b32.xlu0 %v1302, 72
        %v1615 = vpop.permute.xlu0 %1614
        %1616 = vrot.lane.b32.xlu0 %v1303, 72
        %v1617 = vpop.permute.xlu0 %1616
        %1618 = vrot.lane.b32.xlu0 %v1304, 72
        %v1619 = vpop.permute.xlu0 %1618
        %1620 = vrot.lane.b32.xlu0 %v1305, 72
        %v1621 = vpop.permute.xlu0 %1620
        %1622 = vrot.lane.b32.xlu0 %v1306, 72
        %v1623 = vpop.permute.xlu0 %1622
        %1624 = vrot.lane.b32.xlu0 %v1307, 72
        %v1625 = vpop.permute.xlu0 %1624
        %1626 = vrot.lane.b32.xlu0 %v1308, 72
        %v1627 = vpop.permute.xlu0 %1626
        %1628 = vrot.lane.b32.xlu0 %v1309, 72
        %v1629 = vpop.permute.xlu0 %1628
        %1630 = vrot.lane.b32.xlu0 %v1310, 72
        %v1631 = vpop.permute.xlu0 %1630
        %1632 = vrot.lane.b32.xlu0 %v1311, 72
        %v1633 = vpop.permute.xlu0 %1632
        %1634 = vrot.lane.b32.xlu0 %v1312, 72
        %v1635 = vpop.permute.xlu0 %1634
        %1636 = vrot.lane.b32.xlu0 %v1313, 72
        %v1637 = vpop.permute.xlu0 %1636
        %1638 = vrot.lane.b32.xlu0 %v1314, 72
        %v1639 = vpop.permute.xlu0 %1638
        %1640 = vrot.lane.b32.xlu0 %v1315, 72
        %v1641 = vpop.permute.xlu0 %1640
        %1642 = vrot.lane.b32.xlu0 %v1316, 72
        %v1643 = vpop.permute.xlu0 %1642
        %1644 = vrot.lane.b32.xlu0 %v1317, 72
        %v1645 = vpop.permute.xlu0 %1644
        %1646 = vrot.lane.b32.xlu0 %v1318, 72
        %v1647 = vpop.permute.xlu0 %1646
        %1648 = vrot.lane.b32.xlu0 %v1319, 72
        %v1649 = vpop.permute.xlu0 %1648
        %1650 = vrot.lane.b32.xlu0 %v1320, 72
        %v1651 = vpop.permute.xlu0 %1650
        %1652 = vrot.lane.b32.xlu0 %v1321, 72
        %v1653 = vpop.permute.xlu0 %1652
        %1654 = vrot.lane.b32.xlu0 %v1322, 72
        %v1655 = vpop.permute.xlu0 %1654
        %1656 = vrot.lane.b32.xlu0 %v1323, 72
        %v1657 = vpop.permute.xlu0 %1656
        %1658 = vrot.lane.b32.xlu0 %v1324, 72
        %v1659 = vpop.permute.xlu0 %1658
        %1660 = vrot.lane.b32.xlu0 %v1325, 72
        %v1661 = vpop.permute.xlu0 %1660
        %1662 = vrot.lane.b32.xlu0 %v1326, 72
        %v1663 = vpop.permute.xlu0 %1662
        %1664 = vrot.lane.b32.xlu0 %v1327, 72
        %v1665 = vpop.permute.xlu0 %1664
        %1666 = vrot.lane.b32.xlu0 %v1328, 72
        %v1667 = vpop.permute.xlu0 %1666
        %1668 = vrot.lane.b32.xlu0 %v1329, 72
        %v1669 = vpop.permute.xlu0 %1668
        %1670 = vrot.lane.b32.xlu0 %v1330, 72
        %v1671 = vpop.permute.xlu0 %1670
        %1672 = vrot.lane.b32.xlu0 %v1331, 72
        %v1673 = vpop.permute.xlu0 %1672
        %1674 = vrot.lane.b32.xlu0 %v1332, 72
        %v1675 = vpop.permute.xlu0 %1674
        %1676 = vrot.lane.b32.xlu0 %v1333, 72
        %v1677 = vpop.permute.xlu0 %1676
        %1678 = vrot.lane.b32.xlu0 %v1334, 72
        %v1679 = vpop.permute.xlu0 %1678
        %1680 = vrot.lane.b32.xlu0 %v1335, 72
        %v1681 = vpop.permute.xlu0 %1680
        %1682 = vrot.lane.b32.xlu0 %v1336, 72
        %v1683 = vpop.permute.xlu0 %1682
        %1684 = vrot.lane.b32.xlu0 %v1337, 72
        %v1685 = vpop.permute.xlu0 %1684
        %1686 = vrot.lane.b32.xlu0 %v1338, 72
        %v1687 = vpop.permute.xlu0 %1686
        %1688 = vrot.lane.b32.xlu0 %v1339, 72
        %v1689 = vpop.permute.xlu0 %1688
        %1690 = vrot.lane.b32.xlu0 %v1340, 72
        %v1691 = vpop.permute.xlu0 %1690
        %1692 = vrot.lane.b32.xlu0 %v1341, 72
        %v1693 = vpop.permute.xlu0 %1692
        %1694 = vrot.lane.b32.xlu0 %v1342, 72
        %v1695 = vpop.permute.xlu0 %1694
        %1696 = vrot.lane.b32.xlu0 %v1343, 72
        %v1697 = vpop.permute.xlu0 %1696
        %1698 = vrot.lane.b32.xlu0 %v1344, 72
        %v1699 = vpop.permute.xlu0 %1698
        %1700 = vrot.lane.b32.xlu0 %v1345, 72
        %v1701 = vpop.permute.xlu0 %1700
        %1704 = vrot.lane.b32.xlu0 %v1298, 100
        %v1705 = vpop.permute.xlu0 %1704
        %1706 = vrot.lane.b32.xlu0 %v1299, 100
        %v1707 = vpop.permute.xlu0 %1706
        %1708 = vrot.lane.b32.xlu0 %v1300, 100
        %v1709 = vpop.permute.xlu0 %1708
        %1710 = vrot.lane.b32.xlu0 %v1301, 100
        %v1711 = vpop.permute.xlu0 %1710
        %1712 = vrot.lane.b32.xlu0 %v1302, 100
        %v1713 = vpop.permute.xlu0 %1712
        %1714 = vrot.lane.b32.xlu0 %v1303, 100
        %v1715 = vpop.permute.xlu0 %1714
        %1716 = vrot.lane.b32.xlu0 %v1304, 100
        %v1717 = vpop.permute.xlu0 %1716
        %1718 = vrot.lane.b32.xlu0 %v1305, 100
        %v1719 = vpop.permute.xlu0 %1718
        %1720 = vrot.lane.b32.xlu0 %v1306, 100
        %v1721 = vpop.permute.xlu0 %1720
        %1722 = vrot.lane.b32.xlu0 %v1307, 100
        %v1723 = vpop.permute.xlu0 %1722
        %1724 = vrot.lane.b32.xlu0 %v1308, 100
        %v1725 = vpop.permute.xlu0 %1724
        %1726 = vrot.lane.b32.xlu0 %v1309, 100
        %v1727 = vpop.permute.xlu0 %1726
        %1728 = vrot.lane.b32.xlu0 %v1310, 100
        %v1729 = vpop.permute.xlu0 %1728
        %1730 = vrot.lane.b32.xlu0 %v1311, 100
        %v1731 = vpop.permute.xlu0 %1730
        %1732 = vrot.lane.b32.xlu0 %v1312, 100
        %v1733 = vpop.permute.xlu0 %1732
        %1734 = vrot.lane.b32.xlu0 %v1313, 100
        %v1735 = vpop.permute.xlu0 %1734
        %1736 = vrot.lane.b32.xlu0 %v1314, 100
        %v1737 = vpop.permute.xlu0 %1736
        %1738 = vrot.lane.b32.xlu0 %v1315, 100
        %v1739 = vpop.permute.xlu0 %1738
        %1740 = vrot.lane.b32.xlu0 %v1316, 100
        %v1741 = vpop.permute.xlu0 %1740
        %1742 = vrot.lane.b32.xlu0 %v1317, 100
        %v1743 = vpop.permute.xlu0 %1742
        %1744 = vrot.lane.b32.xlu0 %v1318, 100
        %v1745 = vpop.permute.xlu0 %1744
        %1746 = vrot.lane.b32.xlu0 %v1319, 100
        %v1747 = vpop.permute.xlu0 %1746
        %1748 = vrot.lane.b32.xlu0 %v1320, 100
        %v1749 = vpop.permute.xlu0 %1748
        %1750 = vrot.lane.b32.xlu0 %v1321, 100
        %v1751 = vpop.permute.xlu0 %1750
        %1752 = vrot.lane.b32.xlu0 %v1322, 100
        %v1753 = vpop.permute.xlu0 %1752
        %1754 = vrot.lane.b32.xlu0 %v1323, 100
        %v1755 = vpop.permute.xlu0 %1754
        %1756 = vrot.lane.b32.xlu0 %v1324, 100
        %v1757 = vpop.permute.xlu0 %1756
        %1758 = vrot.lane.b32.xlu0 %v1325, 100
        %v1759 = vpop.permute.xlu0 %1758
        %1760 = vrot.lane.b32.xlu0 %v1326, 100
        %v1761 = vpop.permute.xlu0 %1760
        %1762 = vrot.lane.b32.xlu0 %v1327, 100
        %v1763 = vpop.permute.xlu0 %1762
        %1764 = vrot.lane.b32.xlu0 %v1328, 100
        %v1765 = vpop.permute.xlu0 %1764
        %1766 = vrot.lane.b32.xlu0 %v1329, 100
        %v1767 = vpop.permute.xlu0 %1766
        %1768 = vrot.lane.b32.xlu0 %v1330, 100
        %v1769 = vpop.permute.xlu0 %1768
        %1770 = vrot.lane.b32.xlu0 %v1331, 100
        %v1771 = vpop.permute.xlu0 %1770
        %1772 = vrot.lane.b32.xlu0 %v1332, 100
        %v1773 = vpop.permute.xlu0 %1772
        %1774 = vrot.lane.b32.xlu0 %v1333, 100
        %v1775 = vpop.permute.xlu0 %1774
        %1776 = vrot.lane.b32.xlu0 %v1334, 100
        %v1777 = vpop.permute.xlu0 %1776
        %1778 = vrot.lane.b32.xlu0 %v1335, 100
        %v1779 = vpop.permute.xlu0 %1778
        %1780 = vrot.lane.b32.xlu0 %v1336, 100
        %v1781 = vpop.permute.xlu0 %1780
        %1782 = vrot.lane.b32.xlu0 %v1337, 100
        %v1783 = vpop.permute.xlu0 %1782
        %1784 = vrot.lane.b32.xlu0 %v1338, 100
        %v1785 = vpop.permute.xlu0 %1784
        %1786 = vrot.lane.b32.xlu0 %v1339, 100
        %v1787 = vpop.permute.xlu0 %1786
        %1788 = vrot.lane.b32.xlu0 %v1340, 100
        %v1789 = vpop.permute.xlu0 %1788
        %1790 = vrot.lane.b32.xlu0 %v1341, 100
        %v1791 = vpop.permute.xlu0 %1790
        %1792 = vrot.lane.b32.xlu0 %v1342, 100
        %v1793 = vpop.permute.xlu0 %1792
        %1794 = vrot.lane.b32.xlu0 %v1343, 100
        %v1795 = vpop.permute.xlu0 %1794
        %1796 = vrot.lane.b32.xlu0 %v1344, 100
        %v1797 = vpop.permute.xlu0 %1796
        %1798 = vrot.lane.b32.xlu0 %v1345, 100
        %v1799 = vpop.permute.xlu0 %1798
        %1800 = vrot.lane.b32.xlu0 %v1346, 100
        %v1801 = vpop.permute.xlu0 %1800
        %1802 = vrot.lane.b32.xlu0 %v1347, 100
        %v1803 = vpop.permute.xlu0 %1802
        %1804 = vrot.lane.b32.xlu0 %v1298, 124
        %v1805 = vpop.permute.xlu0 %1804
        %1806 = vrot.lane.b32.xlu0 %v1299, 124
        %v1807 = vpop.permute.xlu0 %1806
        %1808 = vrot.lane.b32.xlu0 %v1300, 124
        %v1809 = vpop.permute.xlu0 %1808
        %1810 = vrot.lane.b32.xlu0 %v1301, 124
        %v1811 = vpop.permute.xlu0 %1810
        %1812 = vrot.lane.b32.xlu0 %v1302, 124
        %v1813 = vpop.permute.xlu0 %1812
        %1814 = vrot.lane.b32.xlu0 %v1303, 124
        %v1815 = vpop.permute.xlu0 %1814
        %1816 = vrot.lane.b32.xlu0 %v1304, 124
        %v1817 = vpop.permute.xlu0 %1816
        %1818 = vrot.lane.b32.xlu0 %v1305, 124
        %v1819 = vpop.permute.xlu0 %1818
        %1820 = vrot.lane.b32.xlu0 %v1306, 124
        %v1821 = vpop.permute.xlu0 %1820
        %1822 = vrot.lane.b32.xlu0 %v1307, 124
        %v1823 = vpop.permute.xlu0 %1822
        %1824 = vrot.lane.b32.xlu0 %v1308, 124
        %v1825 = vpop.permute.xlu0 %1824
        %1826 = vrot.lane.b32.xlu0 %v1309, 124
        %v1827 = vpop.permute.xlu0 %1826
        %1828 = vrot.lane.b32.xlu0 %v1310, 124
        %v1829 = vpop.permute.xlu0 %1828
        %1830 = vrot.lane.b32.xlu0 %v1311, 124
        %v1831 = vpop.permute.xlu0 %1830
        %1832 = vrot.lane.b32.xlu0 %v1312, 124
        %v1833 = vpop.permute.xlu0 %1832
        %1834 = vrot.lane.b32.xlu0 %v1313, 124
        %v1835 = vpop.permute.xlu0 %1834
        %1836 = vrot.lane.b32.xlu0 %v1314, 124
        %v1837 = vpop.permute.xlu0 %1836
        %1838 = vrot.lane.b32.xlu0 %v1315, 124
        %v1839 = vpop.permute.xlu0 %1838
        %1840 = vrot.lane.b32.xlu0 %v1316, 124
        %v1841 = vpop.permute.xlu0 %1840
        %1842 = vrot.lane.b32.xlu0 %v1317, 124
        %v1843 = vpop.permute.xlu0 %1842
        %1844 = vrot.lane.b32.xlu0 %v1318, 124
        %v1845 = vpop.permute.xlu0 %1844
        %1846 = vrot.lane.b32.xlu0 %v1319, 124
        %v1847 = vpop.permute.xlu0 %1846
        %1848 = vrot.lane.b32.xlu0 %v1320, 124
        %v1849 = vpop.permute.xlu0 %1848
        %1850 = vrot.lane.b32.xlu0 %v1321, 124
        %v1851 = vpop.permute.xlu0 %1850
        %1852 = vrot.lane.b32.xlu0 %v1322, 124
        %v1853 = vpop.permute.xlu0 %1852
        %1854 = vrot.lane.b32.xlu0 %v1323, 124
        %v1855 = vpop.permute.xlu0 %1854
        %1856 = vrot.lane.b32.xlu0 %v1324, 124
        %v1857 = vpop.permute.xlu0 %1856
        %1858 = vrot.lane.b32.xlu0 %v1325, 124
        %v1859 = vpop.permute.xlu0 %1858
        %1860 = vrot.lane.b32.xlu0 %v1326, 124
        %v1861 = vpop.permute.xlu0 %1860
        %1862 = vrot.lane.b32.xlu0 %v1327, 124
        %v1863 = vpop.permute.xlu0 %1862
        %1864 = vrot.lane.b32.xlu0 %v1328, 124
        %v1865 = vpop.permute.xlu0 %1864
        %1866 = vrot.lane.b32.xlu0 %v1329, 124
        %v1867 = vpop.permute.xlu0 %1866
        %1868 = vrot.lane.b32.xlu0 %v1330, 124
        %v1869 = vpop.permute.xlu0 %1868
        %1870 = vrot.lane.b32.xlu0 %v1331, 124
        %v1871 = vpop.permute.xlu0 %1870
        %1872 = vrot.lane.b32.xlu0 %v1332, 124
        %v1873 = vpop.permute.xlu0 %1872
        %1874 = vrot.lane.b32.xlu0 %v1333, 124
        %v1875 = vpop.permute.xlu0 %1874
        %1876 = vrot.lane.b32.xlu0 %v1334, 124
        %v1877 = vpop.permute.xlu0 %1876
        %1878 = vrot.lane.b32.xlu0 %v1335, 124
        %v1879 = vpop.permute.xlu0 %1878
        %1880 = vrot.lane.b32.xlu0 %v1336, 124
        %v1881 = vpop.permute.xlu0 %1880
        %1882 = vrot.lane.b32.xlu0 %v1337, 124
        %v1883 = vpop.permute.xlu0 %1882
        %1884 = vrot.lane.b32.xlu0 %v1338, 124
        %v1885 = vpop.permute.xlu0 %1884
        %1886 = vrot.lane.b32.xlu0 %v1339, 124
        %v1887 = vpop.permute.xlu0 %1886
        %1888 = vrot.lane.b32.xlu0 %v1340, 124
        %v1889 = vpop.permute.xlu0 %1888
        %1890 = vrot.lane.b32.xlu0 %v1341, 124
        %v1891 = vpop.permute.xlu0 %1890
        %1892 = vrot.lane.b32.xlu0 %v1342, 124
        %v1893 = vpop.permute.xlu0 %1892
        %1894 = vrot.lane.b32.xlu0 %v1343, 124
        %v1895 = vpop.permute.xlu0 %1894
        %1896 = vrot.lane.b32.xlu0 %v1344, 124
        %v1897 = vpop.permute.xlu0 %1896
        %1898 = vrot.lane.b32.xlu0 %v1345, 124
        %v1899 = vpop.permute.xlu0 %1898
        %1900 = vrot.lane.b32.xlu0 %v1346, 124
        %v1901 = vpop.permute.xlu0 %1900
        %1902 = vrot.lane.b32.xlu0 %v1347, 124
        %v1903 = vpop.permute.xlu0 %1902
        %1904 = vrot.lane.b32.xlu0 %v1298, 20
        %v1905 = vpop.permute.xlu0 %1904
        %1906 = vrot.lane.b32.xlu0 %v1299, 20
        %v1907 = vpop.permute.xlu0 %1906
        %1908 = vrot.lane.b32.xlu0 %v1300, 20
        %v1909 = vpop.permute.xlu0 %1908
        %1910 = vrot.lane.b32.xlu0 %v1301, 20
        %v1911 = vpop.permute.xlu0 %1910
        %1912 = vrot.lane.b32.xlu0 %v1302, 20
        %v1913 = vpop.permute.xlu0 %1912
        %1914 = vrot.lane.b32.xlu0 %v1303, 20
        %v1915 = vpop.permute.xlu0 %1914
        %1916 = vrot.lane.b32.xlu0 %v1304, 20
        %v1917 = vpop.permute.xlu0 %1916
        %1918 = vrot.lane.b32.xlu0 %v1305, 20
        %v1919 = vpop.permute.xlu0 %1918
        %1920 = vrot.lane.b32.xlu0 %v1306, 20
        %v1921 = vpop.permute.xlu0 %1920
        %1922 = vrot.lane.b32.xlu0 %v1307, 20
        %v1923 = vpop.permute.xlu0 %1922
        %1924 = vrot.lane.b32.xlu0 %v1308, 20
        %v1925 = vpop.permute.xlu0 %1924
        %1926 = vrot.lane.b32.xlu0 %v1309, 20
        %v1927 = vpop.permute.xlu0 %1926
        %1928 = vrot.lane.b32.xlu0 %v1310, 20
        %v1929 = vpop.permute.xlu0 %1928
        %1930 = vrot.lane.b32.xlu0 %v1311, 20
        %v1931 = vpop.permute.xlu0 %1930
        %1932 = vrot.lane.b32.xlu0 %v1312, 20
        %v1933 = vpop.permute.xlu0 %1932
        %1934 = vrot.lane.b32.xlu0 %v1313, 20
        %v1935 = vpop.permute.xlu0 %1934
        %1936 = vrot.lane.b32.xlu0 %v1314, 20
        %v1937 = vpop.permute.xlu0 %1936
        %1938 = vrot.lane.b32.xlu0 %v1315, 20
        %v1939 = vpop.permute.xlu0 %1938
        %1940 = vrot.lane.b32.xlu0 %v1316, 20
        %v1941 = vpop.permute.xlu0 %1940
        %1942 = vrot.lane.b32.xlu0 %v1317, 20
        %v1943 = vpop.permute.xlu0 %1942
        %1944 = vrot.lane.b32.xlu0 %v1318, 20
        %v1945 = vpop.permute.xlu0 %1944
        %1946 = vrot.lane.b32.xlu0 %v1319, 20
        %v1947 = vpop.permute.xlu0 %1946
        %1948 = vrot.lane.b32.xlu0 %v1320, 20
        %v1949 = vpop.permute.xlu0 %1948
        %1950 = vrot.lane.b32.xlu0 %v1321, 20
        %v1951 = vpop.permute.xlu0 %1950
        %1952 = vrot.lane.b32.xlu0 %v1322, 20
        %v1953 = vpop.permute.xlu0 %1952
        %1954 = vrot.lane.b32.xlu0 %v1323, 20
        %v1955 = vpop.permute.xlu0 %1954
        %1956 = vrot.lane.b32.xlu0 %v1324, 20
        %v1957 = vpop.permute.xlu0 %1956
        %1958 = vrot.lane.b32.xlu0 %v1325, 20
        %v1959 = vpop.permute.xlu0 %1958
        %1960 = vrot.lane.b32.xlu0 %v1326, 20
        %v1961 = vpop.permute.xlu0 %1960
        %1962 = vrot.lane.b32.xlu0 %v1327, 20
        %v1963 = vpop.permute.xlu0 %1962
        %1964 = vrot.lane.b32.xlu0 %v1328, 20
        %v1965 = vpop.permute.xlu0 %1964
        %1966 = vrot.lane.b32.xlu0 %v1329, 20
        %v1967 = vpop.permute.xlu0 %1966
        %1968 = vrot.lane.b32.xlu0 %v1330, 20
        %v1969 = vpop.permute.xlu0 %1968
        %1970 = vrot.lane.b32.xlu0 %v1331, 20
        %v1971 = vpop.permute.xlu0 %1970
        %1972 = vrot.lane.b32.xlu0 %v1332, 20
        %v1973 = vpop.permute.xlu0 %1972
        %1974 = vrot.lane.b32.xlu0 %v1333, 20
        %v1975 = vpop.permute.xlu0 %1974
        %1976 = vrot.lane.b32.xlu0 %v1334, 20
        %v1977 = vpop.permute.xlu0 %1976
        %1978 = vrot.lane.b32.xlu0 %v1335, 20
        %v1979 = vpop.permute.xlu0 %1978
        %1980 = vrot.lane.b32.xlu0 %v1336, 20
        %v1981 = vpop.permute.xlu0 %1980
        %1982 = vrot.lane.b32.xlu0 %v1337, 20
        %v1983 = vpop.permute.xlu0 %1982
        %1984 = vrot.lane.b32.xlu0 %v1338, 20
        %v1985 = vpop.permute.xlu0 %1984
        %1986 = vrot.lane.b32.xlu0 %v1339, 20
        %v1987 = vpop.permute.xlu0 %1986
        %1988 = vrot.lane.b32.xlu0 %v1340, 20
        %v1989 = vpop.permute.xlu0 %1988
        %1990 = vrot.lane.b32.xlu0 %v1341, 20
        %v1991 = vpop.permute.xlu0 %1990
        %1992 = vrot.lane.b32.xlu0 %v1342, 20
        %v1993 = vpop.permute.xlu0 %1992
        %1994 = vrot.lane.b32.xlu0 %v1343, 20
        %v1995 = vpop.permute.xlu0 %1994
        %1996 = vrot.lane.b32.xlu0 %v1344, 20
        %v1997 = vpop.permute.xlu0 %1996
        %1998 = vrot.lane.b32.xlu0 %v1345, 20
        %v1999 = vpop.permute.xlu0 %1998
        %2000 = vrot.lane.b32.xlu0 %v1346, 20
        %v2001 = vpop.permute.xlu0 %2000
        %2002 = vrot.lane.b32.xlu0 %v1347, 20
        %v2003 = vpop.permute.xlu0 %2002
        %2004 = vrot.lane.b32.xlu0 %v1298, 44
        %v2005 = vpop.permute.xlu0 %2004
        %2006 = vrot.lane.b32.xlu0 %v1299, 44
        %v2007 = vpop.permute.xlu0 %2006
        %2008 = vrot.lane.b32.xlu0 %v1300, 44
        %v2009 = vpop.permute.xlu0 %2008
        %2010 = vrot.lane.b32.xlu0 %v1301, 44
        %v2011 = vpop.permute.xlu0 %2010
        %2012 = vrot.lane.b32.xlu0 %v1302, 44
        %v2013 = vpop.permute.xlu0 %2012
        %2014 = vrot.lane.b32.xlu0 %v1303, 44
        %v2015 = vpop.permute.xlu0 %2014
        %2016 = vrot.lane.b32.xlu0 %v1304, 44
        %v2017 = vpop.permute.xlu0 %2016
        %2018 = vrot.lane.b32.xlu0 %v1305, 44
        %v2019 = vpop.permute.xlu0 %2018
        %2020 = vrot.lane.b32.xlu0 %v1306, 44
        %v2021 = vpop.permute.xlu0 %2020
        %2022 = vrot.lane.b32.xlu0 %v1307, 44
        %v2023 = vpop.permute.xlu0 %2022
        %2024 = vrot.lane.b32.xlu0 %v1308, 44
        %v2025 = vpop.permute.xlu0 %2024
        %2026 = vrot.lane.b32.xlu0 %v1309, 44
        %v2027 = vpop.permute.xlu0 %2026
        %2028 = vrot.lane.b32.xlu0 %v1310, 44
        %v2029 = vpop.permute.xlu0 %2028
        %2030 = vrot.lane.b32.xlu0 %v1311, 44
        %v2031 = vpop.permute.xlu0 %2030
        %2032 = vrot.lane.b32.xlu0 %v1312, 44
        %v2033 = vpop.permute.xlu0 %2032
        %2034 = vrot.lane.b32.xlu0 %v1313, 44
        %v2035 = vpop.permute.xlu0 %2034
        %2036 = vrot.lane.b32.xlu0 %v1314, 44
        %v2037 = vpop.permute.xlu0 %2036
        %2038 = vrot.lane.b32.xlu0 %v1315, 44
        %v2039 = vpop.permute.xlu0 %2038
        %2040 = vrot.lane.b32.xlu0 %v1316, 44
        %v2041 = vpop.permute.xlu0 %2040
        %2042 = vrot.lane.b32.xlu0 %v1317, 44
        %v2043 = vpop.permute.xlu0 %2042
        %2044 = vrot.lane.b32.xlu0 %v1318, 44
        %v2045 = vpop.permute.xlu0 %2044
        %2046 = vrot.lane.b32.xlu0 %v1319, 44
        %v2047 = vpop.permute.xlu0 %2046
        %2048 = vrot.lane.b32.xlu0 %v1320, 44
        %v2049 = vpop.permute.xlu0 %2048
        %2050 = vrot.lane.b32.xlu0 %v1321, 44
        %v2051 = vpop.permute.xlu0 %2050
        %2052 = vrot.lane.b32.xlu0 %v1322, 44
        %v2053 = vpop.permute.xlu0 %2052
        %2054 = vrot.lane.b32.xlu0 %v1323, 44
        %v2055 = vpop.permute.xlu0 %2054
        %2056 = vrot.lane.b32.xlu0 %v1324, 44
        %v2057 = vpop.permute.xlu0 %2056
        %2058 = vrot.lane.b32.xlu0 %v1325, 44
        %v2059 = vpop.permute.xlu0 %2058
        %2060 = vrot.lane.b32.xlu0 %v1326, 44
        %v2061 = vpop.permute.xlu0 %2060
        %2062 = vrot.lane.b32.xlu0 %v1327, 44
        %v2063 = vpop.permute.xlu0 %2062
        %2064 = vrot.lane.b32.xlu0 %v1328, 44
        %v2065 = vpop.permute.xlu0 %2064
        %2066 = vrot.lane.b32.xlu0 %v1329, 44
        %v2067 = vpop.permute.xlu0 %2066
        %2068 = vrot.lane.b32.xlu0 %v1330, 44
        %v2069 = vpop.permute.xlu0 %2068
        %2070 = vrot.lane.b32.xlu0 %v1331, 44
        %v2071 = vpop.permute.xlu0 %2070
        %2072 = vrot.lane.b32.xlu0 %v1332, 44
        %v2073 = vpop.permute.xlu0 %2072
        %2074 = vrot.lane.b32.xlu0 %v1333, 44
        %v2075 = vpop.permute.xlu0 %2074
        %2076 = vrot.lane.b32.xlu0 %v1334, 44
        %v2077 = vpop.permute.xlu0 %2076
        %2078 = vrot.lane.b32.xlu0 %v1335, 44
        %v2079 = vpop.permute.xlu0 %2078
        %2080 = vrot.lane.b32.xlu0 %v1336, 44
        %v2081 = vpop.permute.xlu0 %2080
        %2082 = vrot.lane.b32.xlu0 %v1337, 44
        %v2083 = vpop.permute.xlu0 %2082
        %2084 = vrot.lane.b32.xlu0 %v1338, 44
        %v2085 = vpop.permute.xlu0 %2084
        %2086 = vrot.lane.b32.xlu0 %v1339, 44
        %v2087 = vpop.permute.xlu0 %2086
        %2088 = vrot.lane.b32.xlu0 %v1340, 44
        %v2089 = vpop.permute.xlu0 %2088
        %2090 = vrot.lane.b32.xlu0 %v1341, 44
        %v2091 = vpop.permute.xlu0 %2090
        %2092 = vrot.lane.b32.xlu0 %v1342, 44
        %v2093 = vpop.permute.xlu0 %2092
        %2094 = vrot.lane.b32.xlu0 %v1343, 44
        %v2095 = vpop.permute.xlu0 %2094
        %2096 = vrot.lane.b32.xlu0 %v1344, 44
        %v2097 = vpop.permute.xlu0 %2096
        %2098 = vrot.lane.b32.xlu0 %v1345, 44
        %v2099 = vpop.permute.xlu0 %2098
        %2100 = vrot.lane.b32.xlu0 %v1346, 44
        %v2101 = vpop.permute.xlu0 %2100
        %2102 = vrot.lane.b32.xlu0 %v1347, 44
        %v2103 = vpop.permute.xlu0 %2102
        %2106 = vrot.lane.b32.xlu0 %v1346, 72
        %v2107 = vpop.permute.xlu0 %2106
        %2108 = vrot.lane.b32.xlu0 %v1347, 72
        %v2109 = vpop.permute.xlu0 %2108
        %2110 = vrot.lane.b32.xlu0 %v1348, 72
        %v2111 = vpop.permute.xlu0 %2110
        %2112 = vrot.lane.b32.xlu0 %v1349, 72
        %v2113 = vpop.permute.xlu0 %2112
        %2114 = vrot.lane.b32.xlu0 %v1300, 96
        %v2115 = vpop.permute.xlu0 %2114
        %2116 = vrot.lane.b32.xlu0 %v1301, 96
        %v2117 = vpop.permute.xlu0 %2116
        %2118 = vrot.lane.b32.xlu0 %v1302, 96
        %v2119 = vpop.permute.xlu0 %2118
        %2120 = vrot.lane.b32.xlu0 %v1303, 96
        %v2121 = vpop.permute.xlu0 %2120
        %2122 = vrot.lane.b32.xlu0 %v1304, 96
        %v2123 = vpop.permute.xlu0 %2122
        %2124 = vrot.lane.b32.xlu0 %v1305, 96
        %v2125 = vpop.permute.xlu0 %2124
        %2126 = vrot.lane.b32.xlu0 %v1306, 96
        %v2127 = vpop.permute.xlu0 %2126
        %2128 = vrot.lane.b32.xlu0 %v1307, 96
        %v2129 = vpop.permute.xlu0 %2128
        %2130 = vrot.lane.b32.xlu0 %v1308, 96
        %v2131 = vpop.permute.xlu0 %2130
        %2132 = vrot.lane.b32.xlu0 %v1309, 96
        %v2133 = vpop.permute.xlu0 %2132
        %2134 = vrot.lane.b32.xlu0 %v1310, 96
        %v2135 = vpop.permute.xlu0 %2134
        %2136 = vrot.lane.b32.xlu0 %v1311, 96
        %v2137 = vpop.permute.xlu0 %2136
        %2138 = vrot.lane.b32.xlu0 %v1312, 96
        %v2139 = vpop.permute.xlu0 %2138
        %2140 = vrot.lane.b32.xlu0 %v1313, 96
        %v2141 = vpop.permute.xlu0 %2140
        %2142 = vrot.lane.b32.xlu0 %v1314, 96
        %v2143 = vpop.permute.xlu0 %2142
        %2144 = vrot.lane.b32.xlu0 %v1315, 96
        %v2145 = vpop.permute.xlu0 %2144
        %2146 = vrot.lane.b32.xlu0 %v1316, 96
        %v2147 = vpop.permute.xlu0 %2146
        %2148 = vrot.lane.b32.xlu0 %v1317, 96
        %v2149 = vpop.permute.xlu0 %2148
        %2150 = vrot.lane.b32.xlu0 %v1318, 96
        %v2151 = vpop.permute.xlu0 %2150
        %2152 = vrot.lane.b32.xlu0 %v1319, 96
        %v2153 = vpop.permute.xlu0 %2152
        %2154 = vrot.lane.b32.xlu0 %v1320, 96
        %v2155 = vpop.permute.xlu0 %2154
        %2156 = vrot.lane.b32.xlu0 %v1321, 96
        %v2157 = vpop.permute.xlu0 %2156
        %2158 = vrot.lane.b32.xlu0 %v1322, 96
        %v2159 = vpop.permute.xlu0 %2158
        %2160 = vrot.lane.b32.xlu0 %v1323, 96
        %v2161 = vpop.permute.xlu0 %2160
        %2162 = vrot.lane.b32.xlu0 %v1324, 96
        %v2163 = vpop.permute.xlu0 %2162
        %2164 = vrot.lane.b32.xlu0 %v1325, 96
        %v2165 = vpop.permute.xlu0 %2164
        %2166 = vrot.lane.b32.xlu0 %v1326, 96
        %v2167 = vpop.permute.xlu0 %2166
        %2168 = vrot.lane.b32.xlu0 %v1327, 96
        %v2169 = vpop.permute.xlu0 %2168
        %2170 = vrot.lane.b32.xlu0 %v1328, 96
        %v2171 = vpop.permute.xlu0 %2170
        %2172 = vrot.lane.b32.xlu0 %v1329, 96
        %v2173 = vpop.permute.xlu0 %2172
        %2174 = vrot.lane.b32.xlu0 %v1330, 96
        %v2175 = vpop.permute.xlu0 %2174
        %2176 = vrot.lane.b32.xlu0 %v1331, 96
        %v2177 = vpop.permute.xlu0 %2176
        %2178 = vrot.lane.b32.xlu0 %v1332, 96
        %v2179 = vpop.permute.xlu0 %2178
        %2180 = vrot.lane.b32.xlu0 %v1333, 96
        %v2181 = vpop.permute.xlu0 %2180
        %2182 = vrot.lane.b32.xlu0 %v1334, 96
        %v2183 = vpop.permute.xlu0 %2182
        %2184 = vrot.lane.b32.xlu0 %v1335, 96
        %v2185 = vpop.permute.xlu0 %2184
        %2186 = vrot.lane.b32.xlu0 %v1336, 96
        %v2187 = vpop.permute.xlu0 %2186
        %2188 = vrot.lane.b32.xlu0 %v1337, 96
        %v2189 = vpop.permute.xlu0 %2188
        %2190 = vrot.lane.b32.xlu0 %v1338, 96
        %v2191 = vpop.permute.xlu0 %2190
        %2192 = vrot.lane.b32.xlu0 %v1339, 96
        %v2193 = vpop.permute.xlu0 %2192
        %2194 = vrot.lane.b32.xlu0 %v1340, 96
        %v2195 = vpop.permute.xlu0 %2194
        %2196 = vrot.lane.b32.xlu0 %v1341, 96
        %v2197 = vpop.permute.xlu0 %2196
        %2198 = vrot.lane.b32.xlu0 %v1342, 96
        %v2199 = vpop.permute.xlu0 %2198
        %2200 = vrot.lane.b32.xlu0 %v1343, 96
        %v2201 = vpop.permute.xlu0 %2200
        %2202 = vrot.lane.b32.xlu0 %v1344, 96
        %v2203 = vpop.permute.xlu0 %2202
        %2204 = vrot.lane.b32.xlu0 %v1345, 96
        %v2205 = vpop.permute.xlu0 %2204
        %2206 = vrot.lane.b32.xlu0 %v1346, 96
        %v2207 = vpop.permute.xlu0 %2206
        %2208 = vrot.lane.b32.xlu0 %v1347, 96
        %v2209 = vpop.permute.xlu0 %2208
        %2210 = vrot.lane.b32.xlu0 %v1348, 96
        %v2211 = vpop.permute.xlu0 %2210
        %2212 = vrot.lane.b32.xlu0 %v1349, 96
        %v2213 = vpop.permute.xlu0 %2212
        %2214 = vrot.lane.b32.xlu0 %v1300, 120
        %v2215 = vpop.permute.xlu0 %2214
        %2216 = vrot.lane.b32.xlu0 %v1301, 120
        %v2217 = vpop.permute.xlu0 %2216
        %2218 = vrot.lane.b32.xlu0 %v1302, 120
        %v2219 = vpop.permute.xlu0 %2218
        %2220 = vrot.lane.b32.xlu0 %v1303, 120
        %v2221 = vpop.permute.xlu0 %2220
        %2222 = vrot.lane.b32.xlu0 %v1304, 120
        %v2223 = vpop.permute.xlu0 %2222
        %2224 = vrot.lane.b32.xlu0 %v1305, 120
        %v2225 = vpop.permute.xlu0 %2224
        %2226 = vrot.lane.b32.xlu0 %v1306, 120
        %v2227 = vpop.permute.xlu0 %2226
        %2228 = vrot.lane.b32.xlu0 %v1307, 120
        %v2229 = vpop.permute.xlu0 %2228
        %2230 = vrot.lane.b32.xlu0 %v1308, 120
        %v2231 = vpop.permute.xlu0 %2230
        %2232 = vrot.lane.b32.xlu0 %v1309, 120
        %v2233 = vpop.permute.xlu0 %2232
        %2234 = vrot.lane.b32.xlu0 %v1310, 120
        %v2235 = vpop.permute.xlu0 %2234
        %2236 = vrot.lane.b32.xlu0 %v1311, 120
        %v2237 = vpop.permute.xlu0 %2236
        %2238 = vrot.lane.b32.xlu0 %v1312, 120
        %v2239 = vpop.permute.xlu0 %2238
        %2240 = vrot.lane.b32.xlu0 %v1313, 120
        %v2241 = vpop.permute.xlu0 %2240
        %2242 = vrot.lane.b32.xlu0 %v1314, 120
        %v2243 = vpop.permute.xlu0 %2242
        %2244 = vrot.lane.b32.xlu0 %v1315, 120
        %v2245 = vpop.permute.xlu0 %2244
        %2246 = vrot.lane.b32.xlu0 %v1316, 120
        %v2247 = vpop.permute.xlu0 %2246
        %2248 = vrot.lane.b32.xlu0 %v1317, 120
        %v2249 = vpop.permute.xlu0 %2248
        %2250 = vrot.lane.b32.xlu0 %v1318, 120
        %v2251 = vpop.permute.xlu0 %2250
        %2252 = vrot.lane.b32.xlu0 %v1319, 120
        %v2253 = vpop.permute.xlu0 %2252
        %2254 = vrot.lane.b32.xlu0 %v1320, 120
        %v2255 = vpop.permute.xlu0 %2254
        %2256 = vrot.lane.b32.xlu0 %v1321, 120
        %v2257 = vpop.permute.xlu0 %2256
        %2258 = vrot.lane.b32.xlu0 %v1322, 120
        %v2259 = vpop.permute.xlu0 %2258
        %2260 = vrot.lane.b32.xlu0 %v1323, 120
        %v2261 = vpop.permute.xlu0 %2260
        %2262 = vrot.lane.b32.xlu0 %v1324, 120
        %v2263 = vpop.permute.xlu0 %2262
        %2264 = vrot.lane.b32.xlu0 %v1325, 120
        %v2265 = vpop.permute.xlu0 %2264
        %2266 = vrot.lane.b32.xlu0 %v1326, 120
        %v2267 = vpop.permute.xlu0 %2266
        %2268 = vrot.lane.b32.xlu0 %v1327, 120
        %v2269 = vpop.permute.xlu0 %2268
        %2270 = vrot.lane.b32.xlu0 %v1328, 120
        %v2271 = vpop.permute.xlu0 %2270
        %2272 = vrot.lane.b32.xlu0 %v1329, 120
        %v2273 = vpop.permute.xlu0 %2272
        %2274 = vrot.lane.b32.xlu0 %v1330, 120
        %v2275 = vpop.permute.xlu0 %2274
        %2276 = vrot.lane.b32.xlu0 %v1331, 120
        %v2277 = vpop.permute.xlu0 %2276
        %2278 = vrot.lane.b32.xlu0 %v1332, 120
        %v2279 = vpop.permute.xlu0 %2278
        %2280 = vrot.lane.b32.xlu0 %v1333, 120
        %v2281 = vpop.permute.xlu0 %2280
        %2282 = vrot.lane.b32.xlu0 %v1334, 120
        %v2283 = vpop.permute.xlu0 %2282
        %2284 = vrot.lane.b32.xlu0 %v1335, 120
        %v2285 = vpop.permute.xlu0 %2284
        %2286 = vrot.lane.b32.xlu0 %v1336, 120
        %v2287 = vpop.permute.xlu0 %2286
        %2288 = vrot.lane.b32.xlu0 %v1337, 120
        %v2289 = vpop.permute.xlu0 %2288
        %2290 = vrot.lane.b32.xlu0 %v1338, 120
        %v2291 = vpop.permute.xlu0 %2290
        %2292 = vrot.lane.b32.xlu0 %v1339, 120
        %v2293 = vpop.permute.xlu0 %2292
        %2294 = vrot.lane.b32.xlu0 %v1340, 120
        %v2295 = vpop.permute.xlu0 %2294
        %2296 = vrot.lane.b32.xlu0 %v1341, 120
        %v2297 = vpop.permute.xlu0 %2296
        %2298 = vrot.lane.b32.xlu0 %v1342, 120
        %v2299 = vpop.permute.xlu0 %2298
        %2300 = vrot.lane.b32.xlu0 %v1343, 120
        %v2301 = vpop.permute.xlu0 %2300
        %2302 = vrot.lane.b32.xlu0 %v1344, 120
        %v2303 = vpop.permute.xlu0 %2302
        %2304 = vrot.lane.b32.xlu0 %v1345, 120
        %v2305 = vpop.permute.xlu0 %2304
        %2306 = vrot.lane.b32.xlu0 %v1346, 120
        %v2307 = vpop.permute.xlu0 %2306
        %2308 = vrot.lane.b32.xlu0 %v1347, 120
        %v2309 = vpop.permute.xlu0 %2308
        %2310 = vrot.lane.b32.xlu0 %v1348, 120
        %v2311 = vpop.permute.xlu0 %2310
        %2312 = vrot.lane.b32.xlu0 %v1349, 120
        %v2313 = vpop.permute.xlu0 %2312
        %2314 = vrot.lane.b32.xlu0 %v1300, 16
        %v2315 = vpop.permute.xlu0 %2314
        %2316 = vrot.lane.b32.xlu0 %v1301, 16
        %v2317 = vpop.permute.xlu0 %2316
        %2318 = vrot.lane.b32.xlu0 %v1302, 16
        %v2319 = vpop.permute.xlu0 %2318
        %2320 = vrot.lane.b32.xlu0 %v1303, 16
        %v2321 = vpop.permute.xlu0 %2320
        %2322 = vrot.lane.b32.xlu0 %v1304, 16
        %v2323 = vpop.permute.xlu0 %2322
        %2324 = vrot.lane.b32.xlu0 %v1305, 16
        %v2325 = vpop.permute.xlu0 %2324
        %2326 = vrot.lane.b32.xlu0 %v1306, 16
        %v2327 = vpop.permute.xlu0 %2326
        %2328 = vrot.lane.b32.xlu0 %v1307, 16
        %v2329 = vpop.permute.xlu0 %2328
        %2330 = vrot.lane.b32.xlu0 %v1308, 16
        %v2331 = vpop.permute.xlu0 %2330
        %2332 = vrot.lane.b32.xlu0 %v1309, 16
        %v2333 = vpop.permute.xlu0 %2332
        %2334 = vrot.lane.b32.xlu0 %v1310, 16
        %v2335 = vpop.permute.xlu0 %2334
        %2336 = vrot.lane.b32.xlu0 %v1311, 16
        %v2337 = vpop.permute.xlu0 %2336
        %2338 = vrot.lane.b32.xlu0 %v1312, 16
        %v2339 = vpop.permute.xlu0 %2338
        %2340 = vrot.lane.b32.xlu0 %v1313, 16
        %v2341 = vpop.permute.xlu0 %2340
        %2342 = vrot.lane.b32.xlu0 %v1314, 16
        %v2343 = vpop.permute.xlu0 %2342
        %2344 = vrot.lane.b32.xlu0 %v1315, 16
        %v2345 = vpop.permute.xlu0 %2344
        %2346 = vrot.lane.b32.xlu0 %v1316, 16
        %v2347 = vpop.permute.xlu0 %2346
        %2348 = vrot.lane.b32.xlu0 %v1317, 16
        %v2349 = vpop.permute.xlu0 %2348
        %2350 = vrot.lane.b32.xlu0 %v1318, 16
        %v2351 = vpop.permute.xlu0 %2350
        %2352 = vrot.lane.b32.xlu0 %v1319, 16
        %v2353 = vpop.permute.xlu0 %2352
        %2354 = vrot.lane.b32.xlu0 %v1320, 16
        %v2355 = vpop.permute.xlu0 %2354
        %2356 = vrot.lane.b32.xlu0 %v1321, 16
        %v2357 = vpop.permute.xlu0 %2356
        %2358 = vrot.lane.b32.xlu0 %v1322, 16
        %v2359 = vpop.permute.xlu0 %2358
        %2360 = vrot.lane.b32.xlu0 %v1323, 16
        %v2361 = vpop.permute.xlu0 %2360
        %2362 = vrot.lane.b32.xlu0 %v1324, 16
        %v2363 = vpop.permute.xlu0 %2362
        %2364 = vrot.lane.b32.xlu0 %v1325, 16
        %v2365 = vpop.permute.xlu0 %2364
        %2366 = vrot.lane.b32.xlu0 %v1326, 16
        %v2367 = vpop.permute.xlu0 %2366
        %2368 = vrot.lane.b32.xlu0 %v1327, 16
        %v2369 = vpop.permute.xlu0 %2368
        %2370 = vrot.lane.b32.xlu0 %v1328, 16
        %v2371 = vpop.permute.xlu0 %2370
        %2372 = vrot.lane.b32.xlu0 %v1329, 16
        %v2373 = vpop.permute.xlu0 %2372
        %2374 = vrot.lane.b32.xlu0 %v1330, 16
        %v2375 = vpop.permute.xlu0 %2374
        %2376 = vrot.lane.b32.xlu0 %v1331, 16
        %v2377 = vpop.permute.xlu0 %2376
        %2378 = vrot.lane.b32.xlu0 %v1332, 16
        %v2379 = vpop.permute.xlu0 %2378
        %2380 = vrot.lane.b32.xlu0 %v1333, 16
        %v2381 = vpop.permute.xlu0 %2380
        %2382 = vrot.lane.b32.xlu0 %v1334, 16
        %v2383 = vpop.permute.xlu0 %2382
        %2384 = vrot.lane.b32.xlu0 %v1335, 16
        %v2385 = vpop.permute.xlu0 %2384
        %2386 = vrot.lane.b32.xlu0 %v1336, 16
        %v2387 = vpop.permute.xlu0 %2386
        %2388 = vrot.lane.b32.xlu0 %v1337, 16
        %v2389 = vpop.permute.xlu0 %2388
        %2390 = vrot.lane.b32.xlu0 %v1338, 16
        %v2391 = vpop.permute.xlu0 %2390
        %2392 = vrot.lane.b32.xlu0 %v1339, 16
        %v2393 = vpop.permute.xlu0 %2392
        %2394 = vrot.lane.b32.xlu0 %v1340, 16
        %v2395 = vpop.permute.xlu0 %2394
        %2396 = vrot.lane.b32.xlu0 %v1341, 16
        %v2397 = vpop.permute.xlu0 %2396
        %2398 = vrot.lane.b32.xlu0 %v1342, 16
        %v2399 = vpop.permute.xlu0 %2398
        %2400 = vrot.lane.b32.xlu0 %v1343, 16
        %v2401 = vpop.permute.xlu0 %2400
        %2402 = vrot.lane.b32.xlu0 %v1344, 16
        %v2403 = vpop.permute.xlu0 %2402
        %2404 = vrot.lane.b32.xlu0 %v1345, 16
        %v2405 = vpop.permute.xlu0 %2404
        %2406 = vrot.lane.b32.xlu0 %v1346, 16
        %v2407 = vpop.permute.xlu0 %2406
        %2408 = vrot.lane.b32.xlu0 %v1347, 16
        %v2409 = vpop.permute.xlu0 %2408
        %2410 = vrot.lane.b32.xlu0 %v1348, 16
        %v2411 = vpop.permute.xlu0 %2410
        %2412 = vrot.lane.b32.xlu0 %v1349, 16
        %v2413 = vpop.permute.xlu0 %2412
        %2416 = vrot.lane.b32.xlu0 %v1348, 44
        %v2417 = vpop.permute.xlu0 %2416
        %2418 = vrot.lane.b32.xlu0 %v1349, 44
        %v2419 = vpop.permute.xlu0 %2418
        %2420 = vrot.lane.b32.xlu0 %v1350, 44
        %v2421 = vpop.permute.xlu0 %2420
        %2422 = vrot.lane.b32.xlu0 %v1351, 44
        %v2423 = vpop.permute.xlu0 %2422
        %2424 = vrot.lane.b32.xlu0 %v1302, 68
        %v2425 = vpop.permute.xlu0 %2424
        %2426 = vrot.lane.b32.xlu0 %v1303, 68
        %v2427 = vpop.permute.xlu0 %2426
        %2428 = vrot.lane.b32.xlu0 %v1304, 68
        %v2429 = vpop.permute.xlu0 %2428
        %2430 = vrot.lane.b32.xlu0 %v1305, 68
        %v2431 = vpop.permute.xlu0 %2430
        %2432 = vrot.lane.b32.xlu0 %v1306, 68
        %v2433 = vpop.permute.xlu0 %2432
        %2434 = vrot.lane.b32.xlu0 %v1307, 68
        %v2435 = vpop.permute.xlu0 %2434
        %2436 = vrot.lane.b32.xlu0 %v1308, 68
        %v2437 = vpop.permute.xlu0 %2436
        %2438 = vrot.lane.b32.xlu0 %v1309, 68
        %v2439 = vpop.permute.xlu0 %2438
        %2440 = vrot.lane.b32.xlu0 %v1310, 68
        %v2441 = vpop.permute.xlu0 %2440
        %2442 = vrot.lane.b32.xlu0 %v1311, 68
        %v2443 = vpop.permute.xlu0 %2442
        %2444 = vrot.lane.b32.xlu0 %v1312, 68
        %v2445 = vpop.permute.xlu0 %2444
        %2446 = vrot.lane.b32.xlu0 %v1313, 68
        %v2447 = vpop.permute.xlu0 %2446
        %2448 = vrot.lane.b32.xlu0 %v1314, 68
        %v2449 = vpop.permute.xlu0 %2448
        %2450 = vrot.lane.b32.xlu0 %v1315, 68
        %v2451 = vpop.permute.xlu0 %2450
        %2452 = vrot.lane.b32.xlu0 %v1316, 68
        %v2453 = vpop.permute.xlu0 %2452
        %2454 = vrot.lane.b32.xlu0 %v1317, 68
        %v2455 = vpop.permute.xlu0 %2454
        %2456 = vrot.lane.b32.xlu0 %v1318, 68
        %v2457 = vpop.permute.xlu0 %2456
        %2458 = vrot.lane.b32.xlu0 %v1319, 68
        %v2459 = vpop.permute.xlu0 %2458
        %2460 = vrot.lane.b32.xlu0 %v1320, 68
        %v2461 = vpop.permute.xlu0 %2460
        %2462 = vrot.lane.b32.xlu0 %v1321, 68
        %v2463 = vpop.permute.xlu0 %2462
        %2464 = vrot.lane.b32.xlu0 %v1322, 68
        %v2465 = vpop.permute.xlu0 %2464
        %2466 = vrot.lane.b32.xlu0 %v1323, 68
        %v2467 = vpop.permute.xlu0 %2466
        %2468 = vrot.lane.b32.xlu0 %v1324, 68
        %v2469 = vpop.permute.xlu0 %2468
        %2470 = vrot.lane.b32.xlu0 %v1325, 68
        %v2471 = vpop.permute.xlu0 %2470
        %2472 = vrot.lane.b32.xlu0 %v1326, 68
        %v2473 = vpop.permute.xlu0 %2472
        %2474 = vrot.lane.b32.xlu0 %v1327, 68
        %v2475 = vpop.permute.xlu0 %2474
        %2476 = vrot.lane.b32.xlu0 %v1328, 68
        %v2477 = vpop.permute.xlu0 %2476
        %2478 = vrot.lane.b32.xlu0 %v1329, 68
        %v2479 = vpop.permute.xlu0 %2478
        %2480 = vrot.lane.b32.xlu0 %v1330, 68
        %v2481 = vpop.permute.xlu0 %2480
        %2482 = vrot.lane.b32.xlu0 %v1331, 68
        %v2483 = vpop.permute.xlu0 %2482
        %2484 = vrot.lane.b32.xlu0 %v1332, 68
        %v2485 = vpop.permute.xlu0 %2484
        %2486 = vrot.lane.b32.xlu0 %v1333, 68
        %v2487 = vpop.permute.xlu0 %2486
        %2488 = vrot.lane.b32.xlu0 %v1334, 68
        %v2489 = vpop.permute.xlu0 %2488
        %2490 = vrot.lane.b32.xlu0 %v1335, 68
        %v2491 = vpop.permute.xlu0 %2490
        %2492 = vrot.lane.b32.xlu0 %v1336, 68
        %v2493 = vpop.permute.xlu0 %2492
        %2494 = vrot.lane.b32.xlu0 %v1337, 68
        %v2495 = vpop.permute.xlu0 %2494
        %2496 = vrot.lane.b32.xlu0 %v1338, 68
        %v2497 = vpop.permute.xlu0 %2496
        %2498 = vrot.lane.b32.xlu0 %v1339, 68
        %v2499 = vpop.permute.xlu0 %2498
        %2500 = vrot.lane.b32.xlu0 %v1340, 68
        %v2501 = vpop.permute.xlu0 %2500
        %2502 = vrot.lane.b32.xlu0 %v1341, 68
        %v2503 = vpop.permute.xlu0 %2502
        %2504 = vrot.lane.b32.xlu0 %v1342, 68
        %v2505 = vpop.permute.xlu0 %2504
        %2506 = vrot.lane.b32.xlu0 %v1343, 68
        %v2507 = vpop.permute.xlu0 %2506
        %2508 = vrot.lane.b32.xlu0 %v1344, 68
        %v2509 = vpop.permute.xlu0 %2508
        %2510 = vrot.lane.b32.xlu0 %v1345, 68
        %v2511 = vpop.permute.xlu0 %2510
        %2512 = vrot.lane.b32.xlu0 %v1346, 68
        %v2513 = vpop.permute.xlu0 %2512
        %2514 = vrot.lane.b32.xlu0 %v1347, 68
        %v2515 = vpop.permute.xlu0 %2514
        %2516 = vrot.lane.b32.xlu0 %v1348, 68
        %v2517 = vpop.permute.xlu0 %2516
        %2518 = vrot.lane.b32.xlu0 %v1349, 68
        %v2519 = vpop.permute.xlu0 %2518
        %2520 = vrot.lane.b32.xlu0 %v1350, 68
        %v2521 = vpop.permute.xlu0 %2520
        %2522 = vrot.lane.b32.xlu0 %v1351, 68
        %v2523 = vpop.permute.xlu0 %2522
        %2524 = vrot.lane.b32.xlu0 %v1302, 92
        %v2525 = vpop.permute.xlu0 %2524
        %2526 = vrot.lane.b32.xlu0 %v1303, 92
        %v2527 = vpop.permute.xlu0 %2526
        %2528 = vrot.lane.b32.xlu0 %v1304, 92
        %v2529 = vpop.permute.xlu0 %2528
        %2530 = vrot.lane.b32.xlu0 %v1305, 92
        %v2531 = vpop.permute.xlu0 %2530
        %2532 = vrot.lane.b32.xlu0 %v1306, 92
        %v2533 = vpop.permute.xlu0 %2532
        %2534 = vrot.lane.b32.xlu0 %v1307, 92
        %v2535 = vpop.permute.xlu0 %2534
        %2536 = vrot.lane.b32.xlu0 %v1308, 92
        %v2537 = vpop.permute.xlu0 %2536
        %2538 = vrot.lane.b32.xlu0 %v1309, 92
        %v2539 = vpop.permute.xlu0 %2538
        %2540 = vrot.lane.b32.xlu0 %v1310, 92
        %v2541 = vpop.permute.xlu0 %2540
        %2542 = vrot.lane.b32.xlu0 %v1311, 92
        %v2543 = vpop.permute.xlu0 %2542
        %2544 = vrot.lane.b32.xlu0 %v1312, 92
        %v2545 = vpop.permute.xlu0 %2544
        %2546 = vrot.lane.b32.xlu0 %v1313, 92
        %v2547 = vpop.permute.xlu0 %2546
        %2548 = vrot.lane.b32.xlu0 %v1314, 92
        %v2549 = vpop.permute.xlu0 %2548
        %2550 = vrot.lane.b32.xlu0 %v1315, 92
        %v2551 = vpop.permute.xlu0 %2550
        %2552 = vrot.lane.b32.xlu0 %v1316, 92
        %v2553 = vpop.permute.xlu0 %2552
        %2554 = vrot.lane.b32.xlu0 %v1317, 92
        %v2555 = vpop.permute.xlu0 %2554
        %2556 = vrot.lane.b32.xlu0 %v1318, 92
        %v2557 = vpop.permute.xlu0 %2556
        %2558 = vrot.lane.b32.xlu0 %v1319, 92
        %v2559 = vpop.permute.xlu0 %2558
        %2560 = vrot.lane.b32.xlu0 %v1320, 92
        %v2561 = vpop.permute.xlu0 %2560
        %2562 = vrot.lane.b32.xlu0 %v1321, 92
        %v2563 = vpop.permute.xlu0 %2562
        %2564 = vrot.lane.b32.xlu0 %v1322, 92
        %v2565 = vpop.permute.xlu0 %2564
        %2566 = vrot.lane.b32.xlu0 %v1323, 92
        %v2567 = vpop.permute.xlu0 %2566
        %2568 = vrot.lane.b32.xlu0 %v1324, 92
        %v2569 = vpop.permute.xlu0 %2568
        %2570 = vrot.lane.b32.xlu0 %v1325, 92
        %v2571 = vpop.permute.xlu0 %2570
        %2572 = vrot.lane.b32.xlu0 %v1326, 92
        %v2573 = vpop.permute.xlu0 %2572
        %2574 = vrot.lane.b32.xlu0 %v1327, 92
        %v2575 = vpop.permute.xlu0 %2574
        %2576 = vrot.lane.b32.xlu0 %v1328, 92
        %v2577 = vpop.permute.xlu0 %2576
        %2578 = vrot.lane.b32.xlu0 %v1329, 92
        %v2579 = vpop.permute.xlu0 %2578
        %2580 = vrot.lane.b32.xlu0 %v1330, 92
        %v2581 = vpop.permute.xlu0 %2580
        %2582 = vrot.lane.b32.xlu0 %v1331, 92
        %v2583 = vpop.permute.xlu0 %2582
        %2584 = vrot.lane.b32.xlu0 %v1332, 92
        %v2585 = vpop.permute.xlu0 %2584
        %2586 = vrot.lane.b32.xlu0 %v1333, 92
        %v2587 = vpop.permute.xlu0 %2586
        %2588 = vrot.lane.b32.xlu0 %v1334, 92
        %v2589 = vpop.permute.xlu0 %2588
        %2590 = vrot.lane.b32.xlu0 %v1335, 92
        %v2591 = vpop.permute.xlu0 %2590
        %2592 = vrot.lane.b32.xlu0 %v1336, 92
        %v2593 = vpop.permute.xlu0 %2592
        %2594 = vrot.lane.b32.xlu0 %v1337, 92
        %v2595 = vpop.permute.xlu0 %2594
        %2596 = vrot.lane.b32.xlu0 %v1338, 92
        %v2597 = vpop.permute.xlu0 %2596
        %2598 = vrot.lane.b32.xlu0 %v1339, 92
        %v2599 = vpop.permute.xlu0 %2598
        %2600 = vrot.lane.b32.xlu0 %v1340, 92
        %v2601 = vpop.permute.xlu0 %2600
        %2602 = vrot.lane.b32.xlu0 %v1341, 92
        %v2603 = vpop.permute.xlu0 %2602
        %2604 = vrot.lane.b32.xlu0 %v1342, 92
        %v2605 = vpop.permute.xlu0 %2604
        %2606 = vrot.lane.b32.xlu0 %v1343, 92
        %v2607 = vpop.permute.xlu0 %2606
        %2608 = vrot.lane.b32.xlu0 %v1344, 92
        %v2609 = vpop.permute.xlu0 %2608
        %2610 = vrot.lane.b32.xlu0 %v1345, 92
        %v2611 = vpop.permute.xlu0 %2610
        %2612 = vrot.lane.b32.xlu0 %v1346, 92
        %v2613 = vpop.permute.xlu0 %2612
        %2614 = vrot.lane.b32.xlu0 %v1347, 92
        %v2615 = vpop.permute.xlu0 %2614
        %2616 = vrot.lane.b32.xlu0 %v1348, 92
        %v2617 = vpop.permute.xlu0 %2616
        %2618 = vrot.lane.b32.xlu0 %v1349, 92
        %v2619 = vpop.permute.xlu0 %2618
        %2620 = vrot.lane.b32.xlu0 %v1350, 92
        %v2621 = vpop.permute.xlu0 %2620
        %2622 = vrot.lane.b32.xlu0 %v1351, 92
        %v2623 = vpop.permute.xlu0 %2622
        %2624 = vrot.lane.b32.xlu0 %v1302, 116
        %v2625 = vpop.permute.xlu0 %2624
        %2626 = vrot.lane.b32.xlu0 %v1303, 116
        %v2627 = vpop.permute.xlu0 %2626
        %2628 = vrot.lane.b32.xlu0 %v1304, 116
        %v2629 = vpop.permute.xlu0 %2628
        %2630 = vrot.lane.b32.xlu0 %v1305, 116
        %v2631 = vpop.permute.xlu0 %2630
        %2632 = vrot.lane.b32.xlu0 %v1306, 116
        %v2633 = vpop.permute.xlu0 %2632
        %2634 = vrot.lane.b32.xlu0 %v1307, 116
        %v2635 = vpop.permute.xlu0 %2634
        %2636 = vrot.lane.b32.xlu0 %v1308, 116
        %v2637 = vpop.permute.xlu0 %2636
        %2638 = vrot.lane.b32.xlu0 %v1309, 116
        %v2639 = vpop.permute.xlu0 %2638
        %2640 = vrot.lane.b32.xlu0 %v1310, 116
        %v2641 = vpop.permute.xlu0 %2640
        %2642 = vrot.lane.b32.xlu0 %v1311, 116
        %v2643 = vpop.permute.xlu0 %2642
        %2644 = vrot.lane.b32.xlu0 %v1312, 116
        %v2645 = vpop.permute.xlu0 %2644
        %2646 = vrot.lane.b32.xlu0 %v1313, 116
        %v2647 = vpop.permute.xlu0 %2646
        %2648 = vrot.lane.b32.xlu0 %v1314, 116
        %v2649 = vpop.permute.xlu0 %2648
        %2650 = vrot.lane.b32.xlu0 %v1315, 116
        %v2651 = vpop.permute.xlu0 %2650
        %2652 = vrot.lane.b32.xlu0 %v1316, 116
        %v2653 = vpop.permute.xlu0 %2652
        %2654 = vrot.lane.b32.xlu0 %v1317, 116
        %v2655 = vpop.permute.xlu0 %2654
        %2656 = vrot.lane.b32.xlu0 %v1318, 116
        %v2657 = vpop.permute.xlu0 %2656
        %2658 = vrot.lane.b32.xlu0 %v1319, 116
        %v2659 = vpop.permute.xlu0 %2658
        %2660 = vrot.lane.b32.xlu0 %v1320, 116
        %v2661 = vpop.permute.xlu0 %2660
        %2662 = vrot.lane.b32.xlu0 %v1321, 116
        %v2663 = vpop.permute.xlu0 %2662
        %2664 = vrot.lane.b32.xlu0 %v1322, 116
        %v2665 = vpop.permute.xlu0 %2664
        %2666 = vrot.lane.b32.xlu0 %v1323, 116
        %v2667 = vpop.permute.xlu0 %2666
        %2668 = vrot.lane.b32.xlu0 %v1324, 116
        %v2669 = vpop.permute.xlu0 %2668
        %2670 = vrot.lane.b32.xlu0 %v1325, 116
        %v2671 = vpop.permute.xlu0 %2670
        %2672 = vrot.lane.b32.xlu0 %v1326, 116
        %v2673 = vpop.permute.xlu0 %2672
        %2674 = vrot.lane.b32.xlu0 %v1327, 116
        %v2675 = vpop.permute.xlu0 %2674
        %2676 = vrot.lane.b32.xlu0 %v1328, 116
        %v2677 = vpop.permute.xlu0 %2676
        %2678 = vrot.lane.b32.xlu0 %v1329, 116
        %v2679 = vpop.permute.xlu0 %2678
        %2680 = vrot.lane.b32.xlu0 %v1330, 116
        %v2681 = vpop.permute.xlu0 %2680
        %2682 = vrot.lane.b32.xlu0 %v1331, 116
        %v2683 = vpop.permute.xlu0 %2682
        %2684 = vrot.lane.b32.xlu0 %v1332, 116
        %v2685 = vpop.permute.xlu0 %2684
        %2686 = vrot.lane.b32.xlu0 %v1333, 116
        %v2687 = vpop.permute.xlu0 %2686
        %2688 = vrot.lane.b32.xlu0 %v1334, 116
        %v2689 = vpop.permute.xlu0 %2688
        %2690 = vrot.lane.b32.xlu0 %v1335, 116
        %v2691 = vpop.permute.xlu0 %2690
        %2692 = vrot.lane.b32.xlu0 %v1336, 116
        %v2693 = vpop.permute.xlu0 %2692
        %2694 = vrot.lane.b32.xlu0 %v1337, 116
        %v2695 = vpop.permute.xlu0 %2694
        %2696 = vrot.lane.b32.xlu0 %v1338, 116
        %v2697 = vpop.permute.xlu0 %2696
        %2698 = vrot.lane.b32.xlu0 %v1339, 116
        %v2699 = vpop.permute.xlu0 %2698
        %2700 = vrot.lane.b32.xlu0 %v1340, 116
        %v2701 = vpop.permute.xlu0 %2700
        %2702 = vrot.lane.b32.xlu0 %v1341, 116
        %v2703 = vpop.permute.xlu0 %2702
        %2704 = vrot.lane.b32.xlu0 %v1342, 116
        %v2705 = vpop.permute.xlu0 %2704
        %2706 = vrot.lane.b32.xlu0 %v1343, 116
        %v2707 = vpop.permute.xlu0 %2706
        %2708 = vrot.lane.b32.xlu0 %v1344, 116
        %v2709 = vpop.permute.xlu0 %2708
        %2710 = vrot.lane.b32.xlu0 %v1345, 116
        %v2711 = vpop.permute.xlu0 %2710
        %2712 = vrot.lane.b32.xlu0 %v1346, 116
        %v2713 = vpop.permute.xlu0 %2712
        %2714 = vrot.lane.b32.xlu0 %v1347, 116
        %v2715 = vpop.permute.xlu0 %2714
        %2716 = vrot.lane.b32.xlu0 %v1348, 116
        %v2717 = vpop.permute.xlu0 %2716
        %2718 = vrot.lane.b32.xlu0 %v1349, 116
        %v2719 = vpop.permute.xlu0 %2718
        %2720 = vrot.lane.b32.xlu0 %v1350, 116
        %v2721 = vpop.permute.xlu0 %2720
        %2722 = vrot.lane.b32.xlu0 %v1351, 116
        %v2723 = vpop.permute.xlu0 %2722
        %vm2724 = vcmask 203776
        %v2727 = vsel %vm2724, %v1296, %v1403
        %v2730 = vsel %vm2724, %v1297, %v1405
        %v2733 = vsel %vm2724, %v1298, %v1407
        %v2736 = vsel %vm2724, %v1299, %v1409
        %v2739 = vsel %vm2724, %v1300, %v1411
        %v2742 = vsel %vm2724, %v1301, %v1413
        %v2745 = vsel %vm2724, %v1302, %v1415
        %v2748 = vsel %vm2724, %v1303, %v1417
        %v2751 = vsel %vm2724, %v1304, %v1419
        %v2754 = vsel %vm2724, %v1305, %v1421
        %v2757 = vsel %vm2724, %v1306, %v1423
        %v2760 = vsel %vm2724, %v1307, %v1425
        %v2763 = vsel %vm2724, %v1308, %v1427
        %v2766 = vsel %vm2724, %v1309, %v1429
        %v2769 = vsel %vm2724, %v1310, %v1431
        %v2772 = vsel %vm2724, %v1311, %v1433
        %v2775 = vsel %vm2724, %v1312, %v1435
        %v2778 = vsel %vm2724, %v1313, %v1437
        %v2781 = vsel %vm2724, %v1314, %v1439
        %v2784 = vsel %vm2724, %v1315, %v1441
        %v2787 = vsel %vm2724, %v1316, %v1443
        %v2790 = vsel %vm2724, %v1317, %v1445
        %v2793 = vsel %vm2724, %v1318, %v1447
        %v2796 = vsel %vm2724, %v1319, %v1449
        %v2799 = vsel %vm2724, %v1320, %v1451
        %v2802 = vsel %vm2724, %v1321, %v1453
        %v2805 = vsel %vm2724, %v1322, %v1455
        %v2808 = vsel %vm2724, %v1323, %v1457
        %v2811 = vsel %vm2724, %v1324, %v1459
        %v2814 = vsel %vm2724, %v1325, %v1461
        %v2817 = vsel %vm2724, %v1326, %v1463
        %v2820 = vsel %vm2724, %v1327, %v1465
        %v2823 = vsel %vm2724, %v1328, %v1467
        %v2826 = vsel %vm2724, %v1329, %v1469
        %v2829 = vsel %vm2724, %v1330, %v1471
        %v2832 = vsel %vm2724, %v1331, %v1473
        %v2835 = vsel %vm2724, %v1332, %v1475
        %v2838 = vsel %vm2724, %v1333, %v1477
        %v2841 = vsel %vm2724, %v1334, %v1479
        %v2844 = vsel %vm2724, %v1335, %v1481
        %v2847 = vsel %vm2724, %v1336, %v1483
        %v2850 = vsel %vm2724, %v1337, %v1485
        %v2853 = vsel %vm2724, %v1338, %v1487
        %v2856 = vsel %vm2724, %v1339, %v1489
        %v2859 = vsel %vm2724, %v1340, %v1491
        %v2862 = vsel %vm2724, %v1341, %v1493
        %v2865 = vsel %vm2724, %v1342, %v1495
        %v2868 = vsel %vm2724, %v1343, %v1497
        %v2871 = vsel %vm2724, %v1344, %v1499
        %v2874 = vsel %vm2724, %v1345, %v1501
        %vm2875 = vcmask 408576
        %v2877 = vsel %vm2875, %v2727, %v1503
        %v2879 = vsel %vm2875, %v2730, %v1505
        %v2881 = vsel %vm2875, %v2733, %v1507
        %v2883 = vsel %vm2875, %v2736, %v1509
        %v2885 = vsel %vm2875, %v2739, %v1511
        %v2887 = vsel %vm2875, %v2742, %v1513
        %v2889 = vsel %vm2875, %v2745, %v1515
        %v2891 = vsel %vm2875, %v2748, %v1517
        %v2893 = vsel %vm2875, %v2751, %v1519
        %v2895 = vsel %vm2875, %v2754, %v1521
        %v2897 = vsel %vm2875, %v2757, %v1523
        %v2899 = vsel %vm2875, %v2760, %v1525
        %v2901 = vsel %vm2875, %v2763, %v1527
        %v2903 = vsel %vm2875, %v2766, %v1529
        %v2905 = vsel %vm2875, %v2769, %v1531
        %v2907 = vsel %vm2875, %v2772, %v1533
        %v2909 = vsel %vm2875, %v2775, %v1535
        %v2911 = vsel %vm2875, %v2778, %v1537
        %v2913 = vsel %vm2875, %v2781, %v1539
        %v2915 = vsel %vm2875, %v2784, %v1541
        %v2917 = vsel %vm2875, %v2787, %v1543
        %v2919 = vsel %vm2875, %v2790, %v1545
        %v2921 = vsel %vm2875, %v2793, %v1547
        %v2923 = vsel %vm2875, %v2796, %v1549
        %v2925 = vsel %vm2875, %v2799, %v1551
        %v2927 = vsel %vm2875, %v2802, %v1553
        %v2929 = vsel %vm2875, %v2805, %v1555
        %v2931 = vsel %vm2875, %v2808, %v1557
        %v2933 = vsel %vm2875, %v2811, %v1559
        %v2935 = vsel %vm2875, %v2814, %v1561
        %v2937 = vsel %vm2875, %v2817, %v1563
        %v2939 = vsel %vm2875, %v2820, %v1565
        %v2941 = vsel %vm2875, %v2823, %v1567
        %v2943 = vsel %vm2875, %v2826, %v1569
        %v2945 = vsel %vm2875, %v2829, %v1571
        %v2947 = vsel %vm2875, %v2832, %v1573
        %v2949 = vsel %vm2875, %v2835, %v1575
        %v2951 = vsel %vm2875, %v2838, %v1577
        %v2953 = vsel %vm2875, %v2841, %v1579
        %v2955 = vsel %vm2875, %v2844, %v1581
        %v2957 = vsel %vm2875, %v2847, %v1583
        %v2959 = vsel %vm2875, %v2850, %v1585
        %v2961 = vsel %vm2875, %v2853, %v1587
        %v2963 = vsel %vm2875, %v2856, %v1589
        %v2965 = vsel %vm2875, %v2859, %v1591
        %v2967 = vsel %vm2875, %v2862, %v1593
        %v2969 = vsel %vm2875, %v2865, %v1595
        %v2971 = vsel %vm2875, %v2868, %v1597
        %v2973 = vsel %vm2875, %v2871, %v1599
        %v2975 = vsel %vm2875, %v2874, %v1601
        %vm2976 = vcmask 613376
        %v2978 = vsel %vm2976, %v2877, %v1603
        %v2980 = vsel %vm2976, %v2879, %v1605
        %v2982 = vsel %vm2976, %v2881, %v1607
        %v2984 = vsel %vm2976, %v2883, %v1609
        %v2986 = vsel %vm2976, %v2885, %v1611
        %v2988 = vsel %vm2976, %v2887, %v1613
        %v2990 = vsel %vm2976, %v2889, %v1615
        %v2992 = vsel %vm2976, %v2891, %v1617
        %v2994 = vsel %vm2976, %v2893, %v1619
        %v2996 = vsel %vm2976, %v2895, %v1621
        %v2998 = vsel %vm2976, %v2897, %v1623
        %v3000 = vsel %vm2976, %v2899, %v1625
        %v3002 = vsel %vm2976, %v2901, %v1627
        %v3004 = vsel %vm2976, %v2903, %v1629
        %v3006 = vsel %vm2976, %v2905, %v1631
        %v3008 = vsel %vm2976, %v2907, %v1633
        %v3010 = vsel %vm2976, %v2909, %v1635
        %v3012 = vsel %vm2976, %v2911, %v1637
        %v3014 = vsel %vm2976, %v2913, %v1639
        %v3016 = vsel %vm2976, %v2915, %v1641
        %v3018 = vsel %vm2976, %v2917, %v1643
        %v3020 = vsel %vm2976, %v2919, %v1645
        %v3022 = vsel %vm2976, %v2921, %v1647
        %v3024 = vsel %vm2976, %v2923, %v1649
        %v3026 = vsel %vm2976, %v2925, %v1651
        %v3028 = vsel %vm2976, %v2927, %v1653
        %v3030 = vsel %vm2976, %v2929, %v1655
        %v3032 = vsel %vm2976, %v2931, %v1657
        %v3034 = vsel %vm2976, %v2933, %v1659
        %v3036 = vsel %vm2976, %v2935, %v1661
        %v3038 = vsel %vm2976, %v2937, %v1663
        %v3040 = vsel %vm2976, %v2939, %v1665
        %v3042 = vsel %vm2976, %v2941, %v1667
        %v3044 = vsel %vm2976, %v2943, %v1669
        %v3046 = vsel %vm2976, %v2945, %v1671
        %v3048 = vsel %vm2976, %v2947, %v1673
        %v3050 = vsel %vm2976, %v2949, %v1675
        %v3052 = vsel %vm2976, %v2951, %v1677
        %v3054 = vsel %vm2976, %v2953, %v1679
        %v3056 = vsel %vm2976, %v2955, %v1681
        %v3058 = vsel %vm2976, %v2957, %v1683
        %v3060 = vsel %vm2976, %v2959, %v1685
        %v3062 = vsel %vm2976, %v2961, %v1687
        %v3064 = vsel %vm2976, %v2963, %v1689
        %v3066 = vsel %vm2976, %v2965, %v1691
        %v3068 = vsel %vm2976, %v2967, %v1693
        %v3070 = vsel %vm2976, %v2969, %v1695
        %v3072 = vsel %vm2976, %v2971, %v1697
        %v3074 = vsel %vm2976, %v2973, %v1699
        %v3076 = vsel %vm2976, %v2975, %v1701
        %vm3077 = vcmask 818176
        %v3079 = vsel %vm3077, %v2978, %v1705
        %v3081 = vsel %vm3077, %v2980, %v1707
        %v3083 = vsel %vm3077, %v2982, %v1709
        %v3085 = vsel %vm3077, %v2984, %v1711
        %v3087 = vsel %vm3077, %v2986, %v1713
        %v3089 = vsel %vm3077, %v2988, %v1715
        %v3091 = vsel %vm3077, %v2990, %v1717
        %v3093 = vsel %vm3077, %v2992, %v1719
        %v3095 = vsel %vm3077, %v2994, %v1721
        %v3097 = vsel %vm3077, %v2996, %v1723
        %v3099 = vsel %vm3077, %v2998, %v1725
        %v3101 = vsel %vm3077, %v3000, %v1727
        %v3103 = vsel %vm3077, %v3002, %v1729
        %v3105 = vsel %vm3077, %v3004, %v1731
        %v3107 = vsel %vm3077, %v3006, %v1733
        %v3109 = vsel %vm3077, %v3008, %v1735
        %v3111 = vsel %vm3077, %v3010, %v1737
        %v3113 = vsel %vm3077, %v3012, %v1739
        %v3115 = vsel %vm3077, %v3014, %v1741
        %v3117 = vsel %vm3077, %v3016, %v1743
        %v3119 = vsel %vm3077, %v3018, %v1745
        %v3121 = vsel %vm3077, %v3020, %v1747
        %v3123 = vsel %vm3077, %v3022, %v1749
        %v3125 = vsel %vm3077, %v3024, %v1751
        %v3127 = vsel %vm3077, %v3026, %v1753
        %v3129 = vsel %vm3077, %v3028, %v1755
        %v3131 = vsel %vm3077, %v3030, %v1757
        %v3133 = vsel %vm3077, %v3032, %v1759
        %v3135 = vsel %vm3077, %v3034, %v1761
        %v3137 = vsel %vm3077, %v3036, %v1763
        %v3139 = vsel %vm3077, %v3038, %v1765
        %v3141 = vsel %vm3077, %v3040, %v1767
        %v3143 = vsel %vm3077, %v3042, %v1769
        %v3145 = vsel %vm3077, %v3044, %v1771
        %v3147 = vsel %vm3077, %v3046, %v1773
        %v3149 = vsel %vm3077, %v3048, %v1775
        %v3151 = vsel %vm3077, %v3050, %v1777
        %v3153 = vsel %vm3077, %v3052, %v1779
        %v3155 = vsel %vm3077, %v3054, %v1781
        %v3157 = vsel %vm3077, %v3056, %v1783
        %v3159 = vsel %vm3077, %v3058, %v1785
        %v3161 = vsel %vm3077, %v3060, %v1787
        %v3163 = vsel %vm3077, %v3062, %v1789
        %v3165 = vsel %vm3077, %v3064, %v1791
        %v3167 = vsel %vm3077, %v3066, %v1793
        %v3169 = vsel %vm3077, %v3068, %v1795
        %v3171 = vsel %vm3077, %v3070, %v1797
        %v3173 = vsel %vm3077, %v3072, %v1799
        %v3175 = vsel %vm3077, %v3074, %v1801
        %v3177 = vsel %vm3077, %v3076, %v1803
        %vm3178 = vcmask 1022976
        %v3180 = vsel %vm3178, %v3079, %v1805
        %v3183 = vsel %vm3178, %v3081, %v1807
        %v3186 = vsel %vm3178, %v3083, %v1809
        %v3189 = vsel %vm3178, %v3085, %v1811
        %v3192 = vsel %vm3178, %v3087, %v1813
        %v3195 = vsel %vm3178, %v3089, %v1815
        %v3198 = vsel %vm3178, %v3091, %v1817
        %v3201 = vsel %vm3178, %v3093, %v1819
        %v3204 = vsel %vm3178, %v3095, %v1821
        %v3207 = vsel %vm3178, %v3097, %v1823
        %v3210 = vsel %vm3178, %v3099, %v1825
        %v3213 = vsel %vm3178, %v3101, %v1827
        %v3216 = vsel %vm3178, %v3103, %v1829
        %v3219 = vsel %vm3178, %v3105, %v1831
        %v3222 = vsel %vm3178, %v3107, %v1833
        %v3225 = vsel %vm3178, %v3109, %v1835
        %v3228 = vsel %vm3178, %v3111, %v1837
        %v3231 = vsel %vm3178, %v3113, %v1839
        %v3234 = vsel %vm3178, %v3115, %v1841
        %v3237 = vsel %vm3178, %v3117, %v1843
        %v3240 = vsel %vm3178, %v3119, %v1845
        %v3243 = vsel %vm3178, %v3121, %v1847
        %v3246 = vsel %vm3178, %v3123, %v1849
        %v3249 = vsel %vm3178, %v3125, %v1851
        %v3252 = vsel %vm3178, %v3127, %v1853
        %v3255 = vsel %vm3178, %v3129, %v1855
        %v3258 = vsel %vm3178, %v3131, %v1857
        %v3261 = vsel %vm3178, %v3133, %v1859
        %v3264 = vsel %vm3178, %v3135, %v1861
        %v3267 = vsel %vm3178, %v3137, %v1863
        %v3270 = vsel %vm3178, %v3139, %v1865
        %v3273 = vsel %vm3178, %v3141, %v1867
        %v3276 = vsel %vm3178, %v3143, %v1869
        %v3279 = vsel %vm3178, %v3145, %v1871
        %v3282 = vsel %vm3178, %v3147, %v1873
        %v3285 = vsel %vm3178, %v3149, %v1875
        %v3288 = vsel %vm3178, %v3151, %v1877
        %v3291 = vsel %vm3178, %v3153, %v1879
        %v3294 = vsel %vm3178, %v3155, %v1881
        %v3297 = vsel %vm3178, %v3157, %v1883
        %v3300 = vsel %vm3178, %v3159, %v1885
        %v3303 = vsel %vm3178, %v3161, %v1887
        %v3306 = vsel %vm3178, %v3163, %v1889
        %v3309 = vsel %vm3178, %v3165, %v1891
        %v3312 = vsel %vm3178, %v3167, %v1893
        %v3315 = vsel %vm3178, %v3169, %v1895
        %v3318 = vsel %vm3178, %v3171, %v1897
        %v3321 = vsel %vm3178, %v3173, %v1899
        %v3324 = vsel %vm3178, %v3175, %v1901
        %v3327 = vsel %vm3178, %v3177, %v1903
        %vm3329 = vcmask 179200
        %v3331 = vsel %vm3329, %v1805, %v1905
        %v3333 = vsel %vm3329, %v1807, %v1907
        %v3335 = vsel %vm3329, %v1809, %v1909
        %v3337 = vsel %vm3329, %v1811, %v1911
        %v3339 = vsel %vm3329, %v1813, %v1913
        %v3341 = vsel %vm3329, %v1815, %v1915
        %v3343 = vsel %vm3329, %v1817, %v1917
        %v3345 = vsel %vm3329, %v1819, %v1919
        %v3347 = vsel %vm3329, %v1821, %v1921
        %v3349 = vsel %vm3329, %v1823, %v1923
        %v3351 = vsel %vm3329, %v1825, %v1925
        %v3353 = vsel %vm3329, %v1827, %v1927
        %v3355 = vsel %vm3329, %v1829, %v1929
        %v3357 = vsel %vm3329, %v1831, %v1931
        %v3359 = vsel %vm3329, %v1833, %v1933
        %v3361 = vsel %vm3329, %v1835, %v1935
        %v3363 = vsel %vm3329, %v1837, %v1937
        %v3365 = vsel %vm3329, %v1839, %v1939
        %v3367 = vsel %vm3329, %v1841, %v1941
        %v3369 = vsel %vm3329, %v1843, %v1943
        %v3371 = vsel %vm3329, %v1845, %v1945
        %v3373 = vsel %vm3329, %v1847, %v1947
        %v3375 = vsel %vm3329, %v1849, %v1949
        %v3377 = vsel %vm3329, %v1851, %v1951
        %v3379 = vsel %vm3329, %v1853, %v1953
        %v3381 = vsel %vm3329, %v1855, %v1955
        %v3383 = vsel %vm3329, %v1857, %v1957
        %v3385 = vsel %vm3329, %v1859, %v1959
        %v3387 = vsel %vm3329, %v1861, %v1961
        %v3389 = vsel %vm3329, %v1863, %v1963
        %v3391 = vsel %vm3329, %v1865, %v1965
        %v3393 = vsel %vm3329, %v1867, %v1967
        %v3395 = vsel %vm3329, %v1869, %v1969
        %v3397 = vsel %vm3329, %v1871, %v1971
        %v3399 = vsel %vm3329, %v1873, %v1973
        %v3401 = vsel %vm3329, %v1875, %v1975
        %v3403 = vsel %vm3329, %v1877, %v1977
        %v3405 = vsel %vm3329, %v1879, %v1979
        %v3407 = vsel %vm3329, %v1881, %v1981
        %v3409 = vsel %vm3329, %v1883, %v1983
        %v3411 = vsel %vm3329, %v1885, %v1985
        %v3413 = vsel %vm3329, %v1887, %v1987
        %v3415 = vsel %vm3329, %v1889, %v1989
        %v3417 = vsel %vm3329, %v1891, %v1991
        %v3419 = vsel %vm3329, %v1893, %v1993
        %v3421 = vsel %vm3329, %v1895, %v1995
        %v3423 = vsel %vm3329, %v1897, %v1997
        %v3425 = vsel %vm3329, %v1899, %v1999
        %v3427 = vsel %vm3329, %v1901, %v2001
        %v3429 = vsel %vm3329, %v1903, %v2003
        %vm3430 = vcmask 384000
        %v3432 = vsel %vm3430, %v3331, %v2005
        %v3434 = vsel %vm3430, %v3333, %v2007
        %v3436 = vsel %vm3430, %v3335, %v2009
        %v3438 = vsel %vm3430, %v3337, %v2011
        %v3440 = vsel %vm3430, %v3339, %v2013
        %v3442 = vsel %vm3430, %v3341, %v2015
        %v3444 = vsel %vm3430, %v3343, %v2017
        %v3446 = vsel %vm3430, %v3345, %v2019
        %v3448 = vsel %vm3430, %v3347, %v2021
        %v3450 = vsel %vm3430, %v3349, %v2023
        %v3452 = vsel %vm3430, %v3351, %v2025
        %v3454 = vsel %vm3430, %v3353, %v2027
        %v3456 = vsel %vm3430, %v3355, %v2029
        %v3458 = vsel %vm3430, %v3357, %v2031
        %v3460 = vsel %vm3430, %v3359, %v2033
        %v3462 = vsel %vm3430, %v3361, %v2035
        %v3464 = vsel %vm3430, %v3363, %v2037
        %v3466 = vsel %vm3430, %v3365, %v2039
        %v3468 = vsel %vm3430, %v3367, %v2041
        %v3470 = vsel %vm3430, %v3369, %v2043
        %v3472 = vsel %vm3430, %v3371, %v2045
        %v3474 = vsel %vm3430, %v3373, %v2047
        %v3476 = vsel %vm3430, %v3375, %v2049
        %v3478 = vsel %vm3430, %v3377, %v2051
        %v3480 = vsel %vm3430, %v3379, %v2053
        %v3482 = vsel %vm3430, %v3381, %v2055
        %v3484 = vsel %vm3430, %v3383, %v2057
        %v3486 = vsel %vm3430, %v3385, %v2059
        %v3488 = vsel %vm3430, %v3387, %v2061
        %v3490 = vsel %vm3430, %v3389, %v2063
        %v3492 = vsel %vm3430, %v3391, %v2065
        %v3494 = vsel %vm3430, %v3393, %v2067
        %v3496 = vsel %vm3430, %v3395, %v2069
        %v3498 = vsel %vm3430, %v3397, %v2071
        %v3500 = vsel %vm3430, %v3399, %v2073
        %v3502 = vsel %vm3430, %v3401, %v2075
        %v3504 = vsel %vm3430, %v3403, %v2077
        %v3506 = vsel %vm3430, %v3405, %v2079
        %v3508 = vsel %vm3430, %v3407, %v2081
        %v3510 = vsel %vm3430, %v3409, %v2083
        %v3512 = vsel %vm3430, %v3411, %v2085
        %v3514 = vsel %vm3430, %v3413, %v2087
        %v3516 = vsel %vm3430, %v3415, %v2089
        %v3518 = vsel %vm3430, %v3417, %v2091
        %v3520 = vsel %vm3430, %v3419, %v2093
        %v3522 = vsel %vm3430, %v3421, %v2095
        %v3524 = vsel %vm3430, %v3423, %v2097
        %v3526 = vsel %vm3430, %v3425, %v2099
        %v3528 = vsel %vm3430, %v3427, %v2101
        %v3530 = vsel %vm3430, %v3429, %v2103
        %vm3531 = vcmask 588800
        %v3532 = vsel %vm3531, %v3432, %v1611
        %v3533 = vsel %vm3531, %v3434, %v1613
        %v3534 = vsel %vm3531, %v3436, %v1615
        %v3535 = vsel %vm3531, %v3438, %v1617
        %v3536 = vsel %vm3531, %v3440, %v1619
        %v3537 = vsel %vm3531, %v3442, %v1621
        %v3538 = vsel %vm3531, %v3444, %v1623
        %v3539 = vsel %vm3531, %v3446, %v1625
        %v3540 = vsel %vm3531, %v3448, %v1627
        %v3541 = vsel %vm3531, %v3450, %v1629
        %v3542 = vsel %vm3531, %v3452, %v1631
        %v3543 = vsel %vm3531, %v3454, %v1633
        %v3544 = vsel %vm3531, %v3456, %v1635
        %v3545 = vsel %vm3531, %v3458, %v1637
        %v3546 = vsel %vm3531, %v3460, %v1639
        %v3547 = vsel %vm3531, %v3462, %v1641
        %v3548 = vsel %vm3531, %v3464, %v1643
        %v3549 = vsel %vm3531, %v3466, %v1645
        %v3550 = vsel %vm3531, %v3468, %v1647
        %v3551 = vsel %vm3531, %v3470, %v1649
        %v3552 = vsel %vm3531, %v3472, %v1651
        %v3553 = vsel %vm3531, %v3474, %v1653
        %v3554 = vsel %vm3531, %v3476, %v1655
        %v3555 = vsel %vm3531, %v3478, %v1657
        %v3556 = vsel %vm3531, %v3480, %v1659
        %v3557 = vsel %vm3531, %v3482, %v1661
        %v3558 = vsel %vm3531, %v3484, %v1663
        %v3559 = vsel %vm3531, %v3486, %v1665
        %v3560 = vsel %vm3531, %v3488, %v1667
        %v3561 = vsel %vm3531, %v3490, %v1669
        %v3562 = vsel %vm3531, %v3492, %v1671
        %v3563 = vsel %vm3531, %v3494, %v1673
        %v3564 = vsel %vm3531, %v3496, %v1675
        %v3565 = vsel %vm3531, %v3498, %v1677
        %v3566 = vsel %vm3531, %v3500, %v1679
        %v3567 = vsel %vm3531, %v3502, %v1681
        %v3568 = vsel %vm3531, %v3504, %v1683
        %v3569 = vsel %vm3531, %v3506, %v1685
        %v3570 = vsel %vm3531, %v3508, %v1687
        %v3571 = vsel %vm3531, %v3510, %v1689
        %v3572 = vsel %vm3531, %v3512, %v1691
        %v3573 = vsel %vm3531, %v3514, %v1693
        %v3574 = vsel %vm3531, %v3516, %v1695
        %v3575 = vsel %vm3531, %v3518, %v1697
        %v3576 = vsel %vm3531, %v3520, %v1699
        %v3577 = vsel %vm3531, %v3522, %v1701
        %v3579 = vsel %vm3531, %v3524, %v2107
        %v3581 = vsel %vm3531, %v3526, %v2109
        %v3583 = vsel %vm3531, %v3528, %v2111
        %v3585 = vsel %vm3531, %v3530, %v2113
        %vm3586 = vcmask 793600
        %v3588 = vsel %vm3586, %v3532, %v2115
        %v3590 = vsel %vm3586, %v3533, %v2117
        %v3592 = vsel %vm3586, %v3534, %v2119
        %v3594 = vsel %vm3586, %v3535, %v2121
        %v3596 = vsel %vm3586, %v3536, %v2123
        %v3598 = vsel %vm3586, %v3537, %v2125
        %v3600 = vsel %vm3586, %v3538, %v2127
        %v3602 = vsel %vm3586, %v3539, %v2129
        %v3604 = vsel %vm3586, %v3540, %v2131
        %v3606 = vsel %vm3586, %v3541, %v2133
        %v3608 = vsel %vm3586, %v3542, %v2135
        %v3610 = vsel %vm3586, %v3543, %v2137
        %v3612 = vsel %vm3586, %v3544, %v2139
        %v3614 = vsel %vm3586, %v3545, %v2141
        %v3616 = vsel %vm3586, %v3546, %v2143
        %v3618 = vsel %vm3586, %v3547, %v2145
        %v3620 = vsel %vm3586, %v3548, %v2147
        %v3622 = vsel %vm3586, %v3549, %v2149
        %v3624 = vsel %vm3586, %v3550, %v2151
        %v3626 = vsel %vm3586, %v3551, %v2153
        %v3628 = vsel %vm3586, %v3552, %v2155
        %v3630 = vsel %vm3586, %v3553, %v2157
        %v3632 = vsel %vm3586, %v3554, %v2159
        %v3634 = vsel %vm3586, %v3555, %v2161
        %v3636 = vsel %vm3586, %v3556, %v2163
        %v3638 = vsel %vm3586, %v3557, %v2165
        %v3640 = vsel %vm3586, %v3558, %v2167
        %v3642 = vsel %vm3586, %v3559, %v2169
        %v3644 = vsel %vm3586, %v3560, %v2171
        %v3646 = vsel %vm3586, %v3561, %v2173
        %v3648 = vsel %vm3586, %v3562, %v2175
        %v3650 = vsel %vm3586, %v3563, %v2177
        %v3652 = vsel %vm3586, %v3564, %v2179
        %v3654 = vsel %vm3586, %v3565, %v2181
        %v3656 = vsel %vm3586, %v3566, %v2183
        %v3658 = vsel %vm3586, %v3567, %v2185
        %v3660 = vsel %vm3586, %v3568, %v2187
        %v3662 = vsel %vm3586, %v3569, %v2189
        %v3664 = vsel %vm3586, %v3570, %v2191
        %v3666 = vsel %vm3586, %v3571, %v2193
        %v3668 = vsel %vm3586, %v3572, %v2195
        %v3670 = vsel %vm3586, %v3573, %v2197
        %v3672 = vsel %vm3586, %v3574, %v2199
        %v3674 = vsel %vm3586, %v3575, %v2201
        %v3676 = vsel %vm3586, %v3576, %v2203
        %v3678 = vsel %vm3586, %v3577, %v2205
        %v3680 = vsel %vm3586, %v3579, %v2207
        %v3682 = vsel %vm3586, %v3581, %v2209
        %v3684 = vsel %vm3586, %v3583, %v2211
        %v3686 = vsel %vm3586, %v3585, %v2213
        %vm3687 = vcmask 998400
        %v3689 = vsel %vm3687, %v3588, %v2215
        %v3692 = vsel %vm3687, %v3590, %v2217
        %v3695 = vsel %vm3687, %v3592, %v2219
        %v3698 = vsel %vm3687, %v3594, %v2221
        %v3701 = vsel %vm3687, %v3596, %v2223
        %v3704 = vsel %vm3687, %v3598, %v2225
        %v3707 = vsel %vm3687, %v3600, %v2227
        %v3710 = vsel %vm3687, %v3602, %v2229
        %v3713 = vsel %vm3687, %v3604, %v2231
        %v3716 = vsel %vm3687, %v3606, %v2233
        %v3719 = vsel %vm3687, %v3608, %v2235
        %v3722 = vsel %vm3687, %v3610, %v2237
        %v3725 = vsel %vm3687, %v3612, %v2239
        %v3728 = vsel %vm3687, %v3614, %v2241
        %v3731 = vsel %vm3687, %v3616, %v2243
        %v3734 = vsel %vm3687, %v3618, %v2245
        %v3737 = vsel %vm3687, %v3620, %v2247
        %v3740 = vsel %vm3687, %v3622, %v2249
        %v3743 = vsel %vm3687, %v3624, %v2251
        %v3746 = vsel %vm3687, %v3626, %v2253
        %v3749 = vsel %vm3687, %v3628, %v2255
        %v3752 = vsel %vm3687, %v3630, %v2257
        %v3755 = vsel %vm3687, %v3632, %v2259
        %v3758 = vsel %vm3687, %v3634, %v2261
        %v3761 = vsel %vm3687, %v3636, %v2263
        %v3764 = vsel %vm3687, %v3638, %v2265
        %v3767 = vsel %vm3687, %v3640, %v2267
        %v3770 = vsel %vm3687, %v3642, %v2269
        %v3773 = vsel %vm3687, %v3644, %v2271
        %v3776 = vsel %vm3687, %v3646, %v2273
        %v3779 = vsel %vm3687, %v3648, %v2275
        %v3782 = vsel %vm3687, %v3650, %v2277
        %v3785 = vsel %vm3687, %v3652, %v2279
        %v3788 = vsel %vm3687, %v3654, %v2281
        %v3791 = vsel %vm3687, %v3656, %v2283
        %v3794 = vsel %vm3687, %v3658, %v2285
        %v3797 = vsel %vm3687, %v3660, %v2287
        %v3800 = vsel %vm3687, %v3662, %v2289
        %v3803 = vsel %vm3687, %v3664, %v2291
        %v3806 = vsel %vm3687, %v3666, %v2293
        %v3809 = vsel %vm3687, %v3668, %v2295
        %v3812 = vsel %vm3687, %v3670, %v2297
        %v3815 = vsel %vm3687, %v3672, %v2299
        %v3818 = vsel %vm3687, %v3674, %v2301
        %v3821 = vsel %vm3687, %v3676, %v2303
        %v3824 = vsel %vm3687, %v3678, %v2305
        %v3827 = vsel %vm3687, %v3680, %v2307
        %v3830 = vsel %vm3687, %v3682, %v2309
        %v3833 = vsel %vm3687, %v3684, %v2311
        %v3836 = vsel %vm3687, %v3686, %v2313
        %vm3838 = vcmask 154624
        %v3840 = vsel %vm3838, %v2215, %v2315
        %v3842 = vsel %vm3838, %v2217, %v2317
        %v3844 = vsel %vm3838, %v2219, %v2319
        %v3846 = vsel %vm3838, %v2221, %v2321
        %v3848 = vsel %vm3838, %v2223, %v2323
        %v3850 = vsel %vm3838, %v2225, %v2325
        %v3852 = vsel %vm3838, %v2227, %v2327
        %v3854 = vsel %vm3838, %v2229, %v2329
        %v3856 = vsel %vm3838, %v2231, %v2331
        %v3858 = vsel %vm3838, %v2233, %v2333
        %v3860 = vsel %vm3838, %v2235, %v2335
        %v3862 = vsel %vm3838, %v2237, %v2337
        %v3864 = vsel %vm3838, %v2239, %v2339
        %v3866 = vsel %vm3838, %v2241, %v2341
        %v3868 = vsel %vm3838, %v2243, %v2343
        %v3870 = vsel %vm3838, %v2245, %v2345
        %v3872 = vsel %vm3838, %v2247, %v2347
        %v3874 = vsel %vm3838, %v2249, %v2349
        %v3876 = vsel %vm3838, %v2251, %v2351
        %v3878 = vsel %vm3838, %v2253, %v2353
        %v3880 = vsel %vm3838, %v2255, %v2355
        %v3882 = vsel %vm3838, %v2257, %v2357
        %v3884 = vsel %vm3838, %v2259, %v2359
        %v3886 = vsel %vm3838, %v2261, %v2361
        %v3888 = vsel %vm3838, %v2263, %v2363
        %v3890 = vsel %vm3838, %v2265, %v2365
        %v3892 = vsel %vm3838, %v2267, %v2367
        %v3894 = vsel %vm3838, %v2269, %v2369
        %v3896 = vsel %vm3838, %v2271, %v2371
        %v3898 = vsel %vm3838, %v2273, %v2373
        %v3900 = vsel %vm3838, %v2275, %v2375
        %v3902 = vsel %vm3838, %v2277, %v2377
        %v3904 = vsel %vm3838, %v2279, %v2379
        %v3906 = vsel %vm3838, %v2281, %v2381
        %v3908 = vsel %vm3838, %v2283, %v2383
        %v3910 = vsel %vm3838, %v2285, %v2385
        %v3912 = vsel %vm3838, %v2287, %v2387
        %v3914 = vsel %vm3838, %v2289, %v2389
        %v3916 = vsel %vm3838, %v2291, %v2391
        %v3918 = vsel %vm3838, %v2293, %v2393
        %v3920 = vsel %vm3838, %v2295, %v2395
        %v3922 = vsel %vm3838, %v2297, %v2397
        %v3924 = vsel %vm3838, %v2299, %v2399
        %v3926 = vsel %vm3838, %v2301, %v2401
        %v3928 = vsel %vm3838, %v2303, %v2403
        %v3930 = vsel %vm3838, %v2305, %v2405
        %v3932 = vsel %vm3838, %v2307, %v2407
        %v3934 = vsel %vm3838, %v2309, %v2409
        %v3936 = vsel %vm3838, %v2311, %v2411
        %v3938 = vsel %vm3838, %v2313, %v2413
        %vm3939 = vcmask 359424
        %v3940 = vsel %vm3939, %v3840, %v2013
        %v3941 = vsel %vm3939, %v3842, %v2015
        %v3942 = vsel %vm3939, %v3844, %v2017
        %v3943 = vsel %vm3939, %v3846, %v2019
        %v3944 = vsel %vm3939, %v3848, %v2021
        %v3945 = vsel %vm3939, %v3850, %v2023
        %v3946 = vsel %vm3939, %v3852, %v2025
        %v3947 = vsel %vm3939, %v3854, %v2027
        %v3948 = vsel %vm3939, %v3856, %v2029
        %v3949 = vsel %vm3939, %v3858, %v2031
        %v3950 = vsel %vm3939, %v3860, %v2033
        %v3951 = vsel %vm3939, %v3862, %v2035
        %v3952 = vsel %vm3939, %v3864, %v2037
        %v3953 = vsel %vm3939, %v3866, %v2039
        %v3954 = vsel %vm3939, %v3868, %v2041
        %v3955 = vsel %vm3939, %v3870, %v2043
        %v3956 = vsel %vm3939, %v3872, %v2045
        %v3957 = vsel %vm3939, %v3874, %v2047
        %v3958 = vsel %vm3939, %v3876, %v2049
        %v3959 = vsel %vm3939, %v3878, %v2051
        %v3960 = vsel %vm3939, %v3880, %v2053
        %v3961 = vsel %vm3939, %v3882, %v2055
        %v3962 = vsel %vm3939, %v3884, %v2057
        %v3963 = vsel %vm3939, %v3886, %v2059
        %v3964 = vsel %vm3939, %v3888, %v2061
        %v3965 = vsel %vm3939, %v3890, %v2063
        %v3966 = vsel %vm3939, %v3892, %v2065
        %v3967 = vsel %vm3939, %v3894, %v2067
        %v3968 = vsel %vm3939, %v3896, %v2069
        %v3969 = vsel %vm3939, %v3898, %v2071
        %v3970 = vsel %vm3939, %v3900, %v2073
        %v3971 = vsel %vm3939, %v3902, %v2075
        %v3972 = vsel %vm3939, %v3904, %v2077
        %v3973 = vsel %vm3939, %v3906, %v2079
        %v3974 = vsel %vm3939, %v3908, %v2081
        %v3975 = vsel %vm3939, %v3910, %v2083
        %v3976 = vsel %vm3939, %v3912, %v2085
        %v3977 = vsel %vm3939, %v3914, %v2087
        %v3978 = vsel %vm3939, %v3916, %v2089
        %v3979 = vsel %vm3939, %v3918, %v2091
        %v3980 = vsel %vm3939, %v3920, %v2093
        %v3981 = vsel %vm3939, %v3922, %v2095
        %v3982 = vsel %vm3939, %v3924, %v2097
        %v3983 = vsel %vm3939, %v3926, %v2099
        %v3984 = vsel %vm3939, %v3928, %v2101
        %v3985 = vsel %vm3939, %v3930, %v2103
        %v3987 = vsel %vm3939, %v3932, %v2417
        %v3989 = vsel %vm3939, %v3934, %v2419
        %v3991 = vsel %vm3939, %v3936, %v2421
        %v3993 = vsel %vm3939, %v3938, %v2423
        %vm3994 = vcmask 564224
        %v3996 = vsel %vm3994, %v3940, %v2425
        %v3998 = vsel %vm3994, %v3941, %v2427
        %v4000 = vsel %vm3994, %v3942, %v2429
        %v4002 = vsel %vm3994, %v3943, %v2431
        %v4004 = vsel %vm3994, %v3944, %v2433
        %v4006 = vsel %vm3994, %v3945, %v2435
        %v4008 = vsel %vm3994, %v3946, %v2437
        %v4010 = vsel %vm3994, %v3947, %v2439
        %v4012 = vsel %vm3994, %v3948, %v2441
        %v4014 = vsel %vm3994, %v3949, %v2443
        %v4016 = vsel %vm3994, %v3950, %v2445
        %v4018 = vsel %vm3994, %v3951, %v2447
        %v4020 = vsel %vm3994, %v3952, %v2449
        %v4022 = vsel %vm3994, %v3953, %v2451
        %v4024 = vsel %vm3994, %v3954, %v2453
        %v4026 = vsel %vm3994, %v3955, %v2455
        %v4028 = vsel %vm3994, %v3956, %v2457
        %v4030 = vsel %vm3994, %v3957, %v2459
        %v4032 = vsel %vm3994, %v3958, %v2461
        %v4034 = vsel %vm3994, %v3959, %v2463
        %v4036 = vsel %vm3994, %v3960, %v2465
        %v4038 = vsel %vm3994, %v3961, %v2467
        %v4040 = vsel %vm3994, %v3962, %v2469
        %v4042 = vsel %vm3994, %v3963, %v2471
        %v4044 = vsel %vm3994, %v3964, %v2473
        %v4046 = vsel %vm3994, %v3965, %v2475
        %v4048 = vsel %vm3994, %v3966, %v2477
        %v4050 = vsel %vm3994, %v3967, %v2479
        %v4052 = vsel %vm3994, %v3968, %v2481
        %v4054 = vsel %vm3994, %v3969, %v2483
        %v4056 = vsel %vm3994, %v3970, %v2485
        %v4058 = vsel %vm3994, %v3971, %v2487
        %v4060 = vsel %vm3994, %v3972, %v2489
        %v4062 = vsel %vm3994, %v3973, %v2491
        %v4064 = vsel %vm3994, %v3974, %v2493
        %v4066 = vsel %vm3994, %v3975, %v2495
        %v4068 = vsel %vm3994, %v3976, %v2497
        %v4070 = vsel %vm3994, %v3977, %v2499
        %v4072 = vsel %vm3994, %v3978, %v2501
        %v4074 = vsel %vm3994, %v3979, %v2503
        %v4076 = vsel %vm3994, %v3980, %v2505
        %v4078 = vsel %vm3994, %v3981, %v2507
        %v4080 = vsel %vm3994, %v3982, %v2509
        %v4082 = vsel %vm3994, %v3983, %v2511
        %v4084 = vsel %vm3994, %v3984, %v2513
        %v4086 = vsel %vm3994, %v3985, %v2515
        %v4088 = vsel %vm3994, %v3987, %v2517
        %v4090 = vsel %vm3994, %v3989, %v2519
        %v4092 = vsel %vm3994, %v3991, %v2521
        %v4094 = vsel %vm3994, %v3993, %v2523
        %vm4095 = vcmask 769024
        %v4097 = vsel %vm4095, %v3996, %v2525
        %v4099 = vsel %vm4095, %v3998, %v2527
        %v4101 = vsel %vm4095, %v4000, %v2529
        %v4103 = vsel %vm4095, %v4002, %v2531
        %v4105 = vsel %vm4095, %v4004, %v2533
        %v4107 = vsel %vm4095, %v4006, %v2535
        %v4109 = vsel %vm4095, %v4008, %v2537
        %v4111 = vsel %vm4095, %v4010, %v2539
        %v4113 = vsel %vm4095, %v4012, %v2541
        %v4115 = vsel %vm4095, %v4014, %v2543
        %v4117 = vsel %vm4095, %v4016, %v2545
        %v4119 = vsel %vm4095, %v4018, %v2547
        %v4121 = vsel %vm4095, %v4020, %v2549
        %v4123 = vsel %vm4095, %v4022, %v2551
        %v4125 = vsel %vm4095, %v4024, %v2553
        %v4127 = vsel %vm4095, %v4026, %v2555
        %v4129 = vsel %vm4095, %v4028, %v2557
        %v4131 = vsel %vm4095, %v4030, %v2559
        %v4133 = vsel %vm4095, %v4032, %v2561
        %v4135 = vsel %vm4095, %v4034, %v2563
        %v4137 = vsel %vm4095, %v4036, %v2565
        %v4139 = vsel %vm4095, %v4038, %v2567
        %v4141 = vsel %vm4095, %v4040, %v2569
        %v4143 = vsel %vm4095, %v4042, %v2571
        %v4145 = vsel %vm4095, %v4044, %v2573
        %v4147 = vsel %vm4095, %v4046, %v2575
        %v4149 = vsel %vm4095, %v4048, %v2577
        %v4151 = vsel %vm4095, %v4050, %v2579
        %v4153 = vsel %vm4095, %v4052, %v2581
        %v4155 = vsel %vm4095, %v4054, %v2583
        %v4157 = vsel %vm4095, %v4056, %v2585
        %v4159 = vsel %vm4095, %v4058, %v2587
        %v4161 = vsel %vm4095, %v4060, %v2589
        %v4163 = vsel %vm4095, %v4062, %v2591
        %v4165 = vsel %vm4095, %v4064, %v2593
        %v4167 = vsel %vm4095, %v4066, %v2595
        %v4169 = vsel %vm4095, %v4068, %v2597
        %v4171 = vsel %vm4095, %v4070, %v2599
        %v4173 = vsel %vm4095, %v4072, %v2601
        %v4175 = vsel %vm4095, %v4074, %v2603
        %v4177 = vsel %vm4095, %v4076, %v2605
        %v4179 = vsel %vm4095, %v4078, %v2607
        %v4181 = vsel %vm4095, %v4080, %v2609
        %v4183 = vsel %vm4095, %v4082, %v2611
        %v4185 = vsel %vm4095, %v4084, %v2613
        %v4187 = vsel %vm4095, %v4086, %v2615
        %v4189 = vsel %vm4095, %v4088, %v2617
        %v4191 = vsel %vm4095, %v4090, %v2619
        %v4193 = vsel %vm4095, %v4092, %v2621
        %v4195 = vsel %vm4095, %v4094, %v2623
        %vm4196 = vcmask 973824
        %v4198 = vsel %vm4196, %v4097, %v2625
        %v4201 = vsel %vm4196, %v4099, %v2627
        %v4204 = vsel %vm4196, %v4101, %v2629
        %v4207 = vsel %vm4196, %v4103, %v2631
        %v4210 = vsel %vm4196, %v4105, %v2633
        %v4213 = vsel %vm4196, %v4107, %v2635
        %v4216 = vsel %vm4196, %v4109, %v2637
        %v4219 = vsel %vm4196, %v4111, %v2639
        %v4222 = vsel %vm4196, %v4113, %v2641
        %v4225 = vsel %vm4196, %v4115, %v2643
        %v4228 = vsel %vm4196, %v4117, %v2645
        %v4231 = vsel %vm4196, %v4119, %v2647
        %v4234 = vsel %vm4196, %v4121, %v2649
        %v4237 = vsel %vm4196, %v4123, %v2651
        %v4240 = vsel %vm4196, %v4125, %v2653
        %v4243 = vsel %vm4196, %v4127, %v2655
        %v4246 = vsel %vm4196, %v4129, %v2657
        %v4249 = vsel %vm4196, %v4131, %v2659
        %v4252 = vsel %vm4196, %v4133, %v2661
        %v4255 = vsel %vm4196, %v4135, %v2663
        %v4258 = vsel %vm4196, %v4137, %v2665
        %v4261 = vsel %vm4196, %v4139, %v2667
        %v4264 = vsel %vm4196, %v4141, %v2669
        %v4267 = vsel %vm4196, %v4143, %v2671
        %v4270 = vsel %vm4196, %v4145, %v2673
        %v4273 = vsel %vm4196, %v4147, %v2675
        %v4276 = vsel %vm4196, %v4149, %v2677
        %v4279 = vsel %vm4196, %v4151, %v2679
        %v4282 = vsel %vm4196, %v4153, %v2681
        %v4285 = vsel %vm4196, %v4155, %v2683
        %v4288 = vsel %vm4196, %v4157, %v2685
        %v4291 = vsel %vm4196, %v4159, %v2687
        %v4294 = vsel %vm4196, %v4161, %v2689
        %v4297 = vsel %vm4196, %v4163, %v2691
        %v4300 = vsel %vm4196, %v4165, %v2693
        %v4303 = vsel %vm4196, %v4167, %v2695
        %v4306 = vsel %vm4196, %v4169, %v2697
        %v4309 = vsel %vm4196, %v4171, %v2699
        %v4312 = vsel %vm4196, %v4173, %v2701
        %v4315 = vsel %vm4196, %v4175, %v2703
        %v4318 = vsel %vm4196, %v4177, %v2705
        %v4321 = vsel %vm4196, %v4179, %v2707
        %v4324 = vsel %vm4196, %v4181, %v2709
        %v4327 = vsel %vm4196, %v4183, %v2711
        %v4330 = vsel %vm4196, %v4185, %v2713
        %v4333 = vsel %vm4196, %v4187, %v2715
        %v4336 = vsel %vm4196, %v4189, %v2717
        %v4339 = vsel %vm4196, %v4191, %v2719
        %v4342 = vsel %vm4196, %v4193, %v2721
        %v4345 = vsel %vm4196, %v4195, %v2723
        %v4348 = vlaneseq
        %v4349 = vshrl.u32 %v4348, 7
        %v4350 = vsub.s32 0, %v4349
        %v4351 = vrot.slane %v973, %v4350
        %v4352 = vlaneseq
        %v4353 = vshrl.u32 %v4352, 7
        %v4354 = vsub.s32 1, %v4353
        %v4355 = vrot.slane %v973, %v4354
        %v4408 = vunpack.c.l.b16 %v923
        %v4409 = vunpack.c.h.b16 %v923
        %v4410 = vunpack.c.l.b16 %v924
        %v4411 = vunpack.c.h.b16 %v924
        %v4412 = vunpack.c.l.b16 %v925
        %v4413 = vunpack.c.h.b16 %v925
        %v4414 = vunpack.c.l.b16 %v926
        %v4415 = vunpack.c.h.b16 %v926
        %v4416 = vunpack.c.l.b16 %v927
        %v4417 = vunpack.c.h.b16 %v927
        %v4418 = vunpack.c.l.b16 %v928
        %v4419 = vunpack.c.h.b16 %v928
        %v4420 = vunpack.c.l.b16 %v929
        %v4421 = vunpack.c.h.b16 %v929
        %v4422 = vunpack.c.l.b16 %v930
        %v4423 = vunpack.c.h.b16 %v930
        %v4424 = vunpack.c.l.b16 %v931
        %v4425 = vunpack.c.h.b16 %v931
        %v4426 = vunpack.c.l.b16 %v932
        %v4427 = vunpack.c.h.b16 %v932
        %v4428 = vunpack.c.l.b16 %v933
        %v4429 = vunpack.c.h.b16 %v933
        %v4430 = vunpack.c.l.b16 %v934
        %v4431 = vunpack.c.h.b16 %v934
        %v4432 = vunpack.c.l.b16 %v935
        %v4433 = vunpack.c.h.b16 %v935
        %v4434 = vunpack.c.l.b16 %v936
        %v4435 = vunpack.c.h.b16 %v936
        %v4436 = vunpack.c.l.b16 %v937
        %v4437 = vunpack.c.h.b16 %v937
        %v4438 = vunpack.c.l.b16 %v938
        %v4439 = vunpack.c.h.b16 %v938
        %v4440 = vunpack.c.l.b16 %v939
        %v4441 = vunpack.c.h.b16 %v939
        %v4442 = vunpack.c.l.b16 %v940
        %v4443 = vunpack.c.h.b16 %v940
        %v4444 = vunpack.c.l.b16 %v941
        %v4445 = vunpack.c.h.b16 %v941
        %v4446 = vunpack.c.l.b16 %v942
        %v4447 = vunpack.c.h.b16 %v942
        %v4448 = vunpack.c.l.b16 %v943
        %v4449 = vunpack.c.h.b16 %v943
        %v4450 = vunpack.c.l.b16 %v944
        %v4451 = vunpack.c.h.b16 %v944
        %v4452 = vunpack.c.l.b16 %v945
        %v4453 = vunpack.c.h.b16 %v945
        %v4454 = vunpack.c.l.b16 %v946
        %v4455 = vunpack.c.h.b16 %v946
        %v4456 = vunpack.c.l.b16 %v947
        %v4457 = vunpack.c.h.b16 %v947
        %v4458 = vunpack.c.l.b16 %v948
        %v4459 = vunpack.c.h.b16 %v948
        %v4460 = vunpack.c.l.b16 %v949
        %v4461 = vunpack.c.h.b16 %v949
        %v4462 = vunpack.c.l.b16 %v950
        %v4463 = vunpack.c.h.b16 %v950
        %v4464 = vunpack.c.l.b16 %v951
        %v4465 = vunpack.c.h.b16 %v951
        %v4466 = vunpack.c.l.b16 %v952
        %v4467 = vunpack.c.h.b16 %v952
        %v4468 = vunpack.c.l.b16 %v953
        %v4469 = vunpack.c.h.b16 %v953
        %v4470 = vunpack.c.l.b16 %v954
        %v4471 = vunpack.c.h.b16 %v954
        %v4472 = vunpack.c.l.b16 %v955
        %v4473 = vunpack.c.h.b16 %v955
        %v4474 = vunpack.c.l.b16 %v956
        %v4475 = vunpack.c.h.b16 %v956
        %v4476 = vunpack.c.l.b16 %v957
        %v4477 = vunpack.c.h.b16 %v957
        %v4478 = vunpack.c.l.b16 %v958
        %v4479 = vunpack.c.h.b16 %v958
        %v4480 = vunpack.c.l.b16 %v959
        %v4481 = vunpack.c.h.b16 %v959
        %v4482 = vunpack.c.l.b16 %v960
        %v4483 = vunpack.c.h.b16 %v960
        %v4484 = vunpack.c.l.b16 %v961
        %v4485 = vunpack.c.h.b16 %v961
        %v4486 = vunpack.c.l.b16 %v962
        %v4487 = vunpack.c.h.b16 %v962
        %v4488 = vunpack.c.l.b16 %v963
        %v4489 = vunpack.c.h.b16 %v963
        %v4490 = vunpack.c.l.b16 %v964
        %v4491 = vunpack.c.h.b16 %v964
        %v4492 = vunpack.c.l.b16 %v965
        %v4493 = vunpack.c.h.b16 %v965
        %v4494 = vunpack.c.l.b16 %v966
        %v4495 = vunpack.c.h.b16 %v966
        %v4496 = vunpack.c.l.b16 %v967
        %v4497 = vunpack.c.h.b16 %v967
        %v4498 = vunpack.c.l.b16 %v968
        %v4499 = vunpack.c.h.b16 %v968
        %v4500 = vunpack.c.l.b16 %v969
        %v4501 = vunpack.c.h.b16 %v969
        %v4502 = vunpack.c.l.b16 %v970
        %v4503 = vunpack.c.h.b16 %v970
        %v4504 = vunpack.c.l.b16 %v971
        %v4505 = vunpack.c.h.b16 %v971
        %v4506 = vunpack.c.l.b16 %v972
        %v4507 = vunpack.c.h.b16 %v972
        %v4508 = vpack.c.b16 %v4410, %v4408
        %v4509 = vpack.c.b16 %v4411, %v4409
        %v4510 = vpack.c.b16 %v4414, %v4412
        %v4511 = vpack.c.b16 %v4415, %v4413
        %v4512 = vpack.c.b16 %v4418, %v4416
        %v4513 = vpack.c.b16 %v4419, %v4417
        %v4514 = vpack.c.b16 %v4422, %v4420
        %v4515 = vpack.c.b16 %v4423, %v4421
        %v4516 = vpack.c.b16 %v4426, %v4424
        %v4517 = vpack.c.b16 %v4427, %v4425
        %v4518 = vpack.c.b16 %v4430, %v4428
        %v4519 = vpack.c.b16 %v4431, %v4429
        %v4520 = vpack.c.b16 %v4434, %v4432
        %v4521 = vpack.c.b16 %v4435, %v4433
        %v4522 = vpack.c.b16 %v4438, %v4436
        %v4523 = vpack.c.b16 %v4439, %v4437
        %v4524 = vpack.c.b16 %v4442, %v4440
        %v4525 = vpack.c.b16 %v4443, %v4441
        %v4526 = vpack.c.b16 %v4446, %v4444
        %v4527 = vpack.c.b16 %v4447, %v4445
        %v4528 = vpack.c.b16 %v4450, %v4448
        %v4529 = vpack.c.b16 %v4451, %v4449
        %v4530 = vpack.c.b16 %v4454, %v4452
        %v4531 = vpack.c.b16 %v4455, %v4453
        %v4532 = vpack.c.b16 %v4458, %v4456
        %v4533 = vpack.c.b16 %v4459, %v4457
        %v4534 = vpack.c.b16 %v4462, %v4460
        %v4535 = vpack.c.b16 %v4463, %v4461
        %v4536 = vpack.c.b16 %v4466, %v4464
        %v4537 = vpack.c.b16 %v4467, %v4465
        %v4538 = vpack.c.b16 %v4470, %v4468
        %v4539 = vpack.c.b16 %v4471, %v4469
        %v4540 = vpack.c.b16 %v4474, %v4472
        %v4541 = vpack.c.b16 %v4475, %v4473
        %v4542 = vpack.c.b16 %v4478, %v4476
        %v4543 = vpack.c.b16 %v4479, %v4477
        %v4544 = vpack.c.b16 %v4482, %v4480
        %v4545 = vpack.c.b16 %v4483, %v4481
        %v4546 = vpack.c.b16 %v4486, %v4484
        %v4547 = vpack.c.b16 %v4487, %v4485
        %v4548 = vpack.c.b16 %v4490, %v4488
        %v4549 = vpack.c.b16 %v4491, %v4489
        %v4550 = vpack.c.b16 %v4494, %v4492
        %v4551 = vpack.c.b16 %v4495, %v4493
        %v4552 = vpack.c.b16 %v4498, %v4496
        %v4553 = vpack.c.b16 %v4499, %v4497
        %v4554 = vpack.c.b16 %v4502, %v4500
        %v4555 = vpack.c.b16 %v4503, %v4501
        %v4556 = vpack.c.b16 %v4506, %v4504
        %v4557 = vpack.c.b16 %v4507, %v4505
        %vm4608 = vcmask 130048
        %v4609 = vsel %vm4608, %v2625, 0
        %v4611 = vsel %vm4608, %v2627, 0
        %v4613 = vsel %vm4608, %v2629, 0
        %v4615 = vsel %vm4608, %v2631, 0
        %v4617 = vsel %vm4608, %v2633, 0
        %v4619 = vsel %vm4608, %v2635, 0
        %v4621 = vsel %vm4608, %v2637, 0
        %v4623 = vsel %vm4608, %v2639, 0
        %v4625 = vsel %vm4608, %v2641, 0
        %v4627 = vsel %vm4608, %v2643, 0
        %v4629 = vsel %vm4608, %v2645, 0
        %v4631 = vsel %vm4608, %v2647, 0
        %v4633 = vsel %vm4608, %v2649, 0
        %v4635 = vsel %vm4608, %v2651, 0
        %v4637 = vsel %vm4608, %v2653, 0
        %v4639 = vsel %vm4608, %v2655, 0
        %v4641 = vsel %vm4608, %v2657, 0
        %v4643 = vsel %vm4608, %v2659, 0
        %v4645 = vsel %vm4608, %v2661, 0
        %v4647 = vsel %vm4608, %v2663, 0
        %v4649 = vsel %vm4608, %v2665, 0
        %v4651 = vsel %vm4608, %v2667, 0
        %v4653 = vsel %vm4608, %v2669, 0
        %v4655 = vsel %vm4608, %v2671, 0
        %v4657 = vsel %vm4608, %v2673, 0
        %v4659 = vsel %vm4608, %v2675, 0
        %v4661 = vsel %vm4608, %v2677, 0
        %v4663 = vsel %vm4608, %v2679, 0
        %v4665 = vsel %vm4608, %v2681, 0
        %v4667 = vsel %vm4608, %v2683, 0
        %v4669 = vsel %vm4608, %v2685, 0
        %v4671 = vsel %vm4608, %v2687, 0
        %v4673 = vsel %vm4608, %v2689, 0
        %v4675 = vsel %vm4608, %v2691, 0
        %v4677 = vsel %vm4608, %v2693, 0
        %v4679 = vsel %vm4608, %v2695, 0
        %v4681 = vsel %vm4608, %v2697, 0
        %v4683 = vsel %vm4608, %v2699, 0
        %v4685 = vsel %vm4608, %v2701, 0
        %v4687 = vsel %vm4608, %v2703, 0
        %v4689 = vsel %vm4608, %v2705, 0
        %v4691 = vsel %vm4608, %v2707, 0
        %v4693 = vsel %vm4608, %v2709, 0
        %v4695 = vsel %vm4608, %v2711, 0
        %v4697 = vsel %vm4608, %v2713, 0
        %v4699 = vsel %vm4608, %v2715, 0
        %v4701 = vsel %vm4608, %v2717, 0
        %v4703 = vsel %vm4608, %v2719, 0
        %v4705 = vsel %vm4608, %v2721, 0
        %v4707 = vsel %vm4608, %v2723, 0
        %4709 = vmatprep.subr.bf16.mxu0 %v4509
        %4710 = vmatpush1.bf16.msra.mxu0 %v4508
        %4711 = vmatprep.subr.bf16.mxu0 %v4511
        %4712 = vmatpush1.bf16.msra.mxu0 %v4510
        %4713 = vmatprep.subr.bf16.mxu0 %v4513
        %4714 = vmatpush1.bf16.msra.mxu0 %v4512
        %4715 = vmatprep.subr.bf16.mxu0 %v4515
        %4716 = vmatpush1.bf16.msra.mxu0 %v4514
        %4717 = vmatprep.subr.bf16.mxu0 %v4517
        %4718 = vmatpush1.bf16.msra.mxu0 %v4516
        %4719 = vmatprep.subr.bf16.mxu0 %v4519
        %4720 = vmatpush1.bf16.msra.mxu0 %v4518
        %4721 = vmatprep.subr.bf16.mxu0 %v4521
        %4722 = vmatpush1.bf16.msra.mxu0 %v4520
        %4723 = vmatprep.subr.bf16.mxu0 %v4523
        %4724 = vmatpush1.bf16.msra.mxu0 %v4522
        %4725 = vmatprep.subr.bf16.mxu0 %v4525
        %4726 = vmatpush1.bf16.msra.mxu0 %v4524
        %4727 = vmatprep.subr.bf16.mxu0 %v4527
        %4728 = vmatpush1.bf16.msra.mxu0 %v4526
        %4729 = vmatprep.subr.bf16.mxu0 %v4529
        %4730 = vmatpush1.bf16.msra.mxu0 %v4528
        %4731 = vmatprep.subr.bf16.mxu0 %v4531
        %4732 = vmatpush1.bf16.msra.mxu0 %v4530
        %4733 = vmatprep.subr.bf16.mxu0 %v4533
        %4734 = vmatpush1.bf16.msra.mxu0 %v4532
        %4735 = vmatprep.subr.bf16.mxu0 %v4535
        %4736 = vmatpush1.bf16.msra.mxu0 %v4534
        %4737 = vmatprep.subr.bf16.mxu0 %v4537
        %4738 = vmatpush1.bf16.msra.mxu0 %v4536
        %4739 = vmatprep.subr.bf16.mxu0 %v4539
        %4740 = vmatpush1.bf16.msra.mxu0 %v4538
        %4741 = vmatprep.mubr.bf16.mxu0 %v3689
        %4742 = vmatmul.mubr.bf16.gmra.mrb[0].mxu0 %v3180
        %v4743 = vpop.f32.mrb[0].mxu0
        %v4744 = vadd.f32 %v4351, %v4743
        %v4745 = vpop.f32.mrb[0].mxu0
        %v4746 = vadd.f32 %v4355, %v4745
        %v4747 = vpop.f32.mrb[0].mxu0
        %v4748 = vadd.f32 %v4351, %v4747
        %v4749 = vpop.f32.mrb[0].mxu0
        %v4750 = vadd.f32 %v4355, %v4749
        %4751 = vmatprep.mubr.bf16.mxu0 %v3692
        %4752 = vmatmul.mubr.bf16.gmra.mrb[0].mxu0 %v3183
        %v4753 = vpop.f32.mrb[0].mxu0
        %v4754 = vadd.f32 %v4351, %v4753
        %v4755 = vpop.f32.mrb[0].mxu0
        %v4756 = vadd.f32 %v4355, %v4755
        %v4757 = vpop.f32.mrb[0].mxu0
        %v4758 = vadd.f32 %v4351, %v4757
        %v4759 = vpop.f32.mrb[0].mxu0
        %v4760 = vadd.f32 %v4355, %v4759
        %4761 = vmatprep.mubr.bf16.mxu0 %v3695
        %4762 = vmatmul.mubr.bf16.gmra.mrb[0].mxu0 %v3186
        %v4763 = vpop.f32.mrb[0].mxu0
        %v4764 = vadd.f32 %v4351, %v4763
        %v4765 = vpop.f32.mrb[0].mxu0
        %v4766 = vadd.f32 %v4355, %v4765
        %v4767 = vpop.f32.mrb[0].mxu0
        %v4768 = vadd.f32 %v4351, %v4767
        %v4769 = vpop.f32.mrb[0].mxu0
        %v4770 = vadd.f32 %v4355, %v4769
        %4771 = vmatprep.mubr.bf16.mxu0 %v3698
        %4772 = vmatmul.mubr.bf16.gmra.mrb[0].mxu0 %v3189
        %v4773 = vpop.f32.mrb[0].mxu0
        %v4774 = vadd.f32 %v4351, %v4773
        %v4775 = vpop.f32.mrb[0].mxu0
        %v4776 = vadd.f32 %v4355, %v4775
        %v4777 = vpop.f32.mrb[0].mxu0
        %v4778 = vadd.f32 %v4351, %v4777
        %v4779 = vpop.f32.mrb[0].mxu0
        %v4780 = vadd.f32 %v4355, %v4779
        %4781 = vmatprep.mubr.bf16.mxu0 %v3701
        %4782 = vmatmul.mubr.bf16.gmra.mrb[0].mxu0 %v3192
        %v4783 = vpop.f32.mrb[0].mxu0
        %v4784 = vadd.f32 %v4351, %v4783
        %v4785 = vpop.f32.mrb[0].mxu0
        %v4786 = vadd.f32 %v4355, %v4785
        %v4787 = vpop.f32.mrb[0].mxu0
        %v4788 = vadd.f32 %v4351, %v4787
        %v4789 = vpop.f32.mrb[0].mxu0
        %v4790 = vadd.f32 %v4355, %v4789
        %4791 = vmatprep.mubr.bf16.mxu0 %v3704
        %4792 = vmatmul.mubr.bf16.gmra.mrb[0].mxu0 %v3195
        %v4793 = vpop.f32.mrb[0].mxu0
        %v4794 = vadd.f32 %v4351, %v4793
        %v4795 = vpop.f32.mrb[0].mxu0
        %v4796 = vadd.f32 %v4355, %v4795
        %v4797 = vpop.f32.mrb[0].mxu0
        %v4798 = vadd.f32 %v4351, %v4797
        %v4799 = vpop.f32.mrb[0].mxu0
        %v4800 = vadd.f32 %v4355, %v4799
        %4801 = vmatprep.mubr.bf16.mxu0 %v3707
        %4802 = vmatmul.mubr.bf16.gmra.mrb[0].mxu0 %v3198
        %v4803 = vpop.f32.mrb[0].mxu0
        %v4804 = vadd.f32 %v4351, %v4803
        %v4805 = vpop.f32.mrb[0].mxu0
        %v4806 = vadd.f32 %v4355, %v4805
        %v4807 = vpop.f32.mrb[0].mxu0
        %v4808 = vadd.f32 %v4351, %v4807
        %v4809 = vpop.f32.mrb[0].mxu0
        %v4810 = vadd.f32 %v4355, %v4809
        %4811 = vmatprep.mubr.bf16.mxu0 %v3710
        %4812 = vmatmul.mubr.bf16.gmra.mrb[0].mxu0 %v3201
        %v4813 = vpop.f32.mrb[0].mxu0
        %v4814 = vadd.f32 %v4351, %v4813
        %v4815 = vpop.f32.mrb[0].mxu0
        %v4816 = vadd.f32 %v4355, %v4815
        %v4817 = vpop.f32.mrb[0].mxu0
        %v4818 = vadd.f32 %v4351, %v4817
        %v4819 = vpop.f32.mrb[0].mxu0
        %v4820 = vadd.f32 %v4355, %v4819
        %4821 = vmatprep.mubr.bf16.mxu0 %v3713
        %4822 = vmatmul.mubr.bf16.gmra.mrb[0].mxu0 %v3204
        %v4823 = vpop.f32.mrb[0].mxu0
        %v4824 = vadd.f32 %v4351, %v4823
        %v4825 = vpop.f32.mrb[0].mxu0
        %v4826 = vadd.f32 %v4355, %v4825
        %v4827 = vpop.f32.mrb[0].mxu0
        %v4828 = vadd.f32 %v4351, %v4827
        %v4829 = vpop.f32.mrb[0].mxu0
        %v4830 = vadd.f32 %v4355, %v4829
        %4831 = vmatprep.mubr.bf16.mxu0 %v3716
        %4832 = vmatmul.mubr.bf16.gmra.mrb[0].mxu0 %v3207
        %v4833 = vpop.f32.mrb[0].mxu0
        %v4834 = vadd.f32 %v4351, %v4833
        %v4835 = vpop.f32.mrb[0].mxu0
        %v4836 = vadd.f32 %v4355, %v4835
        %v4837 = vpop.f32.mrb[0].mxu0
        %v4838 = vadd.f32 %v4351, %v4837
        %v4839 = vpop.f32.mrb[0].mxu0
        %v4840 = vadd.f32 %v4355, %v4839
        %4841 = vmatprep.mubr.bf16.mxu0 %v3719
        %4842 = vmatmul.mubr.bf16.gmra.mrb[0].mxu0 %v3210
        %v4843 = vpop.f32.mrb[0].mxu0
        %v4844 = vadd.f32 %v4351, %v4843
        %v4845 = vpop.f32.mrb[0].mxu0
        %v4846 = vadd.f32 %v4355, %v4845
        %v4847 = vpop.f32.mrb[0].mxu0
        %v4848 = vadd.f32 %v4351, %v4847
        %v4849 = vpop.f32.mrb[0].mxu0
        %v4850 = vadd.f32 %v4355, %v4849
        %4851 = vmatprep.mubr.bf16.mxu0 %v3722
        %4852 = vmatmul.mubr.bf16.gmra.mrb[0].mxu0 %v3213
        %v4853 = vpop.f32.mrb[0].mxu0
        %v4854 = vadd.f32 %v4351, %v4853
        %v4855 = vpop.f32.mrb[0].mxu0
        %v4856 = vadd.f32 %v4355, %v4855
        %v4857 = vpop.f32.mrb[0].mxu0
        %v4858 = vadd.f32 %v4351, %v4857
        %v4859 = vpop.f32.mrb[0].mxu0
        %v4860 = vadd.f32 %v4355, %v4859
        %4861 = vmatprep.mubr.bf16.mxu0 %v3725
        %4862 = vmatmul.mubr.bf16.gmra.mrb[0].mxu0 %v3216
        %v4863 = vpop.f32.mrb[0].mxu0
        %v4864 = vadd.f32 %v4351, %v4863
        %v4865 = vpop.f32.mrb[0].mxu0
        %v4866 = vadd.f32 %v4355, %v4865
        %v4867 = vpop.f32.mrb[0].mxu0
        %v4868 = vadd.f32 %v4351, %v4867
        %v4869 = vpop.f32.mrb[0].mxu0
        %v4870 = vadd.f32 %v4355, %v4869
        %4871 = vmatprep.mubr.bf16.mxu0 %v3728
        %4872 = vmatmul.mubr.bf16.gmra.mrb[0].mxu0 %v3219
        %v4873 = vpop.f32.mrb[0].mxu0
        %v4874 = vadd.f32 %v4351, %v4873
        %v4875 = vpop.f32.mrb[0].mxu0
        %v4876 = vadd.f32 %v4355, %v4875
        %v4877 = vpop.f32.mrb[0].mxu0
        %v4878 = vadd.f32 %v4351, %v4877
        %v4879 = vpop.f32.mrb[0].mxu0
        %v4880 = vadd.f32 %v4355, %v4879
        %4881 = vmatprep.mubr.bf16.mxu0 %v3731
        %4882 = vmatmul.mubr.bf16.gmra.mrb[0].mxu0 %v3222
        %v4883 = vpop.f32.mrb[0].mxu0
        %v4884 = vadd.f32 %v4351, %v4883
        %v4885 = vpop.f32.mrb[0].mxu0
        %v4886 = vadd.f32 %v4355, %v4885
        %v4887 = vpop.f32.mrb[0].mxu0
        %v4888 = vadd.f32 %v4351, %v4887
        %v4889 = vpop.f32.mrb[0].mxu0
        %v4890 = vadd.f32 %v4355, %v4889
        %4891 = vmatprep.mubr.bf16.mxu0 %v3734
        %4892 = vmatmul.mubr.bf16.gmra.mrb[0].mxu0 %v3225
        %v4893 = vpop.f32.mrb[0].mxu0
        %v4894 = vadd.f32 %v4351, %v4893
        %v4895 = vpop.f32.mrb[0].mxu0
        %v4896 = vadd.f32 %v4355, %v4895
        %v4897 = vpop.f32.mrb[0].mxu0
        %v4898 = vadd.f32 %v4351, %v4897
        %v4899 = vpop.f32.mrb[0].mxu0
        %v4900 = vadd.f32 %v4355, %v4899
        %4901 = vmatprep.mubr.bf16.mxu0 %v3737
        %4902 = vmatmul.mubr.bf16.gmra.mrb[0].mxu0 %v3228
        %v4903 = vpop.f32.mrb[0].mxu0
        %v4904 = vadd.f32 %v4351, %v4903
        %v4905 = vpop.f32.mrb[0].mxu0
        %v4906 = vadd.f32 %v4355, %v4905
        %v4907 = vpop.f32.mrb[0].mxu0
        %v4908 = vadd.f32 %v4351, %v4907
        %v4909 = vpop.f32.mrb[0].mxu0
        %v4910 = vadd.f32 %v4355, %v4909
        %4911 = vmatprep.mubr.bf16.mxu0 %v3740
        %4912 = vmatmul.mubr.bf16.gmra.mrb[0].mxu0 %v3231
        %v4913 = vpop.f32.mrb[0].mxu0
        %v4914 = vadd.f32 %v4351, %v4913
        %v4915 = vpop.f32.mrb[0].mxu0
        %v4916 = vadd.f32 %v4355, %v4915
        %v4917 = vpop.f32.mrb[0].mxu0
        %v4918 = vadd.f32 %v4351, %v4917
        %v4919 = vpop.f32.mrb[0].mxu0
        %v4920 = vadd.f32 %v4355, %v4919
        %4921 = vmatprep.mubr.bf16.mxu0 %v3743
        %4922 = vmatmul.mubr.bf16.gmra.mrb[0].mxu0 %v3234
        %v4923 = vpop.f32.mrb[0].mxu0
        %v4924 = vadd.f32 %v4351, %v4923
        %v4925 = vpop.f32.mrb[0].mxu0
        %v4926 = vadd.f32 %v4355, %v4925
        %v4927 = vpop.f32.mrb[0].mxu0
        %v4928 = vadd.f32 %v4351, %v4927
        %v4929 = vpop.f32.mrb[0].mxu0
        %v4930 = vadd.f32 %v4355, %v4929
        %4931 = vmatprep.mubr.bf16.mxu0 %v3746
        %4932 = vmatmul.mubr.bf16.gmra.mrb[0].mxu0 %v3237
        %v4933 = vpop.f32.mrb[0].mxu0
        %v4934 = vadd.f32 %v4351, %v4933
        %v4935 = vpop.f32.mrb[0].mxu0
        %v4936 = vadd.f32 %v4355, %v4935
        %v4937 = vpop.f32.mrb[0].mxu0
        %v4938 = vadd.f32 %v4351, %v4937
        %v4939 = vpop.f32.mrb[0].mxu0
        %v4940 = vadd.f32 %v4355, %v4939
        %4941 = vmatprep.mubr.bf16.mxu0 %v3749
        %4942 = vmatmul.mubr.bf16.gmra.mrb[0].mxu0 %v3240
        %v4943 = vpop.f32.mrb[0].mxu0
        %v4944 = vadd.f32 %v4351, %v4943
        %v4945 = vpop.f32.mrb[0].mxu0
        %v4946 = vadd.f32 %v4355, %v4945
        %v4947 = vpop.f32.mrb[0].mxu0
        %v4948 = vadd.f32 %v4351, %v4947
        %v4949 = vpop.f32.mrb[0].mxu0
        %v4950 = vadd.f32 %v4355, %v4949
        %4951 = vmatprep.mubr.bf16.mxu0 %v3752
        %4952 = vmatmul.mubr.bf16.gmra.mrb[0].mxu0 %v3243
        %v4953 = vpop.f32.mrb[0].mxu0
        %v4954 = vadd.f32 %v4351, %v4953
        %v4955 = vpop.f32.mrb[0].mxu0
        %v4956 = vadd.f32 %v4355, %v4955
        %v4957 = vpop.f32.mrb[0].mxu0
        %v4958 = vadd.f32 %v4351, %v4957
        %v4959 = vpop.f32.mrb[0].mxu0
        %v4960 = vadd.f32 %v4355, %v4959
        %4961 = vmatprep.mubr.bf16.mxu0 %v3755
        %4962 = vmatmul.mubr.bf16.gmra.mrb[0].mxu0 %v3246
        %v4963 = vpop.f32.mrb[0].mxu0
        %v4964 = vadd.f32 %v4351, %v4963
        %v4965 = vpop.f32.mrb[0].mxu0
        %v4966 = vadd.f32 %v4355, %v4965
        %v4967 = vpop.f32.mrb[0].mxu0
        %v4968 = vadd.f32 %v4351, %v4967
        %v4969 = vpop.f32.mrb[0].mxu0
        %v4970 = vadd.f32 %v4355, %v4969
        %4971 = vmatprep.mubr.bf16.mxu0 %v3758
        %4972 = vmatmul.mubr.bf16.gmra.mrb[0].mxu0 %v3249
        %v4973 = vpop.f32.mrb[0].mxu0
        %v4974 = vadd.f32 %v4351, %v4973
        %v4975 = vpop.f32.mrb[0].mxu0
        %v4976 = vadd.f32 %v4355, %v4975
        %v4977 = vpop.f32.mrb[0].mxu0
        %v4978 = vadd.f32 %v4351, %v4977
        %v4979 = vpop.f32.mrb[0].mxu0
        %v4980 = vadd.f32 %v4355, %v4979
        %4981 = vmatprep.mubr.bf16.mxu0 %v3761
        %4982 = vmatmul.mubr.bf16.gmra.mrb[0].mxu0 %v3252
        %v4983 = vpop.f32.mrb[0].mxu0
        %v4984 = vadd.f32 %v4351, %v4983
        %v4985 = vpop.f32.mrb[0].mxu0
        %v4986 = vadd.f32 %v4355, %v4985
        %v4987 = vpop.f32.mrb[0].mxu0
        %v4988 = vadd.f32 %v4351, %v4987
        %v4989 = vpop.f32.mrb[0].mxu0
        %v4990 = vadd.f32 %v4355, %v4989
        %4991 = vmatprep.mubr.bf16.mxu0 %v3764
        %4992 = vmatmul.mubr.bf16.gmra.mrb[0].mxu0 %v3255
        %v4993 = vpop.f32.mrb[0].mxu0
        %v4994 = vadd.f32 %v4351, %v4993
        %v4995 = vpop.f32.mrb[0].mxu0
        %v4996 = vadd.f32 %v4355, %v4995
        %v4997 = vpop.f32.mrb[0].mxu0
        %v4998 = vadd.f32 %v4351, %v4997
        %v4999 = vpop.f32.mrb[0].mxu0
        %v5000 = vadd.f32 %v4355, %v4999
        %5001 = vmatprep.mubr.bf16.mxu0 %v3767
        %5002 = vmatmul.mubr.bf16.gmra.mrb[0].mxu0 %v3258
        %v5003 = vpop.f32.mrb[0].mxu0
        %v5004 = vadd.f32 %v4351, %v5003
        %v5005 = vpop.f32.mrb[0].mxu0
        %v5006 = vadd.f32 %v4355, %v5005
        %v5007 = vpop.f32.mrb[0].mxu0
        %v5008 = vadd.f32 %v4351, %v5007
        %v5009 = vpop.f32.mrb[0].mxu0
        %v5010 = vadd.f32 %v4355, %v5009
        %5011 = vmatprep.mubr.bf16.mxu0 %v3770
        %5012 = vmatmul.mubr.bf16.gmra.mrb[0].mxu0 %v3261
        %v5013 = vpop.f32.mrb[0].mxu0
        %v5014 = vadd.f32 %v4351, %v5013
        %v5015 = vpop.f32.mrb[0].mxu0
        %v5016 = vadd.f32 %v4355, %v5015
        %v5017 = vpop.f32.mrb[0].mxu0
        %v5018 = vadd.f32 %v4351, %v5017
        %v5019 = vpop.f32.mrb[0].mxu0
        %v5020 = vadd.f32 %v4355, %v5019
        %5021 = vmatprep.mubr.bf16.mxu0 %v3773
        %5022 = vmatmul.mubr.bf16.gmra.mrb[0].mxu0 %v3264
        %v5023 = vpop.f32.mrb[0].mxu0
        %v5024 = vadd.f32 %v4351, %v5023
        %v5025 = vpop.f32.mrb[0].mxu0
        %v5026 = vadd.f32 %v4355, %v5025
        %v5027 = vpop.f32.mrb[0].mxu0
        %v5028 = vadd.f32 %v4351, %v5027
        %v5029 = vpop.f32.mrb[0].mxu0
        %v5030 = vadd.f32 %v4355, %v5029
        %5031 = vmatprep.mubr.bf16.mxu0 %v3776
        %5032 = vmatmul.mubr.bf16.gmra.mrb[0].mxu0 %v3267
        %v5033 = vpop.f32.mrb[0].mxu0
        %v5034 = vadd.f32 %v4351, %v5033
        %v5035 = vpop.f32.mrb[0].mxu0
        %v5036 = vadd.f32 %v4355, %v5035
        %v5037 = vpop.f32.mrb[0].mxu0
        %v5038 = vadd.f32 %v4351, %v5037
        %v5039 = vpop.f32.mrb[0].mxu0
        %v5040 = vadd.f32 %v4355, %v5039
        %5041 = vmatprep.mubr.bf16.mxu0 %v3779
        %5042 = vmatmul.mubr.bf16.gmra.mrb[0].mxu0 %v3270
        %v5043 = vpop.f32.mrb[0].mxu0
        %v5044 = vadd.f32 %v4351, %v5043
        %v5045 = vpop.f32.mrb[0].mxu0
        %v5046 = vadd.f32 %v4355, %v5045
        %v5047 = vpop.f32.mrb[0].mxu0
        %v5048 = vadd.f32 %v4351, %v5047
        %v5049 = vpop.f32.mrb[0].mxu0
        %v5050 = vadd.f32 %v4355, %v5049
        %5051 = vmatprep.mubr.bf16.mxu0 %v3782
        %5052 = vmatmul.mubr.bf16.gmra.mrb[0].mxu0 %v3273
        %v5053 = vpop.f32.mrb[0].mxu0
        %v5054 = vadd.f32 %v4351, %v5053
        %v5055 = vpop.f32.mrb[0].mxu0
        %v5056 = vadd.f32 %v4355, %v5055
        %v5057 = vpop.f32.mrb[0].mxu0
        %v5058 = vadd.f32 %v4351, %v5057
        %v5059 = vpop.f32.mrb[0].mxu0
        %v5060 = vadd.f32 %v4355, %v5059
        %5061 = vmatprep.mubr.bf16.mxu0 %v3785
        %5062 = vmatmul.mubr.bf16.gmra.mrb[0].mxu0 %v3276
        %v5063 = vpop.f32.mrb[0].mxu0
        %v5064 = vadd.f32 %v4351, %v5063
        %v5065 = vpop.f32.mrb[0].mxu0
        %v5066 = vadd.f32 %v4355, %v5065
        %v5067 = vpop.f32.mrb[0].mxu0
        %v5068 = vadd.f32 %v4351, %v5067
        %v5069 = vpop.f32.mrb[0].mxu0
        %v5070 = vadd.f32 %v4355, %v5069
        %5071 = vmatprep.mubr.bf16.mxu0 %v3788
        %5072 = vmatmul.mubr.bf16.gmra.mrb[0].mxu0 %v3279
        %v5073 = vpop.f32.mrb[0].mxu0
        %v5074 = vadd.f32 %v4351, %v5073
        %v5075 = vpop.f32.mrb[0].mxu0
        %v5076 = vadd.f32 %v4355, %v5075
        %v5077 = vpop.f32.mrb[0].mxu0
        %v5078 = vadd.f32 %v4351, %v5077
        %v5079 = vpop.f32.mrb[0].mxu0
        %v5080 = vadd.f32 %v4355, %v5079
        %5081 = vmatprep.mubr.bf16.mxu0 %v3791
        %5082 = vmatmul.mubr.bf16.gmra.mrb[0].mxu0 %v3282
        %v5083 = vpop.f32.mrb[0].mxu0
        %v5084 = vadd.f32 %v4351, %v5083
        %v5085 = vpop.f32.mrb[0].mxu0
        %v5086 = vadd.f32 %v4355, %v5085
        %v5087 = vpop.f32.mrb[0].mxu0
        %v5088 = vadd.f32 %v4351, %v5087
        %v5089 = vpop.f32.mrb[0].mxu0
        %v5090 = vadd.f32 %v4355, %v5089
        %5091 = vmatprep.mubr.bf16.mxu0 %v3794
        %5092 = vmatmul.mubr.bf16.gmra.mrb[0].mxu0 %v3285
        %v5093 = vpop.f32.mrb[0].mxu0
        %v5094 = vadd.f32 %v4351, %v5093
        %v5095 = vpop.f32.mrb[0].mxu0
        %v5096 = vadd.f32 %v4355, %v5095
        %v5097 = vpop.f32.mrb[0].mxu0
        %v5098 = vadd.f32 %v4351, %v5097
        %v5099 = vpop.f32.mrb[0].mxu0
        %v5100 = vadd.f32 %v4355, %v5099
        %5101 = vmatprep.mubr.bf16.mxu0 %v3797
        %5102 = vmatmul.mubr.bf16.gmra.mrb[0].mxu0 %v3288
        %v5103 = vpop.f32.mrb[0].mxu0
        %v5104 = vadd.f32 %v4351, %v5103
        %v5105 = vpop.f32.mrb[0].mxu0
        %v5106 = vadd.f32 %v4355, %v5105
        %v5107 = vpop.f32.mrb[0].mxu0
        %v5108 = vadd.f32 %v4351, %v5107
        %v5109 = vpop.f32.mrb[0].mxu0
        %v5110 = vadd.f32 %v4355, %v5109
        %5111 = vmatprep.mubr.bf16.mxu0 %v3800
        %5112 = vmatmul.mubr.bf16.gmra.mrb[0].mxu0 %v3291
        %v5113 = vpop.f32.mrb[0].mxu0
        %v5114 = vadd.f32 %v4351, %v5113
        %v5115 = vpop.f32.mrb[0].mxu0
        %v5116 = vadd.f32 %v4355, %v5115
        %v5117 = vpop.f32.mrb[0].mxu0
        %v5118 = vadd.f32 %v4351, %v5117
        %v5119 = vpop.f32.mrb[0].mxu0
        %v5120 = vadd.f32 %v4355, %v5119
        %5121 = vmatprep.mubr.bf16.mxu0 %v3803
        %5122 = vmatmul.mubr.bf16.gmra.mrb[0].mxu0 %v3294
        %v5123 = vpop.f32.mrb[0].mxu0
        %v5124 = vadd.f32 %v4351, %v5123
        %v5125 = vpop.f32.mrb[0].mxu0
        %v5126 = vadd.f32 %v4355, %v5125
        %v5127 = vpop.f32.mrb[0].mxu0
        %v5128 = vadd.f32 %v4351, %v5127
        %v5129 = vpop.f32.mrb[0].mxu0
        %v5130 = vadd.f32 %v4355, %v5129
        %5131 = vmatprep.mubr.bf16.mxu0 %v3806
        %5132 = vmatmul.mubr.bf16.gmra.mrb[0].mxu0 %v3297
        %v5133 = vpop.f32.mrb[0].mxu0
        %v5134 = vadd.f32 %v4351, %v5133
        %v5135 = vpop.f32.mrb[0].mxu0
        %v5136 = vadd.f32 %v4355, %v5135
        %v5137 = vpop.f32.mrb[0].mxu0
        %v5138 = vadd.f32 %v4351, %v5137
        %v5139 = vpop.f32.mrb[0].mxu0
        %v5140 = vadd.f32 %v4355, %v5139
        %5141 = vmatprep.mubr.bf16.mxu0 %v3809
        %5142 = vmatmul.mubr.bf16.gmra.mrb[0].mxu0 %v3300
        %v5143 = vpop.f32.mrb[0].mxu0
        %v5144 = vadd.f32 %v4351, %v5143
        %v5145 = vpop.f32.mrb[0].mxu0
        %v5146 = vadd.f32 %v4355, %v5145
        %v5147 = vpop.f32.mrb[0].mxu0
        %v5148 = vadd.f32 %v4351, %v5147
        %v5149 = vpop.f32.mrb[0].mxu0
        %v5150 = vadd.f32 %v4355, %v5149
        %5151 = vmatprep.mubr.bf16.mxu0 %v3812
        %5152 = vmatmul.mubr.bf16.gmra.mrb[0].mxu0 %v3303
        %v5153 = vpop.f32.mrb[0].mxu0
        %v5154 = vadd.f32 %v4351, %v5153
        %v5155 = vpop.f32.mrb[0].mxu0
        %v5156 = vadd.f32 %v4355, %v5155
        %v5157 = vpop.f32.mrb[0].mxu0
        %v5158 = vadd.f32 %v4351, %v5157
        %v5159 = vpop.f32.mrb[0].mxu0
        %v5160 = vadd.f32 %v4355, %v5159
        %5161 = vmatprep.mubr.bf16.mxu0 %v3815
        %5162 = vmatmul.mubr.bf16.gmra.mrb[0].mxu0 %v3306
        %v5163 = vpop.f32.mrb[0].mxu0
        %v5164 = vadd.f32 %v4351, %v5163
        %v5165 = vpop.f32.mrb[0].mxu0
        %v5166 = vadd.f32 %v4355, %v5165
        %v5167 = vpop.f32.mrb[0].mxu0
        %v5168 = vadd.f32 %v4351, %v5167
        %v5169 = vpop.f32.mrb[0].mxu0
        %v5170 = vadd.f32 %v4355, %v5169
        %5171 = vmatprep.mubr.bf16.mxu0 %v3818
        %5172 = vmatmul.mubr.bf16.gmra.mrb[0].mxu0 %v3309
        %v5173 = vpop.f32.mrb[0].mxu0
        %v5174 = vadd.f32 %v4351, %v5173
        %v5175 = vpop.f32.mrb[0].mxu0
        %v5176 = vadd.f32 %v4355, %v5175
        %v5177 = vpop.f32.mrb[0].mxu0
        %v5178 = vadd.f32 %v4351, %v5177
        %v5179 = vpop.f32.mrb[0].mxu0
        %v5180 = vadd.f32 %v4355, %v5179
        %5181 = vmatprep.mubr.bf16.mxu0 %v3821
        %5182 = vmatmul.mubr.bf16.gmra.mrb[0].mxu0 %v3312
        %v5183 = vpop.f32.mrb[0].mxu0
        %v5184 = vadd.f32 %v4351, %v5183
        %v5185 = vpop.f32.mrb[0].mxu0
        %v5186 = vadd.f32 %v4355, %v5185
        %v5187 = vpop.f32.mrb[0].mxu0
        %v5188 = vadd.f32 %v4351, %v5187
        %v5189 = vpop.f32.mrb[0].mxu0
        %v5190 = vadd.f32 %v4355, %v5189
        %5191 = vmatprep.mubr.bf16.mxu0 %v3824
        %5192 = vmatmul.mubr.bf16.gmra.mrb[0].mxu0 %v3315
        %v5193 = vpop.f32.mrb[0].mxu0
        %v5194 = vadd.f32 %v4351, %v5193
        %v5195 = vpop.f32.mrb[0].mxu0
        %v5196 = vadd.f32 %v4355, %v5195
        %v5197 = vpop.f32.mrb[0].mxu0
        %v5198 = vadd.f32 %v4351, %v5197
        %v5199 = vpop.f32.mrb[0].mxu0
        %v5200 = vadd.f32 %v4355, %v5199
        %5201 = vmatprep.mubr.bf16.mxu0 %v3827
        %5202 = vmatmul.mubr.bf16.gmra.mrb[0].mxu0 %v3318
        %v5203 = vpop.f32.mrb[0].mxu0
        %v5204 = vadd.f32 %v4351, %v5203
        %v5205 = vpop.f32.mrb[0].mxu0
        %v5206 = vadd.f32 %v4355, %v5205
        %v5207 = vpop.f32.mrb[0].mxu0
        %v5208 = vadd.f32 %v4351, %v5207
        %v5209 = vpop.f32.mrb[0].mxu0
        %v5210 = vadd.f32 %v4355, %v5209
        %5211 = vmatprep.mubr.bf16.mxu0 %v3830
        %5212 = vmatmul.mubr.bf16.gmra.mrb[0].mxu0 %v3321
        %v5213 = vpop.f32.mrb[0].mxu0
        %v5214 = vadd.f32 %v4351, %v5213
        %v5215 = vpop.f32.mrb[0].mxu0
        %v5216 = vadd.f32 %v4355, %v5215
        %v5217 = vpop.f32.mrb[0].mxu0
        %v5218 = vadd.f32 %v4351, %v5217
        %v5219 = vpop.f32.mrb[0].mxu0
        %v5220 = vadd.f32 %v4355, %v5219
        %5221 = vmatprep.mubr.bf16.mxu0 %v3833
        %5222 = vmatmul.mubr.bf16.gmra.mrb[0].mxu0 %v3324
        %v5223 = vpop.f32.mrb[0].mxu0
        %v5224 = vpop.f32.mrb[0].mxu0
        %v5225 = vpop.f32.mrb[0].mxu0
        %v5226 = vpop.f32.mrb[0].mxu0
        %5227 = vmatprep.mubr.bf16.mxu0 %v3836
        %5228 = vmatmul.mubr.bf16.gmra.mrb[0].mxu0 %v3327
        %v5229 = vpop.f32.mrb[0].mxu0
        %v5230 = vpop.f32.mrb[0].mxu0
        %v5231 = vpop.f32.mrb[0].mxu0
        %v5232 = vpop.f32.mrb[0].mxu0
        %5233 = vdwg.mxu0
        %5234 = vmatprep.subr.bf16.mxu0 %v4541
        %5235 = vmatpush1.bf16.msra.mxu0 %v4540
        %5236 = vmatprep.subr.bf16.mxu0 %v4543
        %5237 = vmatpush1.bf16.msra.mxu0 %v4542
        %5238 = vmatprep.subr.bf16.mxu0 %v4545
        %5239 = vmatpush1.bf16.msra.mxu0 %v4544
        %5240 = vmatprep.subr.bf16.mxu0 %v4547
        %5241 = vmatpush1.bf16.msra.mxu0 %v4546
        %5242 = vmatprep.subr.bf16.mxu0 %v4549
        %5243 = vmatpush1.bf16.msra.mxu0 %v4548
        %5244 = vmatprep.subr.bf16.mxu0 %v4551
        %5245 = vmatpush1.bf16.msra.mxu0 %v4550
        %5246 = vmatprep.subr.bf16.mxu0 %v4553
        %5247 = vmatpush1.bf16.msra.mxu0 %v4552
        %5248 = vmatprep.subr.bf16.mxu0 %v4555
        %5249 = vmatpush1.bf16.msra.mxu0 %v4554
        %5250 = vmatprep.subr.bf16.mxu0 %v4557
        %5251 = vmatpush1.bf16.msra.mxu0 %v4556
        %5252 = vmatprep.subr.bf16.mxu0 0
        %5253 = vmatpush1.bf16.msra.mxu0 0
        %5254 = vmatprep.subr.bf16.mxu0 0
        %5255 = vmatpush1.bf16.msra.mxu0 0
        %5256 = vmatprep.subr.bf16.mxu0 0
        %5257 = vmatpush1.bf16.msra.mxu0 0
        %5258 = vmatprep.subr.bf16.mxu0 0
        %5259 = vmatpush1.bf16.msra.mxu0 0
        %5260 = vmatprep.subr.bf16.mxu0 0
        %5261 = vmatpush1.bf16.msra.mxu0 0
        %5262 = vmatprep.subr.bf16.mxu0 0
        %5263 = vmatpush1.bf16.msra.mxu0 0
        %5264 = vmatprep.subr.bf16.mxu0 0
        %5265 = vmatpush1.bf16.msra.mxu0 0
        %5266 = vmatprep.mubr.bf16.mxu0 %v4609
        %5267 = vmatmul.mubr.bf16.gmra.mrb[0].mxu0 %v4198
        %v5268 = vpop.f32.mrb[0].mxu0
        %v5269 = vadd.f32 %v4744, %v5268
        %v5270 = vpop.f32.mrb[0].mxu0
        %v5271 = vadd.f32 %v4746, %v5270
        %v5272 = vpop.f32.mrb[0].mxu0
        %v5273 = vadd.f32 %v4748, %v5272
        %v5274 = vpop.f32.mrb[0].mxu0
        %v5275 = vadd.f32 %v4750, %v5274
        %5276 = vmatprep.mubr.bf16.mxu0 %v4611
        %5277 = vmatmul.mubr.bf16.gmra.mrb[0].mxu0 %v4201
        %v5278 = vpop.f32.mrb[0].mxu0
        %v5279 = vadd.f32 %v4754, %v5278
        %v5280 = vpop.f32.mrb[0].mxu0
        %v5281 = vadd.f32 %v4756, %v5280
        %v5282 = vpop.f32.mrb[0].mxu0
        %v5283 = vadd.f32 %v4758, %v5282
        %v5284 = vpop.f32.mrb[0].mxu0
        %v5285 = vadd.f32 %v4760, %v5284
        %5286 = vmatprep.mubr.bf16.mxu0 %v4613
        %5287 = vmatmul.mubr.bf16.gmra.mrb[0].mxu0 %v4204
        %v5288 = vpop.f32.mrb[0].mxu0
        %v5289 = vadd.f32 %v4764, %v5288
        %v5290 = vpop.f32.mrb[0].mxu0
        %v5291 = vadd.f32 %v4766, %v5290
        %v5292 = vpop.f32.mrb[0].mxu0
        %v5293 = vadd.f32 %v4768, %v5292
        %v5294 = vpop.f32.mrb[0].mxu0
        %v5295 = vadd.f32 %v4770, %v5294
        %5296 = vmatprep.mubr.bf16.mxu0 %v4615
        %5297 = vmatmul.mubr.bf16.gmra.mrb[0].mxu0 %v4207
        %v5298 = vpop.f32.mrb[0].mxu0
        %v5299 = vadd.f32 %v4774, %v5298
        %v5300 = vpop.f32.mrb[0].mxu0
        %v5301 = vadd.f32 %v4776, %v5300
        %v5302 = vpop.f32.mrb[0].mxu0
        %v5303 = vadd.f32 %v4778, %v5302
        %v5304 = vpop.f32.mrb[0].mxu0
        %v5305 = vadd.f32 %v4780, %v5304
        %5306 = vmatprep.mubr.bf16.mxu0 %v4617
        %5307 = vmatmul.mubr.bf16.gmra.mrb[0].mxu0 %v4210
        %v5308 = vpop.f32.mrb[0].mxu0
        %v5309 = vadd.f32 %v4784, %v5308
        %v5310 = vpop.f32.mrb[0].mxu0
        %v5311 = vadd.f32 %v4786, %v5310
        %v5312 = vpop.f32.mrb[0].mxu0
        %v5313 = vadd.f32 %v4788, %v5312
        %v5314 = vpop.f32.mrb[0].mxu0
        %v5315 = vadd.f32 %v4790, %v5314
        %5316 = vmatprep.mubr.bf16.mxu0 %v4619
        %5317 = vmatmul.mubr.bf16.gmra.mrb[0].mxu0 %v4213
        %v5318 = vpop.f32.mrb[0].mxu0
        %v5319 = vadd.f32 %v4794, %v5318
        %v5320 = vpop.f32.mrb[0].mxu0
        %v5321 = vadd.f32 %v4796, %v5320
        %v5322 = vpop.f32.mrb[0].mxu0
        %v5323 = vadd.f32 %v4798, %v5322
        %v5324 = vpop.f32.mrb[0].mxu0
        %v5325 = vadd.f32 %v4800, %v5324
        %5326 = vmatprep.mubr.bf16.mxu0 %v4621
        %5327 = vmatmul.mubr.bf16.gmra.mrb[0].mxu0 %v4216
        %v5328 = vpop.f32.mrb[0].mxu0
        %v5329 = vadd.f32 %v4804, %v5328
        %v5330 = vpop.f32.mrb[0].mxu0
        %v5331 = vadd.f32 %v4806, %v5330
        %v5332 = vpop.f32.mrb[0].mxu0
        %v5333 = vadd.f32 %v4808, %v5332
        %v5334 = vpop.f32.mrb[0].mxu0
        %v5335 = vadd.f32 %v4810, %v5334
        %5336 = vmatprep.mubr.bf16.mxu0 %v4623
        %5337 = vmatmul.mubr.bf16.gmra.mrb[0].mxu0 %v4219
        %v5338 = vpop.f32.mrb[0].mxu0
        %v5339 = vadd.f32 %v4814, %v5338
        %v5340 = vpop.f32.mrb[0].mxu0
        %v5341 = vadd.f32 %v4816, %v5340
        %v5342 = vpop.f32.mrb[0].mxu0
        %v5343 = vadd.f32 %v4818, %v5342
        %v5344 = vpop.f32.mrb[0].mxu0
        %v5345 = vadd.f32 %v4820, %v5344
        %5346 = vmatprep.mubr.bf16.mxu0 %v4625
        %5347 = vmatmul.mubr.bf16.gmra.mrb[0].mxu0 %v4222
        %v5348 = vpop.f32.mrb[0].mxu0
        %v5349 = vadd.f32 %v4824, %v5348
        %v5350 = vpop.f32.mrb[0].mxu0
        %v5351 = vadd.f32 %v4826, %v5350
        %v5352 = vpop.f32.mrb[0].mxu0
        %v5353 = vadd.f32 %v4828, %v5352
        %v5354 = vpop.f32.mrb[0].mxu0
        %v5355 = vadd.f32 %v4830, %v5354
        %5356 = vmatprep.mubr.bf16.mxu0 %v4627
        %5357 = vmatmul.mubr.bf16.gmra.mrb[0].mxu0 %v4225
        %v5358 = vpop.f32.mrb[0].mxu0
        %v5359 = vadd.f32 %v4834, %v5358
        %v5360 = vpop.f32.mrb[0].mxu0
        %v5361 = vadd.f32 %v4836, %v5360
        %v5362 = vpop.f32.mrb[0].mxu0
        %v5363 = vadd.f32 %v4838, %v5362
        %v5364 = vpop.f32.mrb[0].mxu0
        %v5365 = vadd.f32 %v4840, %v5364
        %5366 = vmatprep.mubr.bf16.mxu0 %v4629
        %5367 = vmatmul.mubr.bf16.gmra.mrb[0].mxu0 %v4228
        %v5368 = vpop.f32.mrb[0].mxu0
        %v5369 = vadd.f32 %v4844, %v5368
        %v5370 = vpop.f32.mrb[0].mxu0
        %v5371 = vadd.f32 %v4846, %v5370
        %v5372 = vpop.f32.mrb[0].mxu0
        %v5373 = vadd.f32 %v4848, %v5372
        %v5374 = vpop.f32.mrb[0].mxu0
        %v5375 = vadd.f32 %v4850, %v5374
        %5376 = vmatprep.mubr.bf16.mxu0 %v4631
        %5377 = vmatmul.mubr.bf16.gmra.mrb[0].mxu0 %v4231
        %v5378 = vpop.f32.mrb[0].mxu0
        %v5379 = vadd.f32 %v4854, %v5378
        %v5380 = vpop.f32.mrb[0].mxu0
        %v5381 = vadd.f32 %v4856, %v5380
        %v5382 = vpop.f32.mrb[0].mxu0
        %v5383 = vadd.f32 %v4858, %v5382
        %v5384 = vpop.f32.mrb[0].mxu0
        %v5385 = vadd.f32 %v4860, %v5384
        %5386 = vmatprep.mubr.bf16.mxu0 %v4633
        %5387 = vmatmul.mubr.bf16.gmra.mrb[0].mxu0 %v4234
        %v5388 = vpop.f32.mrb[0].mxu0
        %v5389 = vadd.f32 %v4864, %v5388
        %v5390 = vpop.f32.mrb[0].mxu0
        %v5391 = vadd.f32 %v4866, %v5390
        %v5392 = vpop.f32.mrb[0].mxu0
        %v5393 = vadd.f32 %v4868, %v5392
        %v5394 = vpop.f32.mrb[0].mxu0
        %v5395 = vadd.f32 %v4870, %v5394
        %5396 = vmatprep.mubr.bf16.mxu0 %v4635
        %5397 = vmatmul.mubr.bf16.gmra.mrb[0].mxu0 %v4237
        %v5398 = vpop.f32.mrb[0].mxu0
        %v5399 = vadd.f32 %v4874, %v5398
        %v5400 = vpop.f32.mrb[0].mxu0
        %v5401 = vadd.f32 %v4876, %v5400
        %v5402 = vpop.f32.mrb[0].mxu0
        %v5403 = vadd.f32 %v4878, %v5402
        %v5404 = vpop.f32.mrb[0].mxu0
        %v5405 = vadd.f32 %v4880, %v5404
        %5406 = vmatprep.mubr.bf16.mxu0 %v4637
        %5407 = vmatmul.mubr.bf16.gmra.mrb[0].mxu0 %v4240
        %v5408 = vpop.f32.mrb[0].mxu0
        %v5409 = vadd.f32 %v4884, %v5408
        %v5410 = vpop.f32.mrb[0].mxu0
        %v5411 = vadd.f32 %v4886, %v5410
        %v5412 = vpop.f32.mrb[0].mxu0
        %v5413 = vadd.f32 %v4888, %v5412
        %v5414 = vpop.f32.mrb[0].mxu0
        %v5415 = vadd.f32 %v4890, %v5414
        %5416 = vmatprep.mubr.bf16.mxu0 %v4639
        %5417 = vmatmul.mubr.bf16.gmra.mrb[0].mxu0 %v4243
        %v5418 = vpop.f32.mrb[0].mxu0
        %v5419 = vadd.f32 %v4894, %v5418
        %v5420 = vpop.f32.mrb[0].mxu0
        %v5421 = vadd.f32 %v4896, %v5420
        %v5422 = vpop.f32.mrb[0].mxu0
        %v5423 = vadd.f32 %v4898, %v5422
        %v5424 = vpop.f32.mrb[0].mxu0
        %v5425 = vadd.f32 %v4900, %v5424
        %5426 = vmatprep.mubr.bf16.mxu0 %v4641
        %5427 = vmatmul.mubr.bf16.gmra.mrb[0].mxu0 %v4246
        %v5428 = vpop.f32.mrb[0].mxu0
        %v5429 = vadd.f32 %v4904, %v5428
        %v5430 = vpop.f32.mrb[0].mxu0
        %v5431 = vadd.f32 %v4906, %v5430
        %v5432 = vpop.f32.mrb[0].mxu0
        %v5433 = vadd.f32 %v4908, %v5432
        %v5434 = vpop.f32.mrb[0].mxu0
        %v5435 = vadd.f32 %v4910, %v5434
        %5436 = vmatprep.mubr.bf16.mxu0 %v4643
        %5437 = vmatmul.mubr.bf16.gmra.mrb[0].mxu0 %v4249
        %v5438 = vpop.f32.mrb[0].mxu0
        %v5439 = vadd.f32 %v4914, %v5438
        %v5440 = vpop.f32.mrb[0].mxu0
        %v5441 = vadd.f32 %v4916, %v5440
        %v5442 = vpop.f32.mrb[0].mxu0
        %v5443 = vadd.f32 %v4918, %v5442
        %v5444 = vpop.f32.mrb[0].mxu0
        %v5445 = vadd.f32 %v4920, %v5444
        %5446 = vmatprep.mubr.bf16.mxu0 %v4645
        %5447 = vmatmul.mubr.bf16.gmra.mrb[0].mxu0 %v4252
        %v5448 = vpop.f32.mrb[0].mxu0
        %v5449 = vadd.f32 %v4924, %v5448
        %v5450 = vpop.f32.mrb[0].mxu0
        %v5451 = vadd.f32 %v4926, %v5450
        %v5452 = vpop.f32.mrb[0].mxu0
        %v5453 = vadd.f32 %v4928, %v5452
        %v5454 = vpop.f32.mrb[0].mxu0
        %v5455 = vadd.f32 %v4930, %v5454
        %5456 = vmatprep.mubr.bf16.mxu0 %v4647
        %5457 = vmatmul.mubr.bf16.gmra.mrb[0].mxu0 %v4255
        %v5458 = vpop.f32.mrb[0].mxu0
        %v5459 = vadd.f32 %v4934, %v5458
        %v5460 = vpop.f32.mrb[0].mxu0
        %v5461 = vadd.f32 %v4936, %v5460
        %v5462 = vpop.f32.mrb[0].mxu0
        %v5463 = vadd.f32 %v4938, %v5462
        %v5464 = vpop.f32.mrb[0].mxu0
        %v5465 = vadd.f32 %v4940, %v5464
        %5466 = vmatprep.mubr.bf16.mxu0 %v4649
        %5467 = vmatmul.mubr.bf16.gmra.mrb[0].mxu0 %v4258
        %v5468 = vpop.f32.mrb[0].mxu0
        %v5469 = vadd.f32 %v4944, %v5468
        %v5470 = vpop.f32.mrb[0].mxu0
        %v5471 = vadd.f32 %v4946, %v5470
        %v5472 = vpop.f32.mrb[0].mxu0
        %v5473 = vadd.f32 %v4948, %v5472
        %v5474 = vpop.f32.mrb[0].mxu0
        %v5475 = vadd.f32 %v4950, %v5474
        %5476 = vmatprep.mubr.bf16.mxu0 %v4651
        %5477 = vmatmul.mubr.bf16.gmra.mrb[0].mxu0 %v4261
        %v5478 = vpop.f32.mrb[0].mxu0
        %v5479 = vadd.f32 %v4954, %v5478
        %v5480 = vpop.f32.mrb[0].mxu0
        %v5481 = vadd.f32 %v4956, %v5480
        %v5482 = vpop.f32.mrb[0].mxu0
        %v5483 = vadd.f32 %v4958, %v5482
        %v5484 = vpop.f32.mrb[0].mxu0
        %v5485 = vadd.f32 %v4960, %v5484
        %5486 = vmatprep.mubr.bf16.mxu0 %v4653
        %5487 = vmatmul.mubr.bf16.gmra.mrb[0].mxu0 %v4264
        %v5488 = vpop.f32.mrb[0].mxu0
        %v5489 = vadd.f32 %v4964, %v5488
        %v5490 = vpop.f32.mrb[0].mxu0
        %v5491 = vadd.f32 %v4966, %v5490
        %v5492 = vpop.f32.mrb[0].mxu0
        %v5493 = vadd.f32 %v4968, %v5492
        %v5494 = vpop.f32.mrb[0].mxu0
        %v5495 = vadd.f32 %v4970, %v5494
        %5496 = vmatprep.mubr.bf16.mxu0 %v4655
        %5497 = vmatmul.mubr.bf16.gmra.mrb[0].mxu0 %v4267
        %v5498 = vpop.f32.mrb[0].mxu0
        %v5499 = vadd.f32 %v4974, %v5498
        %v5500 = vpop.f32.mrb[0].mxu0
        %v5501 = vadd.f32 %v4976, %v5500
        %v5502 = vpop.f32.mrb[0].mxu0
        %v5503 = vadd.f32 %v4978, %v5502
        %v5504 = vpop.f32.mrb[0].mxu0
        %v5505 = vadd.f32 %v4980, %v5504
        %5506 = vmatprep.mubr.bf16.mxu0 %v4657
        %5507 = vmatmul.mubr.bf16.gmra.mrb[0].mxu0 %v4270
        %v5508 = vpop.f32.mrb[0].mxu0
        %v5509 = vadd.f32 %v4984, %v5508
        %v5510 = vpop.f32.mrb[0].mxu0
        %v5511 = vadd.f32 %v4986, %v5510
        %v5512 = vpop.f32.mrb[0].mxu0
        %v5513 = vadd.f32 %v4988, %v5512
        %v5514 = vpop.f32.mrb[0].mxu0
        %v5515 = vadd.f32 %v4990, %v5514
        %5516 = vmatprep.mubr.bf16.mxu0 %v4659
        %5517 = vmatmul.mubr.bf16.gmra.mrb[0].mxu0 %v4273
        %v5518 = vpop.f32.mrb[0].mxu0
        %v5519 = vadd.f32 %v4994, %v5518
        %v5520 = vpop.f32.mrb[0].mxu0
        %v5521 = vadd.f32 %v4996, %v5520
        %v5522 = vpop.f32.mrb[0].mxu0
        %v5523 = vadd.f32 %v4998, %v5522
        %v5524 = vpop.f32.mrb[0].mxu0
        %v5525 = vadd.f32 %v5000, %v5524
        %5526 = vmatprep.mubr.bf16.mxu0 %v4661
        %5527 = vmatmul.mubr.bf16.gmra.mrb[0].mxu0 %v4276
        %v5528 = vpop.f32.mrb[0].mxu0
        %v5529 = vadd.f32 %v5004, %v5528
        %v5530 = vpop.f32.mrb[0].mxu0
        %v5531 = vadd.f32 %v5006, %v5530
        %v5532 = vpop.f32.mrb[0].mxu0
        %v5533 = vadd.f32 %v5008, %v5532
        %v5534 = vpop.f32.mrb[0].mxu0
        %v5535 = vadd.f32 %v5010, %v5534
        %5536 = vmatprep.mubr.bf16.mxu0 %v4663
        %5537 = vmatmul.mubr.bf16.gmra.mrb[0].mxu0 %v4279
        %v5538 = vpop.f32.mrb[0].mxu0
        %v5539 = vadd.f32 %v5014, %v5538
        %v5540 = vpop.f32.mrb[0].mxu0
        %v5541 = vadd.f32 %v5016, %v5540
        %v5542 = vpop.f32.mrb[0].mxu0
        %v5543 = vadd.f32 %v5018, %v5542
        %v5544 = vpop.f32.mrb[0].mxu0
        %v5545 = vadd.f32 %v5020, %v5544
        %5546 = vmatprep.mubr.bf16.mxu0 %v4665
        %5547 = vmatmul.mubr.bf16.gmra.mrb[0].mxu0 %v4282
        %v5548 = vpop.f32.mrb[0].mxu0
        %v5549 = vadd.f32 %v5024, %v5548
        %v5550 = vpop.f32.mrb[0].mxu0
        %v5551 = vadd.f32 %v5026, %v5550
        %v5552 = vpop.f32.mrb[0].mxu0
        %v5553 = vadd.f32 %v5028, %v5552
        %v5554 = vpop.f32.mrb[0].mxu0
        %v5555 = vadd.f32 %v5030, %v5554
        %5556 = vmatprep.mubr.bf16.mxu0 %v4667
        %5557 = vmatmul.mubr.bf16.gmra.mrb[0].mxu0 %v4285
        %v5558 = vpop.f32.mrb[0].mxu0
        %v5559 = vadd.f32 %v5034, %v5558
        %v5560 = vpop.f32.mrb[0].mxu0
        %v5561 = vadd.f32 %v5036, %v5560
        %v5562 = vpop.f32.mrb[0].mxu0
        %v5563 = vadd.f32 %v5038, %v5562
        %v5564 = vpop.f32.mrb[0].mxu0
        %v5565 = vadd.f32 %v5040, %v5564
        %5566 = vmatprep.mubr.bf16.mxu0 %v4669
        %5567 = vmatmul.mubr.bf16.gmra.mrb[0].mxu0 %v4288
        %v5568 = vpop.f32.mrb[0].mxu0
        %v5569 = vadd.f32 %v5044, %v5568
        %v5570 = vpop.f32.mrb[0].mxu0
        %v5571 = vadd.f32 %v5046, %v5570
        %v5572 = vpop.f32.mrb[0].mxu0
        %v5573 = vadd.f32 %v5048, %v5572
        %v5574 = vpop.f32.mrb[0].mxu0
        %v5575 = vadd.f32 %v5050, %v5574
        %5576 = vmatprep.mubr.bf16.mxu0 %v4671
        %5577 = vmatmul.mubr.bf16.gmra.mrb[0].mxu0 %v4291
        %v5578 = vpop.f32.mrb[0].mxu0
        %v5579 = vadd.f32 %v5054, %v5578
        %v5580 = vpop.f32.mrb[0].mxu0
        %v5581 = vadd.f32 %v5056, %v5580
        %v5582 = vpop.f32.mrb[0].mxu0
        %v5583 = vadd.f32 %v5058, %v5582
        %v5584 = vpop.f32.mrb[0].mxu0
        %v5585 = vadd.f32 %v5060, %v5584
        %5586 = vmatprep.mubr.bf16.mxu0 %v4673
        %5587 = vmatmul.mubr.bf16.gmra.mrb[0].mxu0 %v4294
        %v5588 = vpop.f32.mrb[0].mxu0
        %v5589 = vadd.f32 %v5064, %v5588
        %v5590 = vpop.f32.mrb[0].mxu0
        %v5591 = vadd.f32 %v5066, %v5590
        %v5592 = vpop.f32.mrb[0].mxu0
        %v5593 = vadd.f32 %v5068, %v5592
        %v5594 = vpop.f32.mrb[0].mxu0
        %v5595 = vadd.f32 %v5070, %v5594
        %5596 = vmatprep.mubr.bf16.mxu0 %v4675
        %5597 = vmatmul.mubr.bf16.gmra.mrb[0].mxu0 %v4297
        %v5598 = vpop.f32.mrb[0].mxu0
        %v5599 = vadd.f32 %v5074, %v5598
        %v5600 = vpop.f32.mrb[0].mxu0
        %v5601 = vadd.f32 %v5076, %v5600
        %v5602 = vpop.f32.mrb[0].mxu0
        %v5603 = vadd.f32 %v5078, %v5602
        %v5604 = vpop.f32.mrb[0].mxu0
        %v5605 = vadd.f32 %v5080, %v5604
        %5606 = vmatprep.mubr.bf16.mxu0 %v4677
        %5607 = vmatmul.mubr.bf16.gmra.mrb[0].mxu0 %v4300
        %v5608 = vpop.f32.mrb[0].mxu0
        %v5609 = vadd.f32 %v5084, %v5608
        %v5610 = vpop.f32.mrb[0].mxu0
        %v5611 = vadd.f32 %v5086, %v5610
        %v5612 = vpop.f32.mrb[0].mxu0
        %v5613 = vadd.f32 %v5088, %v5612
        %v5614 = vpop.f32.mrb[0].mxu0
        %v5615 = vadd.f32 %v5090, %v5614
        %5616 = vmatprep.mubr.bf16.mxu0 %v4679
        %5617 = vmatmul.mubr.bf16.gmra.mrb[0].mxu0 %v4303
        %v5618 = vpop.f32.mrb[0].mxu0
        %v5619 = vadd.f32 %v5094, %v5618
        %v5620 = vpop.f32.mrb[0].mxu0
        %v5621 = vadd.f32 %v5096, %v5620
        %v5622 = vpop.f32.mrb[0].mxu0
        %v5623 = vadd.f32 %v5098, %v5622
        %v5624 = vpop.f32.mrb[0].mxu0
        %v5625 = vadd.f32 %v5100, %v5624
        %5626 = vmatprep.mubr.bf16.mxu0 %v4681
        %5627 = vmatmul.mubr.bf16.gmra.mrb[0].mxu0 %v4306
        %v5628 = vpop.f32.mrb[0].mxu0
        %v5629 = vadd.f32 %v5104, %v5628
        %v5630 = vpop.f32.mrb[0].mxu0
        %v5631 = vadd.f32 %v5106, %v5630
        %v5632 = vpop.f32.mrb[0].mxu0
        %v5633 = vadd.f32 %v5108, %v5632
        %v5634 = vpop.f32.mrb[0].mxu0
        %v5635 = vadd.f32 %v5110, %v5634
        %5636 = vmatprep.mubr.bf16.mxu0 %v4683
        %5637 = vmatmul.mubr.bf16.gmra.mrb[0].mxu0 %v4309
        %v5638 = vpop.f32.mrb[0].mxu0
        %v5639 = vadd.f32 %v5114, %v5638
        %v5640 = vpop.f32.mrb[0].mxu0
        %v5641 = vadd.f32 %v5116, %v5640
        %v5642 = vpop.f32.mrb[0].mxu0
        %v5643 = vadd.f32 %v5118, %v5642
        %v5644 = vpop.f32.mrb[0].mxu0
        %v5645 = vadd.f32 %v5120, %v5644
        %5646 = vmatprep.mubr.bf16.mxu0 %v4685
        %5647 = vmatmul.mubr.bf16.gmra.mrb[0].mxu0 %v4312
        %v5648 = vpop.f32.mrb[0].mxu0
        %v5649 = vadd.f32 %v5124, %v5648
        %v5650 = vpop.f32.mrb[0].mxu0
        %v5651 = vadd.f32 %v5126, %v5650
        %v5652 = vpop.f32.mrb[0].mxu0
        %v5653 = vadd.f32 %v5128, %v5652
        %v5654 = vpop.f32.mrb[0].mxu0
        %v5655 = vadd.f32 %v5130, %v5654
        %5656 = vmatprep.mubr.bf16.mxu0 %v4687
        %5657 = vmatmul.mubr.bf16.gmra.mrb[0].mxu0 %v4315
        %v5658 = vpop.f32.mrb[0].mxu0
        %v5659 = vadd.f32 %v5134, %v5658
        %v5660 = vpop.f32.mrb[0].mxu0
        %v5661 = vadd.f32 %v5136, %v5660
        %v5662 = vpop.f32.mrb[0].mxu0
        %v5663 = vadd.f32 %v5138, %v5662
        %v5664 = vpop.f32.mrb[0].mxu0
        %v5665 = vadd.f32 %v5140, %v5664
        %5666 = vmatprep.mubr.bf16.mxu0 %v4689
        %5667 = vmatmul.mubr.bf16.gmra.mrb[0].mxu0 %v4318
        %v5668 = vpop.f32.mrb[0].mxu0
        %v5669 = vadd.f32 %v5144, %v5668
        %v5670 = vpop.f32.mrb[0].mxu0
        %v5671 = vadd.f32 %v5146, %v5670
        %v5672 = vpop.f32.mrb[0].mxu0
        %v5673 = vadd.f32 %v5148, %v5672
        %v5674 = vpop.f32.mrb[0].mxu0
        %v5675 = vadd.f32 %v5150, %v5674
        %5676 = vmatprep.mubr.bf16.mxu0 %v4691
        %5677 = vmatmul.mubr.bf16.gmra.mrb[0].mxu0 %v4321
        %v5678 = vpop.f32.mrb[0].mxu0
        %v5679 = vadd.f32 %v5154, %v5678
        %v5680 = vpop.f32.mrb[0].mxu0
        %v5681 = vadd.f32 %v5156, %v5680
        %v5682 = vpop.f32.mrb[0].mxu0
        %v5683 = vadd.f32 %v5158, %v5682
        %v5684 = vpop.f32.mrb[0].mxu0
        %v5685 = vadd.f32 %v5160, %v5684
        %5686 = vmatprep.mubr.bf16.mxu0 %v4693
        %5687 = vmatmul.mubr.bf16.gmra.mrb[0].mxu0 %v4324
        %v5688 = vpop.f32.mrb[0].mxu0
        %v5689 = vadd.f32 %v5164, %v5688
        %v5690 = vpop.f32.mrb[0].mxu0
        %v5691 = vadd.f32 %v5166, %v5690
        %v5692 = vpop.f32.mrb[0].mxu0
        %v5693 = vadd.f32 %v5168, %v5692
        %v5694 = vpop.f32.mrb[0].mxu0
        %v5695 = vadd.f32 %v5170, %v5694
        %5696 = vmatprep.mubr.bf16.mxu0 %v4695
        %5697 = vmatmul.mubr.bf16.gmra.mrb[0].mxu0 %v4327
        %v5698 = vpop.f32.mrb[0].mxu0
        %v5699 = vadd.f32 %v5174, %v5698
        %v5700 = vpop.f32.mrb[0].mxu0
        %v5701 = vadd.f32 %v5176, %v5700
        %v5702 = vpop.f32.mrb[0].mxu0
        %v5703 = vadd.f32 %v5178, %v5702
        %v5704 = vpop.f32.mrb[0].mxu0
        %v5705 = vadd.f32 %v5180, %v5704
        %5706 = vmatprep.mubr.bf16.mxu0 %v4697
        %5707 = vmatmul.mubr.bf16.gmra.mrb[0].mxu0 %v4330
        %v5708 = vpop.f32.mrb[0].mxu0
        %v5709 = vadd.f32 %v5184, %v5708
        %v5710 = vpop.f32.mrb[0].mxu0
        %v5711 = vadd.f32 %v5186, %v5710
        %v5712 = vpop.f32.mrb[0].mxu0
        %v5713 = vadd.f32 %v5188, %v5712
        %v5714 = vpop.f32.mrb[0].mxu0
        %v5715 = vadd.f32 %v5190, %v5714
        %5716 = vmatprep.mubr.bf16.mxu0 %v4699
        %5717 = vmatmul.mubr.bf16.gmra.mrb[0].mxu0 %v4333
        %v5718 = vpop.f32.mrb[0].mxu0
        %v5719 = vadd.f32 %v5194, %v5718
        %v5720 = vpop.f32.mrb[0].mxu0
        %v5721 = vadd.f32 %v5196, %v5720
        %v5722 = vpop.f32.mrb[0].mxu0
        %v5723 = vadd.f32 %v5198, %v5722
        %v5724 = vpop.f32.mrb[0].mxu0
        %v5725 = vadd.f32 %v5200, %v5724
        %5726 = vmatprep.mubr.bf16.mxu0 %v4701
        %5727 = vmatmul.mubr.bf16.gmra.mrb[0].mxu0 %v4336
        %v5728 = vpop.f32.mrb[0].mxu0
        %v5729 = vadd.f32 %v5204, %v5728
        %v5730 = vpop.f32.mrb[0].mxu0
        %v5731 = vadd.f32 %v5206, %v5730
        %v5732 = vpop.f32.mrb[0].mxu0
        %v5733 = vadd.f32 %v5208, %v5732
        %v5734 = vpop.f32.mrb[0].mxu0
        %v5735 = vadd.f32 %v5210, %v5734
        %5736 = vmatprep.mubr.bf16.mxu0 %v4703
        %5737 = vmatmul.mubr.bf16.gmra.mrb[0].mxu0 %v4339
        %v5738 = vpop.f32.mrb[0].mxu0
        %v5739 = vadd.f32 %v5214, %v5738
        %v5740 = vpop.f32.mrb[0].mxu0
        %v5741 = vadd.f32 %v5216, %v5740
        %v5742 = vpop.f32.mrb[0].mxu0
        %v5743 = vadd.f32 %v5218, %v5742
        %v5744 = vpop.f32.mrb[0].mxu0
        %v5745 = vadd.f32 %v5220, %v5744
        %5746 = vmatprep.mubr.bf16.mxu0 %v4705
        %5747 = vmatmul.mubr.bf16.gmra.mrb[0].mxu0 %v4342
        %v5748 = vpop.f32.mrb[0].mxu0
        %v5749 = vpop.f32.mrb[0].mxu0
        %v5750 = vpop.f32.mrb[0].mxu0
        %v5751 = vpop.f32.mrb[0].mxu0
        %5752 = vmatprep.mubr.bf16.mxu0 %v4707
        %5753 = vmatmul.mubr.bf16.gmra.mrb[0].mxu0 %v4345
        %v5754 = vpop.f32.mrb[0].mxu0
        %v5755 = vpop.f32.mrb[0].mxu0
        %v5756 = vpop.f32.mrb[0].mxu0
        %v5757 = vpop.f32.mrb[0].mxu0
        %5758 = vdwg.mxu0
        %v5759 = vmax.f32 %v5269, 0.0
        %v5760 = vmax.f32 %v5271, 0.0
        %v5761 = vmax.f32 %v5273, 0.0
        %v5762 = vmax.f32 %v5275, 0.0
        %v5763 = vmax.f32 %v5279, 0.0
        %v5764 = vmax.f32 %v5281, 0.0
        %v5765 = vmax.f32 %v5283, 0.0
        %v5766 = vmax.f32 %v5285, 0.0
        %v5767 = vmax.f32 %v5289, 0.0
        %v5768 = vmax.f32 %v5291, 0.0
        %v5769 = vmax.f32 %v5293, 0.0
        %v5770 = vmax.f32 %v5295, 0.0
        %v5771 = vmax.f32 %v5299, 0.0
        %v5772 = vmax.f32 %v5301, 0.0
        %v5773 = vmax.f32 %v5303, 0.0
        %v5774 = vmax.f32 %v5305, 0.0
        %v5775 = vmax.f32 %v5309, 0.0
        %v5776 = vmax.f32 %v5311, 0.0
        %v5777 = vmax.f32 %v5313, 0.0
        %v5778 = vmax.f32 %v5315, 0.0
        %v5779 = vmax.f32 %v5319, 0.0
        %v5780 = vmax.f32 %v5321, 0.0
        %v5781 = vmax.f32 %v5323, 0.0
        %v5782 = vmax.f32 %v5325, 0.0
        %v5783 = vmax.f32 %v5329, 0.0
        %v5784 = vmax.f32 %v5331, 0.0
        %v5785 = vmax.f32 %v5333, 0.0
        %v5786 = vmax.f32 %v5335, 0.0
        %v5787 = vmax.f32 %v5339, 0.0
        %v5788 = vmax.f32 %v5341, 0.0
        %v5789 = vmax.f32 %v5343, 0.0
        %v5790 = vmax.f32 %v5345, 0.0
        %v5791 = vmax.f32 %v5349, 0.0
        %v5792 = vmax.f32 %v5351, 0.0
        %v5793 = vmax.f32 %v5353, 0.0
        %v5794 = vmax.f32 %v5355, 0.0
        %v5795 = vmax.f32 %v5359, 0.0
        %v5796 = vmax.f32 %v5361, 0.0
        %v5797 = vmax.f32 %v5363, 0.0
        %v5798 = vmax.f32 %v5365, 0.0
        %v5799 = vmax.f32 %v5369, 0.0
        %v5800 = vmax.f32 %v5371, 0.0
        %v5801 = vmax.f32 %v5373, 0.0
        %v5802 = vmax.f32 %v5375, 0.0
        %v5803 = vmax.f32 %v5379, 0.0
        %v5804 = vmax.f32 %v5381, 0.0
        %v5805 = vmax.f32 %v5383, 0.0
        %v5806 = vmax.f32 %v5385, 0.0
        %v5807 = vmax.f32 %v5389, 0.0
        %v5808 = vmax.f32 %v5391, 0.0
        %v5809 = vmax.f32 %v5393, 0.0
        %v5810 = vmax.f32 %v5395, 0.0
        %v5811 = vmax.f32 %v5399, 0.0
        %v5812 = vmax.f32 %v5401, 0.0
        %v5813 = vmax.f32 %v5403, 0.0
        %v5814 = vmax.f32 %v5405, 0.0
        %v5815 = vmax.f32 %v5409, 0.0
        %v5816 = vmax.f32 %v5411, 0.0
        %v5817 = vmax.f32 %v5413, 0.0
        %v5818 = vmax.f32 %v5415, 0.0
        %v5819 = vmax.f32 %v5419, 0.0
        %v5820 = vmax.f32 %v5421, 0.0
        %v5821 = vmax.f32 %v5423, 0.0
        %v5822 = vmax.f32 %v5425, 0.0
        %v5823 = vmax.f32 %v5429, 0.0
        %v5824 = vmax.f32 %v5431, 0.0
        %v5825 = vmax.f32 %v5433, 0.0
        %v5826 = vmax.f32 %v5435, 0.0
        %v5827 = vmax.f32 %v5439, 0.0
        %v5828 = vmax.f32 %v5441, 0.0
        %v5829 = vmax.f32 %v5443, 0.0
        %v5830 = vmax.f32 %v5445, 0.0
        %v5831 = vmax.f32 %v5449, 0.0
        %v5832 = vmax.f32 %v5451, 0.0
        %v5833 = vmax.f32 %v5453, 0.0
        %v5834 = vmax.f32 %v5455, 0.0
        %v5835 = vmax.f32 %v5459, 0.0
        %v5836 = vmax.f32 %v5461, 0.0
        %v5837 = vmax.f32 %v5463, 0.0
        %v5838 = vmax.f32 %v5465, 0.0
        %v5839 = vmax.f32 %v5469, 0.0
        %v5840 = vmax.f32 %v5471, 0.0
        %v5841 = vmax.f32 %v5473, 0.0
        %v5842 = vmax.f32 %v5475, 0.0
        %v5843 = vmax.f32 %v5479, 0.0
        %v5844 = vmax.f32 %v5481, 0.0
        %v5845 = vmax.f32 %v5483, 0.0
        %v5846 = vmax.f32 %v5485, 0.0
        %v5847 = vmax.f32 %v5489, 0.0
        %v5848 = vmax.f32 %v5491, 0.0
        %v5849 = vmax.f32 %v5493, 0.0
        %v5850 = vmax.f32 %v5495, 0.0
        %v5851 = vmax.f32 %v5499, 0.0
        %v5852 = vmax.f32 %v5501, 0.0
        %v5853 = vmax.f32 %v5503, 0.0
        %v5854 = vmax.f32 %v5505, 0.0
        %v5855 = vmax.f32 %v5509, 0.0
        %v5856 = vmax.f32 %v5511, 0.0
        %v5857 = vmax.f32 %v5513, 0.0
        %v5858 = vmax.f32 %v5515, 0.0
        %v5859 = vmax.f32 %v5519, 0.0
        %v5860 = vmax.f32 %v5521, 0.0
        %v5861 = vmax.f32 %v5523, 0.0
        %v5862 = vmax.f32 %v5525, 0.0
        %v5863 = vmax.f32 %v5529, 0.0
        %v5864 = vmax.f32 %v5531, 0.0
        %v5865 = vmax.f32 %v5533, 0.0
        %v5866 = vmax.f32 %v5535, 0.0
        %v5867 = vmax.f32 %v5539, 0.0
        %v5868 = vmax.f32 %v5541, 0.0
        %v5869 = vmax.f32 %v5543, 0.0
        %v5870 = vmax.f32 %v5545, 0.0
        %v5871 = vmax.f32 %v5549, 0.0
        %v5872 = vmax.f32 %v5551, 0.0
        %v5873 = vmax.f32 %v5553, 0.0
        %v5874 = vmax.f32 %v5555, 0.0
        %v5875 = vmax.f32 %v5559, 0.0
        %v5876 = vmax.f32 %v5561, 0.0
        %v5877 = vmax.f32 %v5563, 0.0
        %v5878 = vmax.f32 %v5565, 0.0
        %v5879 = vmax.f32 %v5569, 0.0
        %v5880 = vmax.f32 %v5571, 0.0
        %v5881 = vmax.f32 %v5573, 0.0
        %v5882 = vmax.f32 %v5575, 0.0
        %v5883 = vmax.f32 %v5579, 0.0
        %v5884 = vmax.f32 %v5581, 0.0
        %v5885 = vmax.f32 %v5583, 0.0
        %v5886 = vmax.f32 %v5585, 0.0
        %v5887 = vmax.f32 %v5589, 0.0
        %v5888 = vmax.f32 %v5591, 0.0
        %v5889 = vmax.f32 %v5593, 0.0
        %v5890 = vmax.f32 %v5595, 0.0
        %v5891 = vmax.f32 %v5599, 0.0
        %v5892 = vmax.f32 %v5601, 0.0
        %v5893 = vmax.f32 %v5603, 0.0
        %v5894 = vmax.f32 %v5605, 0.0
        %v5895 = vmax.f32 %v5609, 0.0
        %v5896 = vmax.f32 %v5611, 0.0
        %v5897 = vmax.f32 %v5613, 0.0
        %v5898 = vmax.f32 %v5615, 0.0
        %v5899 = vmax.f32 %v5619, 0.0
        %v5900 = vmax.f32 %v5621, 0.0
        %v5901 = vmax.f32 %v5623, 0.0
        %v5902 = vmax.f32 %v5625, 0.0
        %v5903 = vmax.f32 %v5629, 0.0
        %v5904 = vmax.f32 %v5631, 0.0
        %v5905 = vmax.f32 %v5633, 0.0
        %v5906 = vmax.f32 %v5635, 0.0
        %v5907 = vmax.f32 %v5639, 0.0
        %v5908 = vmax.f32 %v5641, 0.0
        %v5909 = vmax.f32 %v5643, 0.0
        %v5910 = vmax.f32 %v5645, 0.0
        %v5911 = vmax.f32 %v5649, 0.0
        %v5912 = vmax.f32 %v5651, 0.0
        %v5913 = vmax.f32 %v5653, 0.0
        %v5914 = vmax.f32 %v5655, 0.0
        %v5915 = vmax.f32 %v5659, 0.0
        %v5916 = vmax.f32 %v5661, 0.0
        %v5917 = vmax.f32 %v5663, 0.0
        %v5918 = vmax.f32 %v5665, 0.0
        %v5919 = vmax.f32 %v5669, 0.0
        %v5920 = vmax.f32 %v5671, 0.0
        %v5921 = vmax.f32 %v5673, 0.0
        %v5922 = vmax.f32 %v5675, 0.0
        %v5923 = vmax.f32 %v5679, 0.0
        %v5924 = vmax.f32 %v5681, 0.0
        %v5925 = vmax.f32 %v5683, 0.0
        %v5926 = vmax.f32 %v5685, 0.0
        %v5927 = vmax.f32 %v5689, 0.0
        %v5928 = vmax.f32 %v5691, 0.0
        %v5929 = vmax.f32 %v5693, 0.0
        %v5930 = vmax.f32 %v5695, 0.0
        %v5931 = vmax.f32 %v5699, 0.0
        %v5932 = vmax.f32 %v5701, 0.0
        %v5933 = vmax.f32 %v5703, 0.0
        %v5934 = vmax.f32 %v5705, 0.0
        %v5935 = vmax.f32 %v5709, 0.0
        %v5936 = vmax.f32 %v5711, 0.0
        %v5937 = vmax.f32 %v5713, 0.0
        %v5938 = vmax.f32 %v5715, 0.0
        %v5939 = vmax.f32 %v5719, 0.0
        %v5940 = vmax.f32 %v5721, 0.0
        %v5941 = vmax.f32 %v5723, 0.0
        %v5942 = vmax.f32 %v5725, 0.0
        %v5943 = vmax.f32 %v5729, 0.0
        %v5944 = vmax.f32 %v5731, 0.0
        %v5945 = vmax.f32 %v5733, 0.0
        %v5946 = vmax.f32 %v5735, 0.0
        %v5947 = vmax.f32 %v5739, 0.0
        %v5948 = vmax.f32 %v5741, 0.0
        %v5949 = vmax.f32 %v5743, 0.0
        %v5950 = vmax.f32 %v5745, 0.0
        %v5951 = vadd.f32 %v5759, %v5767
        %v5952 = vadd.f32 %v5760, %v5768
        %v5953 = vadd.f32 %v5761, %v5769
        %v5954 = vadd.f32 %v5762, %v5770
        %v5955 = vadd.f32 %v5763, %v5771
        %v5956 = vadd.f32 %v5764, %v5772
        %v5957 = vadd.f32 %v5765, %v5773
        %v5958 = vadd.f32 %v5766, %v5774
        %v5959 = vadd.f32 %v5775, %v5783
        %v5960 = vadd.f32 %v5776, %v5784
        %v5961 = vadd.f32 %v5777, %v5785
        %v5962 = vadd.f32 %v5778, %v5786
        %v5963 = vadd.f32 %v5779, %v5787
        %v5964 = vadd.f32 %v5780, %v5788
        %v5965 = vadd.f32 %v5781, %v5789
        %v5966 = vadd.f32 %v5782, %v5790
        %v5967 = vadd.f32 %v5791, %v5799
        %v5968 = vadd.f32 %v5792, %v5800
        %v5969 = vadd.f32 %v5793, %v5801
        %v5970 = vadd.f32 %v5794, %v5802
        %v5971 = vadd.f32 %v5795, %v5803
        %v5972 = vadd.f32 %v5796, %v5804
        %v5973 = vadd.f32 %v5797, %v5805
        %v5974 = vadd.f32 %v5798, %v5806
        %v5975 = vadd.f32 %v5807, %v5815
        %v5976 = vadd.f32 %v5808, %v5816
        %v5977 = vadd.f32 %v5809, %v5817
        %v5978 = vadd.f32 %v5810, %v5818
        %v5979 = vadd.f32 %v5811, %v5819
        %v5980 = vadd.f32 %v5812, %v5820
        %v5981 = vadd.f32 %v5813, %v5821
        %v5982 = vadd.f32 %v5814, %v5822
        %v5983 = vadd.f32 %v5823, %v5831
        %v5984 = vadd.f32 %v5824, %v5832
        %v5985 = vadd.f32 %v5825, %v5833
        %v5986 = vadd.f32 %v5826, %v5834
        %v5987 = vadd.f32 %v5827, %v5835
        %v5988 = vadd.f32 %v5828, %v5836
        %v5989 = vadd.f32 %v5829, %v5837
        %v5990 = vadd.f32 %v5830, %v5838
        %v5991 = vadd.f32 %v5839, %v5847
        %v5992 = vadd.f32 %v5840, %v5848
        %v5993 = vadd.f32 %v5841, %v5849
        %v5994 = vadd.f32 %v5842, %v5850
        %v5995 = vadd.f32 %v5843, %v5851
        %v5996 = vadd.f32 %v5844, %v5852
        %v5997 = vadd.f32 %v5845, %v5853
        %v5998 = vadd.f32 %v5846, %v5854
        %v5999 = vadd.f32 %v5855, %v5863
        %v6000 = vadd.f32 %v5856, %v5864
        %v6001 = vadd.f32 %v5857, %v5865
        %v6002 = vadd.f32 %v5858, %v5866
        %v6003 = vadd.f32 %v5859, %v5867
        %v6004 = vadd.f32 %v5860, %v5868
        %v6005 = vadd.f32 %v5861, %v5869
        %v6006 = vadd.f32 %v5862, %v5870
        %v6007 = vadd.f32 %v5871, %v5879
        %v6008 = vadd.f32 %v5872, %v5880
        %v6009 = vadd.f32 %v5873, %v5881
        %v6010 = vadd.f32 %v5874, %v5882
        %v6011 = vadd.f32 %v5875, %v5883
        %v6012 = vadd.f32 %v5876, %v5884
        %v6013 = vadd.f32 %v5877, %v5885
        %v6014 = vadd.f32 %v5878, %v5886
        %v6015 = vadd.f32 %v5887, %v5895
        %v6016 = vadd.f32 %v5888, %v5896
        %v6017 = vadd.f32 %v5889, %v5897
        %v6018 = vadd.f32 %v5890, %v5898
        %v6019 = vadd.f32 %v5891, %v5899
        %v6020 = vadd.f32 %v5892, %v5900
        %v6021 = vadd.f32 %v5893, %v5901
        %v6022 = vadd.f32 %v5894, %v5902
        %v6023 = vadd.f32 %v5903, %v5911
        %v6024 = vadd.f32 %v5904, %v5912
        %v6025 = vadd.f32 %v5905, %v5913
        %v6026 = vadd.f32 %v5906, %v5914
        %v6027 = vadd.f32 %v5907, %v5915
        %v6028 = vadd.f32 %v5908, %v5916
        %v6029 = vadd.f32 %v5909, %v5917
        %v6030 = vadd.f32 %v5910, %v5918
        %v6031 = vadd.f32 %v5919, %v5927
        %v6032 = vadd.f32 %v5920, %v5928
        %v6033 = vadd.f32 %v5921, %v5929
        %v6034 = vadd.f32 %v5922, %v5930
        %v6035 = vadd.f32 %v5923, %v5931
        %v6036 = vadd.f32 %v5924, %v5932
        %v6037 = vadd.f32 %v5925, %v5933
        %v6038 = vadd.f32 %v5926, %v5934
        %v6039 = vadd.f32 %v5935, %v5943
        %v6040 = vadd.f32 %v5936, %v5944
        %v6041 = vadd.f32 %v5937, %v5945
        %v6042 = vadd.f32 %v5938, %v5946
        %v6043 = vadd.f32 %v5939, %v5947
        %v6044 = vadd.f32 %v5940, %v5948
        %v6045 = vadd.f32 %v5941, %v5949
        %v6046 = vadd.f32 %v5942, %v5950
        %v6047 = vpack.c.bf16 %v5953, %v5951
        %v6048 = vpack.c.bf16 %v5954, %v5952
        %v6049 = vpack.c.bf16 %v5957, %v5955
        %v6050 = vpack.c.bf16 %v5958, %v5956
        %v6051 = vpack.c.bf16 %v5961, %v5959
        %v6052 = vpack.c.bf16 %v5962, %v5960
        %v6053 = vpack.c.bf16 %v5965, %v5963
        %v6054 = vpack.c.bf16 %v5966, %v5964
        %v6055 = vpack.c.bf16 %v5969, %v5967
        %v6056 = vpack.c.bf16 %v5970, %v5968
        %v6057 = vpack.c.bf16 %v5973, %v5971
        %v6058 = vpack.c.bf16 %v5974, %v5972
        %v6059 = vpack.c.bf16 %v5977, %v5975
        %v6060 = vpack.c.bf16 %v5978, %v5976
        %v6061 = vpack.c.bf16 %v5981, %v5979
        %v6062 = vpack.c.bf16 %v5982, %v5980
        %v6063 = vpack.c.bf16 %v5985, %v5983
        %v6064 = vpack.c.bf16 %v5986, %v5984
        %v6065 = vpack.c.bf16 %v5989, %v5987
        %v6066 = vpack.c.bf16 %v5990, %v5988
        %v6067 = vpack.c.bf16 %v5993, %v5991
        %v6068 = vpack.c.bf16 %v5994, %v5992
        %v6069 = vpack.c.bf16 %v5997, %v5995
        %v6070 = vpack.c.bf16 %v5998, %v5996
        %v6071 = vpack.c.bf16 %v6001, %v5999
        %v6072 = vpack.c.bf16 %v6002, %v6000
        %v6073 = vpack.c.bf16 %v6005, %v6003
        %v6074 = vpack.c.bf16 %v6006, %v6004
        %v6075 = vpack.c.bf16 %v6009, %v6007
        %v6076 = vpack.c.bf16 %v6010, %v6008
        %v6077 = vpack.c.bf16 %v6013, %v6011
        %v6078 = vpack.c.bf16 %v6014, %v6012
        %v6079 = vpack.c.bf16 %v6017, %v6015
        %v6080 = vpack.c.bf16 %v6018, %v6016
        %v6081 = vpack.c.bf16 %v6021, %v6019
        %v6082 = vpack.c.bf16 %v6022, %v6020
        %v6083 = vpack.c.bf16 %v6025, %v6023
        %v6084 = vpack.c.bf16 %v6026, %v6024
        %v6085 = vpack.c.bf16 %v6029, %v6027
        %v6086 = vpack.c.bf16 %v6030, %v6028
        %v6087 = vpack.c.bf16 %v6033, %v6031
        %v6088 = vpack.c.bf16 %v6034, %v6032
        %v6089 = vpack.c.bf16 %v6037, %v6035
        %v6090 = vpack.c.bf16 %v6038, %v6036
        %v6091 = vpack.c.bf16 %v6041, %v6039
        %v6092 = vpack.c.bf16 %v6042, %v6040
        %v6093 = vpack.c.bf16 %v6045, %v6043
        %v6094 = vpack.c.bf16 %v6046, %v6044
        %v6114 = vunpack.c.l.b16 %v974
        %v6115 = vunpack.c.l.b16 %v975
        %v6116 = vunpack.c.l.b16 %v976
        %v6117 = vunpack.c.l.b16 %v977
        %v6118 = vunpack.c.l.b16 %v978
        %v6119 = vunpack.c.l.b16 %v979
        %v6120 = vunpack.c.l.b16 %v980
        %v6121 = vunpack.c.l.b16 %v981
        %v6122 = vunpack.c.l.b16 %v982
        %v6123 = vunpack.c.l.b16 %v983
        %v6124 = vunpack.c.l.b16 %v984
        %v6125 = vunpack.c.l.b16 %v985
        %v6126 = vunpack.c.l.b16 %v986
        %v6127 = vunpack.c.l.b16 %v987
        %v6128 = vunpack.c.l.b16 %v988
        %v6129 = vunpack.c.l.b16 %v989
        %v6130 = vunpack.c.l.b16 %v990
        %v6131 = vunpack.c.l.b16 %v991
        %v6132 = vunpack.c.l.b16 %v992
        %v6133 = vpack.c.b16 %v6115, %v6114
        %v6134 = vpack.c.b16 %v6117, %v6116
        %v6135 = vpack.c.b16 %v6119, %v6118
        %v6136 = vpack.c.b16 %v6121, %v6120
        %v6137 = vpack.c.b16 %v6123, %v6122
        %v6138 = vpack.c.b16 %v6125, %v6124
        %v6139 = vpack.c.b16 %v6127, %v6126
        %v6140 = vpack.c.b16 %v6129, %v6128
        %v6141 = vpack.c.b16 %v6131, %v6130
        %v6142 = vpack.c.b16 %v6132, %v6132
        %v6153 = vsel %vm3329, %v6048, 0
        %v6156 = vsel %vm3329, %v6050, 0
        %v6159 = vsel %vm3329, %v6052, 0
        %v6162 = vsel %vm3329, %v6054, 0
        %v6165 = vsel %vm3329, %v6056, 0
        %v6168 = vsel %vm3329, %v6058, 0
        %v6171 = vsel %vm3329, %v6060, 0
        %v6174 = vsel %vm3329, %v6062, 0
        %v6177 = vsel %vm3329, %v6064, 0
        %v6180 = vsel %vm3329, %v6066, 0
        %v6183 = vsel %vm3329, %v6068, 0
        %v6186 = vsel %vm3329, %v6070, 0
        %v6189 = vsel %vm3329, %v6072, 0
        %v6192 = vsel %vm3329, %v6074, 0
        %v6195 = vsel %vm3329, %v6076, 0
        %v6198 = vsel %vm3329, %v6078, 0
        %v6201 = vsel %vm3329, %v6080, 0
        %v6204 = vsel %vm3329, %v6082, 0
        %v6207 = vsel %vm3329, %v6084, 0
        %v6210 = vsel %vm3329, %v6086, 0
        %v6213 = vsel %vm3329, %v6088, 0
        %v6216 = vsel %vm3329, %v6090, 0
        %v6219 = vsel %vm3329, %v6092, 0
        %v6222 = vsel %vm3329, %v6094, 0
        %vm6224 = vcmask 1042432
        %v6226 = vsel %vm6224, %v6142, 0
        %6228 = vmatprep.subr.bf16.mxu0 0
        %6229 = vmatpush1.bf16.msra.mxu0 %v6133
        %6230 = vmatprep.subr.bf16.mxu0 0
        %6231 = vmatpush1.bf16.msra.mxu0 %v6134
        %6232 = vmatprep.subr.bf16.mxu0 0
        %6233 = vmatpush1.bf16.msra.mxu0 %v6135
        %6234 = vmatprep.subr.bf16.mxu0 0
        %6235 = vmatpush1.bf16.msra.mxu0 %v6136
        %6236 = vmatprep.subr.bf16.mxu0 0
        %6237 = vmatpush1.bf16.msra.mxu0 %v6137
        %6238 = vmatprep.subr.bf16.mxu0 0
        %6239 = vmatpush1.bf16.msra.mxu0 %v6138
        %6240 = vmatprep.subr.bf16.mxu0 0
        %6241 = vmatpush1.bf16.msra.mxu0 %v6139
        %6242 = vmatprep.subr.bf16.mxu0 0
        %6243 = vmatpush1.bf16.msra.mxu0 %v6140
        %6244 = vmatprep.subr.bf16.mxu0 0
        %6245 = vmatpush1.bf16.msra.mxu0 %v6141
        %6246 = vmatprep.subr.bf16.mxu0 0
        %6247 = vmatpush1.bf16.msra.mxu0 %v6226
        %6248 = vmatprep.subr.bf16.mxu0 0
        %6249 = vmatpush1.bf16.msra.mxu0 0
        %6250 = vmatprep.subr.bf16.mxu0 0
        %6251 = vmatpush1.bf16.msra.mxu0 0
        %6252 = vmatprep.subr.bf16.mxu0 0
        %6253 = vmatpush1.bf16.msra.mxu0 0
        %6254 = vmatprep.subr.bf16.mxu0 0
        %6255 = vmatpush1.bf16.msra.mxu0 0
        %6256 = vmatprep.subr.bf16.mxu0 0
        %6257 = vmatpush1.bf16.msra.mxu0 0
        %6258 = vmatprep.subr.bf16.mxu0 0
        %6259 = vmatpush1.bf16.msra.mxu0 0
        %6260 = vmatprep.mubr.bf16.mxu0 %v6153
        %6261 = vmatmul.mubr.bf16.gmra.mrb[0].mxu0 %v6047
        %v6262 = vpop.f32.mrb[0].mxu0
        %v6263 = vadd.f32 0.0, %v6262
        %v6264 = vpop.f32.mrb[0].mxu0
        %v6265 = vpop.f32.mrb[0].mxu0
        %v6266 = vadd.f32 0.0, %v6265
        %v6267 = vpop.f32.mrb[0].mxu0
        %6268 = vmatprep.mubr.bf16.mxu0 %v6156
        %6269 = vmatmul.mubr.bf16.gmra.mrb[0].mxu0 %v6049
        %v6270 = vpop.f32.mrb[0].mxu0
        %v6271 = vadd.f32 0.0, %v6270
        %v6272 = vpop.f32.mrb[0].mxu0
        %v6273 = vpop.f32.mrb[0].mxu0
        %v6274 = vadd.f32 0.0, %v6273
        %v6275 = vpop.f32.mrb[0].mxu0
        %6276 = vmatprep.mubr.bf16.mxu0 %v6159
        %6277 = vmatmul.mubr.bf16.gmra.mrb[0].mxu0 %v6051
        %v6278 = vpop.f32.mrb[0].mxu0
        %v6279 = vadd.f32 0.0, %v6278
        %v6280 = vpop.f32.mrb[0].mxu0
        %v6281 = vpop.f32.mrb[0].mxu0
        %v6282 = vadd.f32 0.0, %v6281
        %v6283 = vpop.f32.mrb[0].mxu0
        %6284 = vmatprep.mubr.bf16.mxu0 %v6162
        %6285 = vmatmul.mubr.bf16.gmra.mrb[0].mxu0 %v6053
        %v6286 = vpop.f32.mrb[0].mxu0
        %v6287 = vadd.f32 0.0, %v6286
        %v6288 = vpop.f32.mrb[0].mxu0
        %v6289 = vpop.f32.mrb[0].mxu0
        %v6290 = vadd.f32 0.0, %v6289
        %v6291 = vpop.f32.mrb[0].mxu0
        %6292 = vmatprep.mubr.bf16.mxu0 %v6165
        %6293 = vmatmul.mubr.bf16.gmra.mrb[0].mxu0 %v6055
        %v6294 = vpop.f32.mrb[0].mxu0
        %v6295 = vadd.f32 0.0, %v6294
        %v6296 = vpop.f32.mrb[0].mxu0
        %v6297 = vpop.f32.mrb[0].mxu0
        %v6298 = vadd.f32 0.0, %v6297
        %v6299 = vpop.f32.mrb[0].mxu0
        %6300 = vmatprep.mubr.bf16.mxu0 %v6168
        %6301 = vmatmul.mubr.bf16.gmra.mrb[0].mxu0 %v6057
        %v6302 = vpop.f32.mrb[0].mxu0
        %v6303 = vadd.f32 0.0, %v6302
        %v6304 = vpop.f32.mrb[0].mxu0
        %v6305 = vpop.f32.mrb[0].mxu0
        %v6306 = vadd.f32 0.0, %v6305
        %v6307 = vpop.f32.mrb[0].mxu0
        %6308 = vmatprep.mubr.bf16.mxu0 %v6171
        %6309 = vmatmul.mubr.bf16.gmra.mrb[0].mxu0 %v6059
        %v6310 = vpop.f32.mrb[0].mxu0
        %v6311 = vadd.f32 0.0, %v6310
        %v6312 = vpop.f32.mrb[0].mxu0
        %v6313 = vpop.f32.mrb[0].mxu0
        %v6314 = vadd.f32 0.0, %v6313
        %v6315 = vpop.f32.mrb[0].mxu0
        %6316 = vmatprep.mubr.bf16.mxu0 %v6174
        %6317 = vmatmul.mubr.bf16.gmra.mrb[0].mxu0 %v6061
        %v6318 = vpop.f32.mrb[0].mxu0
        %v6319 = vadd.f32 0.0, %v6318
        %v6320 = vpop.f32.mrb[0].mxu0
        %v6321 = vpop.f32.mrb[0].mxu0
        %v6322 = vadd.f32 0.0, %v6321
        %v6323 = vpop.f32.mrb[0].mxu0
        %6324 = vmatprep.mubr.bf16.mxu0 %v6177
        %6325 = vmatmul.mubr.bf16.gmra.mrb[0].mxu0 %v6063
        %v6326 = vpop.f32.mrb[0].mxu0
        %v6327 = vadd.f32 0.0, %v6326
        %v6328 = vpop.f32.mrb[0].mxu0
        %v6329 = vpop.f32.mrb[0].mxu0
        %v6330 = vadd.f32 0.0, %v6329
        %v6331 = vpop.f32.mrb[0].mxu0
        %6332 = vmatprep.mubr.bf16.mxu0 %v6180
        %6333 = vmatmul.mubr.bf16.gmra.mrb[0].mxu0 %v6065
        %v6334 = vpop.f32.mrb[0].mxu0
        %v6335 = vadd.f32 0.0, %v6334
        %v6336 = vpop.f32.mrb[0].mxu0
        %v6337 = vpop.f32.mrb[0].mxu0
        %v6338 = vadd.f32 0.0, %v6337
        %v6339 = vpop.f32.mrb[0].mxu0
        %6340 = vmatprep.mubr.bf16.mxu0 %v6183
        %6341 = vmatmul.mubr.bf16.gmra.mrb[0].mxu0 %v6067
        %v6342 = vpop.f32.mrb[0].mxu0
        %v6343 = vadd.f32 0.0, %v6342
        %v6344 = vpop.f32.mrb[0].mxu0
        %v6345 = vpop.f32.mrb[0].mxu0
        %v6346 = vadd.f32 0.0, %v6345
        %v6347 = vpop.f32.mrb[0].mxu0
        %6348 = vmatprep.mubr.bf16.mxu0 %v6186
        %6349 = vmatmul.mubr.bf16.gmra.mrb[0].mxu0 %v6069
        %v6350 = vpop.f32.mrb[0].mxu0
        %v6351 = vadd.f32 0.0, %v6350
        %v6352 = vpop.f32.mrb[0].mxu0
        %v6353 = vpop.f32.mrb[0].mxu0
        %v6354 = vadd.f32 0.0, %v6353
        %v6355 = vpop.f32.mrb[0].mxu0
        %6356 = vmatprep.mubr.bf16.mxu0 %v6189
        %6357 = vmatmul.mubr.bf16.gmra.mrb[0].mxu0 %v6071
        %v6358 = vpop.f32.mrb[0].mxu0
        %v6359 = vadd.f32 0.0, %v6358
        %v6360 = vpop.f32.mrb[0].mxu0
        %v6361 = vpop.f32.mrb[0].mxu0
        %v6362 = vadd.f32 0.0, %v6361
        %v6363 = vpop.f32.mrb[0].mxu0
        %6364 = vmatprep.mubr.bf16.mxu0 %v6192
        %6365 = vmatmul.mubr.bf16.gmra.mrb[0].mxu0 %v6073
        %v6366 = vpop.f32.mrb[0].mxu0
        %v6367 = vadd.f32 0.0, %v6366
        %v6368 = vpop.f32.mrb[0].mxu0
        %v6369 = vpop.f32.mrb[0].mxu0
        %v6370 = vadd.f32 0.0, %v6369
        %v6371 = vpop.f32.mrb[0].mxu0
        %6372 = vmatprep.mubr.bf16.mxu0 %v6195
        %6373 = vmatmul.mubr.bf16.gmra.mrb[0].mxu0 %v6075
        %v6374 = vpop.f32.mrb[0].mxu0
        %v6375 = vadd.f32 0.0, %v6374
        %v6376 = vpop.f32.mrb[0].mxu0
        %v6377 = vpop.f32.mrb[0].mxu0
        %v6378 = vadd.f32 0.0, %v6377
        %v6379 = vpop.f32.mrb[0].mxu0
        %6380 = vmatprep.mubr.bf16.mxu0 %v6198
        %6381 = vmatmul.mubr.bf16.gmra.mrb[0].mxu0 %v6077
        %v6382 = vpop.f32.mrb[0].mxu0
        %v6383 = vadd.f32 0.0, %v6382
        %v6384 = vpop.f32.mrb[0].mxu0
        %v6385 = vpop.f32.mrb[0].mxu0
        %v6386 = vadd.f32 0.0, %v6385
        %v6387 = vpop.f32.mrb[0].mxu0
        %6388 = vmatprep.mubr.bf16.mxu0 %v6201
        %6389 = vmatmul.mubr.bf16.gmra.mrb[0].mxu0 %v6079
        %v6390 = vpop.f32.mrb[0].mxu0
        %v6391 = vadd.f32 0.0, %v6390
        %v6392 = vpop.f32.mrb[0].mxu0
        %v6393 = vpop.f32.mrb[0].mxu0
        %v6394 = vadd.f32 0.0, %v6393
        %v6395 = vpop.f32.mrb[0].mxu0
        %6396 = vmatprep.mubr.bf16.mxu0 %v6204
        %6397 = vmatmul.mubr.bf16.gmra.mrb[0].mxu0 %v6081
        %v6398 = vpop.f32.mrb[0].mxu0
        %v6399 = vadd.f32 0.0, %v6398
        %v6400 = vpop.f32.mrb[0].mxu0
        %v6401 = vpop.f32.mrb[0].mxu0
        %v6402 = vadd.f32 0.0, %v6401
        %v6403 = vpop.f32.mrb[0].mxu0
        %6404 = vmatprep.mubr.bf16.mxu0 %v6207
        %6405 = vmatmul.mubr.bf16.gmra.mrb[0].mxu0 %v6083
        %v6406 = vpop.f32.mrb[0].mxu0
        %v6407 = vadd.f32 0.0, %v6406
        %v6408 = vpop.f32.mrb[0].mxu0
        %v6409 = vpop.f32.mrb[0].mxu0
        %v6410 = vadd.f32 0.0, %v6409
        %v6411 = vpop.f32.mrb[0].mxu0
        %6412 = vmatprep.mubr.bf16.mxu0 %v6210
        %6413 = vmatmul.mubr.bf16.gmra.mrb[0].mxu0 %v6085
        %v6414 = vpop.f32.mrb[0].mxu0
        %v6415 = vadd.f32 0.0, %v6414
        %v6416 = vpop.f32.mrb[0].mxu0
        %v6417 = vpop.f32.mrb[0].mxu0
        %v6418 = vadd.f32 0.0, %v6417
        %v6419 = vpop.f32.mrb[0].mxu0
        %6420 = vmatprep.mubr.bf16.mxu0 %v6213
        %6421 = vmatmul.mubr.bf16.gmra.mrb[0].mxu0 %v6087
        %v6422 = vpop.f32.mrb[0].mxu0
        %v6423 = vadd.f32 0.0, %v6422
        %v6424 = vpop.f32.mrb[0].mxu0
        %v6425 = vpop.f32.mrb[0].mxu0
        %v6426 = vadd.f32 0.0, %v6425
        %v6427 = vpop.f32.mrb[0].mxu0
        %6428 = vmatprep.mubr.bf16.mxu0 %v6216
        %6429 = vmatmul.mubr.bf16.gmra.mrb[0].mxu0 %v6089
        %v6430 = vpop.f32.mrb[0].mxu0
        %v6431 = vadd.f32 0.0, %v6430
        %v6432 = vpop.f32.mrb[0].mxu0
        %v6433 = vpop.f32.mrb[0].mxu0
        %v6434 = vadd.f32 0.0, %v6433
        %v6435 = vpop.f32.mrb[0].mxu0
        %6436 = vmatprep.mubr.bf16.mxu0 %v6219
        %6437 = vmatmul.mubr.bf16.gmra.mrb[0].mxu0 %v6091
        %v6438 = vpop.f32.mrb[0].mxu0
        %v6439 = vadd.f32 0.0, %v6438
        %v6440 = vpop.f32.mrb[0].mxu0
        %v6441 = vpop.f32.mrb[0].mxu0
        %v6442 = vadd.f32 0.0, %v6441
        %v6443 = vpop.f32.mrb[0].mxu0
        %6444 = vmatprep.mubr.bf16.mxu0 %v6222
        %6445 = vmatmul.mubr.bf16.gmra.mrb[0].mxu0 %v6093
        %v6446 = vpop.f32.mrb[0].mxu0
        %v6447 = vadd.f32 0.0, %v6446
        %v6448 = vpop.f32.mrb[0].mxu0
        %v6449 = vpop.f32.mrb[0].mxu0
        %v6450 = vadd.f32 0.0, %v6449
        %v6451 = vpop.f32.mrb[0].mxu0
        %6452 = vdwg.mxu0
        %v6453 = vpack.c.bf16 %v6266, %v6263
        %v6454 = vpack.c.bf16 %v6274, %v6271
        %v6455 = vpack.c.bf16 %v6282, %v6279
        %v6456 = vpack.c.bf16 %v6290, %v6287
        %v6457 = vpack.c.bf16 %v6298, %v6295
        %v6458 = vpack.c.bf16 %v6306, %v6303
        %v6459 = vpack.c.bf16 %v6314, %v6311
        %v6460 = vpack.c.bf16 %v6322, %v6319
        %v6461 = vpack.c.bf16 %v6330, %v6327
        %v6462 = vpack.c.bf16 %v6338, %v6335
        %v6463 = vpack.c.bf16 %v6346, %v6343
        %v6464 = vpack.c.bf16 %v6354, %v6351
        %v6465 = vpack.c.bf16 %v6362, %v6359
        %v6466 = vpack.c.bf16 %v6370, %v6367
        %v6467 = vpack.c.bf16 %v6378, %v6375
        %v6468 = vpack.c.bf16 %v6386, %v6383
        %v6469 = vpack.c.bf16 %v6394, %v6391
        %v6470 = vpack.c.bf16 %v6402, %v6399
        %v6471 = vpack.c.bf16 %v6410, %v6407
        %v6472 = vpack.c.bf16 %v6418, %v6415
        %v6473 = vpack.c.bf16 %v6426, %v6423
        %v6474 = vpack.c.bf16 %v6434, %v6431
        %v6475 = vpack.c.bf16 %v6442, %v6439
        %v6476 = vpack.c.bf16 %v6450, %v6447
        %6495 = vrot.lane.b32.xlu0 %v6453, 48
        %v6496 = vpop.permute.xlu0 %6495
        %6497 = vrot.lane.b32.xlu0 %v6454, 48
        %v6498 = vpop.permute.xlu0 %6497
        %6499 = vrot.lane.b32.xlu0 %v6455, 48
        %v6500 = vpop.permute.xlu0 %6499
        %6501 = vrot.lane.b32.xlu0 %v6456, 48
        %v6502 = vpop.permute.xlu0 %6501
        %6503 = vrot.lane.b32.xlu0 %v6457, 48
        %v6504 = vpop.permute.xlu0 %6503
        %6505 = vrot.lane.b32.xlu0 %v6458, 48
        %v6506 = vpop.permute.xlu0 %6505
        %6507 = vrot.lane.b32.xlu0 %v6459, 48
        %v6508 = vpop.permute.xlu0 %6507
        %6509 = vrot.lane.b32.xlu0 %v6460, 48
        %v6510 = vpop.permute.xlu0 %6509
        %6511 = vrot.lane.b32.xlu0 %v6461, 48
        %v6512 = vpop.permute.xlu0 %6511
        %6513 = vrot.lane.b32.xlu0 %v6462, 48
        %v6514 = vpop.permute.xlu0 %6513
        %6515 = vrot.lane.b32.xlu0 %v6463, 48
        %v6516 = vpop.permute.xlu0 %6515
        %6517 = vrot.lane.b32.xlu0 %v6464, 48
        %v6518 = vpop.permute.xlu0 %6517
        %6519 = vrot.lane.b32.xlu0 %v6465, 48
        %v6520 = vpop.permute.xlu0 %6519
        %6521 = vrot.lane.b32.xlu0 %v6466, 48
        %v6522 = vpop.permute.xlu0 %6521
        %6523 = vrot.lane.b32.xlu0 %v6467, 48
        %v6524 = vpop.permute.xlu0 %6523
        %6525 = vrot.lane.b32.xlu0 %v6468, 48
        %v6526 = vpop.permute.xlu0 %6525
        %6527 = vrot.lane.b32.xlu0 %v6469, 48
        %v6528 = vpop.permute.xlu0 %6527
        %6529 = vrot.lane.b32.xlu0 %v6470, 48
        %v6530 = vpop.permute.xlu0 %6529
        %6531 = vrot.lane.b32.xlu0 %v6453, 96
        %v6532 = vpop.permute.xlu0 %6531
        %6533 = vrot.lane.b32.xlu0 %v6454, 96
        %v6534 = vpop.permute.xlu0 %6533
        %6535 = vrot.lane.b32.xlu0 %v6455, 96
        %v6536 = vpop.permute.xlu0 %6535
        %6537 = vrot.lane.b32.xlu0 %v6456, 96
        %v6538 = vpop.permute.xlu0 %6537
        %6539 = vrot.lane.b32.xlu0 %v6457, 96
        %v6540 = vpop.permute.xlu0 %6539
        %6541 = vrot.lane.b32.xlu0 %v6458, 96
        %v6542 = vpop.permute.xlu0 %6541
        %6543 = vrot.lane.b32.xlu0 %v6459, 96
        %v6544 = vpop.permute.xlu0 %6543
        %6545 = vrot.lane.b32.xlu0 %v6460, 96
        %v6546 = vpop.permute.xlu0 %6545
        %6547 = vrot.lane.b32.xlu0 %v6461, 96
        %v6548 = vpop.permute.xlu0 %6547
        %6549 = vrot.lane.b32.xlu0 %v6462, 96
        %v6550 = vpop.permute.xlu0 %6549
        %6551 = vrot.lane.b32.xlu0 %v6463, 96
        %v6552 = vpop.permute.xlu0 %6551
        %6553 = vrot.lane.b32.xlu0 %v6464, 96
        %v6554 = vpop.permute.xlu0 %6553
        %6555 = vrot.lane.b32.xlu0 %v6465, 96
        %v6556 = vpop.permute.xlu0 %6555
        %6557 = vrot.lane.b32.xlu0 %v6466, 96
        %v6558 = vpop.permute.xlu0 %6557
        %6559 = vrot.lane.b32.xlu0 %v6467, 96
        %v6560 = vpop.permute.xlu0 %6559
        %6561 = vrot.lane.b32.xlu0 %v6468, 96
        %v6562 = vpop.permute.xlu0 %6561
        %6563 = vrot.lane.b32.xlu0 %v6469, 96
        %v6564 = vpop.permute.xlu0 %6563
        %6565 = vrot.lane.b32.xlu0 %v6470, 96
        %v6566 = vpop.permute.xlu0 %6565
        %6567 = vrot.lane.b32.xlu0 %v6453, 16
        %v6568 = vpop.permute.xlu0 %6567
        %6569 = vrot.lane.b32.xlu0 %v6454, 16
        %v6570 = vpop.permute.xlu0 %6569
        %6571 = vrot.lane.b32.xlu0 %v6455, 16
        %v6572 = vpop.permute.xlu0 %6571
        %6573 = vrot.lane.b32.xlu0 %v6456, 16
        %v6574 = vpop.permute.xlu0 %6573
        %6575 = vrot.lane.b32.xlu0 %v6457, 16
        %v6576 = vpop.permute.xlu0 %6575
        %6577 = vrot.lane.b32.xlu0 %v6458, 16
        %v6578 = vpop.permute.xlu0 %6577
        %6579 = vrot.lane.b32.xlu0 %v6459, 16
        %v6580 = vpop.permute.xlu0 %6579
        %6581 = vrot.lane.b32.xlu0 %v6460, 16
        %v6582 = vpop.permute.xlu0 %6581
        %6583 = vrot.lane.b32.xlu0 %v6461, 16
        %v6584 = vpop.permute.xlu0 %6583
        %6585 = vrot.lane.b32.xlu0 %v6462, 16
        %v6586 = vpop.permute.xlu0 %6585
        %6587 = vrot.lane.b32.xlu0 %v6463, 16
        %v6588 = vpop.permute.xlu0 %6587
        %6589 = vrot.lane.b32.xlu0 %v6464, 16
        %v6590 = vpop.permute.xlu0 %6589
        %6591 = vrot.lane.b32.xlu0 %v6465, 16
        %v6592 = vpop.permute.xlu0 %6591
        %6593 = vrot.lane.b32.xlu0 %v6466, 16
        %v6594 = vpop.permute.xlu0 %6593
        %6595 = vrot.lane.b32.xlu0 %v6467, 16
        %v6596 = vpop.permute.xlu0 %6595
        %6597 = vrot.lane.b32.xlu0 %v6468, 16
        %v6598 = vpop.permute.xlu0 %6597
        %6599 = vrot.lane.b32.xlu0 %v6469, 16
        %v6600 = vpop.permute.xlu0 %6599
        %6601 = vrot.lane.b32.xlu0 %v6470, 16
        %v6602 = vpop.permute.xlu0 %6601
        %6605 = vrot.lane.b32.xlu0 %v6455, 88
        %v6606 = vpop.permute.xlu0 %6605
        %6607 = vrot.lane.b32.xlu0 %v6456, 88
        %v6608 = vpop.permute.xlu0 %6607
        %6609 = vrot.lane.b32.xlu0 %v6457, 88
        %v6610 = vpop.permute.xlu0 %6609
        %6611 = vrot.lane.b32.xlu0 %v6458, 88
        %v6612 = vpop.permute.xlu0 %6611
        %6613 = vrot.lane.b32.xlu0 %v6459, 88
        %v6614 = vpop.permute.xlu0 %6613
        %6615 = vrot.lane.b32.xlu0 %v6460, 88
        %v6616 = vpop.permute.xlu0 %6615
        %6617 = vrot.lane.b32.xlu0 %v6461, 88
        %v6618 = vpop.permute.xlu0 %6617
        %6619 = vrot.lane.b32.xlu0 %v6462, 88
        %v6620 = vpop.permute.xlu0 %6619
        %6621 = vrot.lane.b32.xlu0 %v6463, 88
        %v6622 = vpop.permute.xlu0 %6621
        %6623 = vrot.lane.b32.xlu0 %v6464, 88
        %v6624 = vpop.permute.xlu0 %6623
        %6625 = vrot.lane.b32.xlu0 %v6465, 88
        %v6626 = vpop.permute.xlu0 %6625
        %6627 = vrot.lane.b32.xlu0 %v6466, 88
        %v6628 = vpop.permute.xlu0 %6627
        %6629 = vrot.lane.b32.xlu0 %v6467, 88
        %v6630 = vpop.permute.xlu0 %6629
        %6631 = vrot.lane.b32.xlu0 %v6468, 88
        %v6632 = vpop.permute.xlu0 %6631
        %6633 = vrot.lane.b32.xlu0 %v6469, 88
        %v6634 = vpop.permute.xlu0 %6633
        %6635 = vrot.lane.b32.xlu0 %v6470, 88
        %v6636 = vpop.permute.xlu0 %6635
        %6637 = vrot.lane.b32.xlu0 %v6471, 88
        %v6638 = vpop.permute.xlu0 %6637
        %6639 = vrot.lane.b32.xlu0 %v6472, 88
        %v6640 = vpop.permute.xlu0 %6639
        %6641 = vrot.lane.b32.xlu0 %v6455, 8
        %v6642 = vpop.permute.xlu0 %6641
        %6643 = vrot.lane.b32.xlu0 %v6456, 8
        %v6644 = vpop.permute.xlu0 %6643
        %6645 = vrot.lane.b32.xlu0 %v6457, 8
        %v6646 = vpop.permute.xlu0 %6645
        %6647 = vrot.lane.b32.xlu0 %v6458, 8
        %v6648 = vpop.permute.xlu0 %6647
        %6649 = vrot.lane.b32.xlu0 %v6459, 8
        %v6650 = vpop.permute.xlu0 %6649
        %6651 = vrot.lane.b32.xlu0 %v6460, 8
        %v6652 = vpop.permute.xlu0 %6651
        %6653 = vrot.lane.b32.xlu0 %v6461, 8
        %v6654 = vpop.permute.xlu0 %6653
        %6655 = vrot.lane.b32.xlu0 %v6462, 8
        %v6656 = vpop.permute.xlu0 %6655
        %6657 = vrot.lane.b32.xlu0 %v6463, 8
        %v6658 = vpop.permute.xlu0 %6657
        %6659 = vrot.lane.b32.xlu0 %v6464, 8
        %v6660 = vpop.permute.xlu0 %6659
        %6661 = vrot.lane.b32.xlu0 %v6465, 8
        %v6662 = vpop.permute.xlu0 %6661
        %6663 = vrot.lane.b32.xlu0 %v6466, 8
        %v6664 = vpop.permute.xlu0 %6663
        %6665 = vrot.lane.b32.xlu0 %v6467, 8
        %v6666 = vpop.permute.xlu0 %6665
        %6667 = vrot.lane.b32.xlu0 %v6468, 8
        %v6668 = vpop.permute.xlu0 %6667
        %6669 = vrot.lane.b32.xlu0 %v6469, 8
        %v6670 = vpop.permute.xlu0 %6669
        %6671 = vrot.lane.b32.xlu0 %v6470, 8
        %v6672 = vpop.permute.xlu0 %6671
        %6673 = vrot.lane.b32.xlu0 %v6471, 8
        %v6674 = vpop.permute.xlu0 %6673
        %6675 = vrot.lane.b32.xlu0 %v6472, 8
        %v6676 = vpop.permute.xlu0 %6675
        %6677 = vrot.lane.b32.xlu0 %v6455, 56
        %v6678 = vpop.permute.xlu0 %6677
        %6679 = vrot.lane.b32.xlu0 %v6456, 56
        %v6680 = vpop.permute.xlu0 %6679
        %6681 = vrot.lane.b32.xlu0 %v6457, 56
        %v6682 = vpop.permute.xlu0 %6681
        %6683 = vrot.lane.b32.xlu0 %v6458, 56
        %v6684 = vpop.permute.xlu0 %6683
        %6685 = vrot.lane.b32.xlu0 %v6459, 56
        %v6686 = vpop.permute.xlu0 %6685
        %6687 = vrot.lane.b32.xlu0 %v6460, 56
        %v6688 = vpop.permute.xlu0 %6687
        %6689 = vrot.lane.b32.xlu0 %v6461, 56
        %v6690 = vpop.permute.xlu0 %6689
        %6691 = vrot.lane.b32.xlu0 %v6462, 56
        %v6692 = vpop.permute.xlu0 %6691
        %6693 = vrot.lane.b32.xlu0 %v6463, 56
        %v6694 = vpop.permute.xlu0 %6693
        %6695 = vrot.lane.b32.xlu0 %v6464, 56
        %v6696 = vpop.permute.xlu0 %6695
        %6697 = vrot.lane.b32.xlu0 %v6465, 56
        %v6698 = vpop.permute.xlu0 %6697
        %6699 = vrot.lane.b32.xlu0 %v6466, 56
        %v6700 = vpop.permute.xlu0 %6699
        %6701 = vrot.lane.b32.xlu0 %v6467, 56
        %v6702 = vpop.permute.xlu0 %6701
        %6703 = vrot.lane.b32.xlu0 %v6468, 56
        %v6704 = vpop.permute.xlu0 %6703
        %6705 = vrot.lane.b32.xlu0 %v6469, 56
        %v6706 = vpop.permute.xlu0 %6705
        %6707 = vrot.lane.b32.xlu0 %v6470, 56
        %v6708 = vpop.permute.xlu0 %6707
        %6709 = vrot.lane.b32.xlu0 %v6471, 56
        %v6710 = vpop.permute.xlu0 %6709
        %6711 = vrot.lane.b32.xlu0 %v6472, 56
        %v6712 = vpop.permute.xlu0 %6711
        %6713 = vrot.lane.b32.xlu0 %v6455, 104
        %v6714 = vpop.permute.xlu0 %6713
        %6715 = vrot.lane.b32.xlu0 %v6456, 104
        %v6716 = vpop.permute.xlu0 %6715
        %6717 = vrot.lane.b32.xlu0 %v6457, 104
        %v6718 = vpop.permute.xlu0 %6717
        %6719 = vrot.lane.b32.xlu0 %v6458, 104
        %v6720 = vpop.permute.xlu0 %6719
        %6721 = vrot.lane.b32.xlu0 %v6459, 104
        %v6722 = vpop.permute.xlu0 %6721
        %6723 = vrot.lane.b32.xlu0 %v6460, 104
        %v6724 = vpop.permute.xlu0 %6723
        %6725 = vrot.lane.b32.xlu0 %v6461, 104
        %v6726 = vpop.permute.xlu0 %6725
        %6727 = vrot.lane.b32.xlu0 %v6462, 104
        %v6728 = vpop.permute.xlu0 %6727
        %6729 = vrot.lane.b32.xlu0 %v6463, 104
        %v6730 = vpop.permute.xlu0 %6729
        %6731 = vrot.lane.b32.xlu0 %v6464, 104
        %v6732 = vpop.permute.xlu0 %6731
        %6733 = vrot.lane.b32.xlu0 %v6465, 104
        %v6734 = vpop.permute.xlu0 %6733
        %6735 = vrot.lane.b32.xlu0 %v6466, 104
        %v6736 = vpop.permute.xlu0 %6735
        %6737 = vrot.lane.b32.xlu0 %v6467, 104
        %v6738 = vpop.permute.xlu0 %6737
        %6739 = vrot.lane.b32.xlu0 %v6468, 104
        %v6740 = vpop.permute.xlu0 %6739
        %6741 = vrot.lane.b32.xlu0 %v6469, 104
        %v6742 = vpop.permute.xlu0 %6741
        %6743 = vrot.lane.b32.xlu0 %v6470, 104
        %v6744 = vpop.permute.xlu0 %6743
        %6745 = vrot.lane.b32.xlu0 %v6471, 104
        %v6746 = vpop.permute.xlu0 %6745
        %6747 = vrot.lane.b32.xlu0 %v6472, 104
        %v6748 = vpop.permute.xlu0 %6747
        %6751 = vrot.lane.b32.xlu0 %v6471, 48
        %v6752 = vpop.permute.xlu0 %6751
        %6753 = vrot.lane.b32.xlu0 %v6472, 48
        %v6754 = vpop.permute.xlu0 %6753
        %6755 = vrot.lane.b32.xlu0 %v6473, 48
        %v6756 = vpop.permute.xlu0 %6755
        %6757 = vrot.lane.b32.xlu0 %v6474, 48
        %v6758 = vpop.permute.xlu0 %6757
        %6759 = vrot.lane.b32.xlu0 %v6471, 96
        %v6760 = vpop.permute.xlu0 %6759
        %6761 = vrot.lane.b32.xlu0 %v6472, 96
        %v6762 = vpop.permute.xlu0 %6761
        %6763 = vrot.lane.b32.xlu0 %v6473, 96
        %v6764 = vpop.permute.xlu0 %6763
        %6765 = vrot.lane.b32.xlu0 %v6474, 96
        %v6766 = vpop.permute.xlu0 %6765
        %6767 = vrot.lane.b32.xlu0 %v6471, 16
        %v6768 = vpop.permute.xlu0 %6767
        %6769 = vrot.lane.b32.xlu0 %v6472, 16
        %v6770 = vpop.permute.xlu0 %6769
        %6771 = vrot.lane.b32.xlu0 %v6473, 16
        %v6772 = vpop.permute.xlu0 %6771
        %6773 = vrot.lane.b32.xlu0 %v6474, 16
        %v6774 = vpop.permute.xlu0 %6773
        %6775 = vrot.lane.b32.xlu0 %v6457, 64
        %v6776 = vpop.permute.xlu0 %6775
        %6777 = vrot.lane.b32.xlu0 %v6458, 64
        %v6778 = vpop.permute.xlu0 %6777
        %6779 = vrot.lane.b32.xlu0 %v6459, 64
        %v6780 = vpop.permute.xlu0 %6779
        %6781 = vrot.lane.b32.xlu0 %v6460, 64
        %v6782 = vpop.permute.xlu0 %6781
        %6783 = vrot.lane.b32.xlu0 %v6461, 64
        %v6784 = vpop.permute.xlu0 %6783
        %6785 = vrot.lane.b32.xlu0 %v6462, 64
        %v6786 = vpop.permute.xlu0 %6785
        %6787 = vrot.lane.b32.xlu0 %v6463, 64
        %v6788 = vpop.permute.xlu0 %6787
        %6789 = vrot.lane.b32.xlu0 %v6464, 64
        %v6790 = vpop.permute.xlu0 %6789
        %6791 = vrot.lane.b32.xlu0 %v6465, 64
        %v6792 = vpop.permute.xlu0 %6791
        %6793 = vrot.lane.b32.xlu0 %v6466, 64
        %v6794 = vpop.permute.xlu0 %6793
        %6795 = vrot.lane.b32.xlu0 %v6467, 64
        %v6796 = vpop.permute.xlu0 %6795
        %6797 = vrot.lane.b32.xlu0 %v6468, 64
        %v6798 = vpop.permute.xlu0 %6797
        %6799 = vrot.lane.b32.xlu0 %v6469, 64
        %v6800 = vpop.permute.xlu0 %6799
        %6801 = vrot.lane.b32.xlu0 %v6470, 64
        %v6802 = vpop.permute.xlu0 %6801
        %6803 = vrot.lane.b32.xlu0 %v6471, 64
        %v6804 = vpop.permute.xlu0 %6803
        %6805 = vrot.lane.b32.xlu0 %v6472, 64
        %v6806 = vpop.permute.xlu0 %6805
        %6807 = vrot.lane.b32.xlu0 %v6473, 64
        %v6808 = vpop.permute.xlu0 %6807
        %6809 = vrot.lane.b32.xlu0 %v6474, 64
        %v6810 = vpop.permute.xlu0 %6809
        %6813 = vrot.lane.b32.xlu0 %v6473, 8
        %v6814 = vpop.permute.xlu0 %6813
        %6815 = vrot.lane.b32.xlu0 %v6474, 8
        %v6816 = vpop.permute.xlu0 %6815
        %6817 = vrot.lane.b32.xlu0 %v6475, 8
        %v6818 = vpop.permute.xlu0 %6817
        %6819 = vrot.lane.b32.xlu0 %v6476, 8
        %v6820 = vpop.permute.xlu0 %6819
        %6821 = vrot.lane.b32.xlu0 %v6473, 56
        %v6822 = vpop.permute.xlu0 %6821
        %6823 = vrot.lane.b32.xlu0 %v6474, 56
        %v6824 = vpop.permute.xlu0 %6823
        %6825 = vrot.lane.b32.xlu0 %v6475, 56
        %v6826 = vpop.permute.xlu0 %6825
        %6827 = vrot.lane.b32.xlu0 %v6476, 56
        %v6828 = vpop.permute.xlu0 %6827
        %6829 = vrot.lane.b32.xlu0 %v6473, 104
        %v6830 = vpop.permute.xlu0 %6829
        %6831 = vrot.lane.b32.xlu0 %v6474, 104
        %v6832 = vpop.permute.xlu0 %6831
        %6833 = vrot.lane.b32.xlu0 %v6475, 104
        %v6834 = vpop.permute.xlu0 %6833
        %6835 = vrot.lane.b32.xlu0 %v6476, 104
        %v6836 = vpop.permute.xlu0 %6835
        %6837 = vrot.lane.b32.xlu0 %v6459, 24
        %v6838 = vpop.permute.xlu0 %6837
        %6839 = vrot.lane.b32.xlu0 %v6460, 24
        %v6840 = vpop.permute.xlu0 %6839
        %6841 = vrot.lane.b32.xlu0 %v6461, 24
        %v6842 = vpop.permute.xlu0 %6841
        %6843 = vrot.lane.b32.xlu0 %v6462, 24
        %v6844 = vpop.permute.xlu0 %6843
        %6845 = vrot.lane.b32.xlu0 %v6463, 24
        %v6846 = vpop.permute.xlu0 %6845
        %6847 = vrot.lane.b32.xlu0 %v6464, 24
        %v6848 = vpop.permute.xlu0 %6847
        %6849 = vrot.lane.b32.xlu0 %v6465, 24
        %v6850 = vpop.permute.xlu0 %6849
        %6851 = vrot.lane.b32.xlu0 %v6466, 24
        %v6852 = vpop.permute.xlu0 %6851
        %6853 = vrot.lane.b32.xlu0 %v6467, 24
        %v6854 = vpop.permute.xlu0 %6853
        %6855 = vrot.lane.b32.xlu0 %v6468, 24
        %v6856 = vpop.permute.xlu0 %6855
        %6857 = vrot.lane.b32.xlu0 %v6469, 24
        %v6858 = vpop.permute.xlu0 %6857
        %6859 = vrot.lane.b32.xlu0 %v6470, 24
        %v6860 = vpop.permute.xlu0 %6859
        %6861 = vrot.lane.b32.xlu0 %v6471, 24
        %v6862 = vpop.permute.xlu0 %6861
        %6863 = vrot.lane.b32.xlu0 %v6472, 24
        %v6864 = vpop.permute.xlu0 %6863
        %6865 = vrot.lane.b32.xlu0 %v6473, 24
        %v6866 = vpop.permute.xlu0 %6865
        %6867 = vrot.lane.b32.xlu0 %v6474, 24
        %v6868 = vpop.permute.xlu0 %6867
        %6869 = vrot.lane.b32.xlu0 %v6475, 24
        %v6870 = vpop.permute.xlu0 %6869
        %6871 = vrot.lane.b32.xlu0 %v6476, 24
        %v6872 = vpop.permute.xlu0 %6871
        %vm6873 = vcmask 441344
        %v6876 = vsel %vm6873, %v6453, %v6496
        %v6879 = vsel %vm6873, %v6454, %v6498
        %v6882 = vsel %vm6873, %v6455, %v6500
        %v6885 = vsel %vm6873, %v6456, %v6502
        %v6888 = vsel %vm6873, %v6457, %v6504
        %v6891 = vsel %vm6873, %v6458, %v6506
        %v6894 = vsel %vm6873, %v6459, %v6508
        %v6897 = vsel %vm6873, %v6460, %v6510
        %v6900 = vsel %vm6873, %v6461, %v6512
        %v6903 = vsel %vm6873, %v6462, %v6514
        %v6906 = vsel %vm6873, %v6463, %v6516
        %v6909 = vsel %vm6873, %v6464, %v6518
        %v6912 = vsel %vm6873, %v6465, %v6520
        %v6915 = vsel %vm6873, %v6466, %v6522
        %v6918 = vsel %vm6873, %v6467, %v6524
        %v6921 = vsel %vm6873, %v6468, %v6526
        %v6924 = vsel %vm6873, %v6469, %v6528
        %v6927 = vsel %vm6873, %v6470, %v6530
        %vm6928 = vcmask 883712
        %v6930 = vsel %vm6928, %v6876, %v6532
        %v6933 = vsel %vm6928, %v6879, %v6534
        %v6936 = vsel %vm6928, %v6882, %v6536
        %v6939 = vsel %vm6928, %v6885, %v6538
        %v6942 = vsel %vm6928, %v6888, %v6540
        %v6945 = vsel %vm6928, %v6891, %v6542
        %v6948 = vsel %vm6928, %v6894, %v6544
        %v6951 = vsel %vm6928, %v6897, %v6546
        %v6954 = vsel %vm6928, %v6900, %v6548
        %v6957 = vsel %vm6928, %v6903, %v6550
        %v6960 = vsel %vm6928, %v6906, %v6552
        %v6963 = vsel %vm6928, %v6909, %v6554
        %v6966 = vsel %vm6928, %v6912, %v6556
        %v6969 = vsel %vm6928, %v6915, %v6558
        %v6972 = vsel %vm6928, %v6918, %v6560
        %v6975 = vsel %vm6928, %v6921, %v6562
        %v6978 = vsel %vm6928, %v6924, %v6564
        %v6981 = vsel %vm6928, %v6927, %v6566
        %vm6983 = vcmask 277504
        %v6985 = vsel %vm6983, %v6532, %v6568
        %v6987 = vsel %vm6983, %v6534, %v6570
        %v6989 = vsel %vm6983, %v6536, %v6572
        %v6991 = vsel %vm6983, %v6538, %v6574
        %v6993 = vsel %vm6983, %v6540, %v6576
        %v6995 = vsel %vm6983, %v6542, %v6578
        %v6997 = vsel %vm6983, %v6544, %v6580
        %v6999 = vsel %vm6983, %v6546, %v6582
        %v7001 = vsel %vm6983, %v6548, %v6584
        %v7003 = vsel %vm6983, %v6550, %v6586
        %v7005 = vsel %vm6983, %v6552, %v6588
        %v7007 = vsel %vm6983, %v6554, %v6590
        %v7009 = vsel %vm6983, %v6556, %v6592
        %v7011 = vsel %vm6983, %v6558, %v6594
        %v7013 = vsel %vm6983, %v6560, %v6596
        %v7015 = vsel %vm6983, %v6562, %v6598
        %v7017 = vsel %vm6983, %v6564, %v6600
        %v7019 = vsel %vm6983, %v6566, %v6602
        %vm7020 = vcmask 719872
        %v7022 = vsel %vm7020, %v6985, %v6606
        %v7025 = vsel %vm7020, %v6987, %v6608
        %v7028 = vsel %vm7020, %v6989, %v6610
        %v7031 = vsel %vm7020, %v6991, %v6612
        %v7034 = vsel %vm7020, %v6993, %v6614
        %v7037 = vsel %vm7020, %v6995, %v6616
        %v7040 = vsel %vm7020, %v6997, %v6618
        %v7043 = vsel %vm7020, %v6999, %v6620
        %v7046 = vsel %vm7020, %v7001, %v6622
        %v7049 = vsel %vm7020, %v7003, %v6624
        %v7052 = vsel %vm7020, %v7005, %v6626
        %v7055 = vsel %vm7020, %v7007, %v6628
        %v7058 = vsel %vm7020, %v7009, %v6630
        %v7061 = vsel %vm7020, %v7011, %v6632
        %v7064 = vsel %vm7020, %v7013, %v6634
        %v7067 = vsel %vm7020, %v7015, %v6636
        %v7070 = vsel %vm7020, %v7017, %v6638
        %v7073 = vsel %vm7020, %v7019, %v6640
        %vm7075 = vcmask 113664
        %v7077 = vsel %vm7075, %v6606, %v6642
        %v7079 = vsel %vm7075, %v6608, %v6644
        %v7081 = vsel %vm7075, %v6610, %v6646
        %v7083 = vsel %vm7075, %v6612, %v6648
        %v7085 = vsel %vm7075, %v6614, %v6650
        %v7087 = vsel %vm7075, %v6616, %v6652
        %v7089 = vsel %vm7075, %v6618, %v6654
        %v7091 = vsel %vm7075, %v6620, %v6656
        %v7093 = vsel %vm7075, %v6622, %v6658
        %v7095 = vsel %vm7075, %v6624, %v6660
        %v7097 = vsel %vm7075, %v6626, %v6662
        %v7099 = vsel %vm7075, %v6628, %v6664
        %v7101 = vsel %vm7075, %v6630, %v6666
        %v7103 = vsel %vm7075, %v6632, %v6668
        %v7105 = vsel %vm7075, %v6634, %v6670
        %v7107 = vsel %vm7075, %v6636, %v6672
        %v7109 = vsel %vm7075, %v6638, %v6674
        %v7111 = vsel %vm7075, %v6640, %v6676
        %vm7112 = vcmask 556032
        %v7114 = vsel %vm7112, %v7077, %v6678
        %v7116 = vsel %vm7112, %v7079, %v6680
        %v7118 = vsel %vm7112, %v7081, %v6682
        %v7120 = vsel %vm7112, %v7083, %v6684
        %v7122 = vsel %vm7112, %v7085, %v6686
        %v7124 = vsel %vm7112, %v7087, %v6688
        %v7126 = vsel %vm7112, %v7089, %v6690
        %v7128 = vsel %vm7112, %v7091, %v6692
        %v7130 = vsel %vm7112, %v7093, %v6694
        %v7132 = vsel %vm7112, %v7095, %v6696
        %v7134 = vsel %vm7112, %v7097, %v6698
        %v7136 = vsel %vm7112, %v7099, %v6700
        %v7138 = vsel %vm7112, %v7101, %v6702
        %v7140 = vsel %vm7112, %v7103, %v6704
        %v7142 = vsel %vm7112, %v7105, %v6706
        %v7144 = vsel %vm7112, %v7107, %v6708
        %v7146 = vsel %vm7112, %v7109, %v6710
        %v7148 = vsel %vm7112, %v7111, %v6712
        %v7150 = vsel %vm3687, %v7114, %v6714
        %v7153 = vsel %vm3687, %v7116, %v6716
        %v7156 = vsel %vm3687, %v7118, %v6718
        %v7159 = vsel %vm3687, %v7120, %v6720
        %v7162 = vsel %vm3687, %v7122, %v6722
        %v7165 = vsel %vm3687, %v7124, %v6724
        %v7168 = vsel %vm3687, %v7126, %v6726
        %v7171 = vsel %vm3687, %v7128, %v6728
        %v7174 = vsel %vm3687, %v7130, %v6730
        %v7177 = vsel %vm3687, %v7132, %v6732
        %v7180 = vsel %vm3687, %v7134, %v6734
        %v7183 = vsel %vm3687, %v7136, %v6736
        %v7186 = vsel %vm3687, %v7138, %v6738
        %v7189 = vsel %vm3687, %v7140, %v6740
        %v7192 = vsel %vm3687, %v7142, %v6742
        %v7195 = vsel %vm3687, %v7144, %v6744
        %v7198 = vsel %vm3687, %v7146, %v6746
        %v7201 = vsel %vm3687, %v7148, %v6748
        %vm7203 = vcmask 392192
        %v7204 = vsel %vm7203, %v6714, %v6504
        %v7205 = vsel %vm7203, %v6716, %v6506
        %v7206 = vsel %vm7203, %v6718, %v6508
        %v7207 = vsel %vm7203, %v6720, %v6510
        %v7208 = vsel %vm7203, %v6722, %v6512
        %v7209 = vsel %vm7203, %v6724, %v6514
        %v7210 = vsel %vm7203, %v6726, %v6516
        %v7211 = vsel %vm7203, %v6728, %v6518
        %v7212 = vsel %vm7203, %v6730, %v6520
        %v7213 = vsel %vm7203, %v6732, %v6522
        %v7214 = vsel %vm7203, %v6734, %v6524
        %v7215 = vsel %vm7203, %v6736, %v6526
        %v7216 = vsel %vm7203, %v6738, %v6528
        %v7217 = vsel %vm7203, %v6740, %v6530
        %v7219 = vsel %vm7203, %v6742, %v6752
        %v7221 = vsel %vm7203, %v6744, %v6754
        %v7223 = vsel %vm7203, %v6746, %v6756
        %v7225 = vsel %vm7203, %v6748, %v6758
        %vm7226 = vcmask 834560
        %v7227 = vsel %vm7226, %v7204, %v6540
        %v7229 = vsel %vm7226, %v7205, %v6542
        %v7231 = vsel %vm7226, %v7206, %v6544
        %v7233 = vsel %vm7226, %v7207, %v6546
        %v7235 = vsel %vm7226, %v7208, %v6548
        %v7237 = vsel %vm7226, %v7209, %v6550
        %v7239 = vsel %vm7226, %v7210, %v6552
        %v7241 = vsel %vm7226, %v7211, %v6554
        %v7243 = vsel %vm7226, %v7212, %v6556
        %v7245 = vsel %vm7226, %v7213, %v6558
        %v7247 = vsel %vm7226, %v7214, %v6560
        %v7249 = vsel %vm7226, %v7215, %v6562
        %v7251 = vsel %vm7226, %v7216, %v6564
        %v7253 = vsel %vm7226, %v7217, %v6566
        %v7256 = vsel %vm7226, %v7219, %v6760
        %v7259 = vsel %vm7226, %v7221, %v6762
        %v7262 = vsel %vm7226, %v7223, %v6764
        %v7265 = vsel %vm7226, %v7225, %v6766
        %vm7267 = vcmask 228352
        %v7268 = vsel %vm7267, %v6540, %v6576
        %v7269 = vsel %vm7267, %v6542, %v6578
        %v7270 = vsel %vm7267, %v6544, %v6580
        %v7271 = vsel %vm7267, %v6546, %v6582
        %v7272 = vsel %vm7267, %v6548, %v6584
        %v7273 = vsel %vm7267, %v6550, %v6586
        %v7274 = vsel %vm7267, %v6552, %v6588
        %v7275 = vsel %vm7267, %v6554, %v6590
        %v7276 = vsel %vm7267, %v6556, %v6592
        %v7277 = vsel %vm7267, %v6558, %v6594
        %v7278 = vsel %vm7267, %v6560, %v6596
        %v7279 = vsel %vm7267, %v6562, %v6598
        %v7280 = vsel %vm7267, %v6564, %v6600
        %v7281 = vsel %vm7267, %v6566, %v6602
        %v7283 = vsel %vm7267, %v6760, %v6768
        %v7285 = vsel %vm7267, %v6762, %v6770
        %v7287 = vsel %vm7267, %v6764, %v6772
        %v7289 = vsel %vm7267, %v6766, %v6774
        %vm7290 = vcmask 670720
        %v7292 = vsel %vm7290, %v7268, %v6776
        %v7295 = vsel %vm7290, %v7269, %v6778
        %v7298 = vsel %vm7290, %v7270, %v6780
        %v7301 = vsel %vm7290, %v7271, %v6782
        %v7304 = vsel %vm7290, %v7272, %v6784
        %v7307 = vsel %vm7290, %v7273, %v6786
        %v7310 = vsel %vm7290, %v7274, %v6788
        %v7313 = vsel %vm7290, %v7275, %v6790
        %v7316 = vsel %vm7290, %v7276, %v6792
        %v7319 = vsel %vm7290, %v7277, %v6794
        %v7322 = vsel %vm7290, %v7278, %v6796
        %v7325 = vsel %vm7290, %v7279, %v6798
        %v7328 = vsel %vm7290, %v7280, %v6800
        %v7331 = vsel %vm7290, %v7281, %v6802
        %v7334 = vsel %vm7290, %v7283, %v6804
        %v7337 = vsel %vm7290, %v7285, %v6806
        %v7340 = vsel %vm7290, %v7287, %v6808
        %v7343 = vsel %vm7290, %v7289, %v6810
        %vm7345 = vcmask 64512
        %v7346 = vsel %vm7345, %v6776, %v6650
        %v7347 = vsel %vm7345, %v6778, %v6652
        %v7348 = vsel %vm7345, %v6780, %v6654
        %v7349 = vsel %vm7345, %v6782, %v6656
        %v7350 = vsel %vm7345, %v6784, %v6658
        %v7351 = vsel %vm7345, %v6786, %v6660
        %v7352 = vsel %vm7345, %v6788, %v6662
        %v7353 = vsel %vm7345, %v6790, %v6664
        %v7354 = vsel %vm7345, %v6792, %v6666
        %v7355 = vsel %vm7345, %v6794, %v6668
        %v7356 = vsel %vm7345, %v6796, %v6670
        %v7357 = vsel %vm7345, %v6798, %v6672
        %v7358 = vsel %vm7345, %v6800, %v6674
        %v7359 = vsel %vm7345, %v6802, %v6676
        %v7361 = vsel %vm7345, %v6804, %v6814
        %v7363 = vsel %vm7345, %v6806, %v6816
        %v7365 = vsel %vm7345, %v6808, %v6818
        %v7367 = vsel %vm7345, %v6810, %v6820
        %vm7368 = vcmask 506880
        %v7369 = vsel %vm7368, %v7346, %v6686
        %v7370 = vsel %vm7368, %v7347, %v6688
        %v7371 = vsel %vm7368, %v7348, %v6690
        %v7372 = vsel %vm7368, %v7349, %v6692
        %v7373 = vsel %vm7368, %v7350, %v6694
        %v7374 = vsel %vm7368, %v7351, %v6696
        %v7375 = vsel %vm7368, %v7352, %v6698
        %v7376 = vsel %vm7368, %v7353, %v6700
        %v7377 = vsel %vm7368, %v7354, %v6702
        %v7378 = vsel %vm7368, %v7355, %v6704
        %v7379 = vsel %vm7368, %v7356, %v6706
        %v7380 = vsel %vm7368, %v7357, %v6708
        %v7381 = vsel %vm7368, %v7358, %v6710
        %v7382 = vsel %vm7368, %v7359, %v6712
        %v7384 = vsel %vm7368, %v7361, %v6822
        %v7386 = vsel %vm7368, %v7363, %v6824
        %v7388 = vsel %vm7368, %v7365, %v6826
        %v7390 = vsel %vm7368, %v7367, %v6828
        %vm7391 = vcmask 949248
        %v7392 = vsel %vm7391, %v7369, %v6722
        %v7394 = vsel %vm7391, %v7370, %v6724
        %v7396 = vsel %vm7391, %v7371, %v6726
        %v7398 = vsel %vm7391, %v7372, %v6728
        %v7400 = vsel %vm7391, %v7373, %v6730
        %v7402 = vsel %vm7391, %v7374, %v6732
        %v7404 = vsel %vm7391, %v7375, %v6734
        %v7406 = vsel %vm7391, %v7376, %v6736
        %v7408 = vsel %vm7391, %v7377, %v6738
        %v7410 = vsel %vm7391, %v7378, %v6740
        %v7412 = vsel %vm7391, %v7379, %v6742
        %v7414 = vsel %vm7391, %v7380, %v6744
        %v7416 = vsel %vm7391, %v7381, %v6746
        %v7418 = vsel %vm7391, %v7382, %v6748
        %v7421 = vsel %vm7391, %v7384, %v6830
        %v7424 = vsel %vm7391, %v7386, %v6832
        %v7427 = vsel %vm7391, %v7388, %v6834
        %v7430 = vsel %vm7391, %v7390, %v6836
        %vm7432 = vcmask 343040
        %v7434 = vsel %vm7432, %v6722, %v6838
        %v7436 = vsel %vm7432, %v6724, %v6840
        %v7438 = vsel %vm7432, %v6726, %v6842
        %v7440 = vsel %vm7432, %v6728, %v6844
        %v7442 = vsel %vm7432, %v6730, %v6846
        %v7444 = vsel %vm7432, %v6732, %v6848
        %v7446 = vsel %vm7432, %v6734, %v6850
        %v7448 = vsel %vm7432, %v6736, %v6852
        %v7450 = vsel %vm7432, %v6738, %v6854
        %v7452 = vsel %vm7432, %v6740, %v6856
        %v7454 = vsel %vm7432, %v6742, %v6858
        %v7456 = vsel %vm7432, %v6744, %v6860
        %v7458 = vsel %vm7432, %v6746, %v6862
        %v7460 = vsel %vm7432, %v6748, %v6864
        %v7462 = vsel %vm7432, %v6830, %v6866
        %v7464 = vsel %vm7432, %v6832, %v6868
        %v7466 = vsel %vm7432, %v6834, %v6870
        %v7468 = vsel %vm7432, %v6836, %v6872
        %v7470 = vlaneseq
        %v7471 = vshrl.u32 %v7470, 7
        %v7472 = vsub.s32 0, %v7471
        %v7473 = vrot.slane %v1101, %v7472
        %v7474 = vlaneseq
        %v7475 = vshrl.u32 %v7474, 7
        %v7476 = vsub.s32 1, %v7475
        %v7477 = vrot.slane %v1101, %v7476
        %v7588 = vunpack.c.l.b16 %v993
        %v7589 = vunpack.c.h.b16 %v993
        %v7590 = vunpack.c.l.b16 %v994
        %v7591 = vunpack.c.h.b16 %v994
        %v7592 = vunpack.c.l.b16 %v995
        %v7593 = vunpack.c.h.b16 %v995
        %v7594 = vunpack.c.l.b16 %v996
        %v7595 = vunpack.c.h.b16 %v996
        %v7596 = vunpack.c.l.b16 %v997
        %v7597 = vunpack.c.h.b16 %v997
        %v7598 = vunpack.c.l.b16 %v998
        %v7599 = vunpack.c.h.b16 %v998
        %v7600 = vunpack.c.l.b16 %v999
        %v7601 = vunpack.c.h.b16 %v999
        %v7602 = vunpack.c.l.b16 %v1000
        %v7603 = vunpack.c.h.b16 %v1000
        %v7604 = vunpack.c.l.b16 %v1001
        %v7605 = vunpack.c.h.b16 %v1001
        %v7606 = vunpack.c.l.b16 %v1002
        %v7607 = vunpack.c.h.b16 %v1002
        %v7608 = vunpack.c.l.b16 %v1003
        %v7609 = vunpack.c.h.b16 %v1003
        %v7610 = vunpack.c.l.b16 %v1004
        %v7611 = vunpack.c.h.b16 %v1004
        %v7612 = vunpack.c.l.b16 %v1005
        %v7613 = vunpack.c.h.b16 %v1005
        %v7614 = vunpack.c.l.b16 %v1006
        %v7615 = vunpack.c.h.b16 %v1006
        %v7616 = vunpack.c.l.b16 %v1007
        %v7617 = vunpack.c.h.b16 %v1007
        %v7618 = vunpack.c.l.b16 %v1008
        %v7619 = vunpack.c.h.b16 %v1008
        %v7620 = vunpack.c.l.b16 %v1009
        %v7621 = vunpack.c.h.b16 %v1009
        %v7622 = vunpack.c.l.b16 %v1010
        %v7623 = vunpack.c.h.b16 %v1010
        %v7624 = vunpack.c.l.b16 %v1011
        %v7625 = vunpack.c.h.b16 %v1011
        %v7626 = vunpack.c.l.b16 %v1012
        %v7627 = vunpack.c.h.b16 %v1012
        %v7628 = vunpack.c.l.b16 %v1013
        %v7629 = vunpack.c.h.b16 %v1013
        %v7630 = vunpack.c.l.b16 %v1014
        %v7631 = vunpack.c.h.b16 %v1014
        %v7632 = vunpack.c.l.b16 %v1015
        %v7633 = vunpack.c.h.b16 %v1015
        %v7634 = vunpack.c.l.b16 %v1016
        %v7635 = vunpack.c.h.b16 %v1016
        %v7636 = vunpack.c.l.b16 %v1017
        %v7637 = vunpack.c.h.b16 %v1017
        %v7638 = vunpack.c.l.b16 %v1018
        %v7639 = vunpack.c.h.b16 %v1018
        %v7640 = vunpack.c.l.b16 %v1019
        %v7641 = vunpack.c.h.b16 %v1019
        %v7642 = vunpack.c.l.b16 %v1020
        %v7643 = vunpack.c.h.b16 %v1020
        %v7644 = vunpack.c.l.b16 %v1021
        %v7645 = vunpack.c.h.b16 %v1021
        %v7646 = vunpack.c.l.b16 %v1022
        %v7647 = vunpack.c.h.b16 %v1022
        %v7648 = vunpack.c.l.b16 %v1023
        %v7649 = vunpack.c.h.b16 %v1023
        %v7650 = vunpack.c.l.b16 %v1024
        %v7651 = vunpack.c.h.b16 %v1024
        %v7652 = vunpack.c.l.b16 %v1025
        %v7653 = vunpack.c.h.b16 %v1025
        %v7654 = vunpack.c.l.b16 %v1026
        %v7655 = vunpack.c.h.b16 %v1026
        %v7656 = vunpack.c.l.b16 %v1027
        %v7657 = vunpack.c.h.b16 %v1027
        %v7658 = vunpack.c.l.b16 %v1028
        %v7659 = vunpack.c.h.b16 %v1028
        %v7660 = vunpack.c.l.b16 %v1029
        %v7661 = vunpack.c.h.b16 %v1029
        %v7662 = vunpack.c.l.b16 %v1030
        %v7663 = vunpack.c.h.b16 %v1030
        %v7664 = vunpack.c.l.b16 %v1031
        %v7665 = vunpack.c.h.b16 %v1031
        %v7666 = vunpack.c.l.b16 %v1032
        %v7667 = vunpack.c.h.b16 %v1032
        %v7668 = vunpack.c.l.b16 %v1033
        %v7669 = vunpack.c.h.b16 %v1033
        %v7670 = vunpack.c.l.b16 %v1034
        %v7671 = vunpack.c.h.b16 %v1034
        %v7672 = vunpack.c.l.b16 %v1035
        %v7673 = vunpack.c.h.b16 %v1035
        %v7674 = vunpack.c.l.b16 %v1036
        %v7675 = vunpack.c.h.b16 %v1036
        %v7676 = vunpack.c.l.b16 %v1037
        %v7677 = vunpack.c.h.b16 %v1037
        %v7678 = vunpack.c.l.b16 %v1038
        %v7679 = vunpack.c.h.b16 %v1038
        %v7680 = vunpack.c.l.b16 %v1039
        %v7681 = vunpack.c.h.b16 %v1039
        %v7682 = vunpack.c.l.b16 %v1040
        %v7683 = vunpack.c.h.b16 %v1040
        %v7684 = vunpack.c.l.b16 %v1041
        %v7685 = vunpack.c.h.b16 %v1041
        %v7686 = vunpack.c.l.b16 %v1042
        %v7687 = vunpack.c.h.b16 %v1042
        %v7688 = vunpack.c.l.b16 %v1043
        %v7689 = vunpack.c.h.b16 %v1043
        %v7690 = vunpack.c.l.b16 %v1044
        %v7691 = vunpack.c.h.b16 %v1044
        %v7692 = vunpack.c.l.b16 %v1045
        %v7693 = vunpack.c.h.b16 %v1045
        %v7694 = vunpack.c.l.b16 %v1046
        %v7695 = vunpack.c.h.b16 %v1046
        %v7696 = vunpack.c.l.b16 %v1047
        %v7697 = vunpack.c.h.b16 %v1047
        %v7698 = vunpack.c.l.b16 %v1048
        %v7699 = vunpack.c.h.b16 %v1048
        %v7700 = vunpack.c.l.b16 %v1049
        %v7701 = vunpack.c.h.b16 %v1049
        %v7702 = vunpack.c.l.b16 %v1050
        %v7703 = vunpack.c.h.b16 %v1050
        %v7704 = vunpack.c.l.b16 %v1051
        %v7705 = vunpack.c.h.b16 %v1051
        %v7706 = vunpack.c.l.b16 %v1052
        %v7707 = vunpack.c.h.b16 %v1052
        %v7708 = vunpack.c.l.b16 %v1053
        %v7709 = vunpack.c.h.b16 %v1053
        %v7710 = vunpack.c.l.b16 %v1054
        %v7711 = vunpack.c.h.b16 %v1054
        %v7712 = vunpack.c.l.b16 %v1055
        %v7713 = vunpack.c.h.b16 %v1055
        %v7714 = vunpack.c.l.b16 %v1056
        %v7715 = vunpack.c.h.b16 %v1056
        %v7716 = vunpack.c.l.b16 %v1057
        %v7717 = vunpack.c.h.b16 %v1057
        %v7718 = vunpack.c.l.b16 %v1058
        %v7719 = vunpack.c.h.b16 %v1058
        %v7720 = vunpack.c.l.b16 %v1059
        %v7721 = vunpack.c.h.b16 %v1059
        %v7722 = vunpack.c.l.b16 %v1060
        %v7723 = vunpack.c.h.b16 %v1060
        %v7724 = vunpack.c.l.b16 %v1061
        %v7725 = vunpack.c.h.b16 %v1061
        %v7726 = vunpack.c.l.b16 %v1062
        %v7727 = vunpack.c.h.b16 %v1062
        %v7728 = vunpack.c.l.b16 %v1063
        %v7729 = vunpack.c.h.b16 %v1063
        %v7730 = vunpack.c.l.b16 %v1064
        %v7731 = vunpack.c.h.b16 %v1064
        %v7732 = vunpack.c.l.b16 %v1065
        %v7733 = vunpack.c.h.b16 %v1065
        %v7734 = vunpack.c.l.b16 %v1066
        %v7735 = vunpack.c.h.b16 %v1066
        %v7736 = vunpack.c.l.b16 %v1067
        %v7737 = vunpack.c.h.b16 %v1067
        %v7738 = vunpack.c.l.b16 %v1068
        %v7739 = vunpack.c.h.b16 %v1068
        %v7740 = vunpack.c.l.b16 %v1069
        %v7741 = vunpack.c.h.b16 %v1069
        %v7742 = vunpack.c.l.b16 %v1070
        %v7743 = vunpack.c.h.b16 %v1070
        %v7744 = vunpack.c.l.b16 %v1071
        %v7745 = vunpack.c.h.b16 %v1071
        %v7746 = vunpack.c.l.b16 %v1072
        %v7747 = vunpack.c.h.b16 %v1072
        %v7748 = vunpack.c.l.b16 %v1073
        %v7749 = vunpack.c.h.b16 %v1073
        %v7750 = vunpack.c.l.b16 %v1074
        %v7751 = vunpack.c.h.b16 %v1074
        %v7752 = vunpack.c.l.b16 %v1075
        %v7753 = vunpack.c.h.b16 %v1075
        %v7754 = vunpack.c.l.b16 %v1076
        %v7755 = vunpack.c.h.b16 %v1076
        %v7756 = vunpack.c.l.b16 %v1077
        %v7757 = vunpack.c.h.b16 %v1077
        %v7758 = vunpack.c.l.b16 %v1078
        %v7759 = vunpack.c.h.b16 %v1078
        %v7760 = vunpack.c.l.b16 %v1079
        %v7761 = vunpack.c.h.b16 %v1079
        %v7762 = vunpack.c.l.b16 %v1080
        %v7763 = vunpack.c.h.b16 %v1080
        %v7764 = vunpack.c.l.b16 %v1081
        %v7765 = vunpack.c.h.b16 %v1081
        %v7766 = vunpack.c.l.b16 %v1082
        %v7767 = vunpack.c.h.b16 %v1082
        %v7768 = vunpack.c.l.b16 %v1083
        %v7769 = vunpack.c.h.b16 %v1083
        %v7770 = vunpack.c.l.b16 %v1084
        %v7771 = vunpack.c.h.b16 %v1084
        %v7772 = vunpack.c.l.b16 %v1085
        %v7773 = vunpack.c.h.b16 %v1085
        %v7774 = vunpack.c.l.b16 %v1086
        %v7775 = vunpack.c.h.b16 %v1086
        %v7776 = vunpack.c.l.b16 %v1087
        %v7777 = vunpack.c.h.b16 %v1087
        %v7778 = vunpack.c.l.b16 %v1088
        %v7779 = vunpack.c.h.b16 %v1088
        %v7780 = vunpack.c.l.b16 %v1089
        %v7781 = vunpack.c.h.b16 %v1089
        %v7782 = vunpack.c.l.b16 %v1090
        %v7783 = vunpack.c.h.b16 %v1090
        %v7784 = vunpack.c.l.b16 %v1091
        %v7785 = vunpack.c.h.b16 %v1091
        %v7786 = vunpack.c.l.b16 %v1092
        %v7787 = vunpack.c.h.b16 %v1092
        %v7788 = vunpack.c.l.b16 %v1093
        %v7789 = vunpack.c.h.b16 %v1093
        %v7790 = vunpack.c.l.b16 %v1094
        %v7791 = vunpack.c.h.b16 %v1094
        %v7792 = vunpack.c.l.b16 %v1095
        %v7793 = vunpack.c.h.b16 %v1095
        %v7794 = vunpack.c.l.b16 %v1096
        %v7795 = vunpack.c.h.b16 %v1096
        %v7796 = vunpack.c.l.b16 %v1097
        %v7797 = vunpack.c.h.b16 %v1097
        %v7798 = vunpack.c.l.b16 %v1098
        %v7799 = vunpack.c.h.b16 %v1098
        %v7800 = vunpack.c.l.b16 %v1099
        %v7801 = vunpack.c.h.b16 %v1099
        %v7802 = vunpack.c.l.b16 %v1100
        %v7803 = vunpack.c.h.b16 %v1100
        %v7804 = vpack.c.b16 %v7590, %v7588
        %v7805 = vpack.c.b16 %v7591, %v7589
        %v7806 = vpack.c.b16 %v7594, %v7592
        %v7807 = vpack.c.b16 %v7595, %v7593
        %v7808 = vpack.c.b16 %v7598, %v7596
        %v7809 = vpack.c.b16 %v7599, %v7597
        %v7810 = vpack.c.b16 %v7602, %v7600
        %v7811 = vpack.c.b16 %v7603, %v7601
        %v7812 = vpack.c.b16 %v7606, %v7604
        %v7813 = vpack.c.b16 %v7607, %v7605
        %v7814 = vpack.c.b16 %v7610, %v7608
        %v7815 = vpack.c.b16 %v7611, %v7609
        %v7816 = vpack.c.b16 %v7614, %v7612
        %v7817 = vpack.c.b16 %v7615, %v7613
        %v7818 = vpack.c.b16 %v7618, %v7616
        %v7819 = vpack.c.b16 %v7619, %v7617
        %v7820 = vpack.c.b16 %v7622, %v7620
        %v7821 = vpack.c.b16 %v7623, %v7621
        %v7822 = vpack.c.b16 %v7626, %v7624
        %v7823 = vpack.c.b16 %v7627, %v7625
        %v7824 = vpack.c.b16 %v7630, %v7628
        %v7825 = vpack.c.b16 %v7631, %v7629
        %v7826 = vpack.c.b16 %v7634, %v7632
        %v7827 = vpack.c.b16 %v7635, %v7633
        %v7828 = vpack.c.b16 %v7638, %v7636
        %v7829 = vpack.c.b16 %v7639, %v7637
        %v7830 = vpack.c.b16 %v7642, %v7640
        %v7831 = vpack.c.b16 %v7643, %v7641
        %v7832 = vpack.c.b16 %v7646, %v7644
        %v7833 = vpack.c.b16 %v7647, %v7645
        %v7834 = vpack.c.b16 %v7650, %v7648
        %v7835 = vpack.c.b16 %v7651, %v7649
        %v7836 = vpack.c.b16 %v7654, %v7652
        %v7837 = vpack.c.b16 %v7655, %v7653
        %v7838 = vpack.c.b16 %v7658, %v7656
        %v7839 = vpack.c.b16 %v7659, %v7657
        %v7840 = vpack.c.b16 %v7662, %v7660
        %v7841 = vpack.c.b16 %v7663, %v7661
        %v7842 = vpack.c.b16 %v7666, %v7664
        %v7843 = vpack.c.b16 %v7667, %v7665
        %v7844 = vpack.c.b16 %v7670, %v7668
        %v7845 = vpack.c.b16 %v7671, %v7669
        %v7846 = vpack.c.b16 %v7674, %v7672
        %v7847 = vpack.c.b16 %v7675, %v7673
        %v7848 = vpack.c.b16 %v7678, %v7676
        %v7849 = vpack.c.b16 %v7679, %v7677
        %v7850 = vpack.c.b16 %v7682, %v7680
        %v7851 = vpack.c.b16 %v7683, %v7681
        %v7852 = vpack.c.b16 %v7686, %v7684
        %v7853 = vpack.c.b16 %v7687, %v7685
        %v7854 = vpack.c.b16 %v7690, %v7688
        %v7855 = vpack.c.b16 %v7691, %v7689
        %v7856 = vpack.c.b16 %v7694, %v7692
        %v7857 = vpack.c.b16 %v7695, %v7693
        %v7858 = vpack.c.b16 %v7698, %v7696
        %v7859 = vpack.c.b16 %v7699, %v7697
        %v7860 = vpack.c.b16 %v7702, %v7700
        %v7861 = vpack.c.b16 %v7703, %v7701
        %v7862 = vpack.c.b16 %v7706, %v7704
        %v7863 = vpack.c.b16 %v7707, %v7705
        %v7864 = vpack.c.b16 %v7710, %v7708
        %v7865 = vpack.c.b16 %v7711, %v7709
        %v7866 = vpack.c.b16 %v7714, %v7712
        %v7867 = vpack.c.b16 %v7715, %v7713
        %v7868 = vpack.c.b16 %v7718, %v7716
        %v7869 = vpack.c.b16 %v7719, %v7717
        %v7870 = vpack.c.b16 %v7722, %v7720
        %v7871 = vpack.c.b16 %v7723, %v7721
        %v7872 = vpack.c.b16 %v7726, %v7724
        %v7873 = vpack.c.b16 %v7727, %v7725
        %v7874 = vpack.c.b16 %v7730, %v7728
        %v7875 = vpack.c.b16 %v7731, %v7729
        %v7876 = vpack.c.b16 %v7734, %v7732
        %v7877 = vpack.c.b16 %v7735, %v7733
        %v7878 = vpack.c.b16 %v7738, %v7736
        %v7879 = vpack.c.b16 %v7739, %v7737
        %v7880 = vpack.c.b16 %v7742, %v7740
        %v7881 = vpack.c.b16 %v7743, %v7741
        %v7882 = vpack.c.b16 %v7746, %v7744
        %v7883 = vpack.c.b16 %v7747, %v7745
        %v7884 = vpack.c.b16 %v7750, %v7748
        %v7885 = vpack.c.b16 %v7751, %v7749
        %v7886 = vpack.c.b16 %v7754, %v7752
        %v7887 = vpack.c.b16 %v7755, %v7753
        %v7888 = vpack.c.b16 %v7758, %v7756
        %v7889 = vpack.c.b16 %v7759, %v7757
        %v7890 = vpack.c.b16 %v7762, %v7760
        %v7891 = vpack.c.b16 %v7763, %v7761
        %v7892 = vpack.c.b16 %v7766, %v7764
        %v7893 = vpack.c.b16 %v7767, %v7765
        %v7894 = vpack.c.b16 %v7770, %v7768
        %v7895 = vpack.c.b16 %v7771, %v7769
        %v7896 = vpack.c.b16 %v7774, %v7772
        %v7897 = vpack.c.b16 %v7775, %v7773
        %v7898 = vpack.c.b16 %v7778, %v7776
        %v7899 = vpack.c.b16 %v7779, %v7777
        %v7900 = vpack.c.b16 %v7782, %v7780
        %v7901 = vpack.c.b16 %v7783, %v7781
        %v7902 = vpack.c.b16 %v7786, %v7784
        %v7903 = vpack.c.b16 %v7787, %v7785
        %v7904 = vpack.c.b16 %v7790, %v7788
        %v7905 = vpack.c.b16 %v7791, %v7789
        %v7906 = vpack.c.b16 %v7794, %v7792
        %v7907 = vpack.c.b16 %v7795, %v7793
        %v7908 = vpack.c.b16 %v7798, %v7796
        %v7909 = vpack.c.b16 %v7799, %v7797
        %v7910 = vpack.c.b16 %v7802, %v7800
        %v7911 = vpack.c.b16 %v7803, %v7801
        %vm8020 = vcmask 785408
        %v8021 = vsel %vm8020, %v7434, 0
        %v8023 = vsel %vm8020, %v7436, 0
        %v8025 = vsel %vm8020, %v7438, 0
        %v8027 = vsel %vm8020, %v7440, 0
        %v8029 = vsel %vm8020, %v7442, 0
        %v8031 = vsel %vm8020, %v7444, 0
        %v8033 = vsel %vm8020, %v7446, 0
        %v8035 = vsel %vm8020, %v7448, 0
        %v8037 = vsel %vm8020, %v7450, 0
        %v8039 = vsel %vm8020, %v7452, 0
        %v8041 = vsel %vm8020, %v7454, 0
        %v8043 = vsel %vm8020, %v7456, 0
        %v8045 = vsel %vm8020, %v7458, 0
        %v8047 = vsel %vm8020, %v7460, 0
        %v8049 = vsel %vm8020, %v7462, 0
        %v8051 = vsel %vm8020, %v7464, 0
        %v8053 = vsel %vm8020, %v7466, 0
        %v8055 = vsel %vm8020, %v7468, 0
        %8057 = vmatprep.subr.bf16.mxu0 %v7805
        %8058 = vmatpush1.bf16.msra.mxu0 %v7804
        %8059 = vmatprep.subr.bf16.mxu0 %v7807
        %8060 = vmatpush1.bf16.msra.mxu0 %v7806
        %8061 = vmatprep.subr.bf16.mxu0 %v7809
        %8062 = vmatpush1.bf16.msra.mxu0 %v7808
        %8063 = vmatprep.subr.bf16.mxu0 %v7811
        %8064 = vmatpush1.bf16.msra.mxu0 %v7810
        %8065 = vmatprep.subr.bf16.mxu0 %v7813
        %8066 = vmatpush1.bf16.msra.mxu0 %v7812
        %8067 = vmatprep.subr.bf16.mxu0 %v7815
        %8068 = vmatpush1.bf16.msra.mxu0 %v7814
        %8069 = vmatprep.subr.bf16.mxu0 %v7817
        %8070 = vmatpush1.bf16.msra.mxu0 %v7816
        %8071 = vmatprep.subr.bf16.mxu0 %v7819
        %8072 = vmatpush1.bf16.msra.mxu0 %v7818
        %8073 = vmatprep.subr.bf16.mxu0 %v7821
        %8074 = vmatpush1.bf16.msra.mxu0 %v7820
        %8075 = vmatprep.subr.bf16.mxu0 %v7823
        %8076 = vmatpush1.bf16.msra.mxu0 %v7822
        %8077 = vmatprep.subr.bf16.mxu0 %v7825
        %8078 = vmatpush1.bf16.msra.mxu0 %v7824
        %8079 = vmatprep.subr.bf16.mxu0 %v7827
        %8080 = vmatpush1.bf16.msra.mxu0 %v7826
        %8081 = vmatprep.subr.bf16.mxu0 %v7829
        %8082 = vmatpush1.bf16.msra.mxu0 %v7828
        %8083 = vmatprep.subr.bf16.mxu0 %v7831
        %8084 = vmatpush1.bf16.msra.mxu0 %v7830
        %8085 = vmatprep.subr.bf16.mxu0 %v7833
        %8086 = vmatpush1.bf16.msra.mxu0 %v7832
        %8087 = vmatprep.subr.bf16.mxu0 %v7835
        %8088 = vmatpush1.bf16.msra.mxu0 %v7834
        %8089 = vmatprep.mubr.bf16.mxu0 %v7022
        %8090 = vmatmul.mubr.bf16.gmra.mrb[0].mxu0 %v6930
        %v8091 = vpop.f32.mrb[0].mxu0
        %v8092 = vadd.f32 %v7473, %v8091
        %v8093 = vpop.f32.mrb[0].mxu0
        %v8094 = vadd.f32 %v7477, %v8093
        %v8095 = vpop.f32.mrb[0].mxu0
        %v8096 = vadd.f32 %v7473, %v8095
        %v8097 = vpop.f32.mrb[0].mxu0
        %v8098 = vadd.f32 %v7477, %v8097
        %8099 = vmatprep.mubr.bf16.mxu0 %v7025
        %8100 = vmatmul.mubr.bf16.gmra.mrb[0].mxu0 %v6933
        %v8101 = vpop.f32.mrb[0].mxu0
        %v8102 = vadd.f32 %v7473, %v8101
        %v8103 = vpop.f32.mrb[0].mxu0
        %v8104 = vadd.f32 %v7477, %v8103
        %v8105 = vpop.f32.mrb[0].mxu0
        %v8106 = vadd.f32 %v7473, %v8105
        %v8107 = vpop.f32.mrb[0].mxu0
        %v8108 = vadd.f32 %v7477, %v8107
        %8109 = vmatprep.mubr.bf16.mxu0 %v7028
        %8110 = vmatmul.mubr.bf16.gmra.mrb[0].mxu0 %v6936
        %v8111 = vpop.f32.mrb[0].mxu0
        %v8112 = vadd.f32 %v7473, %v8111
        %v8113 = vpop.f32.mrb[0].mxu0
        %v8114 = vadd.f32 %v7477, %v8113
        %v8115 = vpop.f32.mrb[0].mxu0
        %v8116 = vadd.f32 %v7473, %v8115
        %v8117 = vpop.f32.mrb[0].mxu0
        %v8118 = vadd.f32 %v7477, %v8117
        %8119 = vmatprep.mubr.bf16.mxu0 %v7031
        %8120 = vmatmul.mubr.bf16.gmra.mrb[0].mxu0 %v6939
        %v8121 = vpop.f32.mrb[0].mxu0
        %v8122 = vadd.f32 %v7473, %v8121
        %v8123 = vpop.f32.mrb[0].mxu0
        %v8124 = vadd.f32 %v7477, %v8123
        %v8125 = vpop.f32.mrb[0].mxu0
        %v8126 = vadd.f32 %v7473, %v8125
        %v8127 = vpop.f32.mrb[0].mxu0
        %v8128 = vadd.f32 %v7477, %v8127
        %8129 = vmatprep.mubr.bf16.mxu0 %v7034
        %8130 = vmatmul.mubr.bf16.gmra.mrb[0].mxu0 %v6942
        %v8131 = vpop.f32.mrb[0].mxu0
        %v8132 = vadd.f32 %v7473, %v8131
        %v8133 = vpop.f32.mrb[0].mxu0
        %v8134 = vadd.f32 %v7477, %v8133
        %v8135 = vpop.f32.mrb[0].mxu0
        %v8136 = vadd.f32 %v7473, %v8135
        %v8137 = vpop.f32.mrb[0].mxu0
        %v8138 = vadd.f32 %v7477, %v8137
        %8139 = vmatprep.mubr.bf16.mxu0 %v7037
        %8140 = vmatmul.mubr.bf16.gmra.mrb[0].mxu0 %v6945
        %v8141 = vpop.f32.mrb[0].mxu0
        %v8142 = vadd.f32 %v7473, %v8141
        %v8143 = vpop.f32.mrb[0].mxu0
        %v8144 = vadd.f32 %v7477, %v8143
        %v8145 = vpop.f32.mrb[0].mxu0
        %v8146 = vadd.f32 %v7473, %v8145
        %v8147 = vpop.f32.mrb[0].mxu0
        %v8148 = vadd.f32 %v7477, %v8147
        %8149 = vmatprep.mubr.bf16.mxu0 %v7040
        %8150 = vmatmul.mubr.bf16.gmra.mrb[0].mxu0 %v6948
        %v8151 = vpop.f32.mrb[0].mxu0
        %v8152 = vadd.f32 %v7473, %v8151
        %v8153 = vpop.f32.mrb[0].mxu0
        %v8154 = vadd.f32 %v7477, %v8153
        %v8155 = vpop.f32.mrb[0].mxu0
        %v8156 = vadd.f32 %v7473, %v8155
        %v8157 = vpop.f32.mrb[0].mxu0
        %v8158 = vadd.f32 %v7477, %v8157
        %8159 = vmatprep.mubr.bf16.mxu0 %v7043
        %8160 = vmatmul.mubr.bf16.gmra.mrb[0].mxu0 %v6951
        %v8161 = vpop.f32.mrb[0].mxu0
        %v8162 = vadd.f32 %v7473, %v8161
        %v8163 = vpop.f32.mrb[0].mxu0
        %v8164 = vadd.f32 %v7477, %v8163
        %v8165 = vpop.f32.mrb[0].mxu0
        %v8166 = vadd.f32 %v7473, %v8165
        %v8167 = vpop.f32.mrb[0].mxu0
        %v8168 = vadd.f32 %v7477, %v8167
        %8169 = vmatprep.mubr.bf16.mxu0 %v7046
        %8170 = vmatmul.mubr.bf16.gmra.mrb[0].mxu0 %v6954
        %v8171 = vpop.f32.mrb[0].mxu0
        %v8172 = vadd.f32 %v7473, %v8171
        %v8173 = vpop.f32.mrb[0].mxu0
        %v8174 = vadd.f32 %v7477, %v8173
        %v8175 = vpop.f32.mrb[0].mxu0
        %v8176 = vadd.f32 %v7473, %v8175
        %v8177 = vpop.f32.mrb[0].mxu0
        %v8178 = vadd.f32 %v7477, %v8177
        %8179 = vmatprep.mubr.bf16.mxu0 %v7049
        %8180 = vmatmul.mubr.bf16.gmra.mrb[0].mxu0 %v6957
        %v8181 = vpop.f32.mrb[0].mxu0
        %v8182 = vadd.f32 %v7473, %v8181
        %v8183 = vpop.f32.mrb[0].mxu0
        %v8184 = vadd.f32 %v7477, %v8183
        %v8185 = vpop.f32.mrb[0].mxu0
        %v8186 = vadd.f32 %v7473, %v8185
        %v8187 = vpop.f32.mrb[0].mxu0
        %v8188 = vadd.f32 %v7477, %v8187
        %8189 = vmatprep.mubr.bf16.mxu0 %v7052
        %8190 = vmatmul.mubr.bf16.gmra.mrb[0].mxu0 %v6960
        %v8191 = vpop.f32.mrb[0].mxu0
        %v8192 = vadd.f32 %v7473, %v8191
        %v8193 = vpop.f32.mrb[0].mxu0
        %v8194 = vadd.f32 %v7477, %v8193
        %v8195 = vpop.f32.mrb[0].mxu0
        %v8196 = vadd.f32 %v7473, %v8195
        %v8197 = vpop.f32.mrb[0].mxu0
        %v8198 = vadd.f32 %v7477, %v8197
        %8199 = vmatprep.mubr.bf16.mxu0 %v7055
        %8200 = vmatmul.mubr.bf16.gmra.mrb[0].mxu0 %v6963
        %v8201 = vpop.f32.mrb[0].mxu0
        %v8202 = vadd.f32 %v7473, %v8201
        %v8203 = vpop.f32.mrb[0].mxu0
        %v8204 = vadd.f32 %v7477, %v8203
        %v8205 = vpop.f32.mrb[0].mxu0
        %v8206 = vadd.f32 %v7473, %v8205
        %v8207 = vpop.f32.mrb[0].mxu0
        %v8208 = vadd.f32 %v7477, %v8207
        %8209 = vmatprep.mubr.bf16.mxu0 %v7058
        %8210 = vmatmul.mubr.bf16.gmra.mrb[0].mxu0 %v6966
        %v8211 = vpop.f32.mrb[0].mxu0
        %v8212 = vadd.f32 %v7473, %v8211
        %v8213 = vpop.f32.mrb[0].mxu0
        %v8214 = vadd.f32 %v7477, %v8213
        %v8215 = vpop.f32.mrb[0].mxu0
        %v8216 = vadd.f32 %v7473, %v8215
        %v8217 = vpop.f32.mrb[0].mxu0
        %v8218 = vadd.f32 %v7477, %v8217
        %8219 = vmatprep.mubr.bf16.mxu0 %v7061
        %8220 = vmatmul.mubr.bf16.gmra.mrb[0].mxu0 %v6969
        %v8221 = vpop.f32.mrb[0].mxu0
        %v8222 = vadd.f32 %v7473, %v8221
        %v8223 = vpop.f32.mrb[0].mxu0
        %v8224 = vadd.f32 %v7477, %v8223
        %v8225 = vpop.f32.mrb[0].mxu0
        %v8226 = vadd.f32 %v7473, %v8225
        %v8227 = vpop.f32.mrb[0].mxu0
        %v8228 = vadd.f32 %v7477, %v8227
        %8229 = vmatprep.mubr.bf16.mxu0 %v7064
        %8230 = vmatmul.mubr.bf16.gmra.mrb[0].mxu0 %v6972
        %v8231 = vpop.f32.mrb[0].mxu0
        %v8232 = vadd.f32 %v7473, %v8231
        %v8233 = vpop.f32.mrb[0].mxu0
        %v8234 = vadd.f32 %v7477, %v8233
        %v8235 = vpop.f32.mrb[0].mxu0
        %v8236 = vadd.f32 %v7473, %v8235
        %v8237 = vpop.f32.mrb[0].mxu0
        %v8238 = vadd.f32 %v7477, %v8237
        %8239 = vmatprep.mubr.bf16.mxu0 %v7067
        %8240 = vmatmul.mubr.bf16.gmra.mrb[0].mxu0 %v6975
        %v8241 = vpop.f32.mrb[0].mxu0
        %v8242 = vadd.f32 %v7473, %v8241
        %v8243 = vpop.f32.mrb[0].mxu0
        %v8244 = vadd.f32 %v7477, %v8243
        %v8245 = vpop.f32.mrb[0].mxu0
        %v8246 = vadd.f32 %v7473, %v8245
        %v8247 = vpop.f32.mrb[0].mxu0
        %v8248 = vadd.f32 %v7477, %v8247
        %8249 = vmatprep.mubr.bf16.mxu0 %v7070
        %8250 = vmatmul.mubr.bf16.gmra.mrb[0].mxu0 %v6978
        %v8251 = vpop.f32.mrb[0].mxu0
        %v8252 = vpop.f32.mrb[0].mxu0
        %v8253 = vpop.f32.mrb[0].mxu0
        %v8254 = vpop.f32.mrb[0].mxu0
        %8255 = vmatprep.mubr.bf16.mxu0 %v7073
        %8256 = vmatmul.mubr.bf16.gmra.mrb[0].mxu0 %v6981
        %v8257 = vpop.f32.mrb[0].mxu0
        %v8258 = vpop.f32.mrb[0].mxu0
        %v8259 = vpop.f32.mrb[0].mxu0
        %v8260 = vpop.f32.mrb[0].mxu0
        %8261 = vdwg.mxu0
        %8262 = vmatprep.subr.bf16.mxu0 %v7837
        %8263 = vmatpush1.bf16.msra.mxu0 %v7836
        %8264 = vmatprep.subr.bf16.mxu0 %v7839
        %8265 = vmatpush1.bf16.msra.mxu0 %v7838
        %8266 = vmatprep.subr.bf16.mxu0 %v7841
        %8267 = vmatpush1.bf16.msra.mxu0 %v7840
        %8268 = vmatprep.subr.bf16.mxu0 %v7843
        %8269 = vmatpush1.bf16.msra.mxu0 %v7842
        %8270 = vmatprep.subr.bf16.mxu0 %v7845
        %8271 = vmatpush1.bf16.msra.mxu0 %v7844
        %8272 = vmatprep.subr.bf16.mxu0 %v7847
        %8273 = vmatpush1.bf16.msra.mxu0 %v7846
        %8274 = vmatprep.subr.bf16.mxu0 %v7849
        %8275 = vmatpush1.bf16.msra.mxu0 %v7848
        %8276 = vmatprep.subr.bf16.mxu0 %v7851
        %8277 = vmatpush1.bf16.msra.mxu0 %v7850
        %8278 = vmatprep.subr.bf16.mxu0 %v7853
        %8279 = vmatpush1.bf16.msra.mxu0 %v7852
        %8280 = vmatprep.subr.bf16.mxu0 %v7855
        %8281 = vmatpush1.bf16.msra.mxu0 %v7854
        %8282 = vmatprep.subr.bf16.mxu0 %v7857
        %8283 = vmatpush1.bf16.msra.mxu0 %v7856
        %8284 = vmatprep.subr.bf16.mxu0 %v7859
        %8285 = vmatpush1.bf16.msra.mxu0 %v7858
        %8286 = vmatprep.subr.bf16.mxu0 %v7861
        %8287 = vmatpush1.bf16.msra.mxu0 %v7860
        %8288 = vmatprep.subr.bf16.mxu0 %v7863
        %8289 = vmatpush1.bf16.msra.mxu0 %v7862
        %8290 = vmatprep.subr.bf16.mxu0 %v7865
        %8291 = vmatpush1.bf16.msra.mxu0 %v7864
        %8292 = vmatprep.subr.bf16.mxu0 %v7867
        %8293 = vmatpush1.bf16.msra.mxu0 %v7866
        %8294 = vmatprep.mubr.bf16.mxu0 %v7227
        %8295 = vmatmul.mubr.bf16.gmra.mrb[0].mxu0 %v7150
        %v8296 = vpop.f32.mrb[0].mxu0
        %v8297 = vadd.f32 %v8092, %v8296
        %v8298 = vpop.f32.mrb[0].mxu0
        %v8299 = vadd.f32 %v8094, %v8298
        %v8300 = vpop.f32.mrb[0].mxu0
        %v8301 = vadd.f32 %v8096, %v8300
        %v8302 = vpop.f32.mrb[0].mxu0
        %v8303 = vadd.f32 %v8098, %v8302
        %8304 = vmatprep.mubr.bf16.mxu0 %v7229
        %8305 = vmatmul.mubr.bf16.gmra.mrb[0].mxu0 %v7153
        %v8306 = vpop.f32.mrb[0].mxu0
        %v8307 = vadd.f32 %v8102, %v8306
        %v8308 = vpop.f32.mrb[0].mxu0
        %v8309 = vadd.f32 %v8104, %v8308
        %v8310 = vpop.f32.mrb[0].mxu0
        %v8311 = vadd.f32 %v8106, %v8310
        %v8312 = vpop.f32.mrb[0].mxu0
        %v8313 = vadd.f32 %v8108, %v8312
        %8314 = vmatprep.mubr.bf16.mxu0 %v7231
        %8315 = vmatmul.mubr.bf16.gmra.mrb[0].mxu0 %v7156
        %v8316 = vpop.f32.mrb[0].mxu0
        %v8317 = vadd.f32 %v8112, %v8316
        %v8318 = vpop.f32.mrb[0].mxu0
        %v8319 = vadd.f32 %v8114, %v8318
        %v8320 = vpop.f32.mrb[0].mxu0
        %v8321 = vadd.f32 %v8116, %v8320
        %v8322 = vpop.f32.mrb[0].mxu0
        %v8323 = vadd.f32 %v8118, %v8322
        %8324 = vmatprep.mubr.bf16.mxu0 %v7233
        %8325 = vmatmul.mubr.bf16.gmra.mrb[0].mxu0 %v7159
        %v8326 = vpop.f32.mrb[0].mxu0
        %v8327 = vadd.f32 %v8122, %v8326
        %v8328 = vpop.f32.mrb[0].mxu0
        %v8329 = vadd.f32 %v8124, %v8328
        %v8330 = vpop.f32.mrb[0].mxu0
        %v8331 = vadd.f32 %v8126, %v8330
        %v8332 = vpop.f32.mrb[0].mxu0
        %v8333 = vadd.f32 %v8128, %v8332
        %8334 = vmatprep.mubr.bf16.mxu0 %v7235
        %8335 = vmatmul.mubr.bf16.gmra.mrb[0].mxu0 %v7162
        %v8336 = vpop.f32.mrb[0].mxu0
        %v8337 = vadd.f32 %v8132, %v8336
        %v8338 = vpop.f32.mrb[0].mxu0
        %v8339 = vadd.f32 %v8134, %v8338
        %v8340 = vpop.f32.mrb[0].mxu0
        %v8341 = vadd.f32 %v8136, %v8340
        %v8342 = vpop.f32.mrb[0].mxu0
        %v8343 = vadd.f32 %v8138, %v8342
        %8344 = vmatprep.mubr.bf16.mxu0 %v7237
        %8345 = vmatmul.mubr.bf16.gmra.mrb[0].mxu0 %v7165
        %v8346 = vpop.f32.mrb[0].mxu0
        %v8347 = vadd.f32 %v8142, %v8346
        %v8348 = vpop.f32.mrb[0].mxu0
        %v8349 = vadd.f32 %v8144, %v8348
        %v8350 = vpop.f32.mrb[0].mxu0
        %v8351 = vadd.f32 %v8146, %v8350
        %v8352 = vpop.f32.mrb[0].mxu0
        %v8353 = vadd.f32 %v8148, %v8352
        %8354 = vmatprep.mubr.bf16.mxu0 %v7239
        %8355 = vmatmul.mubr.bf16.gmra.mrb[0].mxu0 %v7168
        %v8356 = vpop.f32.mrb[0].mxu0
        %v8357 = vadd.f32 %v8152, %v8356
        %v8358 = vpop.f32.mrb[0].mxu0
        %v8359 = vadd.f32 %v8154, %v8358
        %v8360 = vpop.f32.mrb[0].mxu0
        %v8361 = vadd.f32 %v8156, %v8360
        %v8362 = vpop.f32.mrb[0].mxu0
        %v8363 = vadd.f32 %v8158, %v8362
        %8364 = vmatprep.mubr.bf16.mxu0 %v7241
        %8365 = vmatmul.mubr.bf16.gmra.mrb[0].mxu0 %v7171
        %v8366 = vpop.f32.mrb[0].mxu0
        %v8367 = vadd.f32 %v8162, %v8366
        %v8368 = vpop.f32.mrb[0].mxu0
        %v8369 = vadd.f32 %v8164, %v8368
        %v8370 = vpop.f32.mrb[0].mxu0
        %v8371 = vadd.f32 %v8166, %v8370
        %v8372 = vpop.f32.mrb[0].mxu0
        %v8373 = vadd.f32 %v8168, %v8372
        %8374 = vmatprep.mubr.bf16.mxu0 %v7243
        %8375 = vmatmul.mubr.bf16.gmra.mrb[0].mxu0 %v7174
        %v8376 = vpop.f32.mrb[0].mxu0
        %v8377 = vadd.f32 %v8172, %v8376
        %v8378 = vpop.f32.mrb[0].mxu0
        %v8379 = vadd.f32 %v8174, %v8378
        %v8380 = vpop.f32.mrb[0].mxu0
        %v8381 = vadd.f32 %v8176, %v8380
        %v8382 = vpop.f32.mrb[0].mxu0
        %v8383 = vadd.f32 %v8178, %v8382
        %8384 = vmatprep.mubr.bf16.mxu0 %v7245
        %8385 = vmatmul.mubr.bf16.gmra.mrb[0].mxu0 %v7177
        %v8386 = vpop.f32.mrb[0].mxu0
        %v8387 = vadd.f32 %v8182, %v8386
        %v8388 = vpop.f32.mrb[0].mxu0
        %v8389 = vadd.f32 %v8184, %v8388
        %v8390 = vpop.f32.mrb[0].mxu0
        %v8391 = vadd.f32 %v8186, %v8390
        %v8392 = vpop.f32.mrb[0].mxu0
        %v8393 = vadd.f32 %v8188, %v8392
        %8394 = vmatprep.mubr.bf16.mxu0 %v7247
        %8395 = vmatmul.mubr.bf16.gmra.mrb[0].mxu0 %v7180
        %v8396 = vpop.f32.mrb[0].mxu0
        %v8397 = vadd.f32 %v8192, %v8396
        %v8398 = vpop.f32.mrb[0].mxu0
        %v8399 = vadd.f32 %v8194, %v8398
        %v8400 = vpop.f32.mrb[0].mxu0
        %v8401 = vadd.f32 %v8196, %v8400
        %v8402 = vpop.f32.mrb[0].mxu0
        %v8403 = vadd.f32 %v8198, %v8402
        %8404 = vmatprep.mubr.bf16.mxu0 %v7249
        %8405 = vmatmul.mubr.bf16.gmra.mrb[0].mxu0 %v7183
        %v8406 = vpop.f32.mrb[0].mxu0
        %v8407 = vadd.f32 %v8202, %v8406
        %v8408 = vpop.f32.mrb[0].mxu0
        %v8409 = vadd.f32 %v8204, %v8408
        %v8410 = vpop.f32.mrb[0].mxu0
        %v8411 = vadd.f32 %v8206, %v8410
        %v8412 = vpop.f32.mrb[0].mxu0
        %v8413 = vadd.f32 %v8208, %v8412
        %8414 = vmatprep.mubr.bf16.mxu0 %v7251
        %8415 = vmatmul.mubr.bf16.gmra.mrb[0].mxu0 %v7186
        %v8416 = vpop.f32.mrb[0].mxu0
        %v8417 = vadd.f32 %v8212, %v8416
        %v8418 = vpop.f32.mrb[0].mxu0
        %v8419 = vadd.f32 %v8214, %v8418
        %v8420 = vpop.f32.mrb[0].mxu0
        %v8421 = vadd.f32 %v8216, %v8420
        %v8422 = vpop.f32.mrb[0].mxu0
        %v8423 = vadd.f32 %v8218, %v8422
        %8424 = vmatprep.mubr.bf16.mxu0 %v7253
        %8425 = vmatmul.mubr.bf16.gmra.mrb[0].mxu0 %v7189
        %v8426 = vpop.f32.mrb[0].mxu0
        %v8427 = vadd.f32 %v8222, %v8426
        %v8428 = vpop.f32.mrb[0].mxu0
        %v8429 = vadd.f32 %v8224, %v8428
        %v8430 = vpop.f32.mrb[0].mxu0
        %v8431 = vadd.f32 %v8226, %v8430
        %v8432 = vpop.f32.mrb[0].mxu0
        %v8433 = vadd.f32 %v8228, %v8432
        %8434 = vmatprep.mubr.bf16.mxu0 %v7256
        %8435 = vmatmul.mubr.bf16.gmra.mrb[0].mxu0 %v7192
        %v8436 = vpop.f32.mrb[0].mxu0
        %v8437 = vadd.f32 %v8232, %v8436
        %v8438 = vpop.f32.mrb[0].mxu0
        %v8439 = vadd.f32 %v8234, %v8438
        %v8440 = vpop.f32.mrb[0].mxu0
        %v8441 = vadd.f32 %v8236, %v8440
        %v8442 = vpop.f32.mrb[0].mxu0
        %v8443 = vadd.f32 %v8238, %v8442
        %8444 = vmatprep.mubr.bf16.mxu0 %v7259
        %8445 = vmatmul.mubr.bf16.gmra.mrb[0].mxu0 %v7195
        %v8446 = vpop.f32.mrb[0].mxu0
        %v8447 = vadd.f32 %v8242, %v8446
        %v8448 = vpop.f32.mrb[0].mxu0
        %v8449 = vadd.f32 %v8244, %v8448
        %v8450 = vpop.f32.mrb[0].mxu0
        %v8451 = vadd.f32 %v8246, %v8450
        %v8452 = vpop.f32.mrb[0].mxu0
        %v8453 = vadd.f32 %v8248, %v8452
        %8454 = vmatprep.mubr.bf16.mxu0 %v7262
        %8455 = vmatmul.mubr.bf16.gmra.mrb[0].mxu0 %v7198
        %v8456 = vpop.f32.mrb[0].mxu0
        %v8457 = vpop.f32.mrb[0].mxu0
        %v8458 = vpop.f32.mrb[0].mxu0
        %v8459 = vpop.f32.mrb[0].mxu0
        %8460 = vmatprep.mubr.bf16.mxu0 %v7265
        %8461 = vmatmul.mubr.bf16.gmra.mrb[0].mxu0 %v7201
        %v8462 = vpop.f32.mrb[0].mxu0
        %v8463 = vpop.f32.mrb[0].mxu0
        %v8464 = vpop.f32.mrb[0].mxu0
        %v8465 = vpop.f32.mrb[0].mxu0
        %8466 = vdwg.mxu0
        %8467 = vmatprep.subr.bf16.mxu0 %v7869
        %8468 = vmatpush1.bf16.msra.mxu0 %v7868
        %8469 = vmatprep.subr.bf16.mxu0 %v7871
        %8470 = vmatpush1.bf16.msra.mxu0 %v7870
        %8471 = vmatprep.subr.bf16.mxu0 %v7873
        %8472 = vmatpush1.bf16.msra.mxu0 %v7872
        %8473 = vmatprep.subr.bf16.mxu0 %v7875
        %8474 = vmatpush1.bf16.msra.mxu0 %v7874
        %8475 = vmatprep.subr.bf16.mxu0 %v7877
        %8476 = vmatpush1.bf16.msra.mxu0 %v7876
        %8477 = vmatprep.subr.bf16.mxu0 %v7879
        %8478 = vmatpush1.bf16.msra.mxu0 %v7878
        %8479 = vmatprep.subr.bf16.mxu0 %v7881
        %8480 = vmatpush1.bf16.msra.mxu0 %v7880
        %8481 = vmatprep.subr.bf16.mxu0 %v7883
        %8482 = vmatpush1.bf16.msra.mxu0 %v7882
        %8483 = vmatprep.subr.bf16.mxu0 %v7885
        %8484 = vmatpush1.bf16.msra.mxu0 %v7884
        %8485 = vmatprep.subr.bf16.mxu0 %v7887
        %8486 = vmatpush1.bf16.msra.mxu0 %v7886
        %8487 = vmatprep.subr.bf16.mxu0 %v7889
        %8488 = vmatpush1.bf16.msra.mxu0 %v7888
        %8489 = vmatprep.subr.bf16.mxu0 %v7891
        %8490 = vmatpush1.bf16.msra.mxu0 %v7890
        %8491 = vmatprep.subr.bf16.mxu0 %v7893
        %8492 = vmatpush1.bf16.msra.mxu0 %v7892
        %8493 = vmatprep.subr.bf16.mxu0 %v7895
        %8494 = vmatpush1.bf16.msra.mxu0 %v7894
        %8495 = vmatprep.subr.bf16.mxu0 %v7897
        %8496 = vmatpush1.bf16.msra.mxu0 %v7896
        %8497 = vmatprep.subr.bf16.mxu0 %v7899
        %8498 = vmatpush1.bf16.msra.mxu0 %v7898
        %8499 = vmatprep.mubr.bf16.mxu0 %v7392
        %8500 = vmatmul.mubr.bf16.gmra.mrb[0].mxu0 %v7292
        %v8501 = vpop.f32.mrb[0].mxu0
        %v8502 = vadd.f32 %v8297, %v8501
        %v8503 = vpop.f32.mrb[0].mxu0
        %v8504 = vadd.f32 %v8299, %v8503
        %v8505 = vpop.f32.mrb[0].mxu0
        %v8506 = vadd.f32 %v8301, %v8505
        %v8507 = vpop.f32.mrb[0].mxu0
        %v8508 = vadd.f32 %v8303, %v8507
        %8509 = vmatprep.mubr.bf16.mxu0 %v7394
        %8510 = vmatmul.mubr.bf16.gmra.mrb[0].mxu0 %v7295
        %v8511 = vpop.f32.mrb[0].mxu0
        %v8512 = vadd.f32 %v8307, %v8511
        %v8513 = vpop.f32.mrb[0].mxu0
        %v8514 = vadd.f32 %v8309, %v8513
        %v8515 = vpop.f32.mrb[0].mxu0
        %v8516 = vadd.f32 %v8311, %v8515
        %v8517 = vpop.f32.mrb[0].mxu0
        %v8518 = vadd.f32 %v8313, %v8517
        %8519 = vmatprep.mubr.bf16.mxu0 %v7396
        %8520 = vmatmul.mubr.bf16.gmra.mrb[0].mxu0 %v7298
        %v8521 = vpop.f32.mrb[0].mxu0
        %v8522 = vadd.f32 %v8317, %v8521
        %v8523 = vpop.f32.mrb[0].mxu0
        %v8524 = vadd.f32 %v8319, %v8523
        %v8525 = vpop.f32.mrb[0].mxu0
        %v8526 = vadd.f32 %v8321, %v8525
        %v8527 = vpop.f32.mrb[0].mxu0
        %v8528 = vadd.f32 %v8323, %v8527
        %8529 = vmatprep.mubr.bf16.mxu0 %v7398
        %8530 = vmatmul.mubr.bf16.gmra.mrb[0].mxu0 %v7301
        %v8531 = vpop.f32.mrb[0].mxu0
        %v8532 = vadd.f32 %v8327, %v8531
        %v8533 = vpop.f32.mrb[0].mxu0
        %v8534 = vadd.f32 %v8329, %v8533
        %v8535 = vpop.f32.mrb[0].mxu0
        %v8536 = vadd.f32 %v8331, %v8535
        %v8537 = vpop.f32.mrb[0].mxu0
        %v8538 = vadd.f32 %v8333, %v8537
        %8539 = vmatprep.mubr.bf16.mxu0 %v7400
        %8540 = vmatmul.mubr.bf16.gmra.mrb[0].mxu0 %v7304
        %v8541 = vpop.f32.mrb[0].mxu0
        %v8542 = vadd.f32 %v8337, %v8541
        %v8543 = vpop.f32.mrb[0].mxu0
        %v8544 = vadd.f32 %v8339, %v8543
        %v8545 = vpop.f32.mrb[0].mxu0
        %v8546 = vadd.f32 %v8341, %v8545
        %v8547 = vpop.f32.mrb[0].mxu0
        %v8548 = vadd.f32 %v8343, %v8547
        %8549 = vmatprep.mubr.bf16.mxu0 %v7402
        %8550 = vmatmul.mubr.bf16.gmra.mrb[0].mxu0 %v7307
        %v8551 = vpop.f32.mrb[0].mxu0
        %v8552 = vadd.f32 %v8347, %v8551
        %v8553 = vpop.f32.mrb[0].mxu0
        %v8554 = vadd.f32 %v8349, %v8553
        %v8555 = vpop.f32.mrb[0].mxu0
        %v8556 = vadd.f32 %v8351, %v8555
        %v8557 = vpop.f32.mrb[0].mxu0
        %v8558 = vadd.f32 %v8353, %v8557
        %8559 = vmatprep.mubr.bf16.mxu0 %v7404
        %8560 = vmatmul.mubr.bf16.gmra.mrb[0].mxu0 %v7310
        %v8561 = vpop.f32.mrb[0].mxu0
        %v8562 = vadd.f32 %v8357, %v8561
        %v8563 = vpop.f32.mrb[0].mxu0
        %v8564 = vadd.f32 %v8359, %v8563
        %v8565 = vpop.f32.mrb[0].mxu0
        %v8566 = vadd.f32 %v8361, %v8565
        %v8567 = vpop.f32.mrb[0].mxu0
        %v8568 = vadd.f32 %v8363, %v8567
        %8569 = vmatprep.mubr.bf16.mxu0 %v7406
        %8570 = vmatmul.mubr.bf16.gmra.mrb[0].mxu0 %v7313
        %v8571 = vpop.f32.mrb[0].mxu0
        %v8572 = vadd.f32 %v8367, %v8571
        %v8573 = vpop.f32.mrb[0].mxu0
        %v8574 = vadd.f32 %v8369, %v8573
        %v8575 = vpop.f32.mrb[0].mxu0
        %v8576 = vadd.f32 %v8371, %v8575
        %v8577 = vpop.f32.mrb[0].mxu0
        %v8578 = vadd.f32 %v8373, %v8577
        %8579 = vmatprep.mubr.bf16.mxu0 %v7408
        %8580 = vmatmul.mubr.bf16.gmra.mrb[0].mxu0 %v7316
        %v8581 = vpop.f32.mrb[0].mxu0
        %v8582 = vadd.f32 %v8377, %v8581
        %v8583 = vpop.f32.mrb[0].mxu0
        %v8584 = vadd.f32 %v8379, %v8583
        %v8585 = vpop.f32.mrb[0].mxu0
        %v8586 = vadd.f32 %v8381, %v8585
        %v8587 = vpop.f32.mrb[0].mxu0
        %v8588 = vadd.f32 %v8383, %v8587
        %8589 = vmatprep.mubr.bf16.mxu0 %v7410
        %8590 = vmatmul.mubr.bf16.gmra.mrb[0].mxu0 %v7319
        %v8591 = vpop.f32.mrb[0].mxu0
        %v8592 = vadd.f32 %v8387, %v8591
        %v8593 = vpop.f32.mrb[0].mxu0
        %v8594 = vadd.f32 %v8389, %v8593
        %v8595 = vpop.f32.mrb[0].mxu0
        %v8596 = vadd.f32 %v8391, %v8595
        %v8597 = vpop.f32.mrb[0].mxu0
        %v8598 = vadd.f32 %v8393, %v8597
        %8599 = vmatprep.mubr.bf16.mxu0 %v7412
        %8600 = vmatmul.mubr.bf16.gmra.mrb[0].mxu0 %v7322
        %v8601 = vpop.f32.mrb[0].mxu0
        %v8602 = vadd.f32 %v8397, %v8601
        %v8603 = vpop.f32.mrb[0].mxu0
        %v8604 = vadd.f32 %v8399, %v8603
        %v8605 = vpop.f32.mrb[0].mxu0
        %v8606 = vadd.f32 %v8401, %v8605
        %v8607 = vpop.f32.mrb[0].mxu0
        %v8608 = vadd.f32 %v8403, %v8607
        %8609 = vmatprep.mubr.bf16.mxu0 %v7414
        %8610 = vmatmul.mubr.bf16.gmra.mrb[0].mxu0 %v7325
        %v8611 = vpop.f32.mrb[0].mxu0
        %v8612 = vadd.f32 %v8407, %v8611
        %v8613 = vpop.f32.mrb[0].mxu0
        %v8614 = vadd.f32 %v8409, %v8613
        %v8615 = vpop.f32.mrb[0].mxu0
        %v8616 = vadd.f32 %v8411, %v8615
        %v8617 = vpop.f32.mrb[0].mxu0
        %v8618 = vadd.f32 %v8413, %v8617
        %8619 = vmatprep.mubr.bf16.mxu0 %v7416
        %8620 = vmatmul.mubr.bf16.gmra.mrb[0].mxu0 %v7328
        %v8621 = vpop.f32.mrb[0].mxu0
        %v8622 = vadd.f32 %v8417, %v8621
        %v8623 = vpop.f32.mrb[0].mxu0
        %v8624 = vadd.f32 %v8419, %v8623
        %v8625 = vpop.f32.mrb[0].mxu0
        %v8626 = vadd.f32 %v8421, %v8625
        %v8627 = vpop.f32.mrb[0].mxu0
        %v8628 = vadd.f32 %v8423, %v8627
        %8629 = vmatprep.mubr.bf16.mxu0 %v7418
        %8630 = vmatmul.mubr.bf16.gmra.mrb[0].mxu0 %v7331
        %v8631 = vpop.f32.mrb[0].mxu0
        %v8632 = vadd.f32 %v8427, %v8631
        %v8633 = vpop.f32.mrb[0].mxu0
        %v8634 = vadd.f32 %v8429, %v8633
        %v8635 = vpop.f32.mrb[0].mxu0
        %v8636 = vadd.f32 %v8431, %v8635
        %v8637 = vpop.f32.mrb[0].mxu0
        %v8638 = vadd.f32 %v8433, %v8637
        %8639 = vmatprep.mubr.bf16.mxu0 %v7421
        %8640 = vmatmul.mubr.bf16.gmra.mrb[0].mxu0 %v7334
        %v8641 = vpop.f32.mrb[0].mxu0
        %v8642 = vadd.f32 %v8437, %v8641
        %v8643 = vpop.f32.mrb[0].mxu0
        %v8644 = vadd.f32 %v8439, %v8643
        %v8645 = vpop.f32.mrb[0].mxu0
        %v8646 = vadd.f32 %v8441, %v8645
        %v8647 = vpop.f32.mrb[0].mxu0
        %v8648 = vadd.f32 %v8443, %v8647
        %8649 = vmatprep.mubr.bf16.mxu0 %v7424
        %8650 = vmatmul.mubr.bf16.gmra.mrb[0].mxu0 %v7337
        %v8651 = vpop.f32.mrb[0].mxu0
        %v8652 = vadd.f32 %v8447, %v8651
        %v8653 = vpop.f32.mrb[0].mxu0
        %v8654 = vadd.f32 %v8449, %v8653
        %v8655 = vpop.f32.mrb[0].mxu0
        %v8656 = vadd.f32 %v8451, %v8655
        %v8657 = vpop.f32.mrb[0].mxu0
        %v8658 = vadd.f32 %v8453, %v8657
        %8659 = vmatprep.mubr.bf16.mxu0 %v7427
        %8660 = vmatmul.mubr.bf16.gmra.mrb[0].mxu0 %v7340
        %v8661 = vpop.f32.mrb[0].mxu0
        %v8662 = vpop.f32.mrb[0].mxu0
        %v8663 = vpop.f32.mrb[0].mxu0
        %v8664 = vpop.f32.mrb[0].mxu0
        %8665 = vmatprep.mubr.bf16.mxu0 %v7430
        %8666 = vmatmul.mubr.bf16.gmra.mrb[0].mxu0 %v7343
        %v8667 = vpop.f32.mrb[0].mxu0
        %v8668 = vpop.f32.mrb[0].mxu0
        %v8669 = vpop.f32.mrb[0].mxu0
        %v8670 = vpop.f32.mrb[0].mxu0
        %8671 = vdwg.mxu0
        %8672 = vmatprep.subr.bf16.mxu0 %v7901
        %8673 = vmatpush1.bf16.msra.mxu0 %v7900
        %8674 = vmatprep.subr.bf16.mxu0 %v7903
        %8675 = vmatpush1.bf16.msra.mxu0 %v7902
        %8676 = vmatprep.subr.bf16.mxu0 %v7905
        %8677 = vmatpush1.bf16.msra.mxu0 %v7904
        %8678 = vmatprep.subr.bf16.mxu0 %v7907
        %8679 = vmatpush1.bf16.msra.mxu0 %v7906
        %8680 = vmatprep.subr.bf16.mxu0 %v7909
        %8681 = vmatpush1.bf16.msra.mxu0 %v7908
        %8682 = vmatprep.subr.bf16.mxu0 %v7911
        %8683 = vmatpush1.bf16.msra.mxu0 %v7910
        %8684 = vmatprep.subr.bf16.mxu0 0
        %8685 = vmatpush1.bf16.msra.mxu0 0
        %8686 = vmatprep.subr.bf16.mxu0 0
        %8687 = vmatpush1.bf16.msra.mxu0 0
        %8688 = vmatprep.subr.bf16.mxu0 0
        %8689 = vmatpush1.bf16.msra.mxu0 0
        %8690 = vmatprep.subr.bf16.mxu0 0
        %8691 = vmatpush1.bf16.msra.mxu0 0
        %8692 = vmatprep.subr.bf16.mxu0 0
        %8693 = vmatpush1.bf16.msra.mxu0 0
        %8694 = vmatprep.subr.bf16.mxu0 0
        %8695 = vmatpush1.bf16.msra.mxu0 0
        %8696 = vmatprep.subr.bf16.mxu0 0
        %8697 = vmatpush1.bf16.msra.mxu0 0
        %8698 = vmatprep.subr.bf16.mxu0 0
        %8699 = vmatpush1.bf16.msra.mxu0 0
        %8700 = vmatprep.subr.bf16.mxu0 0
        %8701 = vmatpush1.bf16.msra.mxu0 0
        %8702 = vmatprep.subr.bf16.mxu0 0
        %8703 = vmatpush1.bf16.msra.mxu0 0
        %8704 = vmatprep.mubr.bf16.mxu0 0
        %8705 = vmatmul.mubr.bf16.gmra.mrb[0].mxu0 %v8021
        %v8706 = vpop.f32.mrb[0].mxu0
        %v8707 = vadd.f32 %v8502, %v8706
        %v8708 = vpop.f32.mrb[0].mxu0
        %v8709 = vadd.f32 %v8504, %v8708
        %v8710 = vpop.f32.mrb[0].mxu0
        %v8711 = vadd.f32 %v8506, %v8710
        %v8712 = vpop.f32.mrb[0].mxu0
        %v8713 = vadd.f32 %v8508, %v8712
        %8714 = vmatprep.mubr.bf16.mxu0 0
        %8715 = vmatmul.mubr.bf16.gmra.mrb[0].mxu0 %v8023
        %v8716 = vpop.f32.mrb[0].mxu0
        %v8717 = vadd.f32 %v8512, %v8716
        %v8718 = vpop.f32.mrb[0].mxu0
        %v8719 = vadd.f32 %v8514, %v8718
        %v8720 = vpop.f32.mrb[0].mxu0
        %v8721 = vadd.f32 %v8516, %v8720
        %v8722 = vpop.f32.mrb[0].mxu0
        %v8723 = vadd.f32 %v8518, %v8722
        %8724 = vmatprep.mubr.bf16.mxu0 0
        %8725 = vmatmul.mubr.bf16.gmra.mrb[0].mxu0 %v8025
        %v8726 = vpop.f32.mrb[0].mxu0
        %v8727 = vadd.f32 %v8522, %v8726
        %v8728 = vpop.f32.mrb[0].mxu0
        %v8729 = vadd.f32 %v8524, %v8728
        %v8730 = vpop.f32.mrb[0].mxu0
        %v8731 = vadd.f32 %v8526, %v8730
        %v8732 = vpop.f32.mrb[0].mxu0
        %v8733 = vadd.f32 %v8528, %v8732
        %8734 = vmatprep.mubr.bf16.mxu0 0
        %8735 = vmatmul.mubr.bf16.gmra.mrb[0].mxu0 %v8027
        %v8736 = vpop.f32.mrb[0].mxu0
        %v8737 = vadd.f32 %v8532, %v8736
        %v8738 = vpop.f32.mrb[0].mxu0
        %v8739 = vadd.f32 %v8534, %v8738
        %v8740 = vpop.f32.mrb[0].mxu0
        %v8741 = vadd.f32 %v8536, %v8740
        %v8742 = vpop.f32.mrb[0].mxu0
        %v8743 = vadd.f32 %v8538, %v8742
        %8744 = vmatprep.mubr.bf16.mxu0 0
        %8745 = vmatmul.mubr.bf16.gmra.mrb[0].mxu0 %v8029
        %v8746 = vpop.f32.mrb[0].mxu0
        %v8747 = vadd.f32 %v8542, %v8746
        %v8748 = vpop.f32.mrb[0].mxu0
        %v8749 = vadd.f32 %v8544, %v8748
        %v8750 = vpop.f32.mrb[0].mxu0
        %v8751 = vadd.f32 %v8546, %v8750
        %v8752 = vpop.f32.mrb[0].mxu0
        %v8753 = vadd.f32 %v8548, %v8752
        %8754 = vmatprep.mubr.bf16.mxu0 0
        %8755 = vmatmul.mubr.bf16.gmra.mrb[0].mxu0 %v8031
        %v8756 = vpop.f32.mrb[0].mxu0
        %v8757 = vadd.f32 %v8552, %v8756
        %v8758 = vpop.f32.mrb[0].mxu0
        %v8759 = vadd.f32 %v8554, %v8758
        %v8760 = vpop.f32.mrb[0].mxu0
        %v8761 = vadd.f32 %v8556, %v8760
        %v8762 = vpop.f32.mrb[0].mxu0
        %v8763 = vadd.f32 %v8558, %v8762
        %8764 = vmatprep.mubr.bf16.mxu0 0
        %8765 = vmatmul.mubr.bf16.gmra.mrb[0].mxu0 %v8033
        %v8766 = vpop.f32.mrb[0].mxu0
        %v8767 = vadd.f32 %v8562, %v8766
        %v8768 = vpop.f32.mrb[0].mxu0
        %v8769 = vadd.f32 %v8564, %v8768
        %v8770 = vpop.f32.mrb[0].mxu0
        %v8771 = vadd.f32 %v8566, %v8770
        %v8772 = vpop.f32.mrb[0].mxu0
        %v8773 = vadd.f32 %v8568, %v8772
        %8774 = vmatprep.mubr.bf16.mxu0 0
        %8775 = vmatmul.mubr.bf16.gmra.mrb[0].mxu0 %v8035
        %v8776 = vpop.f32.mrb[0].mxu0
        %v8777 = vadd.f32 %v8572, %v8776
        %v8778 = vpop.f32.mrb[0].mxu0
        %v8779 = vadd.f32 %v8574, %v8778
        %v8780 = vpop.f32.mrb[0].mxu0
        %v8781 = vadd.f32 %v8576, %v8780
        %v8782 = vpop.f32.mrb[0].mxu0
        %v8783 = vadd.f32 %v8578, %v8782
        %8784 = vmatprep.mubr.bf16.mxu0 0
        %8785 = vmatmul.mubr.bf16.gmra.mrb[0].mxu0 %v8037
        %v8786 = vpop.f32.mrb[0].mxu0
        %v8787 = vadd.f32 %v8582, %v8786
        %v8788 = vpop.f32.mrb[0].mxu0
        %v8789 = vadd.f32 %v8584, %v8788
        %v8790 = vpop.f32.mrb[0].mxu0
        %v8791 = vadd.f32 %v8586, %v8790
        %v8792 = vpop.f32.mrb[0].mxu0
        %v8793 = vadd.f32 %v8588, %v8792
        %8794 = vmatprep.mubr.bf16.mxu0 0
        %8795 = vmatmul.mubr.bf16.gmra.mrb[0].mxu0 %v8039
        %v8796 = vpop.f32.mrb[0].mxu0
        %v8797 = vadd.f32 %v8592, %v8796
        %v8798 = vpop.f32.mrb[0].mxu0
        %v8799 = vadd.f32 %v8594, %v8798
        %v8800 = vpop.f32.mrb[0].mxu0
        %v8801 = vadd.f32 %v8596, %v8800
        %v8802 = vpop.f32.mrb[0].mxu0
        %v8803 = vadd.f32 %v8598, %v8802
        %8804 = vmatprep.mubr.bf16.mxu0 0
        %8805 = vmatmul.mubr.bf16.gmra.mrb[0].mxu0 %v8041
        %v8806 = vpop.f32.mrb[0].mxu0
        %v8807 = vadd.f32 %v8602, %v8806
        %v8808 = vpop.f32.mrb[0].mxu0
        %v8809 = vadd.f32 %v8604, %v8808
        %v8810 = vpop.f32.mrb[0].mxu0
        %v8811 = vadd.f32 %v8606, %v8810
        %v8812 = vpop.f32.mrb[0].mxu0
        %v8813 = vadd.f32 %v8608, %v8812
        %8814 = vmatprep.mubr.bf16.mxu0 0
        %8815 = vmatmul.mubr.bf16.gmra.mrb[0].mxu0 %v8043
        %v8816 = vpop.f32.mrb[0].mxu0
        %v8817 = vadd.f32 %v8612, %v8816
        %v8818 = vpop.f32.mrb[0].mxu0
        %v8819 = vadd.f32 %v8614, %v8818
        %v8820 = vpop.f32.mrb[0].mxu0
        %v8821 = vadd.f32 %v8616, %v8820
        %v8822 = vpop.f32.mrb[0].mxu0
        %v8823 = vadd.f32 %v8618, %v8822
        %8824 = vmatprep.mubr.bf16.mxu0 0
        %8825 = vmatmul.mubr.bf16.gmra.mrb[0].mxu0 %v8045
        %v8826 = vpop.f32.mrb[0].mxu0
        %v8827 = vadd.f32 %v8622, %v8826
        %v8828 = vpop.f32.mrb[0].mxu0
        %v8829 = vadd.f32 %v8624, %v8828
        %v8830 = vpop.f32.mrb[0].mxu0
        %v8831 = vadd.f32 %v8626, %v8830
        %v8832 = vpop.f32.mrb[0].mxu0
        %v8833 = vadd.f32 %v8628, %v8832
        %8834 = vmatprep.mubr.bf16.mxu0 0
        %8835 = vmatmul.mubr.bf16.gmra.mrb[0].mxu0 %v8047
        %v8836 = vpop.f32.mrb[0].mxu0
        %v8837 = vadd.f32 %v8632, %v8836
        %v8838 = vpop.f32.mrb[0].mxu0
        %v8839 = vadd.f32 %v8634, %v8838
        %v8840 = vpop.f32.mrb[0].mxu0
        %v8841 = vadd.f32 %v8636, %v8840
        %v8842 = vpop.f32.mrb[0].mxu0
        %v8843 = vadd.f32 %v8638, %v8842
        %8844 = vmatprep.mubr.bf16.mxu0 0
        %8845 = vmatmul.mubr.bf16.gmra.mrb[0].mxu0 %v8049
        %v8846 = vpop.f32.mrb[0].mxu0
        %v8847 = vadd.f32 %v8642, %v8846
        %v8848 = vpop.f32.mrb[0].mxu0
        %v8849 = vadd.f32 %v8644, %v8848
        %v8850 = vpop.f32.mrb[0].mxu0
        %v8851 = vadd.f32 %v8646, %v8850
        %v8852 = vpop.f32.mrb[0].mxu0
        %v8853 = vadd.f32 %v8648, %v8852
        %8854 = vmatprep.mubr.bf16.mxu0 0
        %8855 = vmatmul.mubr.bf16.gmra.mrb[0].mxu0 %v8051
        %v8856 = vpop.f32.mrb[0].mxu0
        %v8857 = vadd.f32 %v8652, %v8856
        %v8858 = vpop.f32.mrb[0].mxu0
        %v8859 = vadd.f32 %v8654, %v8858
        %v8860 = vpop.f32.mrb[0].mxu0
        %v8861 = vadd.f32 %v8656, %v8860
        %v8862 = vpop.f32.mrb[0].mxu0
        %v8863 = vadd.f32 %v8658, %v8862
        %8864 = vmatprep.mubr.bf16.mxu0 0
        %8865 = vmatmul.mubr.bf16.gmra.mrb[0].mxu0 %v8053
        %v8866 = vpop.f32.mrb[0].mxu0
        %v8867 = vpop.f32.mrb[0].mxu0
        %v8868 = vpop.f32.mrb[0].mxu0
        %v8869 = vpop.f32.mrb[0].mxu0
        %8870 = vmatprep.mubr.bf16.mxu0 0
        %8871 = vmatmul.mubr.bf16.gmra.mrb[0].mxu0 %v8055
        %v8872 = vpop.f32.mrb[0].mxu0
        %v8873 = vpop.f32.mrb[0].mxu0
        %v8874 = vpop.f32.mrb[0].mxu0
        %v8875 = vpop.f32.mrb[0].mxu0
        %8876 = vdwg.mxu0
        %v8877 = vmax.f32 %v8707, 0.0
        %v8878 = vmax.f32 %v8709, 0.0
        %v8879 = vmax.f32 %v8711, 0.0
        %v8880 = vmax.f32 %v8713, 0.0
        %v8881 = vmax.f32 %v8717, 0.0
        %v8882 = vmax.f32 %v8719, 0.0
        %v8883 = vmax.f32 %v8721, 0.0
        %v8884 = vmax.f32 %v8723, 0.0
        %v8885 = vmax.f32 %v8727, 0.0
        %v8886 = vmax.f32 %v8729, 0.0
        %v8887 = vmax.f32 %v8731, 0.0
        %v8888 = vmax.f32 %v8733, 0.0
        %v8889 = vmax.f32 %v8737, 0.0
        %v8890 = vmax.f32 %v8739, 0.0
        %v8891 = vmax.f32 %v8741, 0.0
        %v8892 = vmax.f32 %v8743, 0.0
        %v8893 = vmax.f32 %v8747, 0.0
        %v8894 = vmax.f32 %v8749, 0.0
        %v8895 = vmax.f32 %v8751, 0.0
        %v8896 = vmax.f32 %v8753, 0.0
        %v8897 = vmax.f32 %v8757, 0.0
        %v8898 = vmax.f32 %v8759, 0.0
        %v8899 = vmax.f32 %v8761, 0.0
        %v8900 = vmax.f32 %v8763, 0.0
        %v8901 = vmax.f32 %v8767, 0.0
        %v8902 = vmax.f32 %v8769, 0.0
        %v8903 = vmax.f32 %v8771, 0.0
        %v8904 = vmax.f32 %v8773, 0.0
        %v8905 = vmax.f32 %v8777, 0.0
        %v8906 = vmax.f32 %v8779, 0.0
        %v8907 = vmax.f32 %v8781, 0.0
        %v8908 = vmax.f32 %v8783, 0.0
        %v8909 = vmax.f32 %v8787, 0.0
        %v8910 = vmax.f32 %v8789, 0.0
        %v8911 = vmax.f32 %v8791, 0.0
        %v8912 = vmax.f32 %v8793, 0.0
        %v8913 = vmax.f32 %v8797, 0.0
        %v8914 = vmax.f32 %v8799, 0.0
        %v8915 = vmax.f32 %v8801, 0.0
        %v8916 = vmax.f32 %v8803, 0.0
        %v8917 = vmax.f32 %v8807, 0.0
        %v8918 = vmax.f32 %v8809, 0.0
        %v8919 = vmax.f32 %v8811, 0.0
        %v8920 = vmax.f32 %v8813, 0.0
        %v8921 = vmax.f32 %v8817, 0.0
        %v8922 = vmax.f32 %v8819, 0.0
        %v8923 = vmax.f32 %v8821, 0.0
        %v8924 = vmax.f32 %v8823, 0.0
        %v8925 = vmax.f32 %v8827, 0.0
        %v8926 = vmax.f32 %v8829, 0.0
        %v8927 = vmax.f32 %v8831, 0.0
        %v8928 = vmax.f32 %v8833, 0.0
        %v8929 = vmax.f32 %v8837, 0.0
        %v8930 = vmax.f32 %v8839, 0.0
        %v8931 = vmax.f32 %v8841, 0.0
        %v8932 = vmax.f32 %v8843, 0.0
        %v8933 = vmax.f32 %v8847, 0.0
        %v8934 = vmax.f32 %v8849, 0.0
        %v8935 = vmax.f32 %v8851, 0.0
        %v8936 = vmax.f32 %v8853, 0.0
        %v8937 = vmax.f32 %v8857, 0.0
        %v8938 = vmax.f32 %v8859, 0.0
        %v8939 = vmax.f32 %v8861, 0.0
        %v8940 = vmax.f32 %v8863, 0.0
        %v8941 = vadd.f32 %v8877, %v8885
        %v8942 = vadd.f32 %v8878, %v8886
        %v8943 = vadd.f32 %v8879, %v8887
        %v8944 = vadd.f32 %v8880, %v8888
        %v8945 = vadd.f32 %v8881, %v8889
        %v8946 = vadd.f32 %v8882, %v8890
        %v8947 = vadd.f32 %v8883, %v8891
        %v8948 = vadd.f32 %v8884, %v8892
        %v8949 = vadd.f32 %v8893, %v8901
        %v8950 = vadd.f32 %v8894, %v8902
        %v8951 = vadd.f32 %v8895, %v8903
        %v8952 = vadd.f32 %v8896, %v8904
        %v8953 = vadd.f32 %v8897, %v8905
        %v8954 = vadd.f32 %v8898, %v8906
        %v8955 = vadd.f32 %v8899, %v8907
        %v8956 = vadd.f32 %v8900, %v8908
        %v8957 = vadd.f32 %v8909, %v8917
        %v8958 = vadd.f32 %v8910, %v8918
        %v8959 = vadd.f32 %v8911, %v8919
        %v8960 = vadd.f32 %v8912, %v8920
        %v8961 = vadd.f32 %v8913, %v8921
        %v8962 = vadd.f32 %v8914, %v8922
        %v8963 = vadd.f32 %v8915, %v8923
        %v8964 = vadd.f32 %v8916, %v8924
        %v8965 = vadd.f32 %v8925, %v8933
        %v8966 = vadd.f32 %v8926, %v8934
        %v8967 = vadd.f32 %v8927, %v8935
        %v8968 = vadd.f32 %v8928, %v8936
        %v8969 = vadd.f32 %v8929, %v8937
        %v8970 = vadd.f32 %v8930, %v8938
        %v8971 = vadd.f32 %v8931, %v8939
        %v8972 = vadd.f32 %v8932, %v8940
        %v8973 = vpack.c.bf16 %v8943, %v8941
        %v8974 = vpack.c.bf16 %v8944, %v8942
        %v8975 = vpack.c.bf16 %v8947, %v8945
        %v8976 = vpack.c.bf16 %v8948, %v8946
        %v8977 = vpack.c.bf16 %v8951, %v8949
        %v8978 = vpack.c.bf16 %v8952, %v8950
        %v8979 = vpack.c.bf16 %v8955, %v8953
        %v8980 = vpack.c.bf16 %v8956, %v8954
        %v8981 = vpack.c.bf16 %v8959, %v8957
        %v8982 = vpack.c.bf16 %v8960, %v8958
        %v8983 = vpack.c.bf16 %v8963, %v8961
        %v8984 = vpack.c.bf16 %v8964, %v8962
        %v8985 = vpack.c.bf16 %v8967, %v8965
        %v8986 = vpack.c.bf16 %v8968, %v8966
        %v8987 = vpack.c.bf16 %v8971, %v8969
        %v8988 = vpack.c.bf16 %v8972, %v8970
        %v9007 = vunpack.c.l.b16 %v1102
        %v9008 = vunpack.c.l.b16 %v1103
        %v9009 = vunpack.c.l.b16 %v1104
        %v9010 = vunpack.c.l.b16 %v1105
        %v9011 = vunpack.c.l.b16 %v1106
        %v9012 = vunpack.c.l.b16 %v1107
        %v9013 = vunpack.c.l.b16 %v1108
        %v9014 = vunpack.c.l.b16 %v1109
        %v9015 = vunpack.c.l.b16 %v1110
        %v9016 = vunpack.c.l.b16 %v1111
        %v9017 = vunpack.c.l.b16 %v1112
        %v9018 = vunpack.c.l.b16 %v1113
        %v9019 = vunpack.c.l.b16 %v1114
        %v9020 = vunpack.c.l.b16 %v1115
        %v9021 = vunpack.c.l.b16 %v1116
        %v9022 = vunpack.c.l.b16 %v1117
        %v9023 = vunpack.c.l.b16 %v1118
        %v9024 = vunpack.c.l.b16 %v1119
        %v9025 = vpack.c.b16 %v9008, %v9007
        %v9026 = vpack.c.b16 %v9010, %v9009
        %v9027 = vpack.c.b16 %v9012, %v9011
        %v9028 = vpack.c.b16 %v9014, %v9013
        %v9029 = vpack.c.b16 %v9016, %v9015
        %v9030 = vpack.c.b16 %v9018, %v9017
        %v9031 = vpack.c.b16 %v9020, %v9019
        %v9032 = vpack.c.b16 %v9022, %v9021
        %v9033 = vpack.c.b16 %v9024, %v9023
        %v9044 = vsel %vm4608, %v8974, 0
        %v9047 = vsel %vm4608, %v8976, 0
        %v9050 = vsel %vm4608, %v8978, 0
        %v9053 = vsel %vm4608, %v8980, 0
        %v9056 = vsel %vm4608, %v8982, 0
        %v9059 = vsel %vm4608, %v8984, 0
        %v9062 = vsel %vm4608, %v8986, 0
        %v9065 = vsel %vm4608, %v8988, 0
        %9067 = vmatprep.subr.bf16.mxu0 0
        %9068 = vmatpush1.bf16.msra.mxu0 %v9025
        %9069 = vmatprep.subr.bf16.mxu0 0
        %9070 = vmatpush1.bf16.msra.mxu0 %v9026
        %9071 = vmatprep.subr.bf16.mxu0 0
        %9072 = vmatpush1.bf16.msra.mxu0 %v9027
        %9073 = vmatprep.subr.bf16.mxu0 0
        %9074 = vmatpush1.bf16.msra.mxu0 %v9028
        %9075 = vmatprep.subr.bf16.mxu0 0
        %9076 = vmatpush1.bf16.msra.mxu0 %v9029
        %9077 = vmatprep.subr.bf16.mxu0 0
        %9078 = vmatpush1.bf16.msra.mxu0 %v9030
        %9079 = vmatprep.subr.bf16.mxu0 0
        %9080 = vmatpush1.bf16.msra.mxu0 %v9031
        %9081 = vmatprep.subr.bf16.mxu0 0
        %9082 = vmatpush1.bf16.msra.mxu0 %v9032
        %9083 = vmatprep.subr.bf16.mxu0 0
        %9084 = vmatpush1.bf16.msra.mxu0 %v9033
        %9085 = vmatprep.subr.bf16.mxu0 0
        %9086 = vmatpush1.bf16.msra.mxu0 0
        %9087 = vmatprep.subr.bf16.mxu0 0
        %9088 = vmatpush1.bf16.msra.mxu0 0
        %9089 = vmatprep.subr.bf16.mxu0 0
        %9090 = vmatpush1.bf16.msra.mxu0 0
        %9091 = vmatprep.subr.bf16.mxu0 0
        %9092 = vmatpush1.bf16.msra.mxu0 0
        %9093 = vmatprep.subr.bf16.mxu0 0
        %9094 = vmatpush1.bf16.msra.mxu0 0
        %9095 = vmatprep.subr.bf16.mxu0 0
        %9096 = vmatpush1.bf16.msra.mxu0 0
        %9097 = vmatprep.subr.bf16.mxu0 0
        %9098 = vmatpush1.bf16.msra.mxu0 0
        %9099 = vmatprep.mubr.bf16.mxu0 %v9044
        %9100 = vmatmul.mubr.bf16.gmra.mrb[0].mxu0 %v8973
        %v9101 = vpop.f32.mrb[0].mxu0
        %v9102 = vadd.f32 0.0, %v9101
        %v9103 = vpop.f32.mrb[0].mxu0
        %v9104 = vpop.f32.mrb[0].mxu0
        %v9105 = vadd.f32 0.0, %v9104
        %v9106 = vpop.f32.mrb[0].mxu0
        %9107 = vmatprep.mubr.bf16.mxu0 %v9047
        %9108 = vmatmul.mubr.bf16.gmra.mrb[0].mxu0 %v8975
        %v9109 = vpop.f32.mrb[0].mxu0
        %v9110 = vadd.f32 0.0, %v9109
        %v9111 = vpop.f32.mrb[0].mxu0
        %v9112 = vpop.f32.mrb[0].mxu0
        %v9113 = vadd.f32 0.0, %v9112
        %v9114 = vpop.f32.mrb[0].mxu0
        %9115 = vmatprep.mubr.bf16.mxu0 %v9050
        %9116 = vmatmul.mubr.bf16.gmra.mrb[0].mxu0 %v8977
        %v9117 = vpop.f32.mrb[0].mxu0
        %v9118 = vadd.f32 0.0, %v9117
        %v9119 = vpop.f32.mrb[0].mxu0
        %v9120 = vpop.f32.mrb[0].mxu0
        %v9121 = vadd.f32 0.0, %v9120
        %v9122 = vpop.f32.mrb[0].mxu0
        %9123 = vmatprep.mubr.bf16.mxu0 %v9053
        %9124 = vmatmul.mubr.bf16.gmra.mrb[0].mxu0 %v8979
        %v9125 = vpop.f32.mrb[0].mxu0
        %v9126 = vadd.f32 0.0, %v9125
        %v9127 = vpop.f32.mrb[0].mxu0
        %v9128 = vpop.f32.mrb[0].mxu0
        %v9129 = vadd.f32 0.0, %v9128
        %v9130 = vpop.f32.mrb[0].mxu0
        %9131 = vmatprep.mubr.bf16.mxu0 %v9056
        %9132 = vmatmul.mubr.bf16.gmra.mrb[0].mxu0 %v8981
        %v9133 = vpop.f32.mrb[0].mxu0
        %v9134 = vadd.f32 0.0, %v9133
        %v9135 = vpop.f32.mrb[0].mxu0
        %v9136 = vpop.f32.mrb[0].mxu0
        %v9137 = vadd.f32 0.0, %v9136
        %v9138 = vpop.f32.mrb[0].mxu0
        %9139 = vmatprep.mubr.bf16.mxu0 %v9059
        %9140 = vmatmul.mubr.bf16.gmra.mrb[0].mxu0 %v8983
        %v9141 = vpop.f32.mrb[0].mxu0
        %v9142 = vadd.f32 0.0, %v9141
        %v9143 = vpop.f32.mrb[0].mxu0
        %v9144 = vpop.f32.mrb[0].mxu0
        %v9145 = vadd.f32 0.0, %v9144
        %v9146 = vpop.f32.mrb[0].mxu0
        %9147 = vmatprep.mubr.bf16.mxu0 %v9062
        %9148 = vmatmul.mubr.bf16.gmra.mrb[0].mxu0 %v8985
        %v9149 = vpop.f32.mrb[0].mxu0
        %v9150 = vadd.f32 0.0, %v9149
        %v9151 = vpop.f32.mrb[0].mxu0
        %v9152 = vpop.f32.mrb[0].mxu0
        %v9153 = vadd.f32 0.0, %v9152
        %v9154 = vpop.f32.mrb[0].mxu0
        %9155 = vmatprep.mubr.bf16.mxu0 %v9065
        %9156 = vmatmul.mubr.bf16.gmra.mrb[0].mxu0 %v8987
        %v9157 = vpop.f32.mrb[0].mxu0
        %v9158 = vadd.f32 0.0, %v9157
        %v9159 = vpop.f32.mrb[0].mxu0
        %v9160 = vpop.f32.mrb[0].mxu0
        %v9161 = vadd.f32 0.0, %v9160
        %v9162 = vpop.f32.mrb[0].mxu0
        %9163 = vdwg.mxu0
        %9168 = vrot.lane.b32.xlu0 %v9118, 64
        %v9169 = vpop.permute.xlu0 %9168
        %9170 = vrot.lane.b32.xlu0 %v9121, 64
        %v9171 = vpop.permute.xlu0 %9170
        %9172 = vrot.lane.b32.xlu0 %v9126, 64
        %v9173 = vpop.permute.xlu0 %9172
        %9174 = vrot.lane.b32.xlu0 %v9129, 64
        %v9175 = vpop.permute.xlu0 %9174
        %9184 = vrot.lane.b32.xlu0 %v9150, 64
        %v9185 = vpop.permute.xlu0 %9184
        %9186 = vrot.lane.b32.xlu0 %v9153, 64
        %v9187 = vpop.permute.xlu0 %9186
        %9188 = vrot.lane.b32.xlu0 %v9158, 64
        %v9189 = vpop.permute.xlu0 %9188
        %9190 = vrot.lane.b32.xlu0 %v9161, 64
        %v9191 = vpop.permute.xlu0 %9190
        %vm9196 = vcmask 523264
        %v9197 = vsel %vm9196, %v9102, %v9169
        %v9198 = vsel %vm9196, %v9105, %v9171
        %v9199 = vsel %vm9196, %v9110, %v9173
        %v9200 = vsel %vm9196, %v9113, %v9175
        %v9201 = vsel %vm9196, %v9134, %v9185
        %v9202 = vsel %vm9196, %v9137, %v9187
        %v9203 = vsel %vm9196, %v9142, %v9189
        %v9204 = vsel %vm9196, %v9145, %v9191
        %v9205 = vpack.c.bf16 %v9198, %v9197
        %v9206 = vpack.c.bf16 %v9202, %v9201
        %v9207 = vpack.c.bf16 %v9200, %v9199
        %v9208 = vpack.c.bf16 %v9204, %v9203
        %v9210 = vlaneseq
        %v9211 = vshrl.u32 %v9210, 7
        %v9212 = vsub.s32 0, %v9211
        %v9213 = vrot.slane %v1152, %v9212
        %v9214 = vlaneseq
        %v9215 = vshrl.u32 %v9214, 7
        %v9216 = vsub.s32 1, %v9215
        %v9217 = vrot.slane %v1152, %v9216
        %v9252 = vunpack.c.l.b16 %v1120
        %v9253 = vunpack.c.h.b16 %v1120
        %v9254 = vunpack.c.l.b16 %v1121
        %v9255 = vunpack.c.h.b16 %v1121
        %v9256 = vunpack.c.l.b16 %v1122
        %v9257 = vunpack.c.h.b16 %v1122
        %v9258 = vunpack.c.l.b16 %v1123
        %v9259 = vunpack.c.h.b16 %v1123
        %v9260 = vunpack.c.l.b16 %v1124
        %v9261 = vunpack.c.h.b16 %v1124
        %v9262 = vunpack.c.l.b16 %v1125
        %v9263 = vunpack.c.h.b16 %v1125
        %v9264 = vunpack.c.l.b16 %v1126
        %v9265 = vunpack.c.h.b16 %v1126
        %v9266 = vunpack.c.l.b16 %v1127
        %v9267 = vunpack.c.h.b16 %v1127
        %v9268 = vunpack.c.l.b16 %v1128
        %v9269 = vunpack.c.h.b16 %v1128
        %v9270 = vunpack.c.l.b16 %v1129
        %v9271 = vunpack.c.h.b16 %v1129
        %v9272 = vunpack.c.l.b16 %v1130
        %v9273 = vunpack.c.h.b16 %v1130
        %v9274 = vunpack.c.l.b16 %v1131
        %v9275 = vunpack.c.h.b16 %v1131
        %v9276 = vunpack.c.l.b16 %v1132
        %v9277 = vunpack.c.h.b16 %v1132
        %v9278 = vunpack.c.l.b16 %v1133
        %v9279 = vunpack.c.h.b16 %v1133
        %v9280 = vunpack.c.l.b16 %v1134
        %v9281 = vunpack.c.h.b16 %v1134
        %v9282 = vunpack.c.l.b16 %v1135
        %v9283 = vunpack.c.h.b16 %v1135
        %v9284 = vunpack.c.l.b16 %v1136
        %v9285 = vunpack.c.h.b16 %v1136
        %v9286 = vunpack.c.l.b16 %v1137
        %v9287 = vunpack.c.h.b16 %v1137
        %v9288 = vunpack.c.l.b16 %v1138
        %v9289 = vunpack.c.h.b16 %v1138
        %v9290 = vunpack.c.l.b16 %v1139
        %v9291 = vunpack.c.h.b16 %v1139
        %v9292 = vunpack.c.l.b16 %v1140
        %v9293 = vunpack.c.h.b16 %v1140
        %v9294 = vunpack.c.l.b16 %v1141
        %v9295 = vunpack.c.h.b16 %v1141
        %v9296 = vunpack.c.l.b16 %v1142
        %v9297 = vunpack.c.h.b16 %v1142
        %v9298 = vunpack.c.l.b16 %v1143
        %v9299 = vunpack.c.h.b16 %v1143
        %v9300 = vunpack.c.l.b16 %v1144
        %v9301 = vunpack.c.h.b16 %v1144
        %v9302 = vunpack.c.l.b16 %v1145
        %v9303 = vunpack.c.h.b16 %v1145
        %v9304 = vunpack.c.l.b16 %v1146
        %v9305 = vunpack.c.h.b16 %v1146
        %v9306 = vunpack.c.l.b16 %v1147
        %v9307 = vunpack.c.h.b16 %v1147
        %v9308 = vunpack.c.l.b16 %v1148
        %v9309 = vunpack.c.h.b16 %v1148
        %v9310 = vunpack.c.l.b16 %v1149
        %v9311 = vunpack.c.h.b16 %v1149
        %v9312 = vunpack.c.l.b16 %v1150
        %v9313 = vunpack.c.h.b16 %v1150
        %v9314 = vunpack.c.l.b16 %v1151
        %v9315 = vunpack.c.h.b16 %v1151
        %v9316 = vpack.c.b16 %v9254, %v9252
        %v9317 = vpack.c.b16 %v9255, %v9253
        %v9318 = vpack.c.b16 %v9258, %v9256
        %v9319 = vpack.c.b16 %v9259, %v9257
        %v9320 = vpack.c.b16 %v9262, %v9260
        %v9321 = vpack.c.b16 %v9263, %v9261
        %v9322 = vpack.c.b16 %v9266, %v9264
        %v9323 = vpack.c.b16 %v9267, %v9265
        %v9324 = vpack.c.b16 %v9270, %v9268
        %v9325 = vpack.c.b16 %v9271, %v9269
        %v9326 = vpack.c.b16 %v9274, %v9272
        %v9327 = vpack.c.b16 %v9275, %v9273
        %v9328 = vpack.c.b16 %v9278, %v9276
        %v9329 = vpack.c.b16 %v9279, %v9277
        %v9330 = vpack.c.b16 %v9282, %v9280
        %v9331 = vpack.c.b16 %v9283, %v9281
        %v9332 = vpack.c.b16 %v9286, %v9284
        %v9333 = vpack.c.b16 %v9287, %v9285
        %v9334 = vpack.c.b16 %v9290, %v9288
        %v9335 = vpack.c.b16 %v9291, %v9289
        %v9336 = vpack.c.b16 %v9294, %v9292
        %v9337 = vpack.c.b16 %v9295, %v9293
        %v9338 = vpack.c.b16 %v9298, %v9296
        %v9339 = vpack.c.b16 %v9299, %v9297
        %v9340 = vpack.c.b16 %v9302, %v9300
        %v9341 = vpack.c.b16 %v9303, %v9301
        %v9342 = vpack.c.b16 %v9306, %v9304
        %v9343 = vpack.c.b16 %v9307, %v9305
        %v9344 = vpack.c.b16 %v9310, %v9308
        %v9345 = vpack.c.b16 %v9311, %v9309
        %v9346 = vpack.c.b16 %v9314, %v9312
        %v9347 = vpack.c.b16 %v9315, %v9313
        %9380 = vmatprep.subr.bf16.mxu0 %v9317
        %9381 = vmatpush1.bf16.msra.mxu0 %v9316
        %9382 = vmatprep.subr.bf16.mxu0 %v9319
        %9383 = vmatpush1.bf16.msra.mxu0 %v9318
        %9384 = vmatprep.subr.bf16.mxu0 %v9321
        %9385 = vmatpush1.bf16.msra.mxu0 %v9320
        %9386 = vmatprep.subr.bf16.mxu0 %v9323
        %9387 = vmatpush1.bf16.msra.mxu0 %v9322
        %9388 = vmatprep.subr.bf16.mxu0 %v9325
        %9389 = vmatpush1.bf16.msra.mxu0 %v9324
        %9390 = vmatprep.subr.bf16.mxu0 %v9327
        %9391 = vmatpush1.bf16.msra.mxu0 %v9326
        %9392 = vmatprep.subr.bf16.mxu0 %v9329
        %9393 = vmatpush1.bf16.msra.mxu0 %v9328
        %9394 = vmatprep.subr.bf16.mxu0 %v9331
        %9395 = vmatpush1.bf16.msra.mxu0 %v9330
        %9396 = vmatprep.subr.bf16.mxu0 %v9333
        %9397 = vmatpush1.bf16.msra.mxu0 %v9332
        %9398 = vmatprep.subr.bf16.mxu0 %v9335
        %9399 = vmatpush1.bf16.msra.mxu0 %v9334
        %9400 = vmatprep.subr.bf16.mxu0 %v9337
        %9401 = vmatpush1.bf16.msra.mxu0 %v9336
        %9402 = vmatprep.subr.bf16.mxu0 %v9339
        %9403 = vmatpush1.bf16.msra.mxu0 %v9338
        %9404 = vmatprep.subr.bf16.mxu0 %v9341
        %9405 = vmatpush1.bf16.msra.mxu0 %v9340
        %9406 = vmatprep.subr.bf16.mxu0 %v9343
        %9407 = vmatpush1.bf16.msra.mxu0 %v9342
        %9408 = vmatprep.subr.bf16.mxu0 %v9345
        %9409 = vmatpush1.bf16.msra.mxu0 %v9344
        %9410 = vmatprep.subr.bf16.mxu0 %v9347
        %9411 = vmatpush1.bf16.msra.mxu0 %v9346
        %9412 = vmatprep.mubr.bf16.mxu0 %v9206
        %9413 = vmatmul.mubr.bf16.gmra.mrb[0].mxu0 %v9205
        %v9414 = vpop.f32.mrb[0].mxu0
        %v9415 = vadd.f32 %v9213, %v9414
        %v9416 = vpop.f32.mrb[0].mxu0
        %v9417 = vadd.f32 %v9217, %v9416
        %v9418 = vpop.f32.mrb[0].mxu0
        %v9419 = vadd.f32 %v9213, %v9418
        %v9420 = vpop.f32.mrb[0].mxu0
        %v9421 = vadd.f32 %v9217, %v9420
        %9422 = vmatprep.mubr.bf16.mxu0 %v9208
        %9423 = vmatmul.mubr.bf16.gmra.mrb[0].mxu0 %v9207
        %v9424 = vpop.f32.mrb[0].mxu0
        %v9425 = vadd.f32 %v9213, %v9424
        %v9426 = vpop.f32.mrb[0].mxu0
        %v9427 = vadd.f32 %v9217, %v9426
        %v9428 = vpop.f32.mrb[0].mxu0
        %v9429 = vadd.f32 %v9213, %v9428
        %v9430 = vpop.f32.mrb[0].mxu0
        %v9431 = vadd.f32 %v9217, %v9430
        %9432 = vdwg.mxu0
        %v9433 = vmax.f32 %v9415, 0.0
        %v9434 = vmax.f32 %v9417, 0.0
        %v9435 = vmax.f32 %v9419, 0.0
        %v9436 = vmax.f32 %v9421, 0.0
        %v9437 = vmax.f32 %v9425, 0.0
        %v9438 = vmax.f32 %v9427, 0.0
        %v9439 = vmax.f32 %v9429, 0.0
        %v9440 = vmax.f32 %v9431, 0.0
        %v9441 = vpack.c.bf16 %v9435, %v9433
        %v9442 = vpack.c.bf16 %v9436, %v9434
        %v9443 = vpack.c.bf16 %v9439, %v9437
        %v9444 = vpack.c.bf16 %v9440, %v9438
        %v9446 = vlaneseq
        %v9447 = vshrl.u32 %v9446, 7
        %v9448 = vsub.s32 0, %v9447
        %v9449 = vrot.slane %v1171, %v9448
        %v9469 = vunpack.c.l.b16 %v1153
        %v9470 = vunpack.c.l.b16 %v1154
        %v9471 = vunpack.c.l.b16 %v1155
        %v9472 = vunpack.c.l.b16 %v1156
        %v9473 = vunpack.c.l.b16 %v1157
        %v9474 = vunpack.c.l.b16 %v1158
        %v9475 = vunpack.c.l.b16 %v1159
        %v9476 = vunpack.c.l.b16 %v1160
        %v9477 = vunpack.c.l.b16 %v1161
        %v9478 = vunpack.c.l.b16 %v1162
        %v9479 = vunpack.c.l.b16 %v1163
        %v9480 = vunpack.c.l.b16 %v1164
        %v9481 = vunpack.c.l.b16 %v1165
        %v9482 = vunpack.c.l.b16 %v1166
        %v9483 = vunpack.c.l.b16 %v1167
        %v9484 = vunpack.c.l.b16 %v1168
        %v9485 = vunpack.c.l.b16 %v1169
        %v9486 = vunpack.c.l.b16 %v1170
        %v9487 = vpack.c.b16 %v9470, %v9469
        %v9488 = vpack.c.b16 %v9472, %v9471
        %v9489 = vpack.c.b16 %v9474, %v9473
        %v9490 = vpack.c.b16 %v9476, %v9475
        %v9491 = vpack.c.b16 %v9478, %v9477
        %v9492 = vpack.c.b16 %v9480, %v9479
        %v9493 = vpack.c.b16 %v9482, %v9481
        %v9494 = vpack.c.b16 %v9484, %v9483
        %v9495 = vpack.c.b16 %v9486, %v9485
        %v9506 = vsel %vm4608, %v9442, 0
        %v9509 = vsel %vm4608, %v9444, 0
        %9511 = vmatprep.subr.bf16.mxu0 0
        %9512 = vmatpush1.bf16.msra.mxu0 %v9487
        %9513 = vmatprep.subr.bf16.mxu0 0
        %9514 = vmatpush1.bf16.msra.mxu0 %v9488
        %9515 = vmatprep.subr.bf16.mxu0 0
        %9516 = vmatpush1.bf16.msra.mxu0 %v9489
        %9517 = vmatprep.subr.bf16.mxu0 0
        %9518 = vmatpush1.bf16.msra.mxu0 %v9490
        %9519 = vmatprep.subr.bf16.mxu0 0
        %9520 = vmatpush1.bf16.msra.mxu0 %v9491
        %9521 = vmatprep.subr.bf16.mxu0 0
        %9522 = vmatpush1.bf16.msra.mxu0 %v9492
        %9523 = vmatprep.subr.bf16.mxu0 0
        %9524 = vmatpush1.bf16.msra.mxu0 %v9493
        %9525 = vmatprep.subr.bf16.mxu0 0
        %9526 = vmatpush1.bf16.msra.mxu0 %v9494
        %9527 = vmatprep.subr.bf16.mxu0 0
        %9528 = vmatpush1.bf16.msra.mxu0 %v9495
        %9529 = vmatprep.subr.bf16.mxu0 0
        %9530 = vmatpush1.bf16.msra.mxu0 0
        %9531 = vmatprep.subr.bf16.mxu0 0
        %9532 = vmatpush1.bf16.msra.mxu0 0
        %9533 = vmatprep.subr.bf16.mxu0 0
        %9534 = vmatpush1.bf16.msra.mxu0 0
        %9535 = vmatprep.subr.bf16.mxu0 0
        %9536 = vmatpush1.bf16.msra.mxu0 0
        %9537 = vmatprep.subr.bf16.mxu0 0
        %9538 = vmatpush1.bf16.msra.mxu0 0
        %9539 = vmatprep.subr.bf16.mxu0 0
        %9540 = vmatpush1.bf16.msra.mxu0 0
        %9541 = vmatprep.subr.bf16.mxu0 0
        %9542 = vmatpush1.bf16.msra.mxu0 0
        %9543 = vmatprep.mubr.bf16.mxu0 %v9506
        %9544 = vmatmul.mubr.bf16.gmra.mrb[0].mxu0 %v9441
        %v9545 = vpop.f32.mrb[0].mxu0
        %v9546 = vadd.f32 %v9449, %v9545
        %v9547 = vpop.f32.mrb[0].mxu0
        %v9548 = vpop.f32.mrb[0].mxu0
        %v9549 = vadd.f32 %v9449, %v9548
        %v9550 = vpop.f32.mrb[0].mxu0
        %9551 = vmatprep.mubr.bf16.mxu0 %v9509
        %9552 = vmatmul.mubr.bf16.gmra.mrb[0].mxu0 %v9443
        %v9553 = vpop.f32.mrb[0].mxu0
        %v9554 = vadd.f32 %v9449, %v9553
        %v9555 = vpop.f32.mrb[0].mxu0
        %v9556 = vpop.f32.mrb[0].mxu0
        %v9557 = vadd.f32 %v9449, %v9556
        %v9558 = vpop.f32.mrb[0].mxu0
        %9559 = vdwg.mxu0
        %v9560 = vmax.f32 %v9546, 0.0
        %v9561 = vmax.f32 %v9549, 0.0
        %v9562 = vmax.f32 %v9554, 0.0
        %v9563 = vmax.f32 %v9557, 0.0
        %v9564 = vpack.c.bf16 %v9561, %v9560
        %v9565 = vpack.c.bf16 %v9563, %v9562
        %v9567 = vlaneseq
        %v9568 = vshrl.u32 %v9567, 7
        %v9569 = vsub.s32 0, %v9568
        %v9570 = vrot.slane %v1183, %v9569
        %v9583 = vunpack.c.l.b16 %v1172
        %v9584 = vunpack.c.l.b16 %v1173
        %v9585 = vunpack.c.l.b16 %v1174
        %v9586 = vunpack.c.l.b16 %v1175
        %v9587 = vunpack.c.l.b16 %v1176
        %v9588 = vunpack.c.l.b16 %v1177
        %v9589 = vunpack.c.l.b16 %v1178
        %v9590 = vunpack.c.l.b16 %v1179
        %v9591 = vunpack.c.l.b16 %v1180
        %v9592 = vunpack.c.l.b16 %v1181
        %v9593 = vunpack.c.l.b16 %v1182
        %v9594 = vpack.c.b16 %v9584, %v9583
        %v9595 = vpack.c.b16 %v9586, %v9585
        %v9596 = vpack.c.b16 %v9588, %v9587
        %v9597 = vpack.c.b16 %v9590, %v9589
        %v9598 = vpack.c.b16 %v9592, %v9591
        %v9599 = vpack.c.b16 %v9593, %v9593
        %vm9605 = vcmask 687104
        %v9607 = vsel %vm9605, %v9564, 0
        %v9610 = vsel %vm9605, %v9565, 0
        %vm9612 = vcmask 1041408
        %v9614 = vsel %vm9612, %v9599, 0
        %9616 = vmatprep.subr.bf16.mxu0 0
        %9617 = vmatpush1.bf16.msra.mxu0 %v9594
        %9618 = vmatprep.subr.bf16.mxu0 0
        %9619 = vmatpush1.bf16.msra.mxu0 %v9595
        %9620 = vmatprep.subr.bf16.mxu0 0
        %9621 = vmatpush1.bf16.msra.mxu0 %v9596
        %9622 = vmatprep.subr.bf16.mxu0 0
        %9623 = vmatpush1.bf16.msra.mxu0 %v9597
        %9624 = vmatprep.subr.bf16.mxu0 0
        %9625 = vmatpush1.bf16.msra.mxu0 %v9598
        %9626 = vmatprep.subr.bf16.mxu0 0
        %9627 = vmatpush1.bf16.msra.mxu0 %v9614
        %9628 = vmatprep.subr.bf16.mxu0 0
        %9629 = vmatpush1.bf16.msra.mxu0 0
        %9630 = vmatprep.subr.bf16.mxu0 0
        %9631 = vmatpush1.bf16.msra.mxu0 0
        %9632 = vmatprep.subr.bf16.mxu0 0
        %9633 = vmatpush1.bf16.msra.mxu0 0
        %9634 = vmatprep.subr.bf16.mxu0 0
        %9635 = vmatpush1.bf16.msra.mxu0 0
        %9636 = vmatprep.subr.bf16.mxu0 0
        %9637 = vmatpush1.bf16.msra.mxu0 0
        %9638 = vmatprep.subr.bf16.mxu0 0
        %9639 = vmatpush1.bf16.msra.mxu0 0
        %9640 = vmatprep.subr.bf16.mxu0 0
        %9641 = vmatpush1.bf16.msra.mxu0 0
        %9642 = vmatprep.subr.bf16.mxu0 0
        %9643 = vmatpush1.bf16.msra.mxu0 0
        %9644 = vmatprep.subr.bf16.mxu0 0
        %9645 = vmatpush1.bf16.msra.mxu0 0
        %9646 = vmatprep.subr.bf16.mxu0 0
        %9647 = vmatpush1.bf16.msra.mxu0 0
        %9648 = vmatprep.mubr.bf16.mxu0 0
        %9649 = vmatmul.mubr.bf16.gmra.mrb[0].mxu0 %v9607
        %v9650 = vpop.f32.mrb[0].mxu0
        %v9651 = vadd.f32 %v9570, %v9650
        %v9652 = vpop.f32.mrb[0].mxu0
        %v9653 = vpop.f32.mrb[0].mxu0
        %v9654 = vadd.f32 %v9570, %v9653
        %v9655 = vpop.f32.mrb[0].mxu0
        %9656 = vmatprep.mubr.bf16.mxu0 0
        %9657 = vmatmul.mubr.bf16.gmra.mrb[0].mxu0 %v9610
        %v9658 = vpop.f32.mrb[0].mxu0
        %v9659 = vadd.f32 %v9570, %v9658
        %v9660 = vpop.f32.mrb[0].mxu0
        %v9661 = vpop.f32.mrb[0].mxu0
        %v9662 = vadd.f32 %v9570, %v9661
        %v9663 = vpop.f32.mrb[0].mxu0
        %9664 = vdwg.mxu0
        %vm9665 = vcmask 80896
        %9666 = vst.msk [vmem:[%s920] sm:$0xff] %vm9665, %v9651
        %9667 = vst.msk [vmem:[%s920 + $0x8] sm:$0xff] %vm9665, %v9654
        %9668 = vst.msk [vmem:[%s920 + $0x10] sm:$0xff] %vm9665, %v9659
        %9669 = vst.msk [vmem:[%s920 + $0x18] sm:$0xff] %vm9665, %v9662
        %s9670 = smul.u32 4, %s24
        %p9671 = scmp.lt.s32.totalorder %s9670, 11
        %s9672 = scalar_select %p9671, %s9670, 11
        %s9673 = smul.addr %s9672, 8
        %s9674 = scalar_lea.vmem %s13, %s9673
        // Predicated region
        $region111: #{lenet_forward.1} parent=105 // pred_check
          %p9675 = pneg %p320
        $region112: #{lenet_forward.1} parent=105 // pred_check_branch
          %9677 = sbr.rel (%p9675) target = $region114
        $region113: #{lenet_forward.1} parent=105 // pred_region
          %s9678 = smul.u32 4, %s24
        $region114: #{lenet_forward.1} parent=105 // pred_fallthru
          _
      $region106: #{lenet_forward.1} parent=5 // pred_fallthru
        _
      %p9679 = scmp.le.s32.totalorder 2, %s19
      // Predicated region
      $region115: #{lenet_forward.1} parent=5 // pred_check
        %p9680 = pneg %p9679
      $region116: #{lenet_forward.1} parent=5 // pred_check_branch
        %9682 = sbr.rel (%p9680) target = $region118
      $region117: #{lenet_forward.1} parent=5 // pred_region
        %s9683 = ssub.s32 %s19, 2
        // Predicated region
        $region119: #{lenet_forward.1} parent=117 // pred_check
          %p9684 = pneg %p326
        $region120: #{lenet_forward.1} parent=117 // pred_check_branch
          %9686 = sbr.rel (%p9684) target = $region122
        $region121: #{lenet_forward.1} parent=117 // pred_region
          %s9687 = smul.u32 4, %s25
          %p9688 = scmp.lt.s32.totalorder %s9687, 11
          %s9689 = scalar_select %p9688, %s9687, 11
          %s9690 = smul.addr %s9689, 8
          %s9691 = scalar_lea.vmem %s13, %s9690
        $region122: #{lenet_forward.1} parent=117 // pred_fallthru
          _
      $region118: #{lenet_forward.1} parent=5 // pred_fallthru
        _
    $region6: #{lenet_forward.1} parent=1 // loop_footer
      %s23 = sadd.s32 1, %s19
    $region7: #{lenet_forward.1} parent=1 // loop_footer_branch
      %18 = sbr.rel target = $region3
    $region8: #{lenet_forward.1} parent=1 // loop_exit
      _

</llo_original>
